<compile_context>
chip_gen: v7x
topology: tpu7x:2x2x1
jax: 0.10.0
libtpu: 0.0.40
codegen_flags: <defaults>
</compile_context>

<pallas_src>
import functools

import jax
import jax.numpy as jnp
from jax.experimental import pallas as pl
from jax.experimental.pallas import tpu as pltpu

EMBED_DIM = 32          # args.embed_dim
CHANNEL = 64            # self.channel_size  -> total_layer out = 256
FD = 672                # d_feature width (stand-in)
FC = 672                # c_feature width (stand-in)
FUSED_N = FD + EMBED_DIM            # 704: fused wd/wc output width (no zero gap)
assert FD + FC + 2 * EMBED_DIM == 1408   # total_layer input width
assert FC == FD

D_DRUGFEAT = 256        # drug_feature input width   (stand-in)
D_GRAPH = 96            # drug_graph  input width    (stand-in)
D_CELLFEAT = 512        # cell_feature input width   (stand-in)

_BN_EPS = 1e-5


def _elu(x):
    # exp(x)-1 kept (vs expm1) for guaranteed Mosaic lowering; where() discards
    # the positive-branch exp overflow.
    return jnp.where(x > 0, x, jnp.exp(x) - 1.0)


def isgdrp_kernel(
    dfeat_ref, dgraph_ref, cfeat_ref,       # f32 activations, cast in-kernel
    wg1_ref, bg1_ref,                       # drug_graph stand-in folded into emb Linear 1
    w2_ref, b2_ref,                         # drug_graph_emb Linear(E, E), eval-BN folded in
    wd_ref, bd_ref,                         # fused drug_feature stand-in (wdf | wdd), N=704
    wc_ref, bc_ref,                         # fused cell_feature stand-in (wcf | wcc), N=704
    wtd_ref, wtc_ref, wtio_ref, bt_ref,     # total_layer, pre-split by concat piece
    wc1_ref, bc1_ref,                       # con_layer Linear(256, 512)
    wc2_ref, bc2_ref,                       # con_layer Linear(512, 1) as a row (VPU path)
    out_ref,
):
    f32 = jnp.float32
    bf16 = jnp.bfloat16

    # --- drug_graph_module (stand-in, linear -> folded) + drug_graph_emb
    #     Linear/ELU/Dropout(eval)/Linear + BN(eval) folded into w2.
    h = _elu(jnp.dot(dgraph_ref[...].astype(bf16), wg1_ref[...],
                     preferred_element_type=f32) + bg1_ref[...])
    d_graph = jnp.dot(h.astype(bf16), w2_ref[...],
                      preferred_element_type=f32) + b2_ref[...]

    # --- drug_feature_module (stand-in): one fused matmul, N=704 (feat | E-block)
    dblk = jnp.dot(dfeat_ref[...].astype(bf16), wd_ref[...],
                   preferred_element_type=f32) + bd_ref[...]
    d_feature = _elu(dblk[:, :FD])                              # [tb, 672]
    d_drugs = _elu(dblk[:, FD:FD + EMBED_DIM] + d_graph)        # [tb, 32] (lane shift)

    # --- cell_feature_module (stand-in): one fused matmul, same layout
    cblk = jnp.dot(cfeat_ref[...].astype(bf16), wc_ref[...],
                   preferred_element_type=f32) + bc_ref[...]
    c_feature = _elu(cblk[:, :FC])                              # [tb, 672]
    c_cells = _elu(cblk[:, FD:FD + EMBED_DIM])                  # [tb, 32]

    # --- interaction_module (stand-in): Inner = elementwise, Outer = row-mean outer product
    inner = d_drugs * c_cells                                   # [tb, 32]
    outer = jnp.mean(d_drugs, axis=1, keepdims=True) * c_cells  # [tb, 32]

    # --- total = cat(d_feature, c_feature, Inner, Outer); total_layer + ReLU.
    # Split matmul over the concat pieces == concat-then-matmul (exact);
    # inner|outer merged into one K=64 operand (cheap lane concat, same group).
    io = jnp.concatenate([inner, outer], axis=-1)               # [tb, 64]
    t = jnp.dot(d_feature.astype(bf16), wtd_ref[...], preferred_element_type=f32)
    t = t + jnp.dot(c_feature.astype(bf16), wtc_ref[...], preferred_element_type=f32)
    t = t + jnp.dot(io.astype(bf16), wtio_ref[...], preferred_element_type=f32)
    t = jnp.maximum(t + bt_ref[...], 0.0)
    # F.dropout(total, p=droprate): identity at inference.  # TODO(synk)

    # --- con_layer: Linear(256,512) -> ELU -> Dropout(eval) -> Linear(512,1)
    r = _elu(jnp.dot(t.astype(bf16), wc1_ref[...], preferred_element_type=f32) + bc1_ref[...])
    # Final N=1 layer on the VPU/XLU path (multiply + lane reduce) instead of the MXU.
    out_ref[...] = jnp.sum(r * wc2_ref[...], axis=-1, keepdims=True) + bc2_ref[...]


def init_params(key):
    """Raw parameters in the PyTorch-equivalent layout (all float32)."""
    def lin(k, fan_in, fan_out):
        kw, kb = jax.random.split(k)
        w = jax.random.normal(kw, (fan_in, fan_out), jnp.float32) / jnp.sqrt(fan_in)
        b = 0.01 * jax.random.normal(kb, (1, fan_out), jnp.float32)
        return w, b

    ks = jax.random.split(key, 10)
    p = {}
    p["wg"], p["bg"] = lin(ks[0], D_GRAPH, 3 * EMBED_DIM)
    p["w1"], p["b1"] = lin(ks[1], 3 * EMBED_DIM, EMBED_DIM)
    p["w2"], p["b2"] = lin(ks[2], EMBED_DIM, EMBED_DIM)
    p["bn_g"] = jnp.ones((1, EMBED_DIM), jnp.float32)
    p["bn_b"] = jnp.zeros((1, EMBED_DIM), jnp.float32)
    p["bn_m"] = jnp.zeros((1, EMBED_DIM), jnp.float32)
    p["bn_v"] = jnp.ones((1, EMBED_DIM), jnp.float32)
    p["wdd"], p["bdd"] = lin(ks[3], D_DRUGFEAT, EMBED_DIM)
    p["wdf"], p["bdf"] = lin(ks[4], D_DRUGFEAT, FD)
    p["wcc"], p["bcc"] = lin(ks[5], D_CELLFEAT, EMBED_DIM)
    p["wcf"], p["bcf"] = lin(ks[6], D_CELLFEAT, FC)
    p["wt"], p["bt"] = lin(ks[7], FD + FC + 2 * EMBED_DIM, CHANNEL * 4)
    p["wc1"], p["bc1"] = lin(ks[8], CHANNEL * 4, 512)
    p["wc2"], p["bc2"] = lin(ks[9], 512, 1)
    return p


def prepare_params(p):
    """Fold linear drug_graph stand-in + eval BN, fuse same-LHS weights at N=704,
    split total_layer by concat piece, cast large weights to bf16."""
    bf16 = jnp.bfloat16
    f32 = jnp.float32

    # Fold the purely-linear drug_graph stand-in into the first emb Linear (f32 math).
    wg1 = p["wg"] @ p["w1"]                                           # (96, 32)
    bg1 = p["bg"] @ p["w1"] + p["b1"]                                 # (1, 32)

    # Fold eval-mode BatchNorm1d into the second drug_graph_emb Linear.
    scale = p["bn_g"] / jnp.sqrt(p["bn_v"] + _BN_EPS)                 # (1, 32)
    w2f = p["w2"] * scale
    b2f = (p["b2"] - p["bn_m"]) * scale + p["bn_b"]

    def fuse(w_wide, b_wide, w_narrow, b_narrow):
        # [wide-feature block | E-block], no zero padding gap (N = 672 + 32 = 704).
        fan_in, wide = w_wide.shape
        assert wide == FD and w_narrow.shape[1] == EMBED_DIM
        w = jnp.concatenate([w_wide, w_narrow], axis=1).astype(f32)
        b = jnp.concatenate([b_wide, b_narrow], axis=1).astype(f32)
        return w, b

    wd, bd = fuse(p["wdf"], p["bdf"], p["wdd"], p["bdd"])
    wc, bc = fuse(p["wcf"], p["bcf"], p["wcc"], p["bcc"])

    # Split total_layer weight along the concat boundaries (d_feature, c_feature, inner|outer).
    wt_d = p["wt"][:FD, :]                # (672, 256)
    wt_c = p["wt"][FD:FD + FC, :]         # (672, 256)
    wt_io = p["wt"][FD + FC:, :]          # (64, 256), rows = [inner | outer]

    return (
        wg1.astype(bf16), bg1.astype(f32),
        w2f.astype(bf16), b2f.astype(f32),
        wd.astype(bf16), bd,
        wc.astype(bf16), bc,
        wt_d.astype(bf16), wt_c.astype(bf16), wt_io.astype(bf16), p["bt"],
        p["wc1"].astype(bf16), p["bc1"],
        p["wc2"].reshape(1, 512).astype(f32), p["bc2"].reshape(1, 1).astype(f32),
    )


@functools.partial(jax.jit, static_argnames=("tb",))
def _isgdrp_forward_impl(drug_feature, drug_graph, cell_feature, kparams, *, tb):
    b = drug_feature.shape[0]
    grid = (pl.cdiv(b, tb),)              # partial last tile's OOB rows are dropped

    def batch_spec(n):
        return pl.BlockSpec((tb, n), lambda i: (i, 0))

    def weight_spec(shape):
        return pl.BlockSpec(shape, lambda i: (0,) * len(shape))

    in_specs = [
        batch_spec(D_DRUGFEAT),
        batch_spec(D_GRAPH),
        batch_spec(D_CELLFEAT),
    ] + [weight_spec(w.shape) for w in kparams]

    return pl.pallas_call(
        isgdrp_kernel,
        out_shape=jax.ShapeDtypeStruct((b, 1), jnp.float32),
        grid=grid,
        in_specs=in_specs,
        out_specs=pl.BlockSpec((tb, 1), lambda i: (i, 0)),
        compiler_params=pltpu.CompilerParams(
            dimension_semantics=("parallel",),
            # 32 MiB fits every generation's scoped VMEM at tb<=512; raise to
            # ~64 MiB on v6e (and cap ~48 MiB on v7x) only if sweeping tb>=1024.
            vmem_limit_bytes=32 * 1024 * 1024,
        ),
    )(drug_feature, drug_graph, cell_feature, *kparams)


def isgdrp_forward(drug_feature, drug_graph, cell_feature, kparams, *, tb=128):
    """tb = batch tile; sweep 256/512 at large B, keep cdiv(B, tb) >= 2 for megacore."""
    b = drug_feature.shape[0]
    out = _isgdrp_forward_impl(
        drug_feature.astype(jnp.float32),
        drug_graph.astype(jnp.float32),
        cell_feature.astype(jnp.float32),
        kparams, tb=tb)
    return out[:b, 0]                     # regression.squeeze()


if __name__ == "__main__":
    key = jax.random.PRNGKey(0)
    k_df, k_dg, k_cf, k_params = jax.random.split(key, 4)

    B = 256                                # 2 grid steps at tb=128 (both v7x cores busy)
    drug_feature = jax.random.normal(k_df, (B, D_DRUGFEAT), jnp.float32)
    drug_graph = jax.random.normal(k_dg, (B, D_GRAPH), jnp.float32)
    cell_feature = jax.random.normal(k_cf, (B, D_CELLFEAT), jnp.float32)

    kparams = prepare_params(init_params(k_params))

    regression = isgdrp_forward(drug_feature, drug_graph, cell_feature, kparams, tb=128)
    jax.block_until_ready(regression)
    assert regression.shape == (B,)
    print("KERNEL_OK")
</pallas_src>

<mosaic_0001>
module attributes {stable_mosaic.version = 11 : i64} {
  func.func @isgdrp_kernel(%arg0: i32, %arg1: memref<128x256xf32, #tpu.memory_space<vmem>>, %arg2: memref<128x96xf32, #tpu.memory_space<vmem>>, %arg3: memref<128x512xf32, #tpu.memory_space<vmem>>, %arg4: memref<96x32xbf16, #tpu.memory_space<vmem>>, %arg5: memref<1x32xf32, #tpu.memory_space<vmem>>, %arg6: memref<32x32xbf16, #tpu.memory_space<vmem>>, %arg7: memref<1x32xf32, #tpu.memory_space<vmem>>, %arg8: memref<256x704xbf16, #tpu.memory_space<vmem>>, %arg9: memref<1x704xf32, #tpu.memory_space<vmem>>, %arg10: memref<512x704xbf16, #tpu.memory_space<vmem>>, %arg11: memref<1x704xf32, #tpu.memory_space<vmem>>, %arg12: memref<672x256xbf16, #tpu.memory_space<vmem>>, %arg13: memref<672x256xbf16, #tpu.memory_space<vmem>>, %arg14: memref<64x256xbf16, #tpu.memory_space<vmem>>, %arg15: memref<1x256xf32, #tpu.memory_space<vmem>>, %arg16: memref<256x512xbf16, #tpu.memory_space<vmem>>, %arg17: memref<1x512xf32, #tpu.memory_space<vmem>>, %arg18: memref<1x512xf32, #tpu.memory_space<vmem>>, %arg19: memref<1x1xf32, #tpu.memory_space<vmem>>, %arg20: memref<128x1xf32, #tpu.memory_space<vmem>>) attributes {dimension_semantics = [#tpu.dimension_semantics<parallel>], iteration_bounds = array<i64: 2>, scalar_prefetch = 0 : i64, scratch_operands = 0 : i64, tpu.core_type = #tpu.core_type<tc>, window_params = [{transform_indices = @transform_0, window_bounds = array<i64: 128, 256>}, {transform_indices = @transform_1, window_bounds = array<i64: 128, 96>}, {transform_indices = @transform_2, window_bounds = array<i64: 128, 512>}, {pipeline_mode = #tpu.pipeline_mode<synchronous>, transform_indices = @transform_3, window_bounds = array<i64: 96, 32>}, {pipeline_mode = #tpu.pipeline_mode<synchronous>, transform_indices = @transform_4, window_bounds = array<i64: 1, 32>}, {pipeline_mode = #tpu.pipeline_mode<synchronous>, transform_indices = @transform_5, window_bounds = array<i64: 32, 32>}, {pipeline_mode = #tpu.pipeline_mode<synchronous>, transform_indices = @transform_6, window_bounds = array<i64: 1, 32>}, {pipeline_mode = #tpu.pipeline_mode<synchronous>, transform_indices = @transform_7, window_bounds = array<i64: 256, 704>}, {pipeline_mode = #tpu.pipeline_mode<synchronous>, transform_indices = @transform_8, window_bounds = array<i64: 1, 704>}, {pipeline_mode = #tpu.pipeline_mode<synchronous>, transform_indices = @transform_9, window_bounds = array<i64: 512, 704>}, {pipeline_mode = #tpu.pipeline_mode<synchronous>, transform_indices = @transform_10, window_bounds = array<i64: 1, 704>}, {pipeline_mode = #tpu.pipeline_mode<synchronous>, transform_indices = @transform_11, window_bounds = array<i64: 672, 256>}, {pipeline_mode = #tpu.pipeline_mode<synchronous>, transform_indices = @transform_12, window_bounds = array<i64: 672, 256>}, {pipeline_mode = #tpu.pipeline_mode<synchronous>, transform_indices = @transform_13, window_bounds = array<i64: 64, 256>}, {pipeline_mode = #tpu.pipeline_mode<synchronous>, transform_indices = @transform_14, window_bounds = array<i64: 1, 256>}, {pipeline_mode = #tpu.pipeline_mode<synchronous>, transform_indices = @transform_15, window_bounds = array<i64: 256, 512>}, {pipeline_mode = #tpu.pipeline_mode<synchronous>, transform_indices = @transform_16, window_bounds = array<i64: 1, 512>}, {pipeline_mode = #tpu.pipeline_mode<synchronous>, transform_indices = @transform_17, window_bounds = array<i64: 1, 512>}, {pipeline_mode = #tpu.pipeline_mode<synchronous>, transform_indices = @transform_18, window_bounds = array<i64: 1, 1>}, {transform_indices = @transform_19, window_bounds = array<i64: 128, 1>}]} {
    %c0 = arith.constant 0 : index
    %c0_0 = arith.constant 0 : index
    %0 = vector.load %arg2[%c0, %c0_0] : memref<128x96xf32, #tpu.memory_space<vmem>>, vector<128x96xf32>
    %1 = arith.truncf %0 : vector<128x96xf32> to vector<128x96xbf16>
    %c0_1 = arith.constant 0 : index
    %c0_2 = arith.constant 0 : index
    %2 = vector.load %arg4[%c0_1, %c0_2] : memref<96x32xbf16, #tpu.memory_space<vmem>>, vector<96x32xbf16>
    %cst = arith.constant dense<0.000000e+00> : vector<128x32xf32>
    %3 = tpu.matmul %1, %2, %cst {dimension_numbers = #tpu.dot_dimension_numbers<[1], [0], [0], [1], [0, 0, 1, 1], [], []>} : vector<128x96xbf16>, vector<96x32xbf16>, vector<128x32xf32> -> vector<128x32xf32>
    %c0_3 = arith.constant 0 : index
    %c0_4 = arith.constant 0 : index
    %4 = vector.load %arg5[%c0_3, %c0_4] : memref<1x32xf32, #tpu.memory_space<vmem>>, vector<1x32xf32>
    %5 = vector.broadcast %4 : vector<1x32xf32> to vector<128x32xf32>
    %6 = arith.addf %3, %5 : vector<128x32xf32>
    %cst_5 = arith.constant 0.000000e+00 : f32
    %7 = vector.broadcast %cst_5 : f32 to vector<128x32xf32>
    %8 = arith.cmpf ogt, %6, %7 : vector<128x32xf32>
    %9 = math.exp %6 : vector<128x32xf32>
    %cst_6 = arith.constant 1.000000e+00 : f32
    %10 = vector.broadcast %cst_6 : f32 to vector<128x32xf32>
    %11 = arith.subf %9, %10 : vector<128x32xf32>
    %12 = arith.select %8, %6, %11 : vector<128x32xi1>, vector<128x32xf32>
    %13 = arith.truncf %12 : vector<128x32xf32> to vector<128x32xbf16>
    %c0_7 = arith.constant 0 : index
    %c0_8 = arith.constant 0 : index
    %14 = vector.load %arg6[%c0_7, %c0_8] : memref<32x32xbf16, #tpu.memory_space<vmem>>, vector<32x32xbf16>
    %cst_9 = arith.constant dense<0.000000e+00> : vector<128x32xf32>
    %15 = tpu.matmul %13, %14, %cst_9 {dimension_numbers = #tpu.dot_dimension_numbers<[1], [0], [0], [1], [0, 0, 1, 1], [], []>} : vector<128x32xbf16>, vector<32x32xbf16>, vector<128x32xf32> -> vector<128x32xf32>
    %c0_10 = arith.constant 0 : index
    %c0_11 = arith.constant 0 : index
    %16 = vector.load %arg7[%c0_10, %c0_11] : memref<1x32xf32, #tpu.memory_space<vmem>>, vector<1x32xf32>
    %17 = vector.broadcast %16 : vector<1x32xf32> to vector<128x32xf32>
    %18 = arith.addf %15, %17 : vector<128x32xf32>
    %c0_12 = arith.constant 0 : index
    %c0_13 = arith.constant 0 : index
    %19 = vector.load %arg1[%c0_12, %c0_13] : memref<128x256xf32, #tpu.memory_space<vmem>>, vector<128x256xf32>
    %20 = arith.truncf %19 : vector<128x256xf32> to vector<128x256xbf16>
    %c0_14 = arith.constant 0 : index
    %c0_15 = arith.constant 0 : index
    %21 = vector.load %arg8[%c0_14, %c0_15] : memref<256x704xbf16, #tpu.memory_space<vmem>>, vector<256x704xbf16>
    %cst_16 = arith.constant dense<0.000000e+00> : vector<128x704xf32>
    %22 = tpu.matmul %20, %21, %cst_16 {dimension_numbers = #tpu.dot_dimension_numbers<[1], [0], [0], [1], [0, 0, 1, 1], [], []>} : vector<128x256xbf16>, vector<256x704xbf16>, vector<128x704xf32> -> vector<128x704xf32>
    %c0_17 = arith.constant 0 : index
    %c0_18 = arith.constant 0 : index
    %23 = vector.load %arg9[%c0_17, %c0_18] : memref<1x704xf32, #tpu.memory_space<vmem>>, vector<1x704xf32>
    %24 = vector.broadcast %23 : vector<1x704xf32> to vector<128x704xf32>
    %25 = arith.addf %22, %24 : vector<128x704xf32>
    %26 = vector.extract_strided_slice %25 {offsets = [0, 0], sizes = [128, 672], strides = [1, 1]} : vector<128x704xf32> to vector<128x672xf32>
    %cst_19 = arith.constant 0.000000e+00 : f32
    %27 = vector.broadcast %cst_19 : f32 to vector<128x672xf32>
    %28 = arith.cmpf ogt, %26, %27 : vector<128x672xf32>
    %29 = math.exp %26 : vector<128x672xf32>
    %cst_20 = arith.constant 1.000000e+00 : f32
    %30 = vector.broadcast %cst_20 : f32 to vector<128x672xf32>
    %31 = arith.subf %29, %30 : vector<128x672xf32>
    %32 = arith.select %28, %26, %31 : vector<128x672xi1>, vector<128x672xf32>
    %33 = vector.extract_strided_slice %25 {offsets = [0, 672], sizes = [128, 32], strides = [1, 1]} : vector<128x704xf32> to vector<128x32xf32>
    %34 = arith.addf %33, %18 : vector<128x32xf32>
    %cst_21 = arith.constant 0.000000e+00 : f32
    %35 = vector.broadcast %cst_21 : f32 to vector<128x32xf32>
    %36 = arith.cmpf ogt, %34, %35 : vector<128x32xf32>
    %37 = math.exp %34 : vector<128x32xf32>
    %cst_22 = arith.constant 1.000000e+00 : f32
    %38 = vector.broadcast %cst_22 : f32 to vector<128x32xf32>
    %39 = arith.subf %37, %38 : vector<128x32xf32>
    %40 = arith.select %36, %34, %39 : vector<128x32xi1>, vector<128x32xf32>
    %c0_23 = arith.constant 0 : index
    %c0_24 = arith.constant 0 : index
    %41 = vector.load %arg3[%c0_23, %c0_24] : memref<128x512xf32, #tpu.memory_space<vmem>>, vector<128x512xf32>
    %42 = arith.truncf %41 : vector<128x512xf32> to vector<128x512xbf16>
    %c0_25 = arith.constant 0 : index
    %c0_26 = arith.constant 0 : index
    %43 = vector.load %arg10[%c0_25, %c0_26] : memref<512x704xbf16, #tpu.memory_space<vmem>>, vector<512x704xbf16>
    %cst_27 = arith.constant dense<0.000000e+00> : vector<128x704xf32>
    %44 = tpu.matmul %42, %43, %cst_27 {dimension_numbers = #tpu.dot_dimension_numbers<[1], [0], [0], [1], [0, 0, 1, 1], [], []>} : vector<128x512xbf16>, vector<512x704xbf16>, vector<128x704xf32> -> vector<128x704xf32>
    %c0_28 = arith.constant 0 : index
    %c0_29 = arith.constant 0 : index
    %45 = vector.load %arg11[%c0_28, %c0_29] : memref<1x704xf32, #tpu.memory_space<vmem>>, vector<1x704xf32>
    %46 = vector.broadcast %45 : vector<1x704xf32> to vector<128x704xf32>
    %47 = arith.addf %44, %46 : vector<128x704xf32>
    %48 = vector.extract_strided_slice %47 {offsets = [0, 0], sizes = [128, 672], strides = [1, 1]} : vector<128x704xf32> to vector<128x672xf32>
    %cst_30 = arith.constant 0.000000e+00 : f32
    %49 = vector.broadcast %cst_30 : f32 to vector<128x672xf32>
    %50 = arith.cmpf ogt, %48, %49 : vector<128x672xf32>
    %51 = math.exp %48 : vector<128x672xf32>
    %cst_31 = arith.constant 1.000000e+00 : f32
    %52 = vector.broadcast %cst_31 : f32 to vector<128x672xf32>
    %53 = arith.subf %51, %52 : vector<128x672xf32>
    %54 = arith.select %50, %48, %53 : vector<128x672xi1>, vector<128x672xf32>
    %55 = vector.extract_strided_slice %47 {offsets = [0, 672], sizes = [128, 32], strides = [1, 1]} : vector<128x704xf32> to vector<128x32xf32>
    %cst_32 = arith.constant 0.000000e+00 : f32
    %56 = vector.broadcast %cst_32 : f32 to vector<128x32xf32>
    %57 = arith.cmpf ogt, %55, %56 : vector<128x32xf32>
    %58 = math.exp %55 : vector<128x32xf32>
    %cst_33 = arith.constant 1.000000e+00 : f32
    %59 = vector.broadcast %cst_33 : f32 to vector<128x32xf32>
    %60 = arith.subf %58, %59 : vector<128x32xf32>
    %61 = arith.select %57, %55, %60 : vector<128x32xi1>, vector<128x32xf32>
    %62 = arith.mulf %40, %61 : vector<128x32xf32>
    %cst_34 = arith.constant dense<0.000000e+00> : vector<128xf32>
    %63 = vector.multi_reduction <add>, %40, %cst_34 [1] : vector<128x32xf32> to vector<128xf32>
    %64 = vector.shape_cast %63 : vector<128xf32> to vector<128x1xf32>
    %cst_35 = arith.constant 3.200000e+01 : f32
    %65 = vector.broadcast %cst_35 : f32 to vector<128x1xf32>
    %66 = arith.divf %64, %65 : vector<128x1xf32>
    %67 = vector.broadcast %66 : vector<128x1xf32> to vector<128x32xf32>
    %68 = arith.mulf %67, %61 : vector<128x32xf32>
    %69 = tpu.concatenate %62, %68 in 1 : vector<128x32xf32>, vector<128x32xf32> -> vector<128x64xf32>
    %70 = arith.truncf %32 : vector<128x672xf32> to vector<128x672xbf16>
    %c0_36 = arith.constant 0 : index
    %c0_37 = arith.constant 0 : index
    %71 = vector.load %arg12[%c0_36, %c0_37] : memref<672x256xbf16, #tpu.memory_space<vmem>>, vector<672x256xbf16>
    %cst_38 = arith.constant dense<0.000000e+00> : vector<128x256xf32>
    %72 = tpu.matmul %70, %71, %cst_38 {dimension_numbers = #tpu.dot_dimension_numbers<[1], [0], [0], [1], [0, 0, 1, 1], [], []>} : vector<128x672xbf16>, vector<672x256xbf16>, vector<128x256xf32> -> vector<128x256xf32>
    %73 = arith.truncf %54 : vector<128x672xf32> to vector<128x672xbf16>
    %c0_39 = arith.constant 0 : index
    %c0_40 = arith.constant 0 : index
    %74 = vector.load %arg13[%c0_39, %c0_40] : memref<672x256xbf16, #tpu.memory_space<vmem>>, vector<672x256xbf16>
    %cst_41 = arith.constant dense<0.000000e+00> : vector<128x256xf32>
    %75 = tpu.matmul %73, %74, %cst_41 {dimension_numbers = #tpu.dot_dimension_numbers<[1], [0], [0], [1], [0, 0, 1, 1], [], []>} : vector<128x672xbf16>, vector<672x256xbf16>, vector<128x256xf32> -> vector<128x256xf32>
    %76 = arith.addf %72, %75 : vector<128x256xf32>
    %77 = arith.truncf %69 : vector<128x64xf32> to vector<128x64xbf16>
    %c0_42 = arith.constant 0 : index
    %c0_43 = arith.constant 0 : index
    %78 = vector.load %arg14[%c0_42, %c0_43] : memref<64x256xbf16, #tpu.memory_space<vmem>>, vector<64x256xbf16>
    %cst_44 = arith.constant dense<0.000000e+00> : vector<128x256xf32>
    %79 = tpu.matmul %77, %78, %cst_44 {dimension_numbers = #tpu.dot_dimension_numbers<[1], [0], [0], [1], [0, 0, 1, 1], [], []>} : vector<128x64xbf16>, vector<64x256xbf16>, vector<128x256xf32> -> vector<128x256xf32>
    %80 = arith.addf %76, %79 : vector<128x256xf32>
    %c0_45 = arith.constant 0 : index
    %c0_46 = arith.constant 0 : index
    %81 = vector.load %arg15[%c0_45, %c0_46] : memref<1x256xf32, #tpu.memory_space<vmem>>, vector<1x256xf32>
    %82 = vector.broadcast %81 : vector<1x256xf32> to vector<128x256xf32>
    %83 = arith.addf %80, %82 : vector<128x256xf32>
    %cst_47 = arith.constant 0.000000e+00 : f32
    %84 = vector.broadcast %cst_47 : f32 to vector<128x256xf32>
    %85 = arith.maximumf %83, %84 : vector<128x256xf32>
    %86 = arith.truncf %85 : vector<128x256xf32> to vector<128x256xbf16>
    %c0_48 = arith.constant 0 : index
    %c0_49 = arith.constant 0 : index
    %87 = vector.load %arg16[%c0_48, %c0_49] : memref<256x512xbf16, #tpu.memory_space<vmem>>, vector<256x512xbf16>
    %cst_50 = arith.constant dense<0.000000e+00> : vector<128x512xf32>
    %88 = tpu.matmul %86, %87, %cst_50 {dimension_numbers = #tpu.dot_dimension_numbers<[1], [0], [0], [1], [0, 0, 1, 1], [], []>} : vector<128x256xbf16>, vector<256x512xbf16>, vector<128x512xf32> -> vector<128x512xf32>
    %c0_51 = arith.constant 0 : index
    %c0_52 = arith.constant 0 : index
    %89 = vector.load %arg17[%c0_51, %c0_52] : memref<1x512xf32, #tpu.memory_space<vmem>>, vector<1x512xf32>
    %90 = vector.broadcast %89 : vector<1x512xf32> to vector<128x512xf32>
    %91 = arith.addf %88, %90 : vector<128x512xf32>
    %cst_53 = arith.constant 0.000000e+00 : f32
    %92 = vector.broadcast %cst_53 : f32 to vector<128x512xf32>
    %93 = arith.cmpf ogt, %91, %92 : vector<128x512xf32>
    %94 = math.exp %91 : vector<128x512xf32>
    %cst_54 = arith.constant 1.000000e+00 : f32
    %95 = vector.broadcast %cst_54 : f32 to vector<128x512xf32>
    %96 = arith.subf %94, %95 : vector<128x512xf32>
    %97 = arith.select %93, %91, %96 : vector<128x512xi1>, vector<128x512xf32>
    %c0_55 = arith.constant 0 : index
    %c0_56 = arith.constant 0 : index
    %98 = vector.load %arg18[%c0_55, %c0_56] : memref<1x512xf32, #tpu.memory_space<vmem>>, vector<1x512xf32>
    %99 = vector.broadcast %98 : vector<1x512xf32> to vector<128x512xf32>
    %100 = arith.mulf %97, %99 : vector<128x512xf32>
    %cst_57 = arith.constant dense<0.000000e+00> : vector<128xf32>
    %101 = vector.multi_reduction <add>, %100, %cst_57 [1] : vector<128x512xf32> to vector<128xf32>
    %102 = vector.shape_cast %101 : vector<128xf32> to vector<128x1xf32>
    %c0_58 = arith.constant 0 : index
    %c0_59 = arith.constant 0 : index
    %103 = vector.load %arg19[%c0_58, %c0_59] : memref<1x1xf32, #tpu.memory_space<vmem>>, vector<1x1xf32>
    %104 = vector.broadcast %103 : vector<1x1xf32> to vector<128x1xf32>
    %105 = arith.addf %102, %104 : vector<128x1xf32>
    %c0_60 = arith.constant 0 : index
    %c0_61 = arith.constant 0 : index
    %106 = vector.load %arg20[%c0_60, %c0_61] : memref<128x1xf32, #tpu.memory_space<vmem>>, vector<128x1xf32>
    tpu.vector_store %arg20[%c0_60, %c0_61], %105 {strides = array<i32>} : memref<128x1xf32, #tpu.memory_space<vmem>>, vector<128x1xf32>,
    return
  }
  func.func @transform_0(%arg0: i32) -> (i32, i32) {
    %c0_i32 = arith.constant 0 : i32
    %c0_i32_0 = arith.constant 0 : i32
    return %arg0, %c0_i32 : i32, i32
  }
  func.func @transform_1(%arg0: i32) -> (i32, i32) {
    %c0_i32 = arith.constant 0 : i32
    %c0_i32_0 = arith.constant 0 : i32
    return %arg0, %c0_i32 : i32, i32
  }
  func.func @transform_2(%arg0: i32) -> (i32, i32) {
    %c0_i32 = arith.constant 0 : i32
    %c0_i32_0 = arith.constant 0 : i32
    return %arg0, %c0_i32 : i32, i32
  }
  func.func @transform_3(%arg0: i32) -> (i32, i32) {
    %c0_i32 = arith.constant 0 : i32
    %c0_i32_0 = arith.constant 0 : i32
    %c0_i32_1 = arith.constant 0 : i32
    return %c0_i32, %c0_i32_0 : i32, i32
  }
  func.func @transform_4(%arg0: i32) -> (i32, i32) {
    %c0_i32 = arith.constant 0 : i32
    %c0_i32_0 = arith.constant 0 : i32
    %c0_i32_1 = arith.constant 0 : i32
    return %c0_i32, %c0_i32_0 : i32, i32
  }
  func.func @transform_5(%arg0: i32) -> (i32, i32) {
    %c0_i32 = arith.constant 0 : i32
    %c0_i32_0 = arith.constant 0 : i32
    %c0_i32_1 = arith.constant 0 : i32
    return %c0_i32, %c0_i32_0 : i32, i32
  }
  func.func @transform_6(%arg0: i32) -> (i32, i32) {
    %c0_i32 = arith.constant 0 : i32
    %c0_i32_0 = arith.constant 0 : i32
    %c0_i32_1 = arith.constant 0 : i32
    return %c0_i32, %c0_i32_0 : i32, i32
  }
  func.func @transform_7(%arg0: i32) -> (i32, i32) {
    %c0_i32 = arith.constant 0 : i32
    %c0_i32_0 = arith.constant 0 : i32
    %c0_i32_1 = arith.constant 0 : i32
    return %c0_i32, %c0_i32_0 : i32, i32
  }
  func.func @transform_8(%arg0: i32) -> (i32, i32) {
    %c0_i32 = arith.constant 0 : i32
    %c0_i32_0 = arith.constant 0 : i32
    %c0_i32_1 = arith.constant 0 : i32
    return %c0_i32, %c0_i32_0 : i32, i32
  }
  func.func @transform_9(%arg0: i32) -> (i32, i32) {
    %c0_i32 = arith.constant 0 : i32
    %c0_i32_0 = arith.constant 0 : i32
    %c0_i32_1 = arith.constant 0 : i32
    return %c0_i32, %c0_i32_0 : i32, i32
  }
  func.func @transform_10(%arg0: i32) -> (i32, i32) {
    %c0_i32 = arith.constant 0 : i32
    %c0_i32_0 = arith.constant 0 : i32
    %c0_i32_1 = arith.constant 0 : i32
    return %c0_i32, %c0_i32_0 : i32, i32
  }
  func.func @transform_11(%arg0: i32) -> (i32, i32) {
    %c0_i32 = arith.constant 0 : i32
    %c0_i32_0 = arith.constant 0 : i32
    %c0_i32_1 = arith.constant 0 : i32
    return %c0_i32, %c0_i32_0 : i32, i32
  }
  func.func @transform_12(%arg0: i32) -> (i32, i32) {
    %c0_i32 = arith.constant 0 : i32
    %c0_i32_0 = arith.constant 0 : i32
    %c0_i32_1 = arith.constant 0 : i32
    return %c0_i32, %c0_i32_0 : i32, i32
  }
  func.func @transform_13(%arg0: i32) -> (i32, i32) {
    %c0_i32 = arith.constant 0 : i32
    %c0_i32_0 = arith.constant 0 : i32
    %c0_i32_1 = arith.constant 0 : i32
    return %c0_i32, %c0_i32_0 : i32, i32
  }
  func.func @transform_14(%arg0: i32) -> (i32, i32) {
    %c0_i32 = arith.constant 0 : i32
    %c0_i32_0 = arith.constant 0 : i32
    %c0_i32_1 = arith.constant 0 : i32
    return %c0_i32, %c0_i32_0 : i32, i32
  }
  func.func @transform_15(%arg0: i32) -> (i32, i32) {
    %c0_i32 = arith.constant 0 : i32
    %c0_i32_0 = arith.constant 0 : i32
    %c0_i32_1 = arith.constant 0 : i32
    return %c0_i32, %c0_i32_0 : i32, i32
  }
  func.func @transform_16(%arg0: i32) -> (i32, i32) {
    %c0_i32 = arith.constant 0 : i32
    %c0_i32_0 = arith.constant 0 : i32
    %c0_i32_1 = arith.constant 0 : i32
    return %c0_i32, %c0_i32_0 : i32, i32
  }
  func.func @transform_17(%arg0: i32) -> (i32, i32) {
    %c0_i32 = arith.constant 0 : i32
    %c0_i32_0 = arith.constant 0 : i32
    %c0_i32_1 = arith.constant 0 : i32
    return %c0_i32, %c0_i32_0 : i32, i32
  }
  func.func @transform_18(%arg0: i32) -> (i32, i32) {
    %c0_i32 = arith.constant 0 : i32
    %c0_i32_0 = arith.constant 0 : i32
    %c0_i32_1 = arith.constant 0 : i32
    return %c0_i32, %c0_i32_0 : i32, i32
  }
  func.func @transform_19(%arg0: i32) -> (i32, i32) {
    %c0_i32 = arith.constant 0 : i32
    %c0_i32_0 = arith.constant 0 : i32
    return %arg0, %c0_i32 : i32, i32
  }
}

</mosaic_0001>

<llo_original>
// kernel: _isgdrp_forward_impl.1
$region0: #{_isgdrp_forward_impl.1}
  #allocation0 [shape = 'u32[]', space=smem, size = 0x4, offset = 0x4, fixed_abs, tag = 'smem constant byte address 0x4 - core index']
  #allocation1 [shape = 'u32[144,128]{1,0:T(1,128)}', space=vmem, size = 0x12000, scoped, tag = 'internal scratch']
  #allocation2 [shape = 'f32[1,1]{1,0:T(1,128)S(1)}', space=vmem, size = 0x200, scoped, tag = 'scoped memory for _isgdrp_forward_impl.1']
  %s0 = inlined_call_operand.vmem [shape: f32[256,256], index: 0, kind: input, shape index: {}]
  %s1 = inlined_call_operand.vmem [shape: f32[256,96], index: 1, kind: input, shape index: {}]
  %s2 = inlined_call_operand.vmem [shape: f32[256,512], index: 2, kind: input, shape index: {}]
  %s3 = inlined_call_operand.vmem [shape: bf16[96,32], index: 3, kind: input, shape index: {}]
  %s4 = inlined_call_operand.vmem [shape: f32[1,32], index: 4, kind: input, shape index: {}]
  %s5 = inlined_call_operand.vmem [shape: bf16[32,32], index: 5, kind: input, shape index: {}]
  %s6 = inlined_call_operand.vmem [shape: f32[1,32], index: 6, kind: input, shape index: {}]
  %s7 = inlined_call_operand.vmem [shape: bf16[256,704], index: 7, kind: input, shape index: {}]
  %s8 = inlined_call_operand.vmem [shape: f32[1,704], index: 8, kind: input, shape index: {}]
  %s9 = inlined_call_operand.vmem [shape: bf16[512,704], index: 9, kind: input, shape index: {}]
  %s10 = inlined_call_operand.vmem [shape: f32[1,704], index: 10, kind: input, shape index: {}]
  %s11 = inlined_call_operand.vmem [shape: bf16[672,256], index: 11, kind: input, shape index: {}]
  %s12 = inlined_call_operand.vmem [shape: bf16[672,256], index: 12, kind: input, shape index: {}]
  %s13 = inlined_call_operand.vmem [shape: bf16[64,256], index: 13, kind: input, shape index: {}]
  %s14 = inlined_call_operand.vmem [shape: f32[1,256], index: 14, kind: input, shape index: {}]
  %s15 = inlined_call_operand.vmem [shape: bf16[256,512], index: 15, kind: input, shape index: {}]
  %s16 = inlined_call_operand.vmem [shape: f32[1,512], index: 16, kind: input, shape index: {}]
  %s17 = inlined_call_operand.vmem [shape: f32[1,512], index: 17, kind: input, shape index: {}]
  %s18 = inlined_call_operand.<no memory space> [shape: f32[1,1], index: 18, kind: input, shape index: {}]
  %s19 = inlined_call_operand.vmem [shape: f32[256,1], index: 19, kind: output, shape index: {}]
  %s20 = sld [smem:[#allocation0]]
  $region109: #{_isgdrp_forward_impl.1} parent=0
    _
  %s22 = ssub.s32 1, %s20
  %s23 = scalar_select 0, %s22, %s20
  %v24 = vstv %s18
  %25 = vst [vmem:[#allocation2] sm:$0x1] %v24
  loop: start=0, step=1, limit=4
  $region2: #{_isgdrp_forward_impl.1} parent=0 // loop_pre_header
    _
  $region3: #{_isgdrp_forward_impl.1} parent=0 // loop_header
    %s27 = sphi 0, %s31
    %p28 = scmp.ge.s32.totalorder %s27, 4
    %s37 = sphi 0, %s39
    %s40 = sphi 0, %s37
    %s41 = sphi 0, %s40
    %s57 = sphi 0, %s41
    %s63 = sphi 0, %s65
    %s66 = sphi 0, %s63
    %s67 = sphi 0, %s66
    %s83 = sphi 0, %s67
    %s89 = sphi 0, %s91
    %s92 = sphi 0, %s89
    %s93 = sphi 0, %s92
    %s109 = sphi 0, %s93
    %s113 = sphi 0, %s113
    %s115 = sphi 0, %s113
    %s116 = sphi 0, %s115
    %s130 = sphi 0, %s116
    %s134 = sphi 0, %s134
    %s136 = sphi 0, %s134
    %s137 = sphi 0, %s136
    %s151 = sphi 0, %s137
    %s155 = sphi 0, %s155
    %s157 = sphi 0, %s155
    %s158 = sphi 0, %s157
    %s172 = sphi 0, %s158
    %s176 = sphi 0, %s176
    %s178 = sphi 0, %s176
    %s179 = sphi 0, %s178
    %s193 = sphi 0, %s179
    %s197 = sphi 0, %s197
    %s199 = sphi 0, %s197
    %s200 = sphi 0, %s199
    %s214 = sphi 0, %s200
    %s218 = sphi 0, %s218
    %s220 = sphi 0, %s218
    %s221 = sphi 0, %s220
    %s235 = sphi 0, %s221
    %s239 = sphi 0, %s239
    %s241 = sphi 0, %s239
    %s242 = sphi 0, %s241
    %s256 = sphi 0, %s242
    %s260 = sphi 0, %s260
    %s262 = sphi 0, %s260
    %s263 = sphi 0, %s262
    %s277 = sphi 0, %s263
    %s281 = sphi 0, %s281
    %s283 = sphi 0, %s281
    %s284 = sphi 0, %s283
    %s298 = sphi 0, %s284
    %s302 = sphi 0, %s302
    %s304 = sphi 0, %s302
    %s305 = sphi 0, %s304
    %s319 = sphi 0, %s305
    %s323 = sphi 0, %s323
    %s325 = sphi 0, %s323
    %s326 = sphi 0, %s325
    %s340 = sphi 0, %s326
    %s344 = sphi 0, %s344
    %s346 = sphi 0, %s344
    %s347 = sphi 0, %s346
    %s361 = sphi 0, %s347
    %s365 = sphi 0, %s365
    %s367 = sphi 0, %s365
    %s368 = sphi 0, %s367
    %s382 = sphi 0, %s368
    %s386 = sphi 0, %s386
    %s388 = sphi 0, %s386
    %s389 = sphi 0, %s388
    %s403 = sphi 0, %s389
    %s407 = sphi 0, %s407
    %s409 = sphi 0, %s407
    %s410 = sphi 0, %s409
    %s424 = sphi 0, %s410
    %s428 = sphi 0, %s428
    %s430 = sphi 0, %s428
    %s431 = sphi 0, %s430
    %s445 = sphi 0, %s431
    %s451 = sphi 0, %s453
    %s454 = sphi 0, %s451
    %s455 = sphi 0, %s454
    %s471 = sphi 0, %s455
  $region4: #{_isgdrp_forward_impl.1} parent=0 // loop_header_branch
    %30 = sbr.rel (%p28) target = $region8
  $region5: #{_isgdrp_forward_impl.1} parent=0 // loop_body
    %s32 = ssub.s32 %s27, 1
    %s33 = ssub.s32 %s27, 2
    %s34 = sadd.s32 %s27, 1
    %s35 = ssub.s32 %s27, %s34
    %p36 = scmp.eq.s32.totalorder %s35, 0
    %s38 = sadd.s32 %s37, 1
    %s39 = scalar_select %p36, %s37, %s38
    %p42 = pneg %p36
    %p43 = scmp.eq.s32.totalorder %s27, 1
    %p44 = por %p42, %p43
    %p45 = scmp.ne.s32.totalorder %s37, %s40
    %p46 = scmp.eq.s32.totalorder %s27, 0
    %p47 = por %p45, %p46
    %p48 = scmp.ne.s32.totalorder %s37, %s40
    %p49 = scmp.eq.s32.totalorder %s32, 1
    %p50 = por %p48, %p49
    %p51 = scmp.ne.s32.totalorder %s40, %s41
    %p52 = scmp.eq.s32.totalorder %s32, 0
    %p53 = por %p51, %p52
    %p54 = scmp.ne.s32.totalorder %s40, %s41
    %p55 = scmp.eq.s32.totalorder %s33, 1
    %p56 = por %p54, %p55
    %p58 = scmp.ne.s32.totalorder %s41, %s57
    %p59 = scmp.eq.s32.totalorder %s33, 0
    %p60 = por %p58, %p59
    %s61 = ssub.s32 %s27, %s34
    %p62 = scmp.eq.s32.totalorder %s61, 0
    %s64 = sadd.s32 %s63, 1
    %s65 = scalar_select %p62, %s63, %s64
    %p68 = pneg %p62
    %p69 = scmp.eq.s32.totalorder %s27, 1
    %p70 = por %p68, %p69
    %p71 = scmp.ne.s32.totalorder %s63, %s66
    %p72 = scmp.eq.s32.totalorder %s27, 0
    %p73 = por %p71, %p72
    %p74 = scmp.ne.s32.totalorder %s63, %s66
    %p75 = scmp.eq.s32.totalorder %s32, 1
    %p76 = por %p74, %p75
    %p77 = scmp.ne.s32.totalorder %s66, %s67
    %p78 = scmp.eq.s32.totalorder %s32, 0
    %p79 = por %p77, %p78
    %p80 = scmp.ne.s32.totalorder %s66, %s67
    %p81 = scmp.eq.s32.totalorder %s33, 1
    %p82 = por %p80, %p81
    %p84 = scmp.ne.s32.totalorder %s67, %s83
    %p85 = scmp.eq.s32.totalorder %s33, 0
    %p86 = por %p84, %p85
    %s87 = ssub.s32 %s27, %s34
    %p88 = scmp.eq.s32.totalorder %s87, 0
    %s90 = sadd.s32 %s89, 1
    %s91 = scalar_select %p88, %s89, %s90
    %p94 = pneg %p88
    %p95 = scmp.eq.s32.totalorder %s27, 1
    %p96 = por %p94, %p95
    %p97 = scmp.ne.s32.totalorder %s89, %s92
    %p98 = scmp.eq.s32.totalorder %s27, 0
    %p99 = por %p97, %p98
    %p100 = scmp.ne.s32.totalorder %s89, %s92
    %p101 = scmp.eq.s32.totalorder %s32, 1
    %p102 = por %p100, %p101
    %p103 = scmp.ne.s32.totalorder %s92, %s93
    %p104 = scmp.eq.s32.totalorder %s32, 0
    %p105 = por %p103, %p104
    %p106 = scmp.ne.s32.totalorder %s92, %s93
    %p107 = scmp.eq.s32.totalorder %s33, 1
    %p108 = por %p106, %p107
    %p110 = scmp.ne.s32.totalorder %s93, %s109
    %p111 = scmp.eq.s32.totalorder %s33, 0
    %p112 = por %p110, %p111
    %s114 = sadd.s32 %s113, 1
    %p117 = scmp.eq.s32.totalorder %s27, 1
    %p118 = scmp.ne.s32.totalorder %s113, %s115
    %p119 = scmp.eq.s32.totalorder %s27, 0
    %p120 = por %p118, %p119
    %p121 = scmp.ne.s32.totalorder %s113, %s115
    %p122 = scmp.eq.s32.totalorder %s32, 1
    %p123 = por %p121, %p122
    %p124 = scmp.ne.s32.totalorder %s115, %s116
    %p125 = scmp.eq.s32.totalorder %s32, 0
    %p126 = por %p124, %p125
    %p127 = scmp.ne.s32.totalorder %s115, %s116
    %p128 = scmp.eq.s32.totalorder %s33, 1
    %p129 = por %p127, %p128
    %p131 = scmp.ne.s32.totalorder %s116, %s130
    %p132 = scmp.eq.s32.totalorder %s33, 0
    %p133 = por %p131, %p132
    %s135 = sadd.s32 %s134, 1
    %p138 = scmp.eq.s32.totalorder %s27, 1
    %p139 = scmp.ne.s32.totalorder %s134, %s136
    %p140 = scmp.eq.s32.totalorder %s27, 0
    %p141 = por %p139, %p140
    %p142 = scmp.ne.s32.totalorder %s134, %s136
    %p143 = scmp.eq.s32.totalorder %s32, 1
    %p144 = por %p142, %p143
    %p145 = scmp.ne.s32.totalorder %s136, %s137
    %p146 = scmp.eq.s32.totalorder %s32, 0
    %p147 = por %p145, %p146
    %p148 = scmp.ne.s32.totalorder %s136, %s137
    %p149 = scmp.eq.s32.totalorder %s33, 1
    %p150 = por %p148, %p149
    %p152 = scmp.ne.s32.totalorder %s137, %s151
    %p153 = scmp.eq.s32.totalorder %s33, 0
    %p154 = por %p152, %p153
    %s156 = sadd.s32 %s155, 1
    %p159 = scmp.eq.s32.totalorder %s27, 1
    %p160 = scmp.ne.s32.totalorder %s155, %s157
    %p161 = scmp.eq.s32.totalorder %s27, 0
    %p162 = por %p160, %p161
    %p163 = scmp.ne.s32.totalorder %s155, %s157
    %p164 = scmp.eq.s32.totalorder %s32, 1
    %p165 = por %p163, %p164
    %p166 = scmp.ne.s32.totalorder %s157, %s158
    %p167 = scmp.eq.s32.totalorder %s32, 0
    %p168 = por %p166, %p167
    %p169 = scmp.ne.s32.totalorder %s157, %s158
    %p170 = scmp.eq.s32.totalorder %s33, 1
    %p171 = por %p169, %p170
    %p173 = scmp.ne.s32.totalorder %s158, %s172
    %p174 = scmp.eq.s32.totalorder %s33, 0
    %p175 = por %p173, %p174
    %s177 = sadd.s32 %s176, 1
    %p180 = scmp.eq.s32.totalorder %s27, 1
    %p181 = scmp.ne.s32.totalorder %s176, %s178
    %p182 = scmp.eq.s32.totalorder %s27, 0
    %p183 = por %p181, %p182
    %p184 = scmp.ne.s32.totalorder %s176, %s178
    %p185 = scmp.eq.s32.totalorder %s32, 1
    %p186 = por %p184, %p185
    %p187 = scmp.ne.s32.totalorder %s178, %s179
    %p188 = scmp.eq.s32.totalorder %s32, 0
    %p189 = por %p187, %p188
    %p190 = scmp.ne.s32.totalorder %s178, %s179
    %p191 = scmp.eq.s32.totalorder %s33, 1
    %p192 = por %p190, %p191
    %p194 = scmp.ne.s32.totalorder %s179, %s193
    %p195 = scmp.eq.s32.totalorder %s33, 0
    %p196 = por %p194, %p195
    %s198 = sadd.s32 %s197, 1
    %p201 = scmp.eq.s32.totalorder %s27, 1
    %p202 = scmp.ne.s32.totalorder %s197, %s199
    %p203 = scmp.eq.s32.totalorder %s27, 0
    %p204 = por %p202, %p203
    %p205 = scmp.ne.s32.totalorder %s197, %s199
    %p206 = scmp.eq.s32.totalorder %s32, 1
    %p207 = por %p205, %p206
    %p208 = scmp.ne.s32.totalorder %s199, %s200
    %p209 = scmp.eq.s32.totalorder %s32, 0
    %p210 = por %p208, %p209
    %p211 = scmp.ne.s32.totalorder %s199, %s200
    %p212 = scmp.eq.s32.totalorder %s33, 1
    %p213 = por %p211, %p212
    %p215 = scmp.ne.s32.totalorder %s200, %s214
    %p216 = scmp.eq.s32.totalorder %s33, 0
    %p217 = por %p215, %p216
    %s219 = sadd.s32 %s218, 1
    %p222 = scmp.eq.s32.totalorder %s27, 1
    %p223 = scmp.ne.s32.totalorder %s218, %s220
    %p224 = scmp.eq.s32.totalorder %s27, 0
    %p225 = por %p223, %p224
    %p226 = scmp.ne.s32.totalorder %s218, %s220
    %p227 = scmp.eq.s32.totalorder %s32, 1
    %p228 = por %p226, %p227
    %p229 = scmp.ne.s32.totalorder %s220, %s221
    %p230 = scmp.eq.s32.totalorder %s32, 0
    %p231 = por %p229, %p230
    %p232 = scmp.ne.s32.totalorder %s220, %s221
    %p233 = scmp.eq.s32.totalorder %s33, 1
    %p234 = por %p232, %p233
    %p236 = scmp.ne.s32.totalorder %s221, %s235
    %p237 = scmp.eq.s32.totalorder %s33, 0
    %p238 = por %p236, %p237
    %s240 = sadd.s32 %s239, 1
    %p243 = scmp.eq.s32.totalorder %s27, 1
    %p244 = scmp.ne.s32.totalorder %s239, %s241
    %p245 = scmp.eq.s32.totalorder %s27, 0
    %p246 = por %p244, %p245
    %p247 = scmp.ne.s32.totalorder %s239, %s241
    %p248 = scmp.eq.s32.totalorder %s32, 1
    %p249 = por %p247, %p248
    %p250 = scmp.ne.s32.totalorder %s241, %s242
    %p251 = scmp.eq.s32.totalorder %s32, 0
    %p252 = por %p250, %p251
    %p253 = scmp.ne.s32.totalorder %s241, %s242
    %p254 = scmp.eq.s32.totalorder %s33, 1
    %p255 = por %p253, %p254
    %p257 = scmp.ne.s32.totalorder %s242, %s256
    %p258 = scmp.eq.s32.totalorder %s33, 0
    %p259 = por %p257, %p258
    %s261 = sadd.s32 %s260, 1
    %p264 = scmp.eq.s32.totalorder %s27, 1
    %p265 = scmp.ne.s32.totalorder %s260, %s262
    %p266 = scmp.eq.s32.totalorder %s27, 0
    %p267 = por %p265, %p266
    %p268 = scmp.ne.s32.totalorder %s260, %s262
    %p269 = scmp.eq.s32.totalorder %s32, 1
    %p270 = por %p268, %p269
    %p271 = scmp.ne.s32.totalorder %s262, %s263
    %p272 = scmp.eq.s32.totalorder %s32, 0
    %p273 = por %p271, %p272
    %p274 = scmp.ne.s32.totalorder %s262, %s263
    %p275 = scmp.eq.s32.totalorder %s33, 1
    %p276 = por %p274, %p275
    %p278 = scmp.ne.s32.totalorder %s263, %s277
    %p279 = scmp.eq.s32.totalorder %s33, 0
    %p280 = por %p278, %p279
    %s282 = sadd.s32 %s281, 1
    %p285 = scmp.eq.s32.totalorder %s27, 1
    %p286 = scmp.ne.s32.totalorder %s281, %s283
    %p287 = scmp.eq.s32.totalorder %s27, 0
    %p288 = por %p286, %p287
    %p289 = scmp.ne.s32.totalorder %s281, %s283
    %p290 = scmp.eq.s32.totalorder %s32, 1
    %p291 = por %p289, %p290
    %p292 = scmp.ne.s32.totalorder %s283, %s284
    %p293 = scmp.eq.s32.totalorder %s32, 0
    %p294 = por %p292, %p293
    %p295 = scmp.ne.s32.totalorder %s283, %s284
    %p296 = scmp.eq.s32.totalorder %s33, 1
    %p297 = por %p295, %p296
    %p299 = scmp.ne.s32.totalorder %s284, %s298
    %p300 = scmp.eq.s32.totalorder %s33, 0
    %p301 = por %p299, %p300
    %s303 = sadd.s32 %s302, 1
    %p306 = scmp.eq.s32.totalorder %s27, 1
    %p307 = scmp.ne.s32.totalorder %s302, %s304
    %p308 = scmp.eq.s32.totalorder %s27, 0
    %p309 = por %p307, %p308
    %p310 = scmp.ne.s32.totalorder %s302, %s304
    %p311 = scmp.eq.s32.totalorder %s32, 1
    %p312 = por %p310, %p311
    %p313 = scmp.ne.s32.totalorder %s304, %s305
    %p314 = scmp.eq.s32.totalorder %s32, 0
    %p315 = por %p313, %p314
    %p316 = scmp.ne.s32.totalorder %s304, %s305
    %p317 = scmp.eq.s32.totalorder %s33, 1
    %p318 = por %p316, %p317
    %p320 = scmp.ne.s32.totalorder %s305, %s319
    %p321 = scmp.eq.s32.totalorder %s33, 0
    %p322 = por %p320, %p321
    %s324 = sadd.s32 %s323, 1
    %p327 = scmp.eq.s32.totalorder %s27, 1
    %p328 = scmp.ne.s32.totalorder %s323, %s325
    %p329 = scmp.eq.s32.totalorder %s27, 0
    %p330 = por %p328, %p329
    %p331 = scmp.ne.s32.totalorder %s323, %s325
    %p332 = scmp.eq.s32.totalorder %s32, 1
    %p333 = por %p331, %p332
    %p334 = scmp.ne.s32.totalorder %s325, %s326
    %p335 = scmp.eq.s32.totalorder %s32, 0
    %p336 = por %p334, %p335
    %p337 = scmp.ne.s32.totalorder %s325, %s326
    %p338 = scmp.eq.s32.totalorder %s33, 1
    %p339 = por %p337, %p338
    %p341 = scmp.ne.s32.totalorder %s326, %s340
    %p342 = scmp.eq.s32.totalorder %s33, 0
    %p343 = por %p341, %p342
    %s345 = sadd.s32 %s344, 1
    %p348 = scmp.eq.s32.totalorder %s27, 1
    %p349 = scmp.ne.s32.totalorder %s344, %s346
    %p350 = scmp.eq.s32.totalorder %s27, 0
    %p351 = por %p349, %p350
    %p352 = scmp.ne.s32.totalorder %s344, %s346
    %p353 = scmp.eq.s32.totalorder %s32, 1
    %p354 = por %p352, %p353
    %p355 = scmp.ne.s32.totalorder %s346, %s347
    %p356 = scmp.eq.s32.totalorder %s32, 0
    %p357 = por %p355, %p356
    %p358 = scmp.ne.s32.totalorder %s346, %s347
    %p359 = scmp.eq.s32.totalorder %s33, 1
    %p360 = por %p358, %p359
    %p362 = scmp.ne.s32.totalorder %s347, %s361
    %p363 = scmp.eq.s32.totalorder %s33, 0
    %p364 = por %p362, %p363
    %s366 = sadd.s32 %s365, 1
    %p369 = scmp.eq.s32.totalorder %s27, 1
    %p370 = scmp.ne.s32.totalorder %s365, %s367
    %p371 = scmp.eq.s32.totalorder %s27, 0
    %p372 = por %p370, %p371
    %p373 = scmp.ne.s32.totalorder %s365, %s367
    %p374 = scmp.eq.s32.totalorder %s32, 1
    %p375 = por %p373, %p374
    %p376 = scmp.ne.s32.totalorder %s367, %s368
    %p377 = scmp.eq.s32.totalorder %s32, 0
    %p378 = por %p376, %p377
    %p379 = scmp.ne.s32.totalorder %s367, %s368
    %p380 = scmp.eq.s32.totalorder %s33, 1
    %p381 = por %p379, %p380
    %p383 = scmp.ne.s32.totalorder %s368, %s382
    %p384 = scmp.eq.s32.totalorder %s33, 0
    %p385 = por %p383, %p384
    %s387 = sadd.s32 %s386, 1
    %p390 = scmp.eq.s32.totalorder %s27, 1
    %p391 = scmp.ne.s32.totalorder %s386, %s388
    %p392 = scmp.eq.s32.totalorder %s27, 0
    %p393 = por %p391, %p392
    %p394 = scmp.ne.s32.totalorder %s386, %s388
    %p395 = scmp.eq.s32.totalorder %s32, 1
    %p396 = por %p394, %p395
    %p397 = scmp.ne.s32.totalorder %s388, %s389
    %p398 = scmp.eq.s32.totalorder %s32, 0
    %p399 = por %p397, %p398
    %p400 = scmp.ne.s32.totalorder %s388, %s389
    %p401 = scmp.eq.s32.totalorder %s33, 1
    %p402 = por %p400, %p401
    %p404 = scmp.ne.s32.totalorder %s389, %s403
    %p405 = scmp.eq.s32.totalorder %s33, 0
    %p406 = por %p404, %p405
    %s408 = sadd.s32 %s407, 1
    %p411 = scmp.eq.s32.totalorder %s27, 1
    %p412 = scmp.ne.s32.totalorder %s407, %s409
    %p413 = scmp.eq.s32.totalorder %s27, 0
    %p414 = por %p412, %p413
    %p415 = scmp.ne.s32.totalorder %s407, %s409
    %p416 = scmp.eq.s32.totalorder %s32, 1
    %p417 = por %p415, %p416
    %p418 = scmp.ne.s32.totalorder %s409, %s410
    %p419 = scmp.eq.s32.totalorder %s32, 0
    %p420 = por %p418, %p419
    %p421 = scmp.ne.s32.totalorder %s409, %s410
    %p422 = scmp.eq.s32.totalorder %s33, 1
    %p423 = por %p421, %p422
    %p425 = scmp.ne.s32.totalorder %s410, %s424
    %p426 = scmp.eq.s32.totalorder %s33, 0
    %p427 = por %p425, %p426
    %s429 = sadd.s32 %s428, 1
    %p432 = scmp.eq.s32.totalorder %s27, 1
    %p433 = scmp.ne.s32.totalorder %s428, %s430
    %p434 = scmp.eq.s32.totalorder %s27, 0
    %p435 = por %p433, %p434
    %p436 = scmp.ne.s32.totalorder %s428, %s430
    %p437 = scmp.eq.s32.totalorder %s32, 1
    %p438 = por %p436, %p437
    %p439 = scmp.ne.s32.totalorder %s430, %s431
    %p440 = scmp.eq.s32.totalorder %s32, 0
    %p441 = por %p439, %p440
    %p442 = scmp.ne.s32.totalorder %s430, %s431
    %p443 = scmp.eq.s32.totalorder %s33, 1
    %p444 = por %p442, %p443
    %p446 = scmp.ne.s32.totalorder %s431, %s445
    %p447 = scmp.eq.s32.totalorder %s33, 0
    %p448 = por %p446, %p447
    %s449 = ssub.s32 %s27, %s34
    %p450 = scmp.eq.s32.totalorder %s449, 0
    %s452 = sadd.s32 %s451, 1
    %s453 = scalar_select %p450, %s451, %s452
    %p456 = pneg %p450
    %p457 = scmp.eq.s32.totalorder %s27, 1
    %p458 = por %p456, %p457
    %p459 = scmp.ne.s32.totalorder %s451, %s454
    %p460 = scmp.eq.s32.totalorder %s27, 0
    %p461 = por %p459, %p460
    %p462 = scmp.ne.s32.totalorder %s451, %s454
    %p463 = scmp.eq.s32.totalorder %s32, 1
    %p464 = por %p462, %p463
    %p465 = scmp.ne.s32.totalorder %s454, %s455
    %p466 = scmp.eq.s32.totalorder %s32, 0
    %p467 = por %p465, %p466
    %p468 = scmp.ne.s32.totalorder %s454, %s455
    %p469 = scmp.eq.s32.totalorder %s33, 1
    %p470 = por %p468, %p469
    %p472 = scmp.ne.s32.totalorder %s455, %s471
    %p473 = scmp.eq.s32.totalorder %s33, 0
    %p474 = por %p472, %p473
    %p475 = scmp.le.s32.totalorder 1, %s27
    %p476 = scmp.lt.s32.totalorder %s27, 3
    %p477 = pnand %p475, %p476
    %p478 = pneg %p477
    // Predicated region
    $region9: #{_isgdrp_forward_impl.1} parent=5 // pred_check
      _
    $region10: #{_isgdrp_forward_impl.1} parent=5 // pred_check_branch
      %480 = sbr.rel (%p477) target = $region12
    $region11: #{_isgdrp_forward_impl.1} parent=5 // pred_region
      %s481 = ssub.s32 %s27, 1
      // Predicated region
      $region13: #{_isgdrp_forward_impl.1} parent=11 // pred_check
        %p482 = pneg %p126
      $region14: #{_isgdrp_forward_impl.1} parent=11 // pred_check_branch
        %484 = sbr.rel (%p482) target = $region16
      $region15: #{_isgdrp_forward_impl.1} parent=11 // pred_region
        _
      $region16: #{_isgdrp_forward_impl.1} parent=11 // pred_fallthru
        _
      // Predicated region
      $region17: #{_isgdrp_forward_impl.1} parent=11 // pred_check
        %p485 = pneg %p147
      $region18: #{_isgdrp_forward_impl.1} parent=11 // pred_check_branch
        %487 = sbr.rel (%p485) target = $region20
      $region19: #{_isgdrp_forward_impl.1} parent=11 // pred_region
        _
      $region20: #{_isgdrp_forward_impl.1} parent=11 // pred_fallthru
        _
      // Predicated region
      $region21: #{_isgdrp_forward_impl.1} parent=11 // pred_check
        %p488 = pneg %p168
      $region22: #{_isgdrp_forward_impl.1} parent=11 // pred_check_branch
        %490 = sbr.rel (%p488) target = $region24
      $region23: #{_isgdrp_forward_impl.1} parent=11 // pred_region
        _
      $region24: #{_isgdrp_forward_impl.1} parent=11 // pred_fallthru
        _
      // Predicated region
      $region25: #{_isgdrp_forward_impl.1} parent=11 // pred_check
        %p491 = pneg %p189
      $region26: #{_isgdrp_forward_impl.1} parent=11 // pred_check_branch
        %493 = sbr.rel (%p491) target = $region28
      $region27: #{_isgdrp_forward_impl.1} parent=11 // pred_region
        _
      $region28: #{_isgdrp_forward_impl.1} parent=11 // pred_fallthru
        _
      // Predicated region
      $region29: #{_isgdrp_forward_impl.1} parent=11 // pred_check
        %p494 = pneg %p210
      $region30: #{_isgdrp_forward_impl.1} parent=11 // pred_check_branch
        %496 = sbr.rel (%p494) target = $region32
      $region31: #{_isgdrp_forward_impl.1} parent=11 // pred_region
        _
      $region32: #{_isgdrp_forward_impl.1} parent=11 // pred_fallthru
        _
      // Predicated region
      $region33: #{_isgdrp_forward_impl.1} parent=11 // pred_check
        %p497 = pneg %p231
      $region34: #{_isgdrp_forward_impl.1} parent=11 // pred_check_branch
        %499 = sbr.rel (%p497) target = $region36
      $region35: #{_isgdrp_forward_impl.1} parent=11 // pred_region
        _
      $region36: #{_isgdrp_forward_impl.1} parent=11 // pred_fallthru
        _
      // Predicated region
      $region37: #{_isgdrp_forward_impl.1} parent=11 // pred_check
        %p500 = pneg %p252
      $region38: #{_isgdrp_forward_impl.1} parent=11 // pred_check_branch
        %502 = sbr.rel (%p500) target = $region40
      $region39: #{_isgdrp_forward_impl.1} parent=11 // pred_region
        _
      $region40: #{_isgdrp_forward_impl.1} parent=11 // pred_fallthru
        _
      // Predicated region
      $region41: #{_isgdrp_forward_impl.1} parent=11 // pred_check
        %p503 = pneg %p273
      $region42: #{_isgdrp_forward_impl.1} parent=11 // pred_check_branch
        %505 = sbr.rel (%p503) target = $region44
      $region43: #{_isgdrp_forward_impl.1} parent=11 // pred_region
        _
      $region44: #{_isgdrp_forward_impl.1} parent=11 // pred_fallthru
        _
      // Predicated region
      $region45: #{_isgdrp_forward_impl.1} parent=11 // pred_check
        %p506 = pneg %p294
      $region46: #{_isgdrp_forward_impl.1} parent=11 // pred_check_branch
        %508 = sbr.rel (%p506) target = $region48
      $region47: #{_isgdrp_forward_impl.1} parent=11 // pred_region
        _
      $region48: #{_isgdrp_forward_impl.1} parent=11 // pred_fallthru
        _
      // Predicated region
      $region49: #{_isgdrp_forward_impl.1} parent=11 // pred_check
        %p509 = pneg %p315
      $region50: #{_isgdrp_forward_impl.1} parent=11 // pred_check_branch
        %511 = sbr.rel (%p509) target = $region52
      $region51: #{_isgdrp_forward_impl.1} parent=11 // pred_region
        _
      $region52: #{_isgdrp_forward_impl.1} parent=11 // pred_fallthru
        _
      // Predicated region
      $region53: #{_isgdrp_forward_impl.1} parent=11 // pred_check
        %p512 = pneg %p336
      $region54: #{_isgdrp_forward_impl.1} parent=11 // pred_check_branch
        %514 = sbr.rel (%p512) target = $region56
      $region55: #{_isgdrp_forward_impl.1} parent=11 // pred_region
        _
      $region56: #{_isgdrp_forward_impl.1} parent=11 // pred_fallthru
        _
      // Predicated region
      $region57: #{_isgdrp_forward_impl.1} parent=11 // pred_check
        %p515 = pneg %p357
      $region58: #{_isgdrp_forward_impl.1} parent=11 // pred_check_branch
        %517 = sbr.rel (%p515) target = $region60
      $region59: #{_isgdrp_forward_impl.1} parent=11 // pred_region
        _
      $region60: #{_isgdrp_forward_impl.1} parent=11 // pred_fallthru
        _
      // Predicated region
      $region61: #{_isgdrp_forward_impl.1} parent=11 // pred_check
        %p518 = pneg %p378
      $region62: #{_isgdrp_forward_impl.1} parent=11 // pred_check_branch
        %520 = sbr.rel (%p518) target = $region64
      $region63: #{_isgdrp_forward_impl.1} parent=11 // pred_region
        _
      $region64: #{_isgdrp_forward_impl.1} parent=11 // pred_fallthru
        _
      // Predicated region
      $region65: #{_isgdrp_forward_impl.1} parent=11 // pred_check
        %p521 = pneg %p399
      $region66: #{_isgdrp_forward_impl.1} parent=11 // pred_check_branch
        %523 = sbr.rel (%p521) target = $region68
      $region67: #{_isgdrp_forward_impl.1} parent=11 // pred_region
        _
      $region68: #{_isgdrp_forward_impl.1} parent=11 // pred_fallthru
        _
      // Predicated region
      $region69: #{_isgdrp_forward_impl.1} parent=11 // pred_check
        %p524 = pneg %p420
      $region70: #{_isgdrp_forward_impl.1} parent=11 // pred_check_branch
        %526 = sbr.rel (%p524) target = $region72
      $region71: #{_isgdrp_forward_impl.1} parent=11 // pred_region
        _
      $region72: #{_isgdrp_forward_impl.1} parent=11 // pred_fallthru
        _
      // Predicated region
      $region73: #{_isgdrp_forward_impl.1} parent=11 // pred_check
        %p527 = pneg %p441
      $region74: #{_isgdrp_forward_impl.1} parent=11 // pred_check_branch
        %529 = sbr.rel (%p527) target = $region76
      $region75: #{_isgdrp_forward_impl.1} parent=11 // pred_region
        _
      $region76: #{_isgdrp_forward_impl.1} parent=11 // pred_fallthru
        _
    $region12: #{_isgdrp_forward_impl.1} parent=5 // pred_fallthru
      _
    %p530 = scmp.lt.s32.totalorder %s27, 2
    // Predicated region
    $region77: #{_isgdrp_forward_impl.1} parent=5 // pred_check
      %p531 = pneg %p530
    $region78: #{_isgdrp_forward_impl.1} parent=5 // pred_check_branch
      %533 = sbr.rel (%p531) target = $region80
    $region79: #{_isgdrp_forward_impl.1} parent=5 // pred_region
      // Predicated region
      $region81: #{_isgdrp_forward_impl.1} parent=79 // pred_check
        %p534 = pneg %p47
      $region82: #{_isgdrp_forward_impl.1} parent=79 // pred_check_branch
        %536 = sbr.rel (%p534) target = $region84
      $region83: #{_isgdrp_forward_impl.1} parent=79 // pred_region
        %s537 = smul.u32 16, %s27
        %p538 = scmp.lt.s32.totalorder %s537, 31
        %s539 = scalar_select %p538, %s537, 31
        %s540 = smul.addr %s539, 2
        %s541 = smul.addr %s540, 8
        %s542 = scalar_lea.vmem %s0, %s541
        %s543 = smul.u32 16, %s27
      $region84: #{_isgdrp_forward_impl.1} parent=79 // pred_fallthru
        _
      // Predicated region
      $region85: #{_isgdrp_forward_impl.1} parent=79 // pred_check
        %p544 = pneg %p73
      $region86: #{_isgdrp_forward_impl.1} parent=79 // pred_check_branch
        %546 = sbr.rel (%p544) target = $region88
      $region87: #{_isgdrp_forward_impl.1} parent=79 // pred_region
        %s547 = smul.u32 16, %s27
        %p548 = scmp.lt.s32.totalorder %s547, 31
        %s549 = scalar_select %p548, %s547, 31
        %s550 = smul.addr %s549, 8
        %s551 = scalar_lea.vmem %s1, %s550
        %s552 = smul.u32 16, %s27
      $region88: #{_isgdrp_forward_impl.1} parent=79 // pred_fallthru
        _
      // Predicated region
      $region89: #{_isgdrp_forward_impl.1} parent=79 // pred_check
        %p553 = pneg %p99
      $region90: #{_isgdrp_forward_impl.1} parent=79 // pred_check_branch
        %555 = sbr.rel (%p553) target = $region92
      $region91: #{_isgdrp_forward_impl.1} parent=79 // pred_region
        %s556 = smul.u32 16, %s27
        %p557 = scmp.lt.s32.totalorder %s556, 31
        %s558 = scalar_select %p557, %s556, 31
        %s559 = smul.addr %s558, 4
        %s560 = smul.addr %s559, 8
        %s561 = scalar_lea.vmem %s2, %s560
        %s562 = smul.u32 16, %s27
      $region92: #{_isgdrp_forward_impl.1} parent=79 // pred_fallthru
        _
    $region80: #{_isgdrp_forward_impl.1} parent=5 // pred_fallthru
      _
    %p563 = scmp.le.s32.totalorder 1, %s27
    %p564 = scmp.lt.s32.totalorder %s27, 3
    %p565 = pnand %p563, %p564
    %p566 = pneg %p565
    // Predicated region
    $region93: #{_isgdrp_forward_impl.1} parent=5 // pred_check
      _
    $region94: #{_isgdrp_forward_impl.1} parent=5 // pred_check_branch
      %568 = sbr.rel (%p565) target = $region96
    $region95: #{_isgdrp_forward_impl.1} parent=5 // pred_region
      %s569 = ssub.s32 %s27, 1
      %s570 = smul.u32 16, %s32
      %p571 = scmp.lt.s32.totalorder %s570, 31
      %s572 = scalar_select %p571, %s570, 31
      %s573 = smul.addr %s572, 2
      %s574 = smul.addr %s573, 8
      %s575 = scalar_lea.vmem %s0, %s574
      %p576 = pneg %p53
      %p577 = pneg %p50
      %s578 = smul.u32 16, %s32
      %p579 = scmp.lt.s32.totalorder %s578, 31
      %s580 = scalar_select %p579, %s578, 31
      %s581 = smul.addr %s580, 8
      %s582 = scalar_lea.vmem %s1, %s581
      %p583 = pneg %p79
      %p584 = pneg %p76
      %s585 = smul.u32 16, %s32
      %p586 = scmp.lt.s32.totalorder %s585, 31
      %s587 = scalar_select %p586, %s585, 31
      %s588 = smul.addr %s587, 4
      %s589 = smul.addr %s588, 8
      %s590 = scalar_lea.vmem %s2, %s589
      %p591 = pneg %p105
      %p592 = pneg %p102
      %p593 = pneg %p126
      %p594 = pneg %p123
      %p595 = pneg %p147
      %p596 = pneg %p144
      %p597 = pneg %p168
      %p598 = pneg %p165
      %p599 = pneg %p189
      %p600 = pneg %p186
      %p601 = pneg %p210
      %p602 = pneg %p207
      %p603 = pneg %p231
      %p604 = pneg %p228
      %p605 = pneg %p252
      %p606 = pneg %p249
      %p607 = pneg %p273
      %p608 = pneg %p270
      %p609 = pneg %p294
      %p610 = pneg %p291
      %p611 = pneg %p315
      %p612 = pneg %p312
      %p613 = pneg %p336
      %p614 = pneg %p333
      %p615 = pneg %p357
      %p616 = pneg %p354
      %p617 = pneg %p378
      %p618 = pneg %p375
      %p619 = pneg %p399
      %p620 = pneg %p396
      %p621 = pneg %p420
      %p622 = pneg %p417
      %p623 = pneg %p441
      %p624 = pneg %p438
      %p625 = pneg %p467
      %p626 = pneg %p464
      %s627 = smul.u32 16, %s32
      %p628 = scmp.lt.s32.totalorder %s627, 31
      %s629 = scalar_select %p628, %s627, 31
      %s630 = smul.addr %s629, 8
      %s631 = scalar_lea.vmem %s19, %s630
      %s632 = smul.u32 16, %s32
      %p633 = scmp.lt.s32.totalorder %s632, 31
      %s634 = scalar_select %p633, %s632, 31
      %s635 = smul.addr %s634, 2
      %s636 = smul.addr %s635, 8
      %s637 = scalar_lea.vmem %s0, %s636
      %s638 = smul.u32 16, %s32
      %s639 = smul.u32 16, %s32
      %p640 = scmp.lt.s32.totalorder %s639, 31
      %s641 = scalar_select %p640, %s639, 31
      %s642 = smul.addr %s641, 8
      %s643 = scalar_lea.vmem %s1, %s642
      %s644 = smul.u32 16, %s32
      %s645 = smul.u32 16, %s32
      %p646 = scmp.lt.s32.totalorder %s645, 31
      %s647 = scalar_select %p646, %s645, 31
      %s648 = smul.addr %s647, 4
      %s649 = smul.addr %s648, 8
      %s650 = scalar_lea.vmem %s2, %s649
      %s651 = smul.u32 16, %s32
      %s652 = smul.u32 16, %s32
      %p653 = scmp.lt.s32.totalorder %s652, 31
      %s654 = scalar_select %p653, %s652, 31
      %s655 = smul.addr %s654, 8
      %s656 = scalar_lea.vmem %s19, %s655
      %s657 = smul.u32 16, %s32
      %v659 = vld [vmem:[%s643] sm:$0xff]
      %v660 = vld [vmem:[%s643 + $0x8] sm:$0xff]
      %v661 = vld [vmem:[%s643 + $0x10] sm:$0xff]
      %v662 = vld [vmem:[%s643 + $0x18] sm:$0xff]
      %v663 = vld [vmem:[%s643 + $0x20] sm:$0xff]
      %v664 = vld [vmem:[%s643 + $0x28] sm:$0xff]
      %v665 = vld [vmem:[%s643 + $0x30] sm:$0xff]
      %v666 = vld [vmem:[%s643 + $0x38] sm:$0xff]
      %v667 = vld [vmem:[%s643 + $0x40] sm:$0xff]
      %v668 = vld [vmem:[%s643 + $0x48] sm:$0xff]
      %v669 = vld [vmem:[%s643 + $0x50] sm:$0xff]
      %v670 = vld [vmem:[%s643 + $0x58] sm:$0xff]
      %v671 = vld [vmem:[%s643 + $0x60] sm:$0xff]
      %v672 = vld [vmem:[%s643 + $0x68] sm:$0xff]
      %v673 = vld [vmem:[%s643 + $0x70] sm:$0xff]
      %v674 = vld [vmem:[%s643 + $0x78] sm:$0xff]
      %v675 = vpack.c.bf16 %v660, %v659
      %v676 = vpack.c.bf16 %v662, %v661
      %v677 = vpack.c.bf16 %v664, %v663
      %v678 = vpack.c.bf16 %v666, %v665
      %v679 = vpack.c.bf16 %v668, %v667
      %v680 = vpack.c.bf16 %v670, %v669
      %v681 = vpack.c.bf16 %v672, %v671
      %v682 = vpack.c.bf16 %v674, %v673
      %v683 = vld [vmem:[%s3] sm:$0xf]
      %v684 = vld [vmem:[%s3 + $0x4] sm:$0xf]
      %v685 = vld [vmem:[%s3 + $0x8] sm:$0xf]
      %v686 = vld [vmem:[%s3 + $0xc] sm:$0xf]
      %v687 = vld [vmem:[%s3 + $0x10] sm:$0xf]
      %v688 = vld [vmem:[%s3 + $0x14] sm:$0xf]
      %v689 = vld [vmem:[%s3 + $0x18] sm:$0xf]
      %v690 = vld [vmem:[%s3 + $0x1c] sm:$0xf]
      %v691 = vld [vmem:[%s3 + $0x20] sm:$0xf]
      %v692 = vld [vmem:[%s3 + $0x24] sm:$0xf]
      %v693 = vld [vmem:[%s3 + $0x28] sm:$0xf]
      %v694 = vld [vmem:[%s3 + $0x2c] sm:$0xf]
      %v695 = vld [vmem:[%s4] sm:$0x1]
      %v697 = vlaneseq
      %v698 = vshrl.u32 %v697, 7
      %v699 = vsub.s32 0, %v698
      %v700 = vrot.slane %v695, %v699
      %v714 = vunpack.c.l.b16 %v683
      %v715 = vunpack.c.l.b16 %v684
      %v716 = vunpack.c.l.b16 %v685
      %v717 = vunpack.c.l.b16 %v686
      %v718 = vunpack.c.l.b16 %v687
      %v719 = vunpack.c.l.b16 %v688
      %v720 = vunpack.c.l.b16 %v689
      %v721 = vunpack.c.l.b16 %v690
      %v722 = vunpack.c.l.b16 %v691
      %v723 = vunpack.c.l.b16 %v692
      %v724 = vunpack.c.l.b16 %v693
      %v725 = vunpack.c.l.b16 %v694
      %v726 = vpack.c.b16 %v715, %v714
      %v727 = vpack.c.b16 %v717, %v716
      %v728 = vpack.c.b16 %v719, %v718
      %v729 = vpack.c.b16 %v721, %v720
      %v730 = vpack.c.b16 %v723, %v722
      %v731 = vpack.c.b16 %v725, %v724
      %vm738 = vcmask 785408
      %v740 = vsel %vm738, %v675, 0
      %v743 = vsel %vm738, %v676, 0
      %v746 = vsel %vm738, %v677, 0
      %v749 = vsel %vm738, %v678, 0
      %v752 = vsel %vm738, %v679, 0
      %v755 = vsel %vm738, %v680, 0
      %v758 = vsel %vm738, %v681, 0
      %v761 = vsel %vm738, %v682, 0
      %763 = vmatprep.subr.bf16.mxu0 0
      %764 = vmatpush1.bf16.msra.mxu0 %v726
      %765 = vmatprep.subr.bf16.mxu0 0
      %766 = vmatpush1.bf16.msra.mxu0 %v727
      %767 = vmatprep.subr.bf16.mxu0 0
      %768 = vmatpush1.bf16.msra.mxu0 %v728
      %769 = vmatprep.subr.bf16.mxu0 0
      %770 = vmatpush1.bf16.msra.mxu0 %v729
      %771 = vmatprep.subr.bf16.mxu0 0
      %772 = vmatpush1.bf16.msra.mxu0 %v730
      %773 = vmatprep.subr.bf16.mxu0 0
      %774 = vmatpush1.bf16.msra.mxu0 %v731
      %775 = vmatprep.subr.bf16.mxu0 0
      %776 = vmatpush1.bf16.msra.mxu0 0
      %777 = vmatprep.subr.bf16.mxu0 0
      %778 = vmatpush1.bf16.msra.mxu0 0
      %779 = vmatprep.subr.bf16.mxu0 0
      %780 = vmatpush1.bf16.msra.mxu0 0
      %781 = vmatprep.subr.bf16.mxu0 0
      %782 = vmatpush1.bf16.msra.mxu0 0
      %783 = vmatprep.subr.bf16.mxu0 0
      %784 = vmatpush1.bf16.msra.mxu0 0
      %785 = vmatprep.subr.bf16.mxu0 0
      %786 = vmatpush1.bf16.msra.mxu0 0
      %787 = vmatprep.subr.bf16.mxu0 0
      %788 = vmatpush1.bf16.msra.mxu0 0
      %789 = vmatprep.subr.bf16.mxu0 0
      %790 = vmatpush1.bf16.msra.mxu0 0
      %791 = vmatprep.subr.bf16.mxu0 0
      %792 = vmatpush1.bf16.msra.mxu0 0
      %793 = vmatprep.subr.bf16.mxu0 0
      %794 = vmatpush1.bf16.msra.mxu0 0
      %795 = vmatprep.mubr.bf16.mxu0 0
      %796 = vmatmul.mubr.bf16.gmra.mrb[0].mxu0 %v740
      %v797 = vpop.f32.mrb[0].mxu0
      %v798 = vadd.f32 %v700, %v797
      %v799 = vpop.f32.mrb[0].mxu0
      %v800 = vpop.f32.mrb[0].mxu0
      %v801 = vadd.f32 %v700, %v800
      %v802 = vpop.f32.mrb[0].mxu0
      %803 = vmatprep.mubr.bf16.mxu0 0
      %804 = vmatmul.mubr.bf16.gmra.mrb[0].mxu0 %v743
      %v805 = vpop.f32.mrb[0].mxu0
      %v806 = vadd.f32 %v700, %v805
      %v807 = vpop.f32.mrb[0].mxu0
      %v808 = vpop.f32.mrb[0].mxu0
      %v809 = vadd.f32 %v700, %v808
      %v810 = vpop.f32.mrb[0].mxu0
      %811 = vmatprep.mubr.bf16.mxu0 0
      %812 = vmatmul.mubr.bf16.gmra.mrb[0].mxu0 %v746
      %v813 = vpop.f32.mrb[0].mxu0
      %v814 = vadd.f32 %v700, %v813
      %v815 = vpop.f32.mrb[0].mxu0
      %v816 = vpop.f32.mrb[0].mxu0
      %v817 = vadd.f32 %v700, %v816
      %v818 = vpop.f32.mrb[0].mxu0
      %819 = vmatprep.mubr.bf16.mxu0 0
      %820 = vmatmul.mubr.bf16.gmra.mrb[0].mxu0 %v749
      %v821 = vpop.f32.mrb[0].mxu0
      %v822 = vadd.f32 %v700, %v821
      %v823 = vpop.f32.mrb[0].mxu0
      %v824 = vpop.f32.mrb[0].mxu0
      %v825 = vadd.f32 %v700, %v824
      %v826 = vpop.f32.mrb[0].mxu0
      %827 = vmatprep.mubr.bf16.mxu0 0
      %828 = vmatmul.mubr.bf16.gmra.mrb[0].mxu0 %v752
      %v829 = vpop.f32.mrb[0].mxu0
      %v830 = vadd.f32 %v700, %v829
      %v831 = vpop.f32.mrb[0].mxu0
      %v832 = vpop.f32.mrb[0].mxu0
      %v833 = vadd.f32 %v700, %v832
      %v834 = vpop.f32.mrb[0].mxu0
      %835 = vmatprep.mubr.bf16.mxu0 0
      %836 = vmatmul.mubr.bf16.gmra.mrb[0].mxu0 %v755
      %v837 = vpop.f32.mrb[0].mxu0
      %v838 = vadd.f32 %v700, %v837
      %v839 = vpop.f32.mrb[0].mxu0
      %v840 = vpop.f32.mrb[0].mxu0
      %v841 = vadd.f32 %v700, %v840
      %v842 = vpop.f32.mrb[0].mxu0
      %843 = vmatprep.mubr.bf16.mxu0 0
      %844 = vmatmul.mubr.bf16.gmra.mrb[0].mxu0 %v758
      %v845 = vpop.f32.mrb[0].mxu0
      %v846 = vadd.f32 %v700, %v845
      %v847 = vpop.f32.mrb[0].mxu0
      %v848 = vpop.f32.mrb[0].mxu0
      %v849 = vadd.f32 %v700, %v848
      %v850 = vpop.f32.mrb[0].mxu0
      %851 = vmatprep.mubr.bf16.mxu0 0
      %852 = vmatmul.mubr.bf16.gmra.mrb[0].mxu0 %v761
      %v853 = vpop.f32.mrb[0].mxu0
      %v854 = vadd.f32 %v700, %v853
      %v855 = vpop.f32.mrb[0].mxu0
      %v856 = vpop.f32.mrb[0].mxu0
      %v857 = vadd.f32 %v700, %v856
      %v858 = vpop.f32.mrb[0].mxu0
      %859 = vdwg.mxu0
      %vm860 = vcmp.gt.f32.partialorder %v798, 0.0
      %vm861 = vcmp.gt.f32.partialorder %v801, 0.0
      %vm862 = vcmp.gt.f32.partialorder %v806, 0.0
      %vm863 = vcmp.gt.f32.partialorder %v809, 0.0
      %vm864 = vcmp.gt.f32.partialorder %v814, 0.0
      %vm865 = vcmp.gt.f32.partialorder %v817, 0.0
      %vm866 = vcmp.gt.f32.partialorder %v822, 0.0
      %vm867 = vcmp.gt.f32.partialorder %v825, 0.0
      %vm868 = vcmp.gt.f32.partialorder %v830, 0.0
      %vm869 = vcmp.gt.f32.partialorder %v833, 0.0
      %vm870 = vcmp.gt.f32.partialorder %v838, 0.0
      %vm871 = vcmp.gt.f32.partialorder %v841, 0.0
      %vm872 = vcmp.gt.f32.partialorder %v846, 0.0
      %vm873 = vcmp.gt.f32.partialorder %v849, 0.0
      %vm874 = vcmp.gt.f32.partialorder %v854, 0.0
      %vm875 = vcmp.gt.f32.partialorder %v857, 0.0
      %v876 = vmul.f32 %v798, 1.442695
      %v877 = vpow.pop %v876
      %v878 = vmul.f32 %v801, 1.442695
      %v879 = vpow.pop %v878
      %v880 = vmul.f32 %v806, 1.442695
      %v881 = vpow.pop %v880
      %v882 = vmul.f32 %v809, 1.442695
      %v883 = vpow.pop %v882
      %v884 = vmul.f32 %v814, 1.442695
      %v885 = vpow.pop %v884
      %v886 = vmul.f32 %v817, 1.442695
      %v887 = vpow.pop %v886
      %v888 = vmul.f32 %v822, 1.442695
      %v889 = vpow.pop %v888
      %v890 = vmul.f32 %v825, 1.442695
      %v891 = vpow.pop %v890
      %v892 = vmul.f32 %v830, 1.442695
      %v893 = vpow.pop %v892
      %v894 = vmul.f32 %v833, 1.442695
      %v895 = vpow.pop %v894
      %v896 = vmul.f32 %v838, 1.442695
      %v897 = vpow.pop %v896
      %v898 = vmul.f32 %v841, 1.442695
      %v899 = vpow.pop %v898
      %v900 = vmul.f32 %v846, 1.442695
      %v901 = vpow.pop %v900
      %v902 = vmul.f32 %v849, 1.442695
      %v903 = vpow.pop %v902
      %v904 = vmul.f32 %v854, 1.442695
      %v905 = vpow.pop %v904
      %v906 = vmul.f32 %v857, 1.442695
      %v907 = vpow.pop %v906
      %v908 = vsub.f32 %v877, 1.0
      %v909 = vsub.f32 %v879, 1.0
      %v910 = vsub.f32 %v881, 1.0
      %v911 = vsub.f32 %v883, 1.0
      %v912 = vsub.f32 %v885, 1.0
      %v913 = vsub.f32 %v887, 1.0
      %v914 = vsub.f32 %v889, 1.0
      %v915 = vsub.f32 %v891, 1.0
      %v916 = vsub.f32 %v893, 1.0
      %v917 = vsub.f32 %v895, 1.0
      %v918 = vsub.f32 %v897, 1.0
      %v919 = vsub.f32 %v899, 1.0
      %v920 = vsub.f32 %v901, 1.0
      %v921 = vsub.f32 %v903, 1.0
      %v922 = vsub.f32 %v905, 1.0
      %v923 = vsub.f32 %v907, 1.0
      %v924 = vsel %vm860, %v798, %v908
      %v925 = vsel %vm861, %v801, %v909
      %v926 = vsel %vm862, %v806, %v910
      %v927 = vsel %vm863, %v809, %v911
      %v928 = vsel %vm864, %v814, %v912
      %v929 = vsel %vm865, %v817, %v913
      %v930 = vsel %vm866, %v822, %v914
      %v931 = vsel %vm867, %v825, %v915
      %v932 = vsel %vm868, %v830, %v916
      %v933 = vsel %vm869, %v833, %v917
      %v934 = vsel %vm870, %v838, %v918
      %v935 = vsel %vm871, %v841, %v919
      %v936 = vsel %vm872, %v846, %v920
      %v937 = vsel %vm873, %v849, %v921
      %v938 = vsel %vm874, %v854, %v922
      %v939 = vsel %vm875, %v857, %v923
      %v940 = vpack.c.bf16 %v925, %v924
      %v941 = vpack.c.bf16 %v927, %v926
      %v942 = vpack.c.bf16 %v929, %v928
      %v943 = vpack.c.bf16 %v931, %v930
      %v944 = vpack.c.bf16 %v933, %v932
      %v945 = vpack.c.bf16 %v935, %v934
      %v946 = vpack.c.bf16 %v937, %v936
      %v947 = vpack.c.bf16 %v939, %v938
      %v948 = vld [vmem:[%s5] sm:$0xf]
      %v949 = vld [vmem:[%s5 + $0x4] sm:$0xf]
      %v950 = vld [vmem:[%s5 + $0x8] sm:$0xf]
      %v951 = vld [vmem:[%s5 + $0xc] sm:$0xf]
      %v952 = vld [vmem:[%s6] sm:$0x1]
      %v954 = vlaneseq
      %v955 = vshrl.u32 %v954, 7
      %v956 = vsub.s32 0, %v955
      %v957 = vrot.slane %v952, %v956
      %v963 = vunpack.c.l.b16 %v948
      %v964 = vunpack.c.l.b16 %v949
      %v965 = vunpack.c.l.b16 %v950
      %v966 = vunpack.c.l.b16 %v951
      %v967 = vpack.c.b16 %v964, %v963
      %v968 = vpack.c.b16 %v966, %v965
      %vm971 = vcmask 261120
      %v973 = vsel %vm971, %v940, 0
      %v976 = vsel %vm971, %v941, 0
      %v979 = vsel %vm971, %v942, 0
      %v982 = vsel %vm971, %v943, 0
      %v985 = vsel %vm971, %v944, 0
      %v988 = vsel %vm971, %v945, 0
      %v991 = vsel %vm971, %v946, 0
      %v994 = vsel %vm971, %v947, 0
      %996 = vmatprep.subr.bf16.mxu0 0
      %997 = vmatpush1.bf16.msra.mxu0 %v967
      %998 = vmatprep.subr.bf16.mxu0 0
      %999 = vmatpush1.bf16.msra.mxu0 %v968
      %1000 = vmatprep.subr.bf16.mxu0 0
      %1001 = vmatpush1.bf16.msra.mxu0 0
      %1002 = vmatprep.subr.bf16.mxu0 0
      %1003 = vmatpush1.bf16.msra.mxu0 0
      %1004 = vmatprep.subr.bf16.mxu0 0
      %1005 = vmatpush1.bf16.msra.mxu0 0
      %1006 = vmatprep.subr.bf16.mxu0 0
      %1007 = vmatpush1.bf16.msra.mxu0 0
      %1008 = vmatprep.subr.bf16.mxu0 0
      %1009 = vmatpush1.bf16.msra.mxu0 0
      %1010 = vmatprep.subr.bf16.mxu0 0
      %1011 = vmatpush1.bf16.msra.mxu0 0
      %1012 = vmatprep.subr.bf16.mxu0 0
      %1013 = vmatpush1.bf16.msra.mxu0 0
      %1014 = vmatprep.subr.bf16.mxu0 0
      %1015 = vmatpush1.bf16.msra.mxu0 0
      %1016 = vmatprep.subr.bf16.mxu0 0
      %1017 = vmatpush1.bf16.msra.mxu0 0
      %1018 = vmatprep.subr.bf16.mxu0 0
      %1019 = vmatpush1.bf16.msra.mxu0 0
      %1020 = vmatprep.subr.bf16.mxu0 0
      %1021 = vmatpush1.bf16.msra.mxu0 0
      %1022 = vmatprep.subr.bf16.mxu0 0
      %1023 = vmatpush1.bf16.msra.mxu0 0
      %1024 = vmatprep.subr.bf16.mxu0 0
      %1025 = vmatpush1.bf16.msra.mxu0 0
      %1026 = vmatprep.subr.bf16.mxu0 0
      %1027 = vmatpush1.bf16.msra.mxu0 0
      %1028 = vmatprep.mubr.bf16.mxu0 0
      %1029 = vmatmul.mubr.bf16.gmra.mrb[0].mxu0 %v973
      %v1030 = vpop.f32.mrb[0].mxu0
      %v1031 = vadd.f32 %v957, %v1030
      %v1032 = vpop.f32.mrb[0].mxu0
      %v1033 = vpop.f32.mrb[0].mxu0
      %v1034 = vadd.f32 %v957, %v1033
      %v1035 = vpop.f32.mrb[0].mxu0
      %1036 = vmatprep.mubr.bf16.mxu0 0
      %1037 = vmatmul.mubr.bf16.gmra.mrb[0].mxu0 %v976
      %v1038 = vpop.f32.mrb[0].mxu0
      %v1039 = vadd.f32 %v957, %v1038
      %v1040 = vpop.f32.mrb[0].mxu0
      %v1041 = vpop.f32.mrb[0].mxu0
      %v1042 = vadd.f32 %v957, %v1041
      %v1043 = vpop.f32.mrb[0].mxu0
      %1044 = vmatprep.mubr.bf16.mxu0 0
      %1045 = vmatmul.mubr.bf16.gmra.mrb[0].mxu0 %v979
      %v1046 = vpop.f32.mrb[0].mxu0
      %v1047 = vadd.f32 %v957, %v1046
      %v1048 = vpop.f32.mrb[0].mxu0
      %v1049 = vpop.f32.mrb[0].mxu0
      %v1050 = vadd.f32 %v957, %v1049
      %v1051 = vpop.f32.mrb[0].mxu0
      %1052 = vmatprep.mubr.bf16.mxu0 0
      %1053 = vmatmul.mubr.bf16.gmra.mrb[0].mxu0 %v982
      %v1054 = vpop.f32.mrb[0].mxu0
      %v1055 = vadd.f32 %v957, %v1054
      %v1056 = vpop.f32.mrb[0].mxu0
      %v1057 = vpop.f32.mrb[0].mxu0
      %v1058 = vadd.f32 %v957, %v1057
      %v1059 = vpop.f32.mrb[0].mxu0
      %1060 = vmatprep.mubr.bf16.mxu0 0
      %1061 = vmatmul.mubr.bf16.gmra.mrb[0].mxu0 %v985
      %v1062 = vpop.f32.mrb[0].mxu0
      %v1063 = vadd.f32 %v957, %v1062
      %v1064 = vpop.f32.mrb[0].mxu0
      %v1065 = vpop.f32.mrb[0].mxu0
      %v1066 = vadd.f32 %v957, %v1065
      %v1067 = vpop.f32.mrb[0].mxu0
      %1068 = vmatprep.mubr.bf16.mxu0 0
      %1069 = vmatmul.mubr.bf16.gmra.mrb[0].mxu0 %v988
      %v1070 = vpop.f32.mrb[0].mxu0
      %v1071 = vadd.f32 %v957, %v1070
      %v1072 = vpop.f32.mrb[0].mxu0
      %v1073 = vpop.f32.mrb[0].mxu0
      %v1074 = vadd.f32 %v957, %v1073
      %v1075 = vpop.f32.mrb[0].mxu0
      %1076 = vmatprep.mubr.bf16.mxu0 0
      %1077 = vmatmul.mubr.bf16.gmra.mrb[0].mxu0 %v991
      %v1078 = vpop.f32.mrb[0].mxu0
      %v1079 = vadd.f32 %v957, %v1078
      %v1080 = vpop.f32.mrb[0].mxu0
      %v1081 = vpop.f32.mrb[0].mxu0
      %v1082 = vadd.f32 %v957, %v1081
      %v1083 = vpop.f32.mrb[0].mxu0
      %1084 = vmatprep.mubr.bf16.mxu0 0
      %1085 = vmatmul.mubr.bf16.gmra.mrb[0].mxu0 %v994
      %v1086 = vpop.f32.mrb[0].mxu0
      %v1087 = vadd.f32 %v957, %v1086
      %v1088 = vpop.f32.mrb[0].mxu0
      %v1089 = vpop.f32.mrb[0].mxu0
      %v1090 = vadd.f32 %v957, %v1089
      %v1091 = vpop.f32.mrb[0].mxu0
      %1092 = vdwg.mxu0
      %v1093 = vld [vmem:[%s637] sm:$0xff]
      %v1094 = vld [vmem:[%s637 + $0x8] sm:$0xff]
      %v1095 = vld [vmem:[%s637 + $0x10] sm:$0xff]
      %v1096 = vld [vmem:[%s637 + $0x18] sm:$0xff]
      %v1097 = vld [vmem:[%s637 + $0x20] sm:$0xff]
      %v1098 = vld [vmem:[%s637 + $0x28] sm:$0xff]
      %v1099 = vld [vmem:[%s637 + $0x30] sm:$0xff]
      %v1100 = vld [vmem:[%s637 + $0x38] sm:$0xff]
      %v1101 = vld [vmem:[%s637 + $0x40] sm:$0xff]
      %v1102 = vld [vmem:[%s637 + $0x48] sm:$0xff]
      %v1103 = vld [vmem:[%s637 + $0x50] sm:$0xff]
      %v1104 = vld [vmem:[%s637 + $0x58] sm:$0xff]
      %v1105 = vld [vmem:[%s637 + $0x60] sm:$0xff]
      %v1106 = vld [vmem:[%s637 + $0x68] sm:$0xff]
      %v1107 = vld [vmem:[%s637 + $0x70] sm:$0xff]
      %v1108 = vld [vmem:[%s637 + $0x78] sm:$0xff]
      %v1109 = vld [vmem:[%s637 + $0x80] sm:$0xff]
      %v1110 = vld [vmem:[%s637 + $0x88] sm:$0xff]
      %v1111 = vld [vmem:[%s637 + $0x90] sm:$0xff]
      %v1112 = vld [vmem:[%s637 + $0x98] sm:$0xff]
      %v1113 = vld [vmem:[%s637 + $0xa0] sm:$0xff]
      %v1114 = vld [vmem:[%s637 + $0xa8] sm:$0xff]
      %v1115 = vld [vmem:[%s637 + $0xb0] sm:$0xff]
      %v1116 = vld [vmem:[%s637 + $0xb8] sm:$0xff]
      %v1117 = vld [vmem:[%s637 + $0xc0] sm:$0xff]
      %v1118 = vld [vmem:[%s637 + $0xc8] sm:$0xff]
      %v1119 = vld [vmem:[%s637 + $0xd0] sm:$0xff]
      %v1120 = vld [vmem:[%s637 + $0xd8] sm:$0xff]
      %v1121 = vld [vmem:[%s637 + $0xe0] sm:$0xff]
      %v1122 = vld [vmem:[%s637 + $0xe8] sm:$0xff]
      %v1123 = vld [vmem:[%s637 + $0xf0] sm:$0xff]
      %v1124 = vld [vmem:[%s637 + $0xf8] sm:$0xff]
      %v1125 = vpack.c.bf16 %v1095, %v1093
      %v1126 = vpack.c.bf16 %v1096, %v1094
      %v1127 = vpack.c.bf16 %v1099, %v1097
      %v1128 = vpack.c.bf16 %v1100, %v1098
      %v1129 = vpack.c.bf16 %v1103, %v1101
      %v1130 = vpack.c.bf16 %v1104, %v1102
      %v1131 = vpack.c.bf16 %v1107, %v1105
      %v1132 = vpack.c.bf16 %v1108, %v1106
      %v1133 = vpack.c.bf16 %v1111, %v1109
      %v1134 = vpack.c.bf16 %v1112, %v1110
      %v1135 = vpack.c.bf16 %v1115, %v1113
      %v1136 = vpack.c.bf16 %v1116, %v1114
      %v1137 = vpack.c.bf16 %v1119, %v1117
      %v1138 = vpack.c.bf16 %v1120, %v1118
      %v1139 = vpack.c.bf16 %v1123, %v1121
      %v1140 = vpack.c.bf16 %v1124, %v1122
      %v1141 = vld [vmem:[%s7] sm:$0xff]
      %v1142 = vld [vmem:[%s7 + $0x8] sm:$0xff]
      %v1143 = vld [vmem:[%s7 + $0x10] sm:$0xff]
      %v1144 = vld [vmem:[%s7 + $0x18] sm:$0xff]
      %v1145 = vld [vmem:[%s7 + $0x20] sm:$0xff]
      %v1146 = vld [vmem:[%s7 + $0x28] sm:$0xff]
      %v1147 = vld [vmem:[%s7 + $0x30] sm:$0xff]
      %v1148 = vld [vmem:[%s7 + $0x38] sm:$0xff]
      %v1149 = vld [vmem:[%s7 + $0x40] sm:$0xff]
      %v1150 = vld [vmem:[%s7 + $0x48] sm:$0xff]
      %v1151 = vld [vmem:[%s7 + $0x50] sm:$0xff]
      %v1152 = vld [vmem:[%s7 + $0x58] sm:$0xff]
      %v1153 = vld [vmem:[%s7 + $0x60] sm:$0xff]
      %v1154 = vld [vmem:[%s7 + $0x68] sm:$0xff]
      %v1155 = vld [vmem:[%s7 + $0x70] sm:$0xff]
      %v1156 = vld [vmem:[%s7 + $0x78] sm:$0xff]
      %v1157 = vld [vmem:[%s7 + $0x80] sm:$0xff]
      %v1158 = vld [vmem:[%s7 + $0x88] sm:$0xff]
      %v1159 = vld [vmem:[%s7 + $0x90] sm:$0xff]
      %v1160 = vld [vmem:[%s7 + $0x98] sm:$0xff]
      %v1161 = vld [vmem:[%s7 + $0xa0] sm:$0xff]
      %v1162 = vld [vmem:[%s7 + $0xa8] sm:$0xff]
      %v1163 = vld [vmem:[%s7 + $0xb0] sm:$0xff]
      %v1164 = vld [vmem:[%s7 + $0xb8] sm:$0xff]
      %v1165 = vld [vmem:[%s7 + $0xc0] sm:$0xff]
      %v1166 = vld [vmem:[%s7 + $0xc8] sm:$0xff]
      %v1167 = vld [vmem:[%s7 + $0xd0] sm:$0xff]
      %v1168 = vld [vmem:[%s7 + $0xd8] sm:$0xff]
      %v1169 = vld [vmem:[%s7 + $0xe0] sm:$0xff]
      %v1170 = vld [vmem:[%s7 + $0xe8] sm:$0xff]
      %v1171 = vld [vmem:[%s7 + $0xf0] sm:$0xff]
      %v1172 = vld [vmem:[%s7 + $0xf8] sm:$0xff]
      %v1173 = vld [vmem:[%s7 + $0x100] sm:$0xff]
      %v1174 = vld [vmem:[%s7 + $0x108] sm:$0xff]
      %v1175 = vld [vmem:[%s7 + $0x110] sm:$0xff]
      %v1176 = vld [vmem:[%s7 + $0x118] sm:$0xff]
      %v1177 = vld [vmem:[%s7 + $0x120] sm:$0xff]
      %v1178 = vld [vmem:[%s7 + $0x128] sm:$0xff]
      %v1179 = vld [vmem:[%s7 + $0x130] sm:$0xff]
      %v1180 = vld [vmem:[%s7 + $0x138] sm:$0xff]
      %v1181 = vld [vmem:[%s7 + $0x140] sm:$0xff]
      %v1182 = vld [vmem:[%s7 + $0x148] sm:$0xff]
      %v1183 = vld [vmem:[%s7 + $0x150] sm:$0xff]
      %v1184 = vld [vmem:[%s7 + $0x158] sm:$0xff]
      %v1185 = vld [vmem:[%s7 + $0x160] sm:$0xff]
      %v1186 = vld [vmem:[%s7 + $0x168] sm:$0xff]
      %v1187 = vld [vmem:[%s7 + $0x170] sm:$0xff]
      %v1188 = vld [vmem:[%s7 + $0x178] sm:$0xff]
      %v1189 = vld [vmem:[%s7 + $0x180] sm:$0xff]
      %v1190 = vld [vmem:[%s7 + $0x188] sm:$0xff]
      %v1191 = vld [vmem:[%s7 + $0x190] sm:$0xff]
      %v1192 = vld [vmem:[%s7 + $0x198] sm:$0xff]
      %v1193 = vld [vmem:[%s7 + $0x1a0] sm:$0xff]
      %v1194 = vld [vmem:[%s7 + $0x1a8] sm:$0xff]
      %v1195 = vld [vmem:[%s7 + $0x1b0] sm:$0xff]
      %v1196 = vld [vmem:[%s7 + $0x1b8] sm:$0xff]
      %v1197 = vld [vmem:[%s7 + $0x1c0] sm:$0xff]
      %v1198 = vld [vmem:[%s7 + $0x1c8] sm:$0xff]
      %v1199 = vld [vmem:[%s7 + $0x1d0] sm:$0xff]
      %v1200 = vld [vmem:[%s7 + $0x1d8] sm:$0xff]
      %v1201 = vld [vmem:[%s7 + $0x1e0] sm:$0xff]
      %v1202 = vld [vmem:[%s7 + $0x1e8] sm:$0xff]
      %v1203 = vld [vmem:[%s7 + $0x1f0] sm:$0xff]
      %v1204 = vld [vmem:[%s7 + $0x1f8] sm:$0xff]
      %v1205 = vld [vmem:[%s7 + $0x200] sm:$0xff]
      %v1206 = vld [vmem:[%s7 + $0x208] sm:$0xff]
      %v1207 = vld [vmem:[%s7 + $0x210] sm:$0xff]
      %v1208 = vld [vmem:[%s7 + $0x218] sm:$0xff]
      %v1209 = vld [vmem:[%s7 + $0x220] sm:$0xff]
      %v1210 = vld [vmem:[%s7 + $0x228] sm:$0xff]
      %v1211 = vld [vmem:[%s7 + $0x230] sm:$0xff]
      %v1212 = vld [vmem:[%s7 + $0x238] sm:$0xff]
      %v1213 = vld [vmem:[%s7 + $0x240] sm:$0xff]
      %v1214 = vld [vmem:[%s7 + $0x248] sm:$0xff]
      %v1215 = vld [vmem:[%s7 + $0x250] sm:$0xff]
      %v1216 = vld [vmem:[%s7 + $0x258] sm:$0xff]
      %v1217 = vld [vmem:[%s7 + $0x260] sm:$0xff]
      %v1218 = vld [vmem:[%s7 + $0x268] sm:$0xff]
      %v1219 = vld [vmem:[%s7 + $0x270] sm:$0xff]
      %v1220 = vld [vmem:[%s7 + $0x278] sm:$0xff]
      %v1221 = vld [vmem:[%s7 + $0x280] sm:$0xff]
      %v1222 = vld [vmem:[%s7 + $0x288] sm:$0xff]
      %v1223 = vld [vmem:[%s7 + $0x290] sm:$0xff]
      %v1224 = vld [vmem:[%s7 + $0x298] sm:$0xff]
      %v1225 = vld [vmem:[%s7 + $0x2a0] sm:$0xff]
      %v1226 = vld [vmem:[%s7 + $0x2a8] sm:$0xff]
      %v1227 = vld [vmem:[%s7 + $0x2b0] sm:$0xff]
      %v1228 = vld [vmem:[%s7 + $0x2b8] sm:$0xff]
      %v1229 = vld [vmem:[%s7 + $0x2c0] sm:$0xff]
      %v1230 = vld [vmem:[%s7 + $0x2c8] sm:$0xff]
      %v1231 = vld [vmem:[%s7 + $0x2d0] sm:$0xff]
      %v1232 = vld [vmem:[%s7 + $0x2d8] sm:$0xff]
      %v1233 = vld [vmem:[%s7 + $0x2e0] sm:$0xff]
      %v1234 = vld [vmem:[%s7 + $0x2e8] sm:$0xff]
      %v1235 = vld [vmem:[%s7 + $0x2f0] sm:$0xff]
      %v1236 = vld [vmem:[%s7 + $0x2f8] sm:$0xff]
      %v1237 = vld [vmem:[%s8] sm:$0x3f]
      %v1239 = vlaneseq
      %v1240 = vshrl.u32 %v1239, 7
      %v1241 = vsub.s32 0, %v1240
      %v1242 = vrot.slane %v1237, %v1241
      %v1243 = vlaneseq
      %v1244 = vshrl.u32 %v1243, 7
      %v1245 = vsub.s32 1, %v1244
      %v1246 = vrot.slane %v1237, %v1245
      %v1247 = vlaneseq
      %v1248 = vshrl.u32 %v1247, 7
      %v1249 = vsub.s32 2, %v1248
      %v1250 = vrot.slane %v1237, %v1249
      %v1251 = vlaneseq
      %v1252 = vshrl.u32 %v1251, 7
      %v1253 = vsub.s32 3, %v1252
      %v1254 = vrot.slane %v1237, %v1253
      %v1255 = vlaneseq
      %v1256 = vshrl.u32 %v1255, 7
      %v1257 = vsub.s32 4, %v1256
      %v1258 = vrot.slane %v1237, %v1257
      %v1259 = vlaneseq
      %v1260 = vshrl.u32 %v1259, 7
      %v1261 = vsub.s32 5, %v1260
      %v1262 = vrot.slane %v1237, %v1261
      %v1365 = vunpack.c.l.b16 %v1141
      %v1366 = vunpack.c.h.b16 %v1141
      %v1367 = vunpack.c.l.b16 %v1142
      %v1368 = vunpack.c.h.b16 %v1142
      %v1369 = vunpack.c.l.b16 %v1143
      %v1370 = vunpack.c.h.b16 %v1143
      %v1371 = vunpack.c.l.b16 %v1144
      %v1372 = vunpack.c.h.b16 %v1144
      %v1373 = vunpack.c.l.b16 %v1145
      %v1374 = vunpack.c.h.b16 %v1145
      %v1375 = vunpack.c.l.b16 %v1146
      %v1376 = vunpack.c.h.b16 %v1146
      %v1377 = vunpack.c.l.b16 %v1147
      %v1378 = vunpack.c.h.b16 %v1147
      %v1379 = vunpack.c.l.b16 %v1148
      %v1380 = vunpack.c.h.b16 %v1148
      %v1381 = vunpack.c.l.b16 %v1149
      %v1382 = vunpack.c.h.b16 %v1149
      %v1383 = vunpack.c.l.b16 %v1150
      %v1384 = vunpack.c.h.b16 %v1150
      %v1385 = vunpack.c.l.b16 %v1151
      %v1386 = vunpack.c.h.b16 %v1151
      %v1387 = vunpack.c.l.b16 %v1152
      %v1388 = vunpack.c.h.b16 %v1152
      %v1389 = vunpack.c.l.b16 %v1153
      %v1390 = vunpack.c.h.b16 %v1153
      %v1391 = vunpack.c.l.b16 %v1154
      %v1392 = vunpack.c.h.b16 %v1154
      %v1393 = vunpack.c.l.b16 %v1155
      %v1394 = vunpack.c.h.b16 %v1155
      %v1395 = vunpack.c.l.b16 %v1156
      %v1396 = vunpack.c.h.b16 %v1156
      %v1397 = vunpack.c.l.b16 %v1157
      %v1398 = vunpack.c.h.b16 %v1157
      %v1399 = vunpack.c.l.b16 %v1158
      %v1400 = vunpack.c.h.b16 %v1158
      %v1401 = vunpack.c.l.b16 %v1159
      %v1402 = vunpack.c.h.b16 %v1159
      %v1403 = vunpack.c.l.b16 %v1160
      %v1404 = vunpack.c.h.b16 %v1160
      %v1405 = vunpack.c.l.b16 %v1161
      %v1406 = vunpack.c.h.b16 %v1161
      %v1407 = vunpack.c.l.b16 %v1162
      %v1408 = vunpack.c.h.b16 %v1162
      %v1409 = vunpack.c.l.b16 %v1163
      %v1410 = vunpack.c.h.b16 %v1163
      %v1411 = vunpack.c.l.b16 %v1164
      %v1412 = vunpack.c.h.b16 %v1164
      %v1413 = vunpack.c.l.b16 %v1165
      %v1414 = vunpack.c.h.b16 %v1165
      %v1415 = vunpack.c.l.b16 %v1166
      %v1416 = vunpack.c.h.b16 %v1166
      %v1417 = vunpack.c.l.b16 %v1167
      %v1418 = vunpack.c.h.b16 %v1167
      %v1419 = vunpack.c.l.b16 %v1168
      %v1420 = vunpack.c.h.b16 %v1168
      %v1421 = vunpack.c.l.b16 %v1169
      %v1422 = vunpack.c.h.b16 %v1169
      %v1423 = vunpack.c.l.b16 %v1170
      %v1424 = vunpack.c.h.b16 %v1170
      %v1425 = vunpack.c.l.b16 %v1171
      %v1426 = vunpack.c.h.b16 %v1171
      %v1427 = vunpack.c.l.b16 %v1172
      %v1428 = vunpack.c.h.b16 %v1172
      %v1429 = vunpack.c.l.b16 %v1173
      %v1430 = vunpack.c.h.b16 %v1173
      %v1431 = vunpack.c.l.b16 %v1174
      %v1432 = vunpack.c.h.b16 %v1174
      %v1433 = vunpack.c.l.b16 %v1175
      %v1434 = vunpack.c.h.b16 %v1175
      %v1435 = vunpack.c.l.b16 %v1176
      %v1436 = vunpack.c.h.b16 %v1176
      %v1437 = vunpack.c.l.b16 %v1177
      %v1438 = vunpack.c.h.b16 %v1177
      %v1439 = vunpack.c.l.b16 %v1178
      %v1440 = vunpack.c.h.b16 %v1178
      %v1441 = vunpack.c.l.b16 %v1179
      %v1442 = vunpack.c.h.b16 %v1179
      %v1443 = vunpack.c.l.b16 %v1180
      %v1444 = vunpack.c.h.b16 %v1180
      %v1445 = vunpack.c.l.b16 %v1181
      %v1446 = vunpack.c.h.b16 %v1181
      %v1447 = vunpack.c.l.b16 %v1182
      %v1448 = vunpack.c.h.b16 %v1182
      %v1449 = vunpack.c.l.b16 %v1183
      %v1450 = vunpack.c.h.b16 %v1183
      %v1451 = vunpack.c.l.b16 %v1184
      %v1452 = vunpack.c.h.b16 %v1184
      %v1453 = vunpack.c.l.b16 %v1185
      %v1454 = vunpack.c.h.b16 %v1185
      %v1455 = vunpack.c.l.b16 %v1186
      %v1456 = vunpack.c.h.b16 %v1186
      %v1457 = vunpack.c.l.b16 %v1187
      %v1458 = vunpack.c.h.b16 %v1187
      %v1459 = vunpack.c.l.b16 %v1188
      %v1460 = vunpack.c.h.b16 %v1188
      %v1461 = vunpack.c.l.b16 %v1189
      %v1462 = vunpack.c.h.b16 %v1189
      %v1463 = vunpack.c.l.b16 %v1190
      %v1464 = vunpack.c.h.b16 %v1190
      %v1465 = vunpack.c.l.b16 %v1191
      %v1466 = vunpack.c.h.b16 %v1191
      %v1467 = vunpack.c.l.b16 %v1192
      %v1468 = vunpack.c.h.b16 %v1192
      %v1469 = vunpack.c.l.b16 %v1193
      %v1470 = vunpack.c.h.b16 %v1193
      %v1471 = vunpack.c.l.b16 %v1194
      %v1472 = vunpack.c.h.b16 %v1194
      %v1473 = vunpack.c.l.b16 %v1195
      %v1474 = vunpack.c.h.b16 %v1195
      %v1475 = vunpack.c.l.b16 %v1196
      %v1476 = vunpack.c.h.b16 %v1196
      %v1477 = vunpack.c.l.b16 %v1197
      %v1478 = vunpack.c.h.b16 %v1197
      %v1479 = vunpack.c.l.b16 %v1198
      %v1480 = vunpack.c.h.b16 %v1198
      %v1481 = vunpack.c.l.b16 %v1199
      %v1482 = vunpack.c.h.b16 %v1199
      %v1483 = vunpack.c.l.b16 %v1200
      %v1484 = vunpack.c.h.b16 %v1200
      %v1485 = vunpack.c.l.b16 %v1201
      %v1486 = vunpack.c.h.b16 %v1201
      %v1487 = vunpack.c.l.b16 %v1202
      %v1488 = vunpack.c.h.b16 %v1202
      %v1489 = vunpack.c.l.b16 %v1203
      %v1490 = vunpack.c.h.b16 %v1203
      %v1491 = vunpack.c.l.b16 %v1204
      %v1492 = vunpack.c.h.b16 %v1204
      %v1493 = vunpack.c.l.b16 %v1205
      %v1494 = vunpack.c.h.b16 %v1205
      %v1495 = vunpack.c.l.b16 %v1206
      %v1496 = vunpack.c.h.b16 %v1206
      %v1497 = vunpack.c.l.b16 %v1207
      %v1498 = vunpack.c.h.b16 %v1207
      %v1499 = vunpack.c.l.b16 %v1208
      %v1500 = vunpack.c.h.b16 %v1208
      %v1501 = vunpack.c.l.b16 %v1209
      %v1502 = vunpack.c.h.b16 %v1209
      %v1503 = vunpack.c.l.b16 %v1210
      %v1504 = vunpack.c.h.b16 %v1210
      %v1505 = vunpack.c.l.b16 %v1211
      %v1506 = vunpack.c.h.b16 %v1211
      %v1507 = vunpack.c.l.b16 %v1212
      %v1508 = vunpack.c.h.b16 %v1212
      %v1509 = vunpack.c.l.b16 %v1213
      %v1510 = vunpack.c.h.b16 %v1213
      %v1511 = vunpack.c.l.b16 %v1214
      %v1512 = vunpack.c.h.b16 %v1214
      %v1513 = vunpack.c.l.b16 %v1215
      %v1514 = vunpack.c.h.b16 %v1215
      %v1515 = vunpack.c.l.b16 %v1216
      %v1516 = vunpack.c.h.b16 %v1216
      %v1517 = vunpack.c.l.b16 %v1217
      %v1518 = vunpack.c.h.b16 %v1217
      %v1519 = vunpack.c.l.b16 %v1218
      %v1520 = vunpack.c.h.b16 %v1218
      %v1521 = vunpack.c.l.b16 %v1219
      %v1522 = vunpack.c.h.b16 %v1219
      %v1523 = vunpack.c.l.b16 %v1220
      %v1524 = vunpack.c.h.b16 %v1220
      %v1525 = vunpack.c.l.b16 %v1221
      %v1526 = vunpack.c.h.b16 %v1221
      %v1527 = vunpack.c.l.b16 %v1222
      %v1528 = vunpack.c.h.b16 %v1222
      %v1529 = vunpack.c.l.b16 %v1223
      %v1530 = vunpack.c.h.b16 %v1223
      %v1531 = vunpack.c.l.b16 %v1224
      %v1532 = vunpack.c.h.b16 %v1224
      %v1533 = vunpack.c.l.b16 %v1225
      %v1534 = vunpack.c.h.b16 %v1225
      %v1535 = vunpack.c.l.b16 %v1226
      %v1536 = vunpack.c.h.b16 %v1226
      %v1537 = vunpack.c.l.b16 %v1227
      %v1538 = vunpack.c.h.b16 %v1227
      %v1539 = vunpack.c.l.b16 %v1228
      %v1540 = vunpack.c.h.b16 %v1228
      %v1541 = vunpack.c.l.b16 %v1229
      %v1542 = vunpack.c.h.b16 %v1229
      %v1543 = vunpack.c.l.b16 %v1230
      %v1544 = vunpack.c.h.b16 %v1230
      %v1545 = vunpack.c.l.b16 %v1231
      %v1546 = vunpack.c.h.b16 %v1231
      %v1547 = vunpack.c.l.b16 %v1232
      %v1548 = vunpack.c.h.b16 %v1232
      %v1549 = vunpack.c.l.b16 %v1233
      %v1550 = vunpack.c.h.b16 %v1233
      %v1551 = vunpack.c.l.b16 %v1234
      %v1552 = vunpack.c.h.b16 %v1234
      %v1553 = vunpack.c.l.b16 %v1235
      %v1554 = vunpack.c.h.b16 %v1235
      %v1555 = vunpack.c.l.b16 %v1236
      %v1556 = vunpack.c.h.b16 %v1236
      %v1557 = vpack.c.b16 %v1371, %v1365
      %v1558 = vpack.c.b16 %v1372, %v1366
      %v1559 = vpack.c.b16 %v1373, %v1367
      %v1560 = vpack.c.b16 %v1374, %v1368
      %v1561 = vpack.c.b16 %v1375, %v1369
      %v1562 = vpack.c.b16 %v1376, %v1370
      %v1563 = vpack.c.b16 %v1383, %v1377
      %v1564 = vpack.c.b16 %v1384, %v1378
      %v1565 = vpack.c.b16 %v1385, %v1379
      %v1566 = vpack.c.b16 %v1386, %v1380
      %v1567 = vpack.c.b16 %v1387, %v1381
      %v1568 = vpack.c.b16 %v1388, %v1382
      %v1569 = vpack.c.b16 %v1395, %v1389
      %v1570 = vpack.c.b16 %v1396, %v1390
      %v1571 = vpack.c.b16 %v1397, %v1391
      %v1572 = vpack.c.b16 %v1398, %v1392
      %v1573 = vpack.c.b16 %v1399, %v1393
      %v1574 = vpack.c.b16 %v1400, %v1394
      %v1575 = vpack.c.b16 %v1407, %v1401
      %v1576 = vpack.c.b16 %v1408, %v1402
      %v1577 = vpack.c.b16 %v1409, %v1403
      %v1578 = vpack.c.b16 %v1410, %v1404
      %v1579 = vpack.c.b16 %v1411, %v1405
      %v1580 = vpack.c.b16 %v1412, %v1406
      %v1581 = vpack.c.b16 %v1419, %v1413
      %v1582 = vpack.c.b16 %v1420, %v1414
      %v1583 = vpack.c.b16 %v1421, %v1415
      %v1584 = vpack.c.b16 %v1422, %v1416
      %v1585 = vpack.c.b16 %v1423, %v1417
      %v1586 = vpack.c.b16 %v1424, %v1418
      %v1587 = vpack.c.b16 %v1431, %v1425
      %v1588 = vpack.c.b16 %v1432, %v1426
      %v1589 = vpack.c.b16 %v1433, %v1427
      %v1590 = vpack.c.b16 %v1434, %v1428
      %v1591 = vpack.c.b16 %v1435, %v1429
      %v1592 = vpack.c.b16 %v1436, %v1430
      %v1593 = vpack.c.b16 %v1443, %v1437
      %v1594 = vpack.c.b16 %v1444, %v1438
      %v1595 = vpack.c.b16 %v1445, %v1439
      %v1596 = vpack.c.b16 %v1446, %v1440
      %v1597 = vpack.c.b16 %v1447, %v1441
      %v1598 = vpack.c.b16 %v1448, %v1442
      %v1599 = vpack.c.b16 %v1455, %v1449
      %v1600 = vpack.c.b16 %v1456, %v1450
      %v1601 = vpack.c.b16 %v1457, %v1451
      %v1602 = vpack.c.b16 %v1458, %v1452
      %v1603 = vpack.c.b16 %v1459, %v1453
      %v1604 = vpack.c.b16 %v1460, %v1454
      %v1605 = vpack.c.b16 %v1467, %v1461
      %v1606 = vpack.c.b16 %v1468, %v1462
      %v1607 = vpack.c.b16 %v1469, %v1463
      %v1608 = vpack.c.b16 %v1470, %v1464
      %v1609 = vpack.c.b16 %v1471, %v1465
      %v1610 = vpack.c.b16 %v1472, %v1466
      %v1611 = vpack.c.b16 %v1479, %v1473
      %v1612 = vpack.c.b16 %v1480, %v1474
      %v1613 = vpack.c.b16 %v1481, %v1475
      %v1614 = vpack.c.b16 %v1482, %v1476
      %v1615 = vpack.c.b16 %v1483, %v1477
      %v1616 = vpack.c.b16 %v1484, %v1478
      %v1617 = vpack.c.b16 %v1491, %v1485
      %v1618 = vpack.c.b16 %v1492, %v1486
      %v1619 = vpack.c.b16 %v1493, %v1487
      %v1620 = vpack.c.b16 %v1494, %v1488
      %v1621 = vpack.c.b16 %v1495, %v1489
      %v1622 = vpack.c.b16 %v1496, %v1490
      %v1623 = vpack.c.b16 %v1503, %v1497
      %v1624 = vpack.c.b16 %v1504, %v1498
      %v1625 = vpack.c.b16 %v1505, %v1499
      %v1626 = vpack.c.b16 %v1506, %v1500
      %v1627 = vpack.c.b16 %v1507, %v1501
      %v1628 = vpack.c.b16 %v1508, %v1502
      %v1629 = vpack.c.b16 %v1515, %v1509
      %v1630 = vpack.c.b16 %v1516, %v1510
      %v1631 = vpack.c.b16 %v1517, %v1511
      %v1632 = vpack.c.b16 %v1518, %v1512
      %v1633 = vpack.c.b16 %v1519, %v1513
      %v1634 = vpack.c.b16 %v1520, %v1514
      %v1635 = vpack.c.b16 %v1527, %v1521
      %v1636 = vpack.c.b16 %v1528, %v1522
      %v1637 = vpack.c.b16 %v1529, %v1523
      %v1638 = vpack.c.b16 %v1530, %v1524
      %v1639 = vpack.c.b16 %v1531, %v1525
      %v1640 = vpack.c.b16 %v1532, %v1526
      %v1641 = vpack.c.b16 %v1539, %v1533
      %v1642 = vpack.c.b16 %v1540, %v1534
      %v1643 = vpack.c.b16 %v1541, %v1535
      %v1644 = vpack.c.b16 %v1542, %v1536
      %v1645 = vpack.c.b16 %v1543, %v1537
      %v1646 = vpack.c.b16 %v1544, %v1538
      %v1647 = vpack.c.b16 %v1551, %v1545
      %v1648 = vpack.c.b16 %v1552, %v1546
      %v1649 = vpack.c.b16 %v1553, %v1547
      %v1650 = vpack.c.b16 %v1554, %v1548
      %v1651 = vpack.c.b16 %v1555, %v1549
      %v1652 = vpack.c.b16 %v1556, %v1550
      %1749 = vmatprep.subr.bf16.mxu0 %v1558
      %1750 = vmatpush1.bf16.msra.mxu0 %v1557
      %1751 = vmatprep.subr.bf16.mxu0 %v1564
      %1752 = vmatpush1.bf16.msra.mxu0 %v1563
      %1753 = vmatprep.subr.bf16.mxu0 %v1570
      %1754 = vmatpush1.bf16.msra.mxu0 %v1569
      %1755 = vmatprep.subr.bf16.mxu0 %v1576
      %1756 = vmatpush1.bf16.msra.mxu0 %v1575
      %1757 = vmatprep.subr.bf16.mxu0 %v1582
      %1758 = vmatpush1.bf16.msra.mxu0 %v1581
      %1759 = vmatprep.subr.bf16.mxu0 %v1588
      %1760 = vmatpush1.bf16.msra.mxu0 %v1587
      %1761 = vmatprep.subr.bf16.mxu0 %v1594
      %1762 = vmatpush1.bf16.msra.mxu0 %v1593
      %1763 = vmatprep.subr.bf16.mxu0 %v1600
      %1764 = vmatpush1.bf16.msra.mxu0 %v1599
      %1765 = vmatprep.subr.bf16.mxu0 %v1606
      %1766 = vmatpush1.bf16.msra.mxu0 %v1605
      %1767 = vmatprep.subr.bf16.mxu0 %v1612
      %1768 = vmatpush1.bf16.msra.mxu0 %v1611
      %1769 = vmatprep.subr.bf16.mxu0 %v1618
      %1770 = vmatpush1.bf16.msra.mxu0 %v1617
      %1771 = vmatprep.subr.bf16.mxu0 %v1624
      %1772 = vmatpush1.bf16.msra.mxu0 %v1623
      %1773 = vmatprep.subr.bf16.mxu0 %v1630
      %1774 = vmatpush1.bf16.msra.mxu0 %v1629
      %1775 = vmatprep.subr.bf16.mxu0 %v1636
      %1776 = vmatpush1.bf16.msra.mxu0 %v1635
      %1777 = vmatprep.subr.bf16.mxu0 %v1642
      %1778 = vmatpush1.bf16.msra.mxu0 %v1641
      %1779 = vmatprep.subr.bf16.mxu0 %v1648
      %1780 = vmatpush1.bf16.msra.mxu0 %v1647
      %1781 = vmatprep.mubr.bf16.mxu0 %v1126
      %1782 = vmatmul.mubr.bf16.gmra.mrb[0].mxu0 %v1125
      %v1783 = vpop.f32.mrb[0].mxu0
      %v1784 = vadd.f32 %v1242, %v1783
      %v1785 = vpop.f32.mrb[0].mxu0
      %v1786 = vadd.f32 %v1246, %v1785
      %v1787 = vpop.f32.mrb[0].mxu0
      %v1788 = vadd.f32 %v1242, %v1787
      %v1789 = vpop.f32.mrb[0].mxu0
      %v1790 = vadd.f32 %v1246, %v1789
      %1791 = vmatprep.mubr.bf16.mxu0 %v1128
      %1792 = vmatmul.mubr.bf16.gmra.mrb[0].mxu0 %v1127
      %v1793 = vpop.f32.mrb[0].mxu0
      %v1794 = vadd.f32 %v1242, %v1793
      %v1795 = vpop.f32.mrb[0].mxu0
      %v1796 = vadd.f32 %v1246, %v1795
      %v1797 = vpop.f32.mrb[0].mxu0
      %v1798 = vadd.f32 %v1242, %v1797
      %v1799 = vpop.f32.mrb[0].mxu0
      %v1800 = vadd.f32 %v1246, %v1799
      %1801 = vmatprep.mubr.bf16.mxu0 %v1130
      %1802 = vmatmul.mubr.bf16.gmra.mrb[0].mxu0 %v1129
      %v1803 = vpop.f32.mrb[0].mxu0
      %v1804 = vadd.f32 %v1242, %v1803
      %v1805 = vpop.f32.mrb[0].mxu0
      %v1806 = vadd.f32 %v1246, %v1805
      %v1807 = vpop.f32.mrb[0].mxu0
      %v1808 = vadd.f32 %v1242, %v1807
      %v1809 = vpop.f32.mrb[0].mxu0
      %v1810 = vadd.f32 %v1246, %v1809
      %1811 = vmatprep.mubr.bf16.mxu0 %v1132
      %1812 = vmatmul.mubr.bf16.gmra.mrb[0].mxu0 %v1131
      %v1813 = vpop.f32.mrb[0].mxu0
      %v1814 = vadd.f32 %v1242, %v1813
      %v1815 = vpop.f32.mrb[0].mxu0
      %v1816 = vadd.f32 %v1246, %v1815
      %v1817 = vpop.f32.mrb[0].mxu0
      %v1818 = vadd.f32 %v1242, %v1817
      %v1819 = vpop.f32.mrb[0].mxu0
      %v1820 = vadd.f32 %v1246, %v1819
      %1821 = vmatprep.mubr.bf16.mxu0 %v1134
      %1822 = vmatmul.mubr.bf16.gmra.mrb[0].mxu0 %v1133
      %v1823 = vpop.f32.mrb[0].mxu0
      %v1824 = vadd.f32 %v1242, %v1823
      %v1825 = vpop.f32.mrb[0].mxu0
      %v1826 = vadd.f32 %v1246, %v1825
      %v1827 = vpop.f32.mrb[0].mxu0
      %v1828 = vadd.f32 %v1242, %v1827
      %v1829 = vpop.f32.mrb[0].mxu0
      %v1830 = vadd.f32 %v1246, %v1829
      %1831 = vmatprep.mubr.bf16.mxu0 %v1136
      %1832 = vmatmul.mubr.bf16.gmra.mrb[0].mxu0 %v1135
      %v1833 = vpop.f32.mrb[0].mxu0
      %v1834 = vadd.f32 %v1242, %v1833
      %v1835 = vpop.f32.mrb[0].mxu0
      %v1836 = vadd.f32 %v1246, %v1835
      %v1837 = vpop.f32.mrb[0].mxu0
      %v1838 = vadd.f32 %v1242, %v1837
      %v1839 = vpop.f32.mrb[0].mxu0
      %v1840 = vadd.f32 %v1246, %v1839
      %1841 = vmatprep.mubr.bf16.mxu0 %v1138
      %1842 = vmatmul.mubr.bf16.gmra.mrb[0].mxu0 %v1137
      %v1843 = vpop.f32.mrb[0].mxu0
      %v1844 = vadd.f32 %v1242, %v1843
      %v1845 = vpop.f32.mrb[0].mxu0
      %v1846 = vadd.f32 %v1246, %v1845
      %v1847 = vpop.f32.mrb[0].mxu0
      %v1848 = vadd.f32 %v1242, %v1847
      %v1849 = vpop.f32.mrb[0].mxu0
      %v1850 = vadd.f32 %v1246, %v1849
      %1851 = vmatprep.mubr.bf16.mxu0 %v1140
      %1852 = vmatmul.mubr.bf16.gmra.mrb[0].mxu0 %v1139
      %v1853 = vpop.f32.mrb[0].mxu0
      %v1854 = vadd.f32 %v1242, %v1853
      %v1855 = vpop.f32.mrb[0].mxu0
      %v1856 = vadd.f32 %v1246, %v1855
      %v1857 = vpop.f32.mrb[0].mxu0
      %v1858 = vadd.f32 %v1242, %v1857
      %v1859 = vpop.f32.mrb[0].mxu0
      %v1860 = vadd.f32 %v1246, %v1859
      %1861 = vdwg.mxu0
      %1862 = vmatprep.subr.bf16.mxu0 %v1560
      %1863 = vmatpush1.bf16.msra.mxu0 %v1559
      %1864 = vmatprep.subr.bf16.mxu0 %v1566
      %1865 = vmatpush1.bf16.msra.mxu0 %v1565
      %1866 = vmatprep.subr.bf16.mxu0 %v1572
      %1867 = vmatpush1.bf16.msra.mxu0 %v1571
      %1868 = vmatprep.subr.bf16.mxu0 %v1578
      %1869 = vmatpush1.bf16.msra.mxu0 %v1577
      %1870 = vmatprep.subr.bf16.mxu0 %v1584
      %1871 = vmatpush1.bf16.msra.mxu0 %v1583
      %1872 = vmatprep.subr.bf16.mxu0 %v1590
      %1873 = vmatpush1.bf16.msra.mxu0 %v1589
      %1874 = vmatprep.subr.bf16.mxu0 %v1596
      %1875 = vmatpush1.bf16.msra.mxu0 %v1595
      %1876 = vmatprep.subr.bf16.mxu0 %v1602
      %1877 = vmatpush1.bf16.msra.mxu0 %v1601
      %1878 = vmatprep.subr.bf16.mxu0 %v1608
      %1879 = vmatpush1.bf16.msra.mxu0 %v1607
      %1880 = vmatprep.subr.bf16.mxu0 %v1614
      %1881 = vmatpush1.bf16.msra.mxu0 %v1613
      %1882 = vmatprep.subr.bf16.mxu0 %v1620
      %1883 = vmatpush1.bf16.msra.mxu0 %v1619
      %1884 = vmatprep.subr.bf16.mxu0 %v1626
      %1885 = vmatpush1.bf16.msra.mxu0 %v1625
      %1886 = vmatprep.subr.bf16.mxu0 %v1632
      %1887 = vmatpush1.bf16.msra.mxu0 %v1631
      %1888 = vmatprep.subr.bf16.mxu0 %v1638
      %1889 = vmatpush1.bf16.msra.mxu0 %v1637
      %1890 = vmatprep.subr.bf16.mxu0 %v1644
      %1891 = vmatpush1.bf16.msra.mxu0 %v1643
      %1892 = vmatprep.subr.bf16.mxu0 %v1650
      %1893 = vmatpush1.bf16.msra.mxu0 %v1649
      %1894 = vmatprep.mubr.bf16.mxu0 %v1126
      %1895 = vmatmul.mubr.bf16.gmra.mrb[0].mxu0 %v1125
      %v1896 = vpop.f32.mrb[0].mxu0
      %v1897 = vadd.f32 %v1250, %v1896
      %v1898 = vpop.f32.mrb[0].mxu0
      %v1899 = vadd.f32 %v1254, %v1898
      %v1900 = vpop.f32.mrb[0].mxu0
      %v1901 = vadd.f32 %v1250, %v1900
      %v1902 = vpop.f32.mrb[0].mxu0
      %v1903 = vadd.f32 %v1254, %v1902
      %1904 = vmatprep.mubr.bf16.mxu0 %v1128
      %1905 = vmatmul.mubr.bf16.gmra.mrb[0].mxu0 %v1127
      %v1906 = vpop.f32.mrb[0].mxu0
      %v1907 = vadd.f32 %v1250, %v1906
      %v1908 = vpop.f32.mrb[0].mxu0
      %v1909 = vadd.f32 %v1254, %v1908
      %v1910 = vpop.f32.mrb[0].mxu0
      %v1911 = vadd.f32 %v1250, %v1910
      %v1912 = vpop.f32.mrb[0].mxu0
      %v1913 = vadd.f32 %v1254, %v1912
      %1914 = vmatprep.mubr.bf16.mxu0 %v1130
      %1915 = vmatmul.mubr.bf16.gmra.mrb[0].mxu0 %v1129
      %v1916 = vpop.f32.mrb[0].mxu0
      %v1917 = vadd.f32 %v1250, %v1916
      %v1918 = vpop.f32.mrb[0].mxu0
      %v1919 = vadd.f32 %v1254, %v1918
      %v1920 = vpop.f32.mrb[0].mxu0
      %v1921 = vadd.f32 %v1250, %v1920
      %v1922 = vpop.f32.mrb[0].mxu0
      %v1923 = vadd.f32 %v1254, %v1922
      %1924 = vmatprep.mubr.bf16.mxu0 %v1132
      %1925 = vmatmul.mubr.bf16.gmra.mrb[0].mxu0 %v1131
      %v1926 = vpop.f32.mrb[0].mxu0
      %v1927 = vadd.f32 %v1250, %v1926
      %v1928 = vpop.f32.mrb[0].mxu0
      %v1929 = vadd.f32 %v1254, %v1928
      %v1930 = vpop.f32.mrb[0].mxu0
      %v1931 = vadd.f32 %v1250, %v1930
      %v1932 = vpop.f32.mrb[0].mxu0
      %v1933 = vadd.f32 %v1254, %v1932
      %1934 = vmatprep.mubr.bf16.mxu0 %v1134
      %1935 = vmatmul.mubr.bf16.gmra.mrb[0].mxu0 %v1133
      %v1936 = vpop.f32.mrb[0].mxu0
      %v1937 = vadd.f32 %v1250, %v1936
      %v1938 = vpop.f32.mrb[0].mxu0
      %v1939 = vadd.f32 %v1254, %v1938
      %v1940 = vpop.f32.mrb[0].mxu0
      %v1941 = vadd.f32 %v1250, %v1940
      %v1942 = vpop.f32.mrb[0].mxu0
      %v1943 = vadd.f32 %v1254, %v1942
      %1944 = vmatprep.mubr.bf16.mxu0 %v1136
      %1945 = vmatmul.mubr.bf16.gmra.mrb[0].mxu0 %v1135
      %v1946 = vpop.f32.mrb[0].mxu0
      %v1947 = vadd.f32 %v1250, %v1946
      %v1948 = vpop.f32.mrb[0].mxu0
      %v1949 = vadd.f32 %v1254, %v1948
      %v1950 = vpop.f32.mrb[0].mxu0
      %v1951 = vadd.f32 %v1250, %v1950
      %v1952 = vpop.f32.mrb[0].mxu0
      %v1953 = vadd.f32 %v1254, %v1952
      %1954 = vmatprep.mubr.bf16.mxu0 %v1138
      %1955 = vmatmul.mubr.bf16.gmra.mrb[0].mxu0 %v1137
      %v1956 = vpop.f32.mrb[0].mxu0
      %v1957 = vadd.f32 %v1250, %v1956
      %v1958 = vpop.f32.mrb[0].mxu0
      %v1959 = vadd.f32 %v1254, %v1958
      %v1960 = vpop.f32.mrb[0].mxu0
      %v1961 = vadd.f32 %v1250, %v1960
      %v1962 = vpop.f32.mrb[0].mxu0
      %v1963 = vadd.f32 %v1254, %v1962
      %1964 = vmatprep.mubr.bf16.mxu0 %v1140
      %1965 = vmatmul.mubr.bf16.gmra.mrb[0].mxu0 %v1139
      %v1966 = vpop.f32.mrb[0].mxu0
      %v1967 = vadd.f32 %v1250, %v1966
      %v1968 = vpop.f32.mrb[0].mxu0
      %v1969 = vadd.f32 %v1254, %v1968
      %v1970 = vpop.f32.mrb[0].mxu0
      %v1971 = vadd.f32 %v1250, %v1970
      %v1972 = vpop.f32.mrb[0].mxu0
      %v1973 = vadd.f32 %v1254, %v1972
      %1974 = vdwg.mxu0
      %1975 = vmatprep.subr.bf16.mxu0 %v1562
      %1976 = vmatpush1.bf16.msra.mxu0 %v1561
      %1977 = vmatprep.subr.bf16.mxu0 %v1568
      %1978 = vmatpush1.bf16.msra.mxu0 %v1567
      %1979 = vmatprep.subr.bf16.mxu0 %v1574
      %1980 = vmatpush1.bf16.msra.mxu0 %v1573
      %1981 = vmatprep.subr.bf16.mxu0 %v1580
      %1982 = vmatpush1.bf16.msra.mxu0 %v1579
      %1983 = vmatprep.subr.bf16.mxu0 %v1586
      %1984 = vmatpush1.bf16.msra.mxu0 %v1585
      %1985 = vmatprep.subr.bf16.mxu0 %v1592
      %1986 = vmatpush1.bf16.msra.mxu0 %v1591
      %1987 = vmatprep.subr.bf16.mxu0 %v1598
      %1988 = vmatpush1.bf16.msra.mxu0 %v1597
      %1989 = vmatprep.subr.bf16.mxu0 %v1604
      %1990 = vmatpush1.bf16.msra.mxu0 %v1603
      %1991 = vmatprep.subr.bf16.mxu0 %v1610
      %1992 = vmatpush1.bf16.msra.mxu0 %v1609
      %1993 = vmatprep.subr.bf16.mxu0 %v1616
      %1994 = vmatpush1.bf16.msra.mxu0 %v1615
      %1995 = vmatprep.subr.bf16.mxu0 %v1622
      %1996 = vmatpush1.bf16.msra.mxu0 %v1621
      %1997 = vmatprep.subr.bf16.mxu0 %v1628
      %1998 = vmatpush1.bf16.msra.mxu0 %v1627
      %1999 = vmatprep.subr.bf16.mxu0 %v1634
      %2000 = vmatpush1.bf16.msra.mxu0 %v1633
      %2001 = vmatprep.subr.bf16.mxu0 %v1640
      %2002 = vmatpush1.bf16.msra.mxu0 %v1639
      %2003 = vmatprep.subr.bf16.mxu0 %v1646
      %2004 = vmatpush1.bf16.msra.mxu0 %v1645
      %2005 = vmatprep.subr.bf16.mxu0 %v1652
      %2006 = vmatpush1.bf16.msra.mxu0 %v1651
      %2007 = vmatprep.mubr.bf16.mxu0 %v1126
      %2008 = vmatmul.mubr.bf16.gmra.mrb[0].mxu0 %v1125
      %v2009 = vpop.f32.mrb[0].mxu0
      %v2010 = vadd.f32 %v1258, %v2009
      %v2011 = vpop.f32.mrb[0].mxu0
      %v2012 = vadd.f32 %v1262, %v2011
      %v2013 = vpop.f32.mrb[0].mxu0
      %v2014 = vadd.f32 %v1258, %v2013
      %v2015 = vpop.f32.mrb[0].mxu0
      %v2016 = vadd.f32 %v1262, %v2015
      %2017 = vmatprep.mubr.bf16.mxu0 %v1128
      %2018 = vmatmul.mubr.bf16.gmra.mrb[0].mxu0 %v1127
      %v2019 = vpop.f32.mrb[0].mxu0
      %v2020 = vadd.f32 %v1258, %v2019
      %v2021 = vpop.f32.mrb[0].mxu0
      %v2022 = vadd.f32 %v1262, %v2021
      %v2023 = vpop.f32.mrb[0].mxu0
      %v2024 = vadd.f32 %v1258, %v2023
      %v2025 = vpop.f32.mrb[0].mxu0
      %v2026 = vadd.f32 %v1262, %v2025
      %2027 = vmatprep.mubr.bf16.mxu0 %v1130
      %2028 = vmatmul.mubr.bf16.gmra.mrb[0].mxu0 %v1129
      %v2029 = vpop.f32.mrb[0].mxu0
      %v2030 = vadd.f32 %v1258, %v2029
      %v2031 = vpop.f32.mrb[0].mxu0
      %v2032 = vadd.f32 %v1262, %v2031
      %v2033 = vpop.f32.mrb[0].mxu0
      %v2034 = vadd.f32 %v1258, %v2033
      %v2035 = vpop.f32.mrb[0].mxu0
      %v2036 = vadd.f32 %v1262, %v2035
      %2037 = vmatprep.mubr.bf16.mxu0 %v1132
      %2038 = vmatmul.mubr.bf16.gmra.mrb[0].mxu0 %v1131
      %v2039 = vpop.f32.mrb[0].mxu0
      %v2040 = vadd.f32 %v1258, %v2039
      %v2041 = vpop.f32.mrb[0].mxu0
      %v2042 = vadd.f32 %v1262, %v2041
      %v2043 = vpop.f32.mrb[0].mxu0
      %v2044 = vadd.f32 %v1258, %v2043
      %v2045 = vpop.f32.mrb[0].mxu0
      %v2046 = vadd.f32 %v1262, %v2045
      %2047 = vmatprep.mubr.bf16.mxu0 %v1134
      %2048 = vmatmul.mubr.bf16.gmra.mrb[0].mxu0 %v1133
      %v2049 = vpop.f32.mrb[0].mxu0
      %v2050 = vadd.f32 %v1258, %v2049
      %v2051 = vpop.f32.mrb[0].mxu0
      %v2052 = vadd.f32 %v1262, %v2051
      %v2053 = vpop.f32.mrb[0].mxu0
      %v2054 = vadd.f32 %v1258, %v2053
      %v2055 = vpop.f32.mrb[0].mxu0
      %v2056 = vadd.f32 %v1262, %v2055
      %2057 = vmatprep.mubr.bf16.mxu0 %v1136
      %2058 = vmatmul.mubr.bf16.gmra.mrb[0].mxu0 %v1135
      %v2059 = vpop.f32.mrb[0].mxu0
      %v2060 = vadd.f32 %v1258, %v2059
      %v2061 = vpop.f32.mrb[0].mxu0
      %v2062 = vadd.f32 %v1262, %v2061
      %v2063 = vpop.f32.mrb[0].mxu0
      %v2064 = vadd.f32 %v1258, %v2063
      %v2065 = vpop.f32.mrb[0].mxu0
      %v2066 = vadd.f32 %v1262, %v2065
      %2067 = vmatprep.mubr.bf16.mxu0 %v1138
      %2068 = vmatmul.mubr.bf16.gmra.mrb[0].mxu0 %v1137
      %v2069 = vpop.f32.mrb[0].mxu0
      %v2070 = vadd.f32 %v1258, %v2069
      %v2071 = vpop.f32.mrb[0].mxu0
      %v2072 = vadd.f32 %v1262, %v2071
      %v2073 = vpop.f32.mrb[0].mxu0
      %v2074 = vadd.f32 %v1258, %v2073
      %v2075 = vpop.f32.mrb[0].mxu0
      %v2076 = vadd.f32 %v1262, %v2075
      %2077 = vmatprep.mubr.bf16.mxu0 %v1140
      %2078 = vmatmul.mubr.bf16.gmra.mrb[0].mxu0 %v1139
      %v2079 = vpop.f32.mrb[0].mxu0
      %v2080 = vadd.f32 %v1258, %v2079
      %v2081 = vpop.f32.mrb[0].mxu0
      %v2082 = vadd.f32 %v1262, %v2081
      %v2083 = vpop.f32.mrb[0].mxu0
      %v2084 = vadd.f32 %v1258, %v2083
      %v2085 = vpop.f32.mrb[0].mxu0
      %v2086 = vadd.f32 %v1262, %v2085
      %2087 = vdwg.mxu0
      %vm2088 = vcmp.gt.f32.partialorder %v1784, 0.0
      %vm2089 = vcmp.gt.f32.partialorder %v1786, 0.0
      %vm2090 = vcmp.gt.f32.partialorder %v1897, 0.0
      %vm2091 = vcmp.gt.f32.partialorder %v1899, 0.0
      %vm2092 = vcmp.gt.f32.partialorder %v2010, 0.0
      %vm2093 = vcmp.gt.f32.partialorder %v2012, 0.0
      %vm2094 = vcmp.gt.f32.partialorder %v1788, 0.0
      %vm2095 = vcmp.gt.f32.partialorder %v1790, 0.0
      %vm2096 = vcmp.gt.f32.partialorder %v1901, 0.0
      %vm2097 = vcmp.gt.f32.partialorder %v1903, 0.0
      %vm2098 = vcmp.gt.f32.partialorder %v2014, 0.0
      %vm2099 = vcmp.gt.f32.partialorder %v2016, 0.0
      %vm2100 = vcmp.gt.f32.partialorder %v1794, 0.0
      %vm2101 = vcmp.gt.f32.partialorder %v1796, 0.0
      %vm2102 = vcmp.gt.f32.partialorder %v1907, 0.0
      %vm2103 = vcmp.gt.f32.partialorder %v1909, 0.0
      %vm2104 = vcmp.gt.f32.partialorder %v2020, 0.0
      %vm2105 = vcmp.gt.f32.partialorder %v2022, 0.0
      %vm2106 = vcmp.gt.f32.partialorder %v1798, 0.0
      %vm2107 = vcmp.gt.f32.partialorder %v1800, 0.0
      %vm2108 = vcmp.gt.f32.partialorder %v1911, 0.0
      %vm2109 = vcmp.gt.f32.partialorder %v1913, 0.0
      %vm2110 = vcmp.gt.f32.partialorder %v2024, 0.0
      %vm2111 = vcmp.gt.f32.partialorder %v2026, 0.0
      %vm2112 = vcmp.gt.f32.partialorder %v1804, 0.0
      %vm2113 = vcmp.gt.f32.partialorder %v1806, 0.0
      %vm2114 = vcmp.gt.f32.partialorder %v1917, 0.0
      %vm2115 = vcmp.gt.f32.partialorder %v1919, 0.0
      %vm2116 = vcmp.gt.f32.partialorder %v2030, 0.0
      %vm2117 = vcmp.gt.f32.partialorder %v2032, 0.0
      %vm2118 = vcmp.gt.f32.partialorder %v1808, 0.0
      %vm2119 = vcmp.gt.f32.partialorder %v1810, 0.0
      %vm2120 = vcmp.gt.f32.partialorder %v1921, 0.0
      %vm2121 = vcmp.gt.f32.partialorder %v1923, 0.0
      %vm2122 = vcmp.gt.f32.partialorder %v2034, 0.0
      %vm2123 = vcmp.gt.f32.partialorder %v2036, 0.0
      %vm2124 = vcmp.gt.f32.partialorder %v1814, 0.0
      %vm2125 = vcmp.gt.f32.partialorder %v1816, 0.0
      %vm2126 = vcmp.gt.f32.partialorder %v1927, 0.0
      %vm2127 = vcmp.gt.f32.partialorder %v1929, 0.0
      %vm2128 = vcmp.gt.f32.partialorder %v2040, 0.0
      %vm2129 = vcmp.gt.f32.partialorder %v2042, 0.0
      %vm2130 = vcmp.gt.f32.partialorder %v1818, 0.0
      %vm2131 = vcmp.gt.f32.partialorder %v1820, 0.0
      %vm2132 = vcmp.gt.f32.partialorder %v1931, 0.0
      %vm2133 = vcmp.gt.f32.partialorder %v1933, 0.0
      %vm2134 = vcmp.gt.f32.partialorder %v2044, 0.0
      %vm2135 = vcmp.gt.f32.partialorder %v2046, 0.0
      %vm2136 = vcmp.gt.f32.partialorder %v1824, 0.0
      %vm2137 = vcmp.gt.f32.partialorder %v1826, 0.0
      %vm2138 = vcmp.gt.f32.partialorder %v1937, 0.0
      %vm2139 = vcmp.gt.f32.partialorder %v1939, 0.0
      %vm2140 = vcmp.gt.f32.partialorder %v2050, 0.0
      %vm2141 = vcmp.gt.f32.partialorder %v2052, 0.0
      %vm2142 = vcmp.gt.f32.partialorder %v1828, 0.0
      %vm2143 = vcmp.gt.f32.partialorder %v1830, 0.0
      %vm2144 = vcmp.gt.f32.partialorder %v1941, 0.0
      %vm2145 = vcmp.gt.f32.partialorder %v1943, 0.0
      %vm2146 = vcmp.gt.f32.partialorder %v2054, 0.0
      %vm2147 = vcmp.gt.f32.partialorder %v2056, 0.0
      %vm2148 = vcmp.gt.f32.partialorder %v1834, 0.0
      %vm2149 = vcmp.gt.f32.partialorder %v1836, 0.0
      %vm2150 = vcmp.gt.f32.partialorder %v1947, 0.0
      %vm2151 = vcmp.gt.f32.partialorder %v1949, 0.0
      %vm2152 = vcmp.gt.f32.partialorder %v2060, 0.0
      %vm2153 = vcmp.gt.f32.partialorder %v2062, 0.0
      %vm2154 = vcmp.gt.f32.partialorder %v1838, 0.0
      %vm2155 = vcmp.gt.f32.partialorder %v1840, 0.0
      %vm2156 = vcmp.gt.f32.partialorder %v1951, 0.0
      %vm2157 = vcmp.gt.f32.partialorder %v1953, 0.0
      %vm2158 = vcmp.gt.f32.partialorder %v2064, 0.0
      %vm2159 = vcmp.gt.f32.partialorder %v2066, 0.0
      %vm2160 = vcmp.gt.f32.partialorder %v1844, 0.0
      %vm2161 = vcmp.gt.f32.partialorder %v1846, 0.0
      %vm2162 = vcmp.gt.f32.partialorder %v1957, 0.0
      %vm2163 = vcmp.gt.f32.partialorder %v1959, 0.0
      %vm2164 = vcmp.gt.f32.partialorder %v2070, 0.0
      %vm2165 = vcmp.gt.f32.partialorder %v2072, 0.0
      %vm2166 = vcmp.gt.f32.partialorder %v1848, 0.0
      %vm2167 = vcmp.gt.f32.partialorder %v1850, 0.0
      %vm2168 = vcmp.gt.f32.partialorder %v1961, 0.0
      %vm2169 = vcmp.gt.f32.partialorder %v1963, 0.0
      %vm2170 = vcmp.gt.f32.partialorder %v2074, 0.0
      %vm2171 = vcmp.gt.f32.partialorder %v2076, 0.0
      %vm2172 = vcmp.gt.f32.partialorder %v1854, 0.0
      %vm2173 = vcmp.gt.f32.partialorder %v1856, 0.0
      %vm2174 = vcmp.gt.f32.partialorder %v1967, 0.0
      %vm2175 = vcmp.gt.f32.partialorder %v1969, 0.0
      %vm2176 = vcmp.gt.f32.partialorder %v2080, 0.0
      %vm2177 = vcmp.gt.f32.partialorder %v2082, 0.0
      %vm2178 = vcmp.gt.f32.partialorder %v1858, 0.0
      %vm2179 = vcmp.gt.f32.partialorder %v1860, 0.0
      %vm2180 = vcmp.gt.f32.partialorder %v1971, 0.0
      %vm2181 = vcmp.gt.f32.partialorder %v1973, 0.0
      %vm2182 = vcmp.gt.f32.partialorder %v2084, 0.0
      %vm2183 = vcmp.gt.f32.partialorder %v2086, 0.0
      %v2184 = vmul.f32 %v1784, 1.442695
      %v2185 = vpow.pop %v2184
      %v2186 = vmul.f32 %v1786, 1.442695
      %v2187 = vpow.pop %v2186
      %v2188 = vmul.f32 %v1897, 1.442695
      %v2189 = vpow.pop %v2188
      %v2190 = vmul.f32 %v1899, 1.442695
      %v2191 = vpow.pop %v2190
      %v2192 = vmul.f32 %v2010, 1.442695
      %v2193 = vpow.pop %v2192
      %v2194 = vmul.f32 %v2012, 1.442695
      %v2195 = vpow.pop %v2194
      %v2196 = vmul.f32 %v1788, 1.442695
      %v2197 = vpow.pop %v2196
      %v2198 = vmul.f32 %v1790, 1.442695
      %v2199 = vpow.pop %v2198
      %v2200 = vmul.f32 %v1901, 1.442695
      %v2201 = vpow.pop %v2200
      %v2202 = vmul.f32 %v1903, 1.442695
      %v2203 = vpow.pop %v2202
      %v2204 = vmul.f32 %v2014, 1.442695
      %v2205 = vpow.pop %v2204
      %v2206 = vmul.f32 %v2016, 1.442695
      %v2207 = vpow.pop %v2206
      %v2208 = vmul.f32 %v1794, 1.442695
      %v2209 = vpow.pop %v2208
      %v2210 = vmul.f32 %v1796, 1.442695
      %v2211 = vpow.pop %v2210
      %v2212 = vmul.f32 %v1907, 1.442695
      %v2213 = vpow.pop %v2212
      %v2214 = vmul.f32 %v1909, 1.442695
      %v2215 = vpow.pop %v2214
      %v2216 = vmul.f32 %v2020, 1.442695
      %v2217 = vpow.pop %v2216
      %v2218 = vmul.f32 %v2022, 1.442695
      %v2219 = vpow.pop %v2218
      %v2220 = vmul.f32 %v1798, 1.442695
      %v2221 = vpow.pop %v2220
      %v2222 = vmul.f32 %v1800, 1.442695
      %v2223 = vpow.pop %v2222
      %v2224 = vmul.f32 %v1911, 1.442695
      %v2225 = vpow.pop %v2224
      %v2226 = vmul.f32 %v1913, 1.442695
      %v2227 = vpow.pop %v2226
      %v2228 = vmul.f32 %v2024, 1.442695
      %v2229 = vpow.pop %v2228
      %v2230 = vmul.f32 %v2026, 1.442695
      %v2231 = vpow.pop %v2230
      %v2232 = vmul.f32 %v1804, 1.442695
      %v2233 = vpow.pop %v2232
      %v2234 = vmul.f32 %v1806, 1.442695
      %v2235 = vpow.pop %v2234
      %v2236 = vmul.f32 %v1917, 1.442695
      %v2237 = vpow.pop %v2236
      %v2238 = vmul.f32 %v1919, 1.442695
      %v2239 = vpow.pop %v2238
      %v2240 = vmul.f32 %v2030, 1.442695
      %v2241 = vpow.pop %v2240
      %v2242 = vmul.f32 %v2032, 1.442695
      %v2243 = vpow.pop %v2242
      %v2244 = vmul.f32 %v1808, 1.442695
      %v2245 = vpow.pop %v2244
      %v2246 = vmul.f32 %v1810, 1.442695
      %v2247 = vpow.pop %v2246
      %v2248 = vmul.f32 %v1921, 1.442695
      %v2249 = vpow.pop %v2248
      %v2250 = vmul.f32 %v1923, 1.442695
      %v2251 = vpow.pop %v2250
      %v2252 = vmul.f32 %v2034, 1.442695
      %v2253 = vpow.pop %v2252
      %v2254 = vmul.f32 %v2036, 1.442695
      %v2255 = vpow.pop %v2254
      %v2256 = vmul.f32 %v1814, 1.442695
      %v2257 = vpow.pop %v2256
      %v2258 = vmul.f32 %v1816, 1.442695
      %v2259 = vpow.pop %v2258
      %v2260 = vmul.f32 %v1927, 1.442695
      %v2261 = vpow.pop %v2260
      %v2262 = vmul.f32 %v1929, 1.442695
      %v2263 = vpow.pop %v2262
      %v2264 = vmul.f32 %v2040, 1.442695
      %v2265 = vpow.pop %v2264
      %v2266 = vmul.f32 %v2042, 1.442695
      %v2267 = vpow.pop %v2266
      %v2268 = vmul.f32 %v1818, 1.442695
      %v2269 = vpow.pop %v2268
      %v2270 = vmul.f32 %v1820, 1.442695
      %v2271 = vpow.pop %v2270
      %v2272 = vmul.f32 %v1931, 1.442695
      %v2273 = vpow.pop %v2272
      %v2274 = vmul.f32 %v1933, 1.442695
      %v2275 = vpow.pop %v2274
      %v2276 = vmul.f32 %v2044, 1.442695
      %v2277 = vpow.pop %v2276
      %v2278 = vmul.f32 %v2046, 1.442695
      %v2279 = vpow.pop %v2278
      %v2280 = vmul.f32 %v1824, 1.442695
      %v2281 = vpow.pop %v2280
      %v2282 = vmul.f32 %v1826, 1.442695
      %v2283 = vpow.pop %v2282
      %v2284 = vmul.f32 %v1937, 1.442695
      %v2285 = vpow.pop %v2284
      %v2286 = vmul.f32 %v1939, 1.442695
      %v2287 = vpow.pop %v2286
      %v2288 = vmul.f32 %v2050, 1.442695
      %v2289 = vpow.pop %v2288
      %v2290 = vmul.f32 %v2052, 1.442695
      %v2291 = vpow.pop %v2290
      %v2292 = vmul.f32 %v1828, 1.442695
      %v2293 = vpow.pop %v2292
      %v2294 = vmul.f32 %v1830, 1.442695
      %v2295 = vpow.pop %v2294
      %v2296 = vmul.f32 %v1941, 1.442695
      %v2297 = vpow.pop %v2296
      %v2298 = vmul.f32 %v1943, 1.442695
      %v2299 = vpow.pop %v2298
      %v2300 = vmul.f32 %v2054, 1.442695
      %v2301 = vpow.pop %v2300
      %v2302 = vmul.f32 %v2056, 1.442695
      %v2303 = vpow.pop %v2302
      %v2304 = vmul.f32 %v1834, 1.442695
      %v2305 = vpow.pop %v2304
      %v2306 = vmul.f32 %v1836, 1.442695
      %v2307 = vpow.pop %v2306
      %v2308 = vmul.f32 %v1947, 1.442695
      %v2309 = vpow.pop %v2308
      %v2310 = vmul.f32 %v1949, 1.442695
      %v2311 = vpow.pop %v2310
      %v2312 = vmul.f32 %v2060, 1.442695
      %v2313 = vpow.pop %v2312
      %v2314 = vmul.f32 %v2062, 1.442695
      %v2315 = vpow.pop %v2314
      %v2316 = vmul.f32 %v1838, 1.442695
      %v2317 = vpow.pop %v2316
      %v2318 = vmul.f32 %v1840, 1.442695
      %v2319 = vpow.pop %v2318
      %v2320 = vmul.f32 %v1951, 1.442695
      %v2321 = vpow.pop %v2320
      %v2322 = vmul.f32 %v1953, 1.442695
      %v2323 = vpow.pop %v2322
      %v2324 = vmul.f32 %v2064, 1.442695
      %v2325 = vpow.pop %v2324
      %v2326 = vmul.f32 %v2066, 1.442695
      %v2327 = vpow.pop %v2326
      %v2328 = vmul.f32 %v1844, 1.442695
      %v2329 = vpow.pop %v2328
      %v2330 = vmul.f32 %v1846, 1.442695
      %v2331 = vpow.pop %v2330
      %v2332 = vmul.f32 %v1957, 1.442695
      %v2333 = vpow.pop %v2332
      %v2334 = vmul.f32 %v1959, 1.442695
      %v2335 = vpow.pop %v2334
      %v2336 = vmul.f32 %v2070, 1.442695
      %v2337 = vpow.pop %v2336
      %v2338 = vmul.f32 %v2072, 1.442695
      %v2339 = vpow.pop %v2338
      %v2340 = vmul.f32 %v1848, 1.442695
      %v2341 = vpow.pop %v2340
      %v2342 = vmul.f32 %v1850, 1.442695
      %v2343 = vpow.pop %v2342
      %v2344 = vmul.f32 %v1961, 1.442695
      %v2345 = vpow.pop %v2344
      %v2346 = vmul.f32 %v1963, 1.442695
      %v2347 = vpow.pop %v2346
      %v2348 = vmul.f32 %v2074, 1.442695
      %v2349 = vpow.pop %v2348
      %v2350 = vmul.f32 %v2076, 1.442695
      %v2351 = vpow.pop %v2350
      %v2352 = vmul.f32 %v1854, 1.442695
      %v2353 = vpow.pop %v2352
      %v2354 = vmul.f32 %v1856, 1.442695
      %v2355 = vpow.pop %v2354
      %v2356 = vmul.f32 %v1967, 1.442695
      %v2357 = vpow.pop %v2356
      %v2358 = vmul.f32 %v1969, 1.442695
      %v2359 = vpow.pop %v2358
      %v2360 = vmul.f32 %v2080, 1.442695
      %v2361 = vpow.pop %v2360
      %v2362 = vmul.f32 %v2082, 1.442695
      %v2363 = vpow.pop %v2362
      %v2364 = vmul.f32 %v1858, 1.442695
      %v2365 = vpow.pop %v2364
      %v2366 = vmul.f32 %v1860, 1.442695
      %v2367 = vpow.pop %v2366
      %v2368 = vmul.f32 %v1971, 1.442695
      %v2369 = vpow.pop %v2368
      %v2370 = vmul.f32 %v1973, 1.442695
      %v2371 = vpow.pop %v2370
      %v2372 = vmul.f32 %v2084, 1.442695
      %v2373 = vpow.pop %v2372
      %v2374 = vmul.f32 %v2086, 1.442695
      %v2375 = vpow.pop %v2374
      %v2376 = vsub.f32 %v2185, 1.0
      %v2377 = vsub.f32 %v2187, 1.0
      %v2378 = vsub.f32 %v2189, 1.0
      %v2379 = vsub.f32 %v2191, 1.0
      %v2380 = vsub.f32 %v2193, 1.0
      %v2381 = vsub.f32 %v2195, 1.0
      %v2382 = vsub.f32 %v2197, 1.0
      %v2383 = vsub.f32 %v2199, 1.0
      %v2384 = vsub.f32 %v2201, 1.0
      %v2385 = vsub.f32 %v2203, 1.0
      %v2386 = vsub.f32 %v2205, 1.0
      %v2387 = vsub.f32 %v2207, 1.0
      %v2388 = vsub.f32 %v2209, 1.0
      %v2389 = vsub.f32 %v2211, 1.0
      %v2390 = vsub.f32 %v2213, 1.0
      %v2391 = vsub.f32 %v2215, 1.0
      %v2392 = vsub.f32 %v2217, 1.0
      %v2393 = vsub.f32 %v2219, 1.0
      %v2394 = vsub.f32 %v2221, 1.0
      %v2395 = vsub.f32 %v2223, 1.0
      %v2396 = vsub.f32 %v2225, 1.0
      %v2397 = vsub.f32 %v2227, 1.0
      %v2398 = vsub.f32 %v2229, 1.0
      %v2399 = vsub.f32 %v2231, 1.0
      %v2400 = vsub.f32 %v2233, 1.0
      %v2401 = vsub.f32 %v2235, 1.0
      %v2402 = vsub.f32 %v2237, 1.0
      %v2403 = vsub.f32 %v2239, 1.0
      %v2404 = vsub.f32 %v2241, 1.0
      %v2405 = vsub.f32 %v2243, 1.0
      %v2406 = vsub.f32 %v2245, 1.0
      %v2407 = vsub.f32 %v2247, 1.0
      %v2408 = vsub.f32 %v2249, 1.0
      %v2409 = vsub.f32 %v2251, 1.0
      %v2410 = vsub.f32 %v2253, 1.0
      %v2411 = vsub.f32 %v2255, 1.0
      %v2412 = vsub.f32 %v2257, 1.0
      %v2413 = vsub.f32 %v2259, 1.0
      %v2414 = vsub.f32 %v2261, 1.0
      %v2415 = vsub.f32 %v2263, 1.0
      %v2416 = vsub.f32 %v2265, 1.0
      %v2417 = vsub.f32 %v2267, 1.0
      %v2418 = vsub.f32 %v2269, 1.0
      %v2419 = vsub.f32 %v2271, 1.0
      %v2420 = vsub.f32 %v2273, 1.0
      %v2421 = vsub.f32 %v2275, 1.0
      %v2422 = vsub.f32 %v2277, 1.0
      %v2423 = vsub.f32 %v2279, 1.0
      %v2424 = vsub.f32 %v2281, 1.0
      %v2425 = vsub.f32 %v2283, 1.0
      %v2426 = vsub.f32 %v2285, 1.0
      %v2427 = vsub.f32 %v2287, 1.0
      %v2428 = vsub.f32 %v2289, 1.0
      %v2429 = vsub.f32 %v2291, 1.0
      %v2430 = vsub.f32 %v2293, 1.0
      %v2431 = vsub.f32 %v2295, 1.0
      %v2432 = vsub.f32 %v2297, 1.0
      %v2433 = vsub.f32 %v2299, 1.0
      %v2434 = vsub.f32 %v2301, 1.0
      %v2435 = vsub.f32 %v2303, 1.0
      %v2436 = vsub.f32 %v2305, 1.0
      %v2437 = vsub.f32 %v2307, 1.0
      %v2438 = vsub.f32 %v2309, 1.0
      %v2439 = vsub.f32 %v2311, 1.0
      %v2440 = vsub.f32 %v2313, 1.0
      %v2441 = vsub.f32 %v2315, 1.0
      %v2442 = vsub.f32 %v2317, 1.0
      %v2443 = vsub.f32 %v2319, 1.0
      %v2444 = vsub.f32 %v2321, 1.0
      %v2445 = vsub.f32 %v2323, 1.0
      %v2446 = vsub.f32 %v2325, 1.0
      %v2447 = vsub.f32 %v2327, 1.0
      %v2448 = vsub.f32 %v2329, 1.0
      %v2449 = vsub.f32 %v2331, 1.0
      %v2450 = vsub.f32 %v2333, 1.0
      %v2451 = vsub.f32 %v2335, 1.0
      %v2452 = vsub.f32 %v2337, 1.0
      %v2453 = vsub.f32 %v2339, 1.0
      %v2454 = vsub.f32 %v2341, 1.0
      %v2455 = vsub.f32 %v2343, 1.0
      %v2456 = vsub.f32 %v2345, 1.0
      %v2457 = vsub.f32 %v2347, 1.0
      %v2458 = vsub.f32 %v2349, 1.0
      %v2459 = vsub.f32 %v2351, 1.0
      %v2460 = vsub.f32 %v2353, 1.0
      %v2461 = vsub.f32 %v2355, 1.0
      %v2462 = vsub.f32 %v2357, 1.0
      %v2463 = vsub.f32 %v2359, 1.0
      %v2464 = vsub.f32 %v2361, 1.0
      %v2465 = vsub.f32 %v2363, 1.0
      %v2466 = vsub.f32 %v2365, 1.0
      %v2467 = vsub.f32 %v2367, 1.0
      %v2468 = vsub.f32 %v2369, 1.0
      %v2469 = vsub.f32 %v2371, 1.0
      %v2470 = vsub.f32 %v2373, 1.0
      %v2471 = vsub.f32 %v2375, 1.0
      %v2472 = vsel %vm2088, %v1784, %v2376
      %v2473 = vsel %vm2089, %v1786, %v2377
      %v2474 = vsel %vm2090, %v1897, %v2378
      %v2475 = vsel %vm2091, %v1899, %v2379
      %v2476 = vsel %vm2092, %v2010, %v2380
      %v2477 = vsel %vm2093, %v2012, %v2381
      %v2478 = vsel %vm2094, %v1788, %v2382
      %v2479 = vsel %vm2095, %v1790, %v2383
      %v2480 = vsel %vm2096, %v1901, %v2384
      %v2481 = vsel %vm2097, %v1903, %v2385
      %v2482 = vsel %vm2098, %v2014, %v2386
      %v2483 = vsel %vm2099, %v2016, %v2387
      %v2484 = vsel %vm2100, %v1794, %v2388
      %v2485 = vsel %vm2101, %v1796, %v2389
      %v2486 = vsel %vm2102, %v1907, %v2390
      %v2487 = vsel %vm2103, %v1909, %v2391
      %v2488 = vsel %vm2104, %v2020, %v2392
      %v2489 = vsel %vm2105, %v2022, %v2393
      %v2490 = vsel %vm2106, %v1798, %v2394
      %v2491 = vsel %vm2107, %v1800, %v2395
      %v2492 = vsel %vm2108, %v1911, %v2396
      %v2493 = vsel %vm2109, %v1913, %v2397
      %v2494 = vsel %vm2110, %v2024, %v2398
      %v2495 = vsel %vm2111, %v2026, %v2399
      %v2496 = vsel %vm2112, %v1804, %v2400
      %v2497 = vsel %vm2113, %v1806, %v2401
      %v2498 = vsel %vm2114, %v1917, %v2402
      %v2499 = vsel %vm2115, %v1919, %v2403
      %v2500 = vsel %vm2116, %v2030, %v2404
      %v2501 = vsel %vm2117, %v2032, %v2405
      %v2502 = vsel %vm2118, %v1808, %v2406
      %v2503 = vsel %vm2119, %v1810, %v2407
      %v2504 = vsel %vm2120, %v1921, %v2408
      %v2505 = vsel %vm2121, %v1923, %v2409
      %v2506 = vsel %vm2122, %v2034, %v2410
      %v2507 = vsel %vm2123, %v2036, %v2411
      %v2508 = vsel %vm2124, %v1814, %v2412
      %v2509 = vsel %vm2125, %v1816, %v2413
      %v2510 = vsel %vm2126, %v1927, %v2414
      %v2511 = vsel %vm2127, %v1929, %v2415
      %v2512 = vsel %vm2128, %v2040, %v2416
      %v2513 = vsel %vm2129, %v2042, %v2417
      %v2514 = vsel %vm2130, %v1818, %v2418
      %v2515 = vsel %vm2131, %v1820, %v2419
      %v2516 = vsel %vm2132, %v1931, %v2420
      %v2517 = vsel %vm2133, %v1933, %v2421
      %v2518 = vsel %vm2134, %v2044, %v2422
      %v2519 = vsel %vm2135, %v2046, %v2423
      %v2520 = vsel %vm2136, %v1824, %v2424
      %v2521 = vsel %vm2137, %v1826, %v2425
      %v2522 = vsel %vm2138, %v1937, %v2426
      %v2523 = vsel %vm2139, %v1939, %v2427
      %v2524 = vsel %vm2140, %v2050, %v2428
      %v2525 = vsel %vm2141, %v2052, %v2429
      %v2526 = vsel %vm2142, %v1828, %v2430
      %v2527 = vsel %vm2143, %v1830, %v2431
      %v2528 = vsel %vm2144, %v1941, %v2432
      %v2529 = vsel %vm2145, %v1943, %v2433
      %v2530 = vsel %vm2146, %v2054, %v2434
      %v2531 = vsel %vm2147, %v2056, %v2435
      %v2532 = vsel %vm2148, %v1834, %v2436
      %v2533 = vsel %vm2149, %v1836, %v2437
      %v2534 = vsel %vm2150, %v1947, %v2438
      %v2535 = vsel %vm2151, %v1949, %v2439
      %v2536 = vsel %vm2152, %v2060, %v2440
      %v2537 = vsel %vm2153, %v2062, %v2441
      %v2538 = vsel %vm2154, %v1838, %v2442
      %v2539 = vsel %vm2155, %v1840, %v2443
      %v2540 = vsel %vm2156, %v1951, %v2444
      %v2541 = vsel %vm2157, %v1953, %v2445
      %v2542 = vsel %vm2158, %v2064, %v2446
      %v2543 = vsel %vm2159, %v2066, %v2447
      %v2544 = vsel %vm2160, %v1844, %v2448
      %v2545 = vsel %vm2161, %v1846, %v2449
      %v2546 = vsel %vm2162, %v1957, %v2450
      %v2547 = vsel %vm2163, %v1959, %v2451
      %v2548 = vsel %vm2164, %v2070, %v2452
      %v2549 = vsel %vm2165, %v2072, %v2453
      %v2550 = vsel %vm2166, %v1848, %v2454
      %v2551 = vsel %vm2167, %v1850, %v2455
      %v2552 = vsel %vm2168, %v1961, %v2456
      %v2553 = vsel %vm2169, %v1963, %v2457
      %v2554 = vsel %vm2170, %v2074, %v2458
      %v2555 = vsel %vm2171, %v2076, %v2459
      %v2556 = vsel %vm2172, %v1854, %v2460
      %v2557 = vsel %vm2173, %v1856, %v2461
      %v2558 = vsel %vm2174, %v1967, %v2462
      %v2559 = vsel %vm2175, %v1969, %v2463
      %v2560 = vsel %vm2176, %v2080, %v2464
      %v2561 = vsel %vm2177, %v2082, %v2465
      %v2562 = vsel %vm2178, %v1858, %v2466
      %v2563 = vsel %vm2179, %v1860, %v2467
      %v2564 = vsel %vm2180, %v1971, %v2468
      %v2565 = vsel %vm2181, %v1973, %v2469
      %v2566 = vsel %vm2182, %v2084, %v2470
      %v2567 = vsel %vm2183, %v2086, %v2471
      %2584 = vrot.lane.b32.xlu0 %v1031, 32
      %v2585 = vpop.permute.xlu0 %2584
      %2586 = vrot.lane.b32.xlu0 %v1034, 32
      %v2587 = vpop.permute.xlu0 %2586
      %2588 = vrot.lane.b32.xlu0 %v1039, 32
      %v2589 = vpop.permute.xlu0 %2588
      %2590 = vrot.lane.b32.xlu0 %v1042, 32
      %v2591 = vpop.permute.xlu0 %2590
      %2592 = vrot.lane.b32.xlu0 %v1047, 32
      %v2593 = vpop.permute.xlu0 %2592
      %2594 = vrot.lane.b32.xlu0 %v1050, 32
      %v2595 = vpop.permute.xlu0 %2594
      %2596 = vrot.lane.b32.xlu0 %v1055, 32
      %v2597 = vpop.permute.xlu0 %2596
      %2598 = vrot.lane.b32.xlu0 %v1058, 32
      %v2599 = vpop.permute.xlu0 %2598
      %2600 = vrot.lane.b32.xlu0 %v1063, 32
      %v2601 = vpop.permute.xlu0 %2600
      %2602 = vrot.lane.b32.xlu0 %v1066, 32
      %v2603 = vpop.permute.xlu0 %2602
      %2604 = vrot.lane.b32.xlu0 %v1071, 32
      %v2605 = vpop.permute.xlu0 %2604
      %2606 = vrot.lane.b32.xlu0 %v1074, 32
      %v2607 = vpop.permute.xlu0 %2606
      %2608 = vrot.lane.b32.xlu0 %v1079, 32
      %v2609 = vpop.permute.xlu0 %2608
      %2610 = vrot.lane.b32.xlu0 %v1082, 32
      %v2611 = vpop.permute.xlu0 %2610
      %2612 = vrot.lane.b32.xlu0 %v1087, 32
      %v2613 = vpop.permute.xlu0 %2612
      %2614 = vrot.lane.b32.xlu0 %v1090, 32
      %v2615 = vpop.permute.xlu0 %2614
      %v2632 = vadd.f32 %v2012, %v2585
      %v2633 = vadd.f32 %v2016, %v2587
      %v2634 = vadd.f32 %v2022, %v2589
      %v2635 = vadd.f32 %v2026, %v2591
      %v2636 = vadd.f32 %v2032, %v2593
      %v2637 = vadd.f32 %v2036, %v2595
      %v2638 = vadd.f32 %v2042, %v2597
      %v2639 = vadd.f32 %v2046, %v2599
      %v2640 = vadd.f32 %v2052, %v2601
      %v2641 = vadd.f32 %v2056, %v2603
      %v2642 = vadd.f32 %v2062, %v2605
      %v2643 = vadd.f32 %v2066, %v2607
      %v2644 = vadd.f32 %v2072, %v2609
      %v2645 = vadd.f32 %v2076, %v2611
      %v2646 = vadd.f32 %v2082, %v2613
      %v2647 = vadd.f32 %v2086, %v2615
      %vm2648 = vcmp.gt.f32.partialorder %v2632, 0.0
      %vm2649 = vcmp.gt.f32.partialorder %v2633, 0.0
      %vm2650 = vcmp.gt.f32.partialorder %v2634, 0.0
      %vm2651 = vcmp.gt.f32.partialorder %v2635, 0.0
      %vm2652 = vcmp.gt.f32.partialorder %v2636, 0.0
      %vm2653 = vcmp.gt.f32.partialorder %v2637, 0.0
      %vm2654 = vcmp.gt.f32.partialorder %v2638, 0.0
      %vm2655 = vcmp.gt.f32.partialorder %v2639, 0.0
      %vm2656 = vcmp.gt.f32.partialorder %v2640, 0.0
      %vm2657 = vcmp.gt.f32.partialorder %v2641, 0.0
      %vm2658 = vcmp.gt.f32.partialorder %v2642, 0.0
      %vm2659 = vcmp.gt.f32.partialorder %v2643, 0.0
      %vm2660 = vcmp.gt.f32.partialorder %v2644, 0.0
      %vm2661 = vcmp.gt.f32.partialorder %v2645, 0.0
      %vm2662 = vcmp.gt.f32.partialorder %v2646, 0.0
      %vm2663 = vcmp.gt.f32.partialorder %v2647, 0.0
      %v2664 = vmul.f32 %v2632, 1.442695
      %v2665 = vpow.pop %v2664
      %v2666 = vmul.f32 %v2633, 1.442695
      %v2667 = vpow.pop %v2666
      %v2668 = vmul.f32 %v2634, 1.442695
      %v2669 = vpow.pop %v2668
      %v2670 = vmul.f32 %v2635, 1.442695
      %v2671 = vpow.pop %v2670
      %v2672 = vmul.f32 %v2636, 1.442695
      %v2673 = vpow.pop %v2672
      %v2674 = vmul.f32 %v2637, 1.442695
      %v2675 = vpow.pop %v2674
      %v2676 = vmul.f32 %v2638, 1.442695
      %v2677 = vpow.pop %v2676
      %v2678 = vmul.f32 %v2639, 1.442695
      %v2679 = vpow.pop %v2678
      %v2680 = vmul.f32 %v2640, 1.442695
      %v2681 = vpow.pop %v2680
      %v2682 = vmul.f32 %v2641, 1.442695
      %v2683 = vpow.pop %v2682
      %v2684 = vmul.f32 %v2642, 1.442695
      %v2685 = vpow.pop %v2684
      %v2686 = vmul.f32 %v2643, 1.442695
      %v2687 = vpow.pop %v2686
      %v2688 = vmul.f32 %v2644, 1.442695
      %v2689 = vpow.pop %v2688
      %v2690 = vmul.f32 %v2645, 1.442695
      %v2691 = vpow.pop %v2690
      %v2692 = vmul.f32 %v2646, 1.442695
      %v2693 = vpow.pop %v2692
      %v2694 = vmul.f32 %v2647, 1.442695
      %v2695 = vpow.pop %v2694
      %v2696 = vsub.f32 %v2665, 1.0
      %v2697 = vsub.f32 %v2667, 1.0
      %v2698 = vsub.f32 %v2669, 1.0
      %v2699 = vsub.f32 %v2671, 1.0
      %v2700 = vsub.f32 %v2673, 1.0
      %v2701 = vsub.f32 %v2675, 1.0
      %v2702 = vsub.f32 %v2677, 1.0
      %v2703 = vsub.f32 %v2679, 1.0
      %v2704 = vsub.f32 %v2681, 1.0
      %v2705 = vsub.f32 %v2683, 1.0
      %v2706 = vsub.f32 %v2685, 1.0
      %v2707 = vsub.f32 %v2687, 1.0
      %v2708 = vsub.f32 %v2689, 1.0
      %v2709 = vsub.f32 %v2691, 1.0
      %v2710 = vsub.f32 %v2693, 1.0
      %v2711 = vsub.f32 %v2695, 1.0
      %v2712 = vsel %vm2648, %v2632, %v2696
      %v2713 = vsel %vm2649, %v2633, %v2697
      %v2714 = vsel %vm2650, %v2634, %v2698
      %v2715 = vsel %vm2651, %v2635, %v2699
      %v2716 = vsel %vm2652, %v2636, %v2700
      %v2717 = vsel %vm2653, %v2637, %v2701
      %v2718 = vsel %vm2654, %v2638, %v2702
      %v2719 = vsel %vm2655, %v2639, %v2703
      %v2720 = vsel %vm2656, %v2640, %v2704
      %v2721 = vsel %vm2657, %v2641, %v2705
      %v2722 = vsel %vm2658, %v2642, %v2706
      %v2723 = vsel %vm2659, %v2643, %v2707
      %v2724 = vsel %vm2660, %v2644, %v2708
      %v2725 = vsel %vm2661, %v2645, %v2709
      %v2726 = vsel %vm2662, %v2646, %v2710
      %v2727 = vsel %vm2663, %v2647, %v2711
      %v2728 = vld [vmem:[%s650] sm:$0xff]
      %v2729 = vld [vmem:[%s650 + $0x8] sm:$0xff]
      %v2730 = vld [vmem:[%s650 + $0x10] sm:$0xff]
      %v2731 = vld [vmem:[%s650 + $0x18] sm:$0xff]
      %v2732 = vld [vmem:[%s650 + $0x20] sm:$0xff]
      %v2733 = vld [vmem:[%s650 + $0x28] sm:$0xff]
      %v2734 = vld [vmem:[%s650 + $0x30] sm:$0xff]
      %v2735 = vld [vmem:[%s650 + $0x38] sm:$0xff]
      %v2736 = vld [vmem:[%s650 + $0x40] sm:$0xff]
      %v2737 = vld [vmem:[%s650 + $0x48] sm:$0xff]
      %v2738 = vld [vmem:[%s650 + $0x50] sm:$0xff]
      %v2739 = vld [vmem:[%s650 + $0x58] sm:$0xff]
      %v2740 = vld [vmem:[%s650 + $0x60] sm:$0xff]
      %v2741 = vld [vmem:[%s650 + $0x68] sm:$0xff]
      %v2742 = vld [vmem:[%s650 + $0x70] sm:$0xff]
      %v2743 = vld [vmem:[%s650 + $0x78] sm:$0xff]
      %v2744 = vld [vmem:[%s650 + $0x80] sm:$0xff]
      %v2745 = vld [vmem:[%s650 + $0x88] sm:$0xff]
      %v2746 = vld [vmem:[%s650 + $0x90] sm:$0xff]
      %v2747 = vld [vmem:[%s650 + $0x98] sm:$0xff]
      %v2748 = vld [vmem:[%s650 + $0xa0] sm:$0xff]
      %v2749 = vld [vmem:[%s650 + $0xa8] sm:$0xff]
      %v2750 = vld [vmem:[%s650 + $0xb0] sm:$0xff]
      %v2751 = vld [vmem:[%s650 + $0xb8] sm:$0xff]
      %v2752 = vld [vmem:[%s650 + $0xc0] sm:$0xff]
      %v2753 = vld [vmem:[%s650 + $0xc8] sm:$0xff]
      %v2754 = vld [vmem:[%s650 + $0xd0] sm:$0xff]
      %v2755 = vld [vmem:[%s650 + $0xd8] sm:$0xff]
      %v2756 = vld [vmem:[%s650 + $0xe0] sm:$0xff]
      %v2757 = vld [vmem:[%s650 + $0xe8] sm:$0xff]
      %v2758 = vld [vmem:[%s650 + $0xf0] sm:$0xff]
      %v2759 = vld [vmem:[%s650 + $0xf8] sm:$0xff]
      %v2760 = vld [vmem:[%s650 + $0x100] sm:$0xff]
      %v2761 = vld [vmem:[%s650 + $0x108] sm:$0xff]
      %v2762 = vld [vmem:[%s650 + $0x110] sm:$0xff]
      %v2763 = vld [vmem:[%s650 + $0x118] sm:$0xff]
      %v2764 = vld [vmem:[%s650 + $0x120] sm:$0xff]
      %v2765 = vld [vmem:[%s650 + $0x128] sm:$0xff]
      %v2766 = vld [vmem:[%s650 + $0x130] sm:$0xff]
      %v2767 = vld [vmem:[%s650 + $0x138] sm:$0xff]
      %v2768 = vld [vmem:[%s650 + $0x140] sm:$0xff]
      %v2769 = vld [vmem:[%s650 + $0x148] sm:$0xff]
      %v2770 = vld [vmem:[%s650 + $0x150] sm:$0xff]
      %v2771 = vld [vmem:[%s650 + $0x158] sm:$0xff]
      %v2772 = vld [vmem:[%s650 + $0x160] sm:$0xff]
      %v2773 = vld [vmem:[%s650 + $0x168] sm:$0xff]
      %v2774 = vld [vmem:[%s650 + $0x170] sm:$0xff]
      %v2775 = vld [vmem:[%s650 + $0x178] sm:$0xff]
      %v2776 = vld [vmem:[%s650 + $0x180] sm:$0xff]
      %v2777 = vld [vmem:[%s650 + $0x188] sm:$0xff]
      %v2778 = vld [vmem:[%s650 + $0x190] sm:$0xff]
      %v2779 = vld [vmem:[%s650 + $0x198] sm:$0xff]
      %v2780 = vld [vmem:[%s650 + $0x1a0] sm:$0xff]
      %v2781 = vld [vmem:[%s650 + $0x1a8] sm:$0xff]
      %v2782 = vld [vmem:[%s650 + $0x1b0] sm:$0xff]
      %v2783 = vld [vmem:[%s650 + $0x1b8] sm:$0xff]
      %v2784 = vld [vmem:[%s650 + $0x1c0] sm:$0xff]
      %v2785 = vld [vmem:[%s650 + $0x1c8] sm:$0xff]
      %v2786 = vld [vmem:[%s650 + $0x1d0] sm:$0xff]
      %v2787 = vld [vmem:[%s650 + $0x1d8] sm:$0xff]
      %v2788 = vld [vmem:[%s650 + $0x1e0] sm:$0xff]
      %v2789 = vld [vmem:[%s650 + $0x1e8] sm:$0xff]
      %v2790 = vld [vmem:[%s650 + $0x1f0] sm:$0xff]
      %v2791 = vld [vmem:[%s650 + $0x1f8] sm:$0xff]
      %v2792 = vpack.c.bf16 %v2732, %v2728
      %v2793 = vpack.c.bf16 %v2733, %v2729
      %v2794 = vpack.c.bf16 %v2734, %v2730
      %v2795 = vpack.c.bf16 %v2735, %v2731
      %v2796 = vpack.c.bf16 %v2740, %v2736
      %v2797 = vpack.c.bf16 %v2741, %v2737
      %v2798 = vpack.c.bf16 %v2742, %v2738
      %v2799 = vpack.c.bf16 %v2743, %v2739
      %v2800 = vpack.c.bf16 %v2748, %v2744
      %v2801 = vpack.c.bf16 %v2749, %v2745
      %v2802 = vpack.c.bf16 %v2750, %v2746
      %v2803 = vpack.c.bf16 %v2751, %v2747
      %v2804 = vpack.c.bf16 %v2756, %v2752
      %v2805 = vpack.c.bf16 %v2757, %v2753
      %v2806 = vpack.c.bf16 %v2758, %v2754
      %v2807 = vpack.c.bf16 %v2759, %v2755
      %v2808 = vpack.c.bf16 %v2764, %v2760
      %v2809 = vpack.c.bf16 %v2765, %v2761
      %v2810 = vpack.c.bf16 %v2766, %v2762
      %v2811 = vpack.c.bf16 %v2767, %v2763
      %v2812 = vpack.c.bf16 %v2772, %v2768
      %v2813 = vpack.c.bf16 %v2773, %v2769
      %v2814 = vpack.c.bf16 %v2774, %v2770
      %v2815 = vpack.c.bf16 %v2775, %v2771
      %v2816 = vpack.c.bf16 %v2780, %v2776
      %v2817 = vpack.c.bf16 %v2781, %v2777
      %v2818 = vpack.c.bf16 %v2782, %v2778
      %v2819 = vpack.c.bf16 %v2783, %v2779
      %v2820 = vpack.c.bf16 %v2788, %v2784
      %v2821 = vpack.c.bf16 %v2789, %v2785
      %v2822 = vpack.c.bf16 %v2790, %v2786
      %v2823 = vpack.c.bf16 %v2791, %v2787
      %v2824 = vld [vmem:[%s9] sm:$0xff]
      %v2825 = vld [vmem:[%s9 + $0x8] sm:$0xff]
      %v2826 = vld [vmem:[%s9 + $0x10] sm:$0xff]
      %v2827 = vld [vmem:[%s9 + $0x18] sm:$0xff]
      %v2828 = vld [vmem:[%s9 + $0x20] sm:$0xff]
      %v2829 = vld [vmem:[%s9 + $0x28] sm:$0xff]
      %v2830 = vld [vmem:[%s9 + $0x30] sm:$0xff]
      %v2831 = vld [vmem:[%s9 + $0x38] sm:$0xff]
      %v2832 = vld [vmem:[%s9 + $0x40] sm:$0xff]
      %v2833 = vld [vmem:[%s9 + $0x48] sm:$0xff]
      %v2834 = vld [vmem:[%s9 + $0x50] sm:$0xff]
      %v2835 = vld [vmem:[%s9 + $0x58] sm:$0xff]
      %v2836 = vld [vmem:[%s9 + $0x60] sm:$0xff]
      %v2837 = vld [vmem:[%s9 + $0x68] sm:$0xff]
      %v2838 = vld [vmem:[%s9 + $0x70] sm:$0xff]
      %v2839 = vld [vmem:[%s9 + $0x78] sm:$0xff]
      %v2840 = vld [vmem:[%s9 + $0x80] sm:$0xff]
      %v2841 = vld [vmem:[%s9 + $0x88] sm:$0xff]
      %v2842 = vld [vmem:[%s9 + $0x90] sm:$0xff]
      %v2843 = vld [vmem:[%s9 + $0x98] sm:$0xff]
      %v2844 = vld [vmem:[%s9 + $0xa0] sm:$0xff]
      %v2845 = vld [vmem:[%s9 + $0xa8] sm:$0xff]
      %v2846 = vld [vmem:[%s9 + $0xb0] sm:$0xff]
      %v2847 = vld [vmem:[%s9 + $0xb8] sm:$0xff]
      %v2848 = vld [vmem:[%s9 + $0xc0] sm:$0xff]
      %v2849 = vld [vmem:[%s9 + $0xc8] sm:$0xff]
      %v2850 = vld [vmem:[%s9 + $0xd0] sm:$0xff]
      %v2851 = vld [vmem:[%s9 + $0xd8] sm:$0xff]
      %v2852 = vld [vmem:[%s9 + $0xe0] sm:$0xff]
      %v2853 = vld [vmem:[%s9 + $0xe8] sm:$0xff]
      %v2854 = vld [vmem:[%s9 + $0xf0] sm:$0xff]
      %v2855 = vld [vmem:[%s9 + $0xf8] sm:$0xff]
      %v2856 = vld [vmem:[%s9 + $0x100] sm:$0xff]
      %v2857 = vld [vmem:[%s9 + $0x108] sm:$0xff]
      %v2858 = vld [vmem:[%s9 + $0x110] sm:$0xff]
      %v2859 = vld [vmem:[%s9 + $0x118] sm:$0xff]
      %v2860 = vld [vmem:[%s9 + $0x120] sm:$0xff]
      %v2861 = vld [vmem:[%s9 + $0x128] sm:$0xff]
      %v2862 = vld [vmem:[%s9 + $0x130] sm:$0xff]
      %v2863 = vld [vmem:[%s9 + $0x138] sm:$0xff]
      %v2864 = vld [vmem:[%s9 + $0x140] sm:$0xff]
      %v2865 = vld [vmem:[%s9 + $0x148] sm:$0xff]
      %v2866 = vld [vmem:[%s9 + $0x150] sm:$0xff]
      %v2867 = vld [vmem:[%s9 + $0x158] sm:$0xff]
      %v2868 = vld [vmem:[%s9 + $0x160] sm:$0xff]
      %v2869 = vld [vmem:[%s9 + $0x168] sm:$0xff]
      %v2870 = vld [vmem:[%s9 + $0x170] sm:$0xff]
      %v2871 = vld [vmem:[%s9 + $0x178] sm:$0xff]
      %v2872 = vld [vmem:[%s9 + $0x180] sm:$0xff]
      %v2873 = vld [vmem:[%s9 + $0x188] sm:$0xff]
      %v2874 = vld [vmem:[%s9 + $0x190] sm:$0xff]
      %v2875 = vld [vmem:[%s9 + $0x198] sm:$0xff]
      %v2876 = vld [vmem:[%s9 + $0x1a0] sm:$0xff]
      %v2877 = vld [vmem:[%s9 + $0x1a8] sm:$0xff]
      %v2878 = vld [vmem:[%s9 + $0x1b0] sm:$0xff]
      %v2879 = vld [vmem:[%s9 + $0x1b8] sm:$0xff]
      %v2880 = vld [vmem:[%s9 + $0x1c0] sm:$0xff]
      %v2881 = vld [vmem:[%s9 + $0x1c8] sm:$0xff]
      %v2882 = vld [vmem:[%s9 + $0x1d0] sm:$0xff]
      %v2883 = vld [vmem:[%s9 + $0x1d8] sm:$0xff]
      %v2884 = vld [vmem:[%s9 + $0x1e0] sm:$0xff]
      %v2885 = vld [vmem:[%s9 + $0x1e8] sm:$0xff]
      %v2886 = vld [vmem:[%s9 + $0x1f0] sm:$0xff]
      %v2887 = vld [vmem:[%s9 + $0x1f8] sm:$0xff]
      %v2888 = vld [vmem:[%s9 + $0x200] sm:$0xff]
      %v2889 = vld [vmem:[%s9 + $0x208] sm:$0xff]
      %v2890 = vld [vmem:[%s9 + $0x210] sm:$0xff]
      %v2891 = vld [vmem:[%s9 + $0x218] sm:$0xff]
      %v2892 = vld [vmem:[%s9 + $0x220] sm:$0xff]
      %v2893 = vld [vmem:[%s9 + $0x228] sm:$0xff]
      %v2894 = vld [vmem:[%s9 + $0x230] sm:$0xff]
      %v2895 = vld [vmem:[%s9 + $0x238] sm:$0xff]
      %v2896 = vld [vmem:[%s9 + $0x240] sm:$0xff]
      %v2897 = vld [vmem:[%s9 + $0x248] sm:$0xff]
      %v2898 = vld [vmem:[%s9 + $0x250] sm:$0xff]
      %v2899 = vld [vmem:[%s9 + $0x258] sm:$0xff]
      %v2900 = vld [vmem:[%s9 + $0x260] sm:$0xff]
      %v2901 = vld [vmem:[%s9 + $0x268] sm:$0xff]
      %v2902 = vld [vmem:[%s9 + $0x270] sm:$0xff]
      %v2903 = vld [vmem:[%s9 + $0x278] sm:$0xff]
      %v2904 = vld [vmem:[%s9 + $0x280] sm:$0xff]
      %v2905 = vld [vmem:[%s9 + $0x288] sm:$0xff]
      %v2906 = vld [vmem:[%s9 + $0x290] sm:$0xff]
      %v2907 = vld [vmem:[%s9 + $0x298] sm:$0xff]
      %v2908 = vld [vmem:[%s9 + $0x2a0] sm:$0xff]
      %v2909 = vld [vmem:[%s9 + $0x2a8] sm:$0xff]
      %v2910 = vld [vmem:[%s9 + $0x2b0] sm:$0xff]
      %v2911 = vld [vmem:[%s9 + $0x2b8] sm:$0xff]
      %v2912 = vld [vmem:[%s9 + $0x2c0] sm:$0xff]
      %v2913 = vld [vmem:[%s9 + $0x2c8] sm:$0xff]
      %v2914 = vld [vmem:[%s9 + $0x2d0] sm:$0xff]
      %v2915 = vld [vmem:[%s9 + $0x2d8] sm:$0xff]
      %v2916 = vld [vmem:[%s9 + $0x2e0] sm:$0xff]
      %v2917 = vld [vmem:[%s9 + $0x2e8] sm:$0xff]
      %v2918 = vld [vmem:[%s9 + $0x2f0] sm:$0xff]
      %v2919 = vld [vmem:[%s9 + $0x2f8] sm:$0xff]
      %v2920 = vld [vmem:[%s9 + $0x300] sm:$0xff]
      %v2921 = vld [vmem:[%s9 + $0x308] sm:$0xff]
      %v2922 = vld [vmem:[%s9 + $0x310] sm:$0xff]
      %v2923 = vld [vmem:[%s9 + $0x318] sm:$0xff]
      %v2924 = vld [vmem:[%s9 + $0x320] sm:$0xff]
      %v2925 = vld [vmem:[%s9 + $0x328] sm:$0xff]
      %v2926 = vld [vmem:[%s9 + $0x330] sm:$0xff]
      %v2927 = vld [vmem:[%s9 + $0x338] sm:$0xff]
      %v2928 = vld [vmem:[%s9 + $0x340] sm:$0xff]
      %v2929 = vld [vmem:[%s9 + $0x348] sm:$0xff]
      %v2930 = vld [vmem:[%s9 + $0x350] sm:$0xff]
      %v2931 = vld [vmem:[%s9 + $0x358] sm:$0xff]
      %v2932 = vld [vmem:[%s9 + $0x360] sm:$0xff]
      %v2933 = vld [vmem:[%s9 + $0x368] sm:$0xff]
      %v2934 = vld [vmem:[%s9 + $0x370] sm:$0xff]
      %v2935 = vld [vmem:[%s9 + $0x378] sm:$0xff]
      %v2936 = vld [vmem:[%s9 + $0x380] sm:$0xff]
      %v2937 = vld [vmem:[%s9 + $0x388] sm:$0xff]
      %v2938 = vld [vmem:[%s9 + $0x390] sm:$0xff]
      %v2939 = vld [vmem:[%s9 + $0x398] sm:$0xff]
      %v2940 = vld [vmem:[%s9 + $0x3a0] sm:$0xff]
      %v2941 = vld [vmem:[%s9 + $0x3a8] sm:$0xff]
      %v2942 = vld [vmem:[%s9 + $0x3b0] sm:$0xff]
      %v2943 = vld [vmem:[%s9 + $0x3b8] sm:$0xff]
      %v2944 = vld [vmem:[%s9 + $0x3c0] sm:$0xff]
      %v2945 = vld [vmem:[%s9 + $0x3c8] sm:$0xff]
      %v2946 = vld [vmem:[%s9 + $0x3d0] sm:$0xff]
      %v2947 = vld [vmem:[%s9 + $0x3d8] sm:$0xff]
      %v2948 = vld [vmem:[%s9 + $0x3e0] sm:$0xff]
      %v2949 = vld [vmem:[%s9 + $0x3e8] sm:$0xff]
      %v2950 = vld [vmem:[%s9 + $0x3f0] sm:$0xff]
      %v2951 = vld [vmem:[%s9 + $0x3f8] sm:$0xff]
      %v2952 = vld [vmem:[%s9 + $0x400] sm:$0xff]
      %v2953 = vld [vmem:[%s9 + $0x408] sm:$0xff]
      %v2954 = vld [vmem:[%s9 + $0x410] sm:$0xff]
      %v2955 = vld [vmem:[%s9 + $0x418] sm:$0xff]
      %v2956 = vld [vmem:[%s9 + $0x420] sm:$0xff]
      %v2957 = vld [vmem:[%s9 + $0x428] sm:$0xff]
      %v2958 = vld [vmem:[%s9 + $0x430] sm:$0xff]
      %v2959 = vld [vmem:[%s9 + $0x438] sm:$0xff]
      %v2960 = vld [vmem:[%s9 + $0x440] sm:$0xff]
      %v2961 = vld [vmem:[%s9 + $0x448] sm:$0xff]
      %v2962 = vld [vmem:[%s9 + $0x450] sm:$0xff]
      %v2963 = vld [vmem:[%s9 + $0x458] sm:$0xff]
      %v2964 = vld [vmem:[%s9 + $0x460] sm:$0xff]
      %v2965 = vld [vmem:[%s9 + $0x468] sm:$0xff]
      %v2966 = vld [vmem:[%s9 + $0x470] sm:$0xff]
      %v2967 = vld [vmem:[%s9 + $0x478] sm:$0xff]
      %v2968 = vld [vmem:[%s9 + $0x480] sm:$0xff]
      %v2969 = vld [vmem:[%s9 + $0x488] sm:$0xff]
      %v2970 = vld [vmem:[%s9 + $0x490] sm:$0xff]
      %v2971 = vld [vmem:[%s9 + $0x498] sm:$0xff]
      %v2972 = vld [vmem:[%s9 + $0x4a0] sm:$0xff]
      %v2973 = vld [vmem:[%s9 + $0x4a8] sm:$0xff]
      %v2974 = vld [vmem:[%s9 + $0x4b0] sm:$0xff]
      %v2975 = vld [vmem:[%s9 + $0x4b8] sm:$0xff]
      %v2976 = vld [vmem:[%s9 + $0x4c0] sm:$0xff]
      %v2977 = vld [vmem:[%s9 + $0x4c8] sm:$0xff]
      %v2978 = vld [vmem:[%s9 + $0x4d0] sm:$0xff]
      %v2979 = vld [vmem:[%s9 + $0x4d8] sm:$0xff]
      %v2980 = vld [vmem:[%s9 + $0x4e0] sm:$0xff]
      %v2981 = vld [vmem:[%s9 + $0x4e8] sm:$0xff]
      %v2982 = vld [vmem:[%s9 + $0x4f0] sm:$0xff]
      %v2983 = vld [vmem:[%s9 + $0x4f8] sm:$0xff]
      %v2984 = vld [vmem:[%s9 + $0x500] sm:$0xff]
      %v2985 = vld [vmem:[%s9 + $0x508] sm:$0xff]
      %v2986 = vld [vmem:[%s9 + $0x510] sm:$0xff]
      %v2987 = vld [vmem:[%s9 + $0x518] sm:$0xff]
      %v2988 = vld [vmem:[%s9 + $0x520] sm:$0xff]
      %v2989 = vld [vmem:[%s9 + $0x528] sm:$0xff]
      %v2990 = vld [vmem:[%s9 + $0x530] sm:$0xff]
      %v2991 = vld [vmem:[%s9 + $0x538] sm:$0xff]
      %v2992 = vld [vmem:[%s9 + $0x540] sm:$0xff]
      %v2993 = vld [vmem:[%s9 + $0x548] sm:$0xff]
      %v2994 = vld [vmem:[%s9 + $0x550] sm:$0xff]
      %v2995 = vld [vmem:[%s9 + $0x558] sm:$0xff]
      %v2996 = vld [vmem:[%s9 + $0x560] sm:$0xff]
      %v2997 = vld [vmem:[%s9 + $0x568] sm:$0xff]
      %v2998 = vld [vmem:[%s9 + $0x570] sm:$0xff]
      %v2999 = vld [vmem:[%s9 + $0x578] sm:$0xff]
      %v3000 = vld [vmem:[%s9 + $0x580] sm:$0xff]
      %v3001 = vld [vmem:[%s9 + $0x588] sm:$0xff]
      %v3002 = vld [vmem:[%s9 + $0x590] sm:$0xff]
      %v3003 = vld [vmem:[%s9 + $0x598] sm:$0xff]
      %v3004 = vld [vmem:[%s9 + $0x5a0] sm:$0xff]
      %v3005 = vld [vmem:[%s9 + $0x5a8] sm:$0xff]
      %v3006 = vld [vmem:[%s9 + $0x5b0] sm:$0xff]
      %v3007 = vld [vmem:[%s9 + $0x5b8] sm:$0xff]
      %v3008 = vld [vmem:[%s9 + $0x5c0] sm:$0xff]
      %v3009 = vld [vmem:[%s9 + $0x5c8] sm:$0xff]
      %v3010 = vld [vmem:[%s9 + $0x5d0] sm:$0xff]
      %v3011 = vld [vmem:[%s9 + $0x5d8] sm:$0xff]
      %v3012 = vld [vmem:[%s9 + $0x5e0] sm:$0xff]
      %v3013 = vld [vmem:[%s9 + $0x5e8] sm:$0xff]
      %v3014 = vld [vmem:[%s9 + $0x5f0] sm:$0xff]
      %v3015 = vld [vmem:[%s9 + $0x5f8] sm:$0xff]
      %v3016 = vld [vmem:[%s10] sm:$0x3f]
      %v3018 = vlaneseq
      %v3019 = vshrl.u32 %v3018, 7
      %v3020 = vsub.s32 0, %v3019
      %v3021 = vrot.slane %v3016, %v3020
      %v3022 = vlaneseq
      %v3023 = vshrl.u32 %v3022, 7
      %v3024 = vsub.s32 1, %v3023
      %v3025 = vrot.slane %v3016, %v3024
      %v3026 = vlaneseq
      %v3027 = vshrl.u32 %v3026, 7
      %v3028 = vsub.s32 2, %v3027
      %v3029 = vrot.slane %v3016, %v3028
      %v3030 = vlaneseq
      %v3031 = vshrl.u32 %v3030, 7
      %v3032 = vsub.s32 3, %v3031
      %v3033 = vrot.slane %v3016, %v3032
      %v3034 = vlaneseq
      %v3035 = vshrl.u32 %v3034, 7
      %v3036 = vsub.s32 4, %v3035
      %v3037 = vrot.slane %v3016, %v3036
      %v3038 = vlaneseq
      %v3039 = vshrl.u32 %v3038, 7
      %v3040 = vsub.s32 5, %v3039
      %v3041 = vrot.slane %v3016, %v3040
      %v3240 = vunpack.c.l.b16 %v2824
      %v3241 = vunpack.c.h.b16 %v2824
      %v3242 = vunpack.c.l.b16 %v2825
      %v3243 = vunpack.c.h.b16 %v2825
      %v3244 = vunpack.c.l.b16 %v2826
      %v3245 = vunpack.c.h.b16 %v2826
      %v3246 = vunpack.c.l.b16 %v2827
      %v3247 = vunpack.c.h.b16 %v2827
      %v3248 = vunpack.c.l.b16 %v2828
      %v3249 = vunpack.c.h.b16 %v2828
      %v3250 = vunpack.c.l.b16 %v2829
      %v3251 = vunpack.c.h.b16 %v2829
      %v3252 = vunpack.c.l.b16 %v2830
      %v3253 = vunpack.c.h.b16 %v2830
      %v3254 = vunpack.c.l.b16 %v2831
      %v3255 = vunpack.c.h.b16 %v2831
      %v3256 = vunpack.c.l.b16 %v2832
      %v3257 = vunpack.c.h.b16 %v2832
      %v3258 = vunpack.c.l.b16 %v2833
      %v3259 = vunpack.c.h.b16 %v2833
      %v3260 = vunpack.c.l.b16 %v2834
      %v3261 = vunpack.c.h.b16 %v2834
      %v3262 = vunpack.c.l.b16 %v2835
      %v3263 = vunpack.c.h.b16 %v2835
      %v3264 = vunpack.c.l.b16 %v2836
      %v3265 = vunpack.c.h.b16 %v2836
      %v3266 = vunpack.c.l.b16 %v2837
      %v3267 = vunpack.c.h.b16 %v2837
      %v3268 = vunpack.c.l.b16 %v2838
      %v3269 = vunpack.c.h.b16 %v2838
      %v3270 = vunpack.c.l.b16 %v2839
      %v3271 = vunpack.c.h.b16 %v2839
      %v3272 = vunpack.c.l.b16 %v2840
      %v3273 = vunpack.c.h.b16 %v2840
      %v3274 = vunpack.c.l.b16 %v2841
      %v3275 = vunpack.c.h.b16 %v2841
      %v3276 = vunpack.c.l.b16 %v2842
      %v3277 = vunpack.c.h.b16 %v2842
      %v3278 = vunpack.c.l.b16 %v2843
      %v3279 = vunpack.c.h.b16 %v2843
      %v3280 = vunpack.c.l.b16 %v2844
      %v3281 = vunpack.c.h.b16 %v2844
      %v3282 = vunpack.c.l.b16 %v2845
      %v3283 = vunpack.c.h.b16 %v2845
      %v3284 = vunpack.c.l.b16 %v2846
      %v3285 = vunpack.c.h.b16 %v2846
      %v3286 = vunpack.c.l.b16 %v2847
      %v3287 = vunpack.c.h.b16 %v2847
      %v3288 = vunpack.c.l.b16 %v2848
      %v3289 = vunpack.c.h.b16 %v2848
      %v3290 = vunpack.c.l.b16 %v2849
      %v3291 = vunpack.c.h.b16 %v2849
      %v3292 = vunpack.c.l.b16 %v2850
      %v3293 = vunpack.c.h.b16 %v2850
      %v3294 = vunpack.c.l.b16 %v2851
      %v3295 = vunpack.c.h.b16 %v2851
      %v3296 = vunpack.c.l.b16 %v2852
      %v3297 = vunpack.c.h.b16 %v2852
      %v3298 = vunpack.c.l.b16 %v2853
      %v3299 = vunpack.c.h.b16 %v2853
      %v3300 = vunpack.c.l.b16 %v2854
      %v3301 = vunpack.c.h.b16 %v2854
      %v3302 = vunpack.c.l.b16 %v2855
      %v3303 = vunpack.c.h.b16 %v2855
      %v3304 = vunpack.c.l.b16 %v2856
      %v3305 = vunpack.c.h.b16 %v2856
      %v3306 = vunpack.c.l.b16 %v2857
      %v3307 = vunpack.c.h.b16 %v2857
      %v3308 = vunpack.c.l.b16 %v2858
      %v3309 = vunpack.c.h.b16 %v2858
      %v3310 = vunpack.c.l.b16 %v2859
      %v3311 = vunpack.c.h.b16 %v2859
      %v3312 = vunpack.c.l.b16 %v2860
      %v3313 = vunpack.c.h.b16 %v2860
      %v3314 = vunpack.c.l.b16 %v2861
      %v3315 = vunpack.c.h.b16 %v2861
      %v3316 = vunpack.c.l.b16 %v2862
      %v3317 = vunpack.c.h.b16 %v2862
      %v3318 = vunpack.c.l.b16 %v2863
      %v3319 = vunpack.c.h.b16 %v2863
      %v3320 = vunpack.c.l.b16 %v2864
      %v3321 = vunpack.c.h.b16 %v2864
      %v3322 = vunpack.c.l.b16 %v2865
      %v3323 = vunpack.c.h.b16 %v2865
      %v3324 = vunpack.c.l.b16 %v2866
      %v3325 = vunpack.c.h.b16 %v2866
      %v3326 = vunpack.c.l.b16 %v2867
      %v3327 = vunpack.c.h.b16 %v2867
      %v3328 = vunpack.c.l.b16 %v2868
      %v3329 = vunpack.c.h.b16 %v2868
      %v3330 = vunpack.c.l.b16 %v2869
      %v3331 = vunpack.c.h.b16 %v2869
      %v3332 = vunpack.c.l.b16 %v2870
      %v3333 = vunpack.c.h.b16 %v2870
      %v3334 = vunpack.c.l.b16 %v2871
      %v3335 = vunpack.c.h.b16 %v2871
      %v3336 = vunpack.c.l.b16 %v2872
      %v3337 = vunpack.c.h.b16 %v2872
      %v3338 = vunpack.c.l.b16 %v2873
      %v3339 = vunpack.c.h.b16 %v2873
      %v3340 = vunpack.c.l.b16 %v2874
      %v3341 = vunpack.c.h.b16 %v2874
      %v3342 = vunpack.c.l.b16 %v2875
      %v3343 = vunpack.c.h.b16 %v2875
      %v3344 = vunpack.c.l.b16 %v2876
      %v3345 = vunpack.c.h.b16 %v2876
      %v3346 = vunpack.c.l.b16 %v2877
      %v3347 = vunpack.c.h.b16 %v2877
      %v3348 = vunpack.c.l.b16 %v2878
      %v3349 = vunpack.c.h.b16 %v2878
      %v3350 = vunpack.c.l.b16 %v2879
      %v3351 = vunpack.c.h.b16 %v2879
      %v3352 = vunpack.c.l.b16 %v2880
      %v3353 = vunpack.c.h.b16 %v2880
      %v3354 = vunpack.c.l.b16 %v2881
      %v3355 = vunpack.c.h.b16 %v2881
      %v3356 = vunpack.c.l.b16 %v2882
      %v3357 = vunpack.c.h.b16 %v2882
      %v3358 = vunpack.c.l.b16 %v2883
      %v3359 = vunpack.c.h.b16 %v2883
      %v3360 = vunpack.c.l.b16 %v2884
      %v3361 = vunpack.c.h.b16 %v2884
      %v3362 = vunpack.c.l.b16 %v2885
      %v3363 = vunpack.c.h.b16 %v2885
      %v3364 = vunpack.c.l.b16 %v2886
      %v3365 = vunpack.c.h.b16 %v2886
      %v3366 = vunpack.c.l.b16 %v2887
      %v3367 = vunpack.c.h.b16 %v2887
      %v3368 = vunpack.c.l.b16 %v2888
      %v3369 = vunpack.c.h.b16 %v2888
      %v3370 = vunpack.c.l.b16 %v2889
      %v3371 = vunpack.c.h.b16 %v2889
      %v3372 = vunpack.c.l.b16 %v2890
      %v3373 = vunpack.c.h.b16 %v2890
      %v3374 = vunpack.c.l.b16 %v2891
      %v3375 = vunpack.c.h.b16 %v2891
      %v3376 = vunpack.c.l.b16 %v2892
      %v3377 = vunpack.c.h.b16 %v2892
      %v3378 = vunpack.c.l.b16 %v2893
      %v3379 = vunpack.c.h.b16 %v2893
      %v3380 = vunpack.c.l.b16 %v2894
      %v3381 = vunpack.c.h.b16 %v2894
      %v3382 = vunpack.c.l.b16 %v2895
      %v3383 = vunpack.c.h.b16 %v2895
      %v3384 = vunpack.c.l.b16 %v2896
      %v3385 = vunpack.c.h.b16 %v2896
      %v3386 = vunpack.c.l.b16 %v2897
      %v3387 = vunpack.c.h.b16 %v2897
      %v3388 = vunpack.c.l.b16 %v2898
      %v3389 = vunpack.c.h.b16 %v2898
      %v3390 = vunpack.c.l.b16 %v2899
      %v3391 = vunpack.c.h.b16 %v2899
      %v3392 = vunpack.c.l.b16 %v2900
      %v3393 = vunpack.c.h.b16 %v2900
      %v3394 = vunpack.c.l.b16 %v2901
      %v3395 = vunpack.c.h.b16 %v2901
      %v3396 = vunpack.c.l.b16 %v2902
      %v3397 = vunpack.c.h.b16 %v2902
      %v3398 = vunpack.c.l.b16 %v2903
      %v3399 = vunpack.c.h.b16 %v2903
      %v3400 = vunpack.c.l.b16 %v2904
      %v3401 = vunpack.c.h.b16 %v2904
      %v3402 = vunpack.c.l.b16 %v2905
      %v3403 = vunpack.c.h.b16 %v2905
      %v3404 = vunpack.c.l.b16 %v2906
      %v3405 = vunpack.c.h.b16 %v2906
      %v3406 = vunpack.c.l.b16 %v2907
      %v3407 = vunpack.c.h.b16 %v2907
      %v3408 = vunpack.c.l.b16 %v2908
      %v3409 = vunpack.c.h.b16 %v2908
      %v3410 = vunpack.c.l.b16 %v2909
      %v3411 = vunpack.c.h.b16 %v2909
      %v3412 = vunpack.c.l.b16 %v2910
      %v3413 = vunpack.c.h.b16 %v2910
      %v3414 = vunpack.c.l.b16 %v2911
      %v3415 = vunpack.c.h.b16 %v2911
      %v3416 = vunpack.c.l.b16 %v2912
      %v3417 = vunpack.c.h.b16 %v2912
      %v3418 = vunpack.c.l.b16 %v2913
      %v3419 = vunpack.c.h.b16 %v2913
      %v3420 = vunpack.c.l.b16 %v2914
      %v3421 = vunpack.c.h.b16 %v2914
      %v3422 = vunpack.c.l.b16 %v2915
      %v3423 = vunpack.c.h.b16 %v2915
      %v3424 = vunpack.c.l.b16 %v2916
      %v3425 = vunpack.c.h.b16 %v2916
      %v3426 = vunpack.c.l.b16 %v2917
      %v3427 = vunpack.c.h.b16 %v2917
      %v3428 = vunpack.c.l.b16 %v2918
      %v3429 = vunpack.c.h.b16 %v2918
      %v3430 = vunpack.c.l.b16 %v2919
      %v3431 = vunpack.c.h.b16 %v2919
      %v3432 = vunpack.c.l.b16 %v2920
      %v3433 = vunpack.c.h.b16 %v2920
      %v3434 = vunpack.c.l.b16 %v2921
      %v3435 = vunpack.c.h.b16 %v2921
      %v3436 = vunpack.c.l.b16 %v2922
      %v3437 = vunpack.c.h.b16 %v2922
      %v3438 = vunpack.c.l.b16 %v2923
      %v3439 = vunpack.c.h.b16 %v2923
      %v3440 = vunpack.c.l.b16 %v2924
      %v3441 = vunpack.c.h.b16 %v2924
      %v3442 = vunpack.c.l.b16 %v2925
      %v3443 = vunpack.c.h.b16 %v2925
      %v3444 = vunpack.c.l.b16 %v2926
      %v3445 = vunpack.c.h.b16 %v2926
      %v3446 = vunpack.c.l.b16 %v2927
      %v3447 = vunpack.c.h.b16 %v2927
      %v3448 = vunpack.c.l.b16 %v2928
      %v3449 = vunpack.c.h.b16 %v2928
      %v3450 = vunpack.c.l.b16 %v2929
      %v3451 = vunpack.c.h.b16 %v2929
      %v3452 = vunpack.c.l.b16 %v2930
      %v3453 = vunpack.c.h.b16 %v2930
      %v3454 = vunpack.c.l.b16 %v2931
      %v3455 = vunpack.c.h.b16 %v2931
      %v3456 = vunpack.c.l.b16 %v2932
      %v3457 = vunpack.c.h.b16 %v2932
      %v3458 = vunpack.c.l.b16 %v2933
      %v3459 = vunpack.c.h.b16 %v2933
      %v3460 = vunpack.c.l.b16 %v2934
      %v3461 = vunpack.c.h.b16 %v2934
      %v3462 = vunpack.c.l.b16 %v2935
      %v3463 = vunpack.c.h.b16 %v2935
      %v3464 = vunpack.c.l.b16 %v2936
      %v3465 = vunpack.c.h.b16 %v2936
      %v3466 = vunpack.c.l.b16 %v2937
      %v3467 = vunpack.c.h.b16 %v2937
      %v3468 = vunpack.c.l.b16 %v2938
      %v3469 = vunpack.c.h.b16 %v2938
      %v3470 = vunpack.c.l.b16 %v2939
      %v3471 = vunpack.c.h.b16 %v2939
      %v3472 = vunpack.c.l.b16 %v2940
      %v3473 = vunpack.c.h.b16 %v2940
      %v3474 = vunpack.c.l.b16 %v2941
      %v3475 = vunpack.c.h.b16 %v2941
      %v3476 = vunpack.c.l.b16 %v2942
      %v3477 = vunpack.c.h.b16 %v2942
      %v3478 = vunpack.c.l.b16 %v2943
      %v3479 = vunpack.c.h.b16 %v2943
      %v3480 = vunpack.c.l.b16 %v2944
      %v3481 = vunpack.c.h.b16 %v2944
      %v3482 = vunpack.c.l.b16 %v2945
      %v3483 = vunpack.c.h.b16 %v2945
      %v3484 = vunpack.c.l.b16 %v2946
      %v3485 = vunpack.c.h.b16 %v2946
      %v3486 = vunpack.c.l.b16 %v2947
      %v3487 = vunpack.c.h.b16 %v2947
      %v3488 = vunpack.c.l.b16 %v2948
      %v3489 = vunpack.c.h.b16 %v2948
      %v3490 = vunpack.c.l.b16 %v2949
      %v3491 = vunpack.c.h.b16 %v2949
      %v3492 = vunpack.c.l.b16 %v2950
      %v3493 = vunpack.c.h.b16 %v2950
      %v3494 = vunpack.c.l.b16 %v2951
      %v3495 = vunpack.c.h.b16 %v2951
      %v3496 = vunpack.c.l.b16 %v2952
      %v3497 = vunpack.c.h.b16 %v2952
      %v3498 = vunpack.c.l.b16 %v2953
      %v3499 = vunpack.c.h.b16 %v2953
      %v3500 = vunpack.c.l.b16 %v2954
      %v3501 = vunpack.c.h.b16 %v2954
      %v3502 = vunpack.c.l.b16 %v2955
      %v3503 = vunpack.c.h.b16 %v2955
      %v3504 = vunpack.c.l.b16 %v2956
      %v3505 = vunpack.c.h.b16 %v2956
      %v3506 = vunpack.c.l.b16 %v2957
      %v3507 = vunpack.c.h.b16 %v2957
      %v3508 = vunpack.c.l.b16 %v2958
      %v3509 = vunpack.c.h.b16 %v2958
      %v3510 = vunpack.c.l.b16 %v2959
      %v3511 = vunpack.c.h.b16 %v2959
      %v3512 = vunpack.c.l.b16 %v2960
      %v3513 = vunpack.c.h.b16 %v2960
      %v3514 = vunpack.c.l.b16 %v2961
      %v3515 = vunpack.c.h.b16 %v2961
      %v3516 = vunpack.c.l.b16 %v2962
      %v3517 = vunpack.c.h.b16 %v2962
      %v3518 = vunpack.c.l.b16 %v2963
      %v3519 = vunpack.c.h.b16 %v2963
      %v3520 = vunpack.c.l.b16 %v2964
      %v3521 = vunpack.c.h.b16 %v2964
      %v3522 = vunpack.c.l.b16 %v2965
      %v3523 = vunpack.c.h.b16 %v2965
      %v3524 = vunpack.c.l.b16 %v2966
      %v3525 = vunpack.c.h.b16 %v2966
      %v3526 = vunpack.c.l.b16 %v2967
      %v3527 = vunpack.c.h.b16 %v2967
      %v3528 = vunpack.c.l.b16 %v2968
      %v3529 = vunpack.c.h.b16 %v2968
      %v3530 = vunpack.c.l.b16 %v2969
      %v3531 = vunpack.c.h.b16 %v2969
      %v3532 = vunpack.c.l.b16 %v2970
      %v3533 = vunpack.c.h.b16 %v2970
      %v3534 = vunpack.c.l.b16 %v2971
      %v3535 = vunpack.c.h.b16 %v2971
      %v3536 = vunpack.c.l.b16 %v2972
      %v3537 = vunpack.c.h.b16 %v2972
      %v3538 = vunpack.c.l.b16 %v2973
      %v3539 = vunpack.c.h.b16 %v2973
      %v3540 = vunpack.c.l.b16 %v2974
      %v3541 = vunpack.c.h.b16 %v2974
      %v3542 = vunpack.c.l.b16 %v2975
      %v3543 = vunpack.c.h.b16 %v2975
      %v3544 = vunpack.c.l.b16 %v2976
      %v3545 = vunpack.c.h.b16 %v2976
      %v3546 = vunpack.c.l.b16 %v2977
      %v3547 = vunpack.c.h.b16 %v2977
      %v3548 = vunpack.c.l.b16 %v2978
      %v3549 = vunpack.c.h.b16 %v2978
      %v3550 = vunpack.c.l.b16 %v2979
      %v3551 = vunpack.c.h.b16 %v2979
      %v3552 = vunpack.c.l.b16 %v2980
      %v3553 = vunpack.c.h.b16 %v2980
      %v3554 = vunpack.c.l.b16 %v2981
      %v3555 = vunpack.c.h.b16 %v2981
      %v3556 = vunpack.c.l.b16 %v2982
      %v3557 = vunpack.c.h.b16 %v2982
      %v3558 = vunpack.c.l.b16 %v2983
      %v3559 = vunpack.c.h.b16 %v2983
      %v3560 = vunpack.c.l.b16 %v2984
      %v3561 = vunpack.c.h.b16 %v2984
      %v3562 = vunpack.c.l.b16 %v2985
      %v3563 = vunpack.c.h.b16 %v2985
      %v3564 = vunpack.c.l.b16 %v2986
      %v3565 = vunpack.c.h.b16 %v2986
      %v3566 = vunpack.c.l.b16 %v2987
      %v3567 = vunpack.c.h.b16 %v2987
      %v3568 = vunpack.c.l.b16 %v2988
      %v3569 = vunpack.c.h.b16 %v2988
      %v3570 = vunpack.c.l.b16 %v2989
      %v3571 = vunpack.c.h.b16 %v2989
      %v3572 = vunpack.c.l.b16 %v2990
      %v3573 = vunpack.c.h.b16 %v2990
      %v3574 = vunpack.c.l.b16 %v2991
      %v3575 = vunpack.c.h.b16 %v2991
      %v3576 = vunpack.c.l.b16 %v2992
      %v3577 = vunpack.c.h.b16 %v2992
      %v3578 = vunpack.c.l.b16 %v2993
      %v3579 = vunpack.c.h.b16 %v2993
      %v3580 = vunpack.c.l.b16 %v2994
      %v3581 = vunpack.c.h.b16 %v2994
      %v3582 = vunpack.c.l.b16 %v2995
      %v3583 = vunpack.c.h.b16 %v2995
      %v3584 = vunpack.c.l.b16 %v2996
      %v3585 = vunpack.c.h.b16 %v2996
      %v3586 = vunpack.c.l.b16 %v2997
      %v3587 = vunpack.c.h.b16 %v2997
      %v3588 = vunpack.c.l.b16 %v2998
      %v3589 = vunpack.c.h.b16 %v2998
      %v3590 = vunpack.c.l.b16 %v2999
      %v3591 = vunpack.c.h.b16 %v2999
      %v3592 = vunpack.c.l.b16 %v3000
      %v3593 = vunpack.c.h.b16 %v3000
      %v3594 = vunpack.c.l.b16 %v3001
      %v3595 = vunpack.c.h.b16 %v3001
      %v3596 = vunpack.c.l.b16 %v3002
      %v3597 = vunpack.c.h.b16 %v3002
      %v3598 = vunpack.c.l.b16 %v3003
      %v3599 = vunpack.c.h.b16 %v3003
      %v3600 = vunpack.c.l.b16 %v3004
      %v3601 = vunpack.c.h.b16 %v3004
      %v3602 = vunpack.c.l.b16 %v3005
      %v3603 = vunpack.c.h.b16 %v3005
      %v3604 = vunpack.c.l.b16 %v3006
      %v3605 = vunpack.c.h.b16 %v3006
      %v3606 = vunpack.c.l.b16 %v3007
      %v3607 = vunpack.c.h.b16 %v3007
      %v3608 = vunpack.c.l.b16 %v3008
      %v3609 = vunpack.c.h.b16 %v3008
      %v3610 = vunpack.c.l.b16 %v3009
      %v3611 = vunpack.c.h.b16 %v3009
      %v3612 = vunpack.c.l.b16 %v3010
      %v3613 = vunpack.c.h.b16 %v3010
      %v3614 = vunpack.c.l.b16 %v3011
      %v3615 = vunpack.c.h.b16 %v3011
      %v3616 = vunpack.c.l.b16 %v3012
      %v3617 = vunpack.c.h.b16 %v3012
      %v3618 = vunpack.c.l.b16 %v3013
      %v3619 = vunpack.c.h.b16 %v3013
      %v3620 = vunpack.c.l.b16 %v3014
      %v3621 = vunpack.c.h.b16 %v3014
      %v3622 = vunpack.c.l.b16 %v3015
      %v3623 = vunpack.c.h.b16 %v3015
      %v3624 = vpack.c.b16 %v3246, %v3240
      %v3625 = vpack.c.b16 %v3247, %v3241
      %v3626 = vpack.c.b16 %v3248, %v3242
      %v3627 = vpack.c.b16 %v3249, %v3243
      %v3628 = vpack.c.b16 %v3250, %v3244
      %v3629 = vpack.c.b16 %v3251, %v3245
      %v3630 = vpack.c.b16 %v3258, %v3252
      %v3631 = vpack.c.b16 %v3259, %v3253
      %v3632 = vpack.c.b16 %v3260, %v3254
      %v3633 = vpack.c.b16 %v3261, %v3255
      %v3634 = vpack.c.b16 %v3262, %v3256
      %v3635 = vpack.c.b16 %v3263, %v3257
      %v3636 = vpack.c.b16 %v3270, %v3264
      %v3637 = vpack.c.b16 %v3271, %v3265
      %v3638 = vpack.c.b16 %v3272, %v3266
      %v3639 = vpack.c.b16 %v3273, %v3267
      %v3640 = vpack.c.b16 %v3274, %v3268
      %v3641 = vpack.c.b16 %v3275, %v3269
      %v3642 = vpack.c.b16 %v3282, %v3276
      %v3643 = vpack.c.b16 %v3283, %v3277
      %v3644 = vpack.c.b16 %v3284, %v3278
      %v3645 = vpack.c.b16 %v3285, %v3279
      %v3646 = vpack.c.b16 %v3286, %v3280
      %v3647 = vpack.c.b16 %v3287, %v3281
      %v3648 = vpack.c.b16 %v3294, %v3288
      %v3649 = vpack.c.b16 %v3295, %v3289
      %v3650 = vpack.c.b16 %v3296, %v3290
      %v3651 = vpack.c.b16 %v3297, %v3291
      %v3652 = vpack.c.b16 %v3298, %v3292
      %v3653 = vpack.c.b16 %v3299, %v3293
      %v3654 = vpack.c.b16 %v3306, %v3300
      %v3655 = vpack.c.b16 %v3307, %v3301
      %v3656 = vpack.c.b16 %v3308, %v3302
      %v3657 = vpack.c.b16 %v3309, %v3303
      %v3658 = vpack.c.b16 %v3310, %v3304
      %v3659 = vpack.c.b16 %v3311, %v3305
      %v3660 = vpack.c.b16 %v3318, %v3312
      %v3661 = vpack.c.b16 %v3319, %v3313
      %v3662 = vpack.c.b16 %v3320, %v3314
      %v3663 = vpack.c.b16 %v3321, %v3315
      %v3664 = vpack.c.b16 %v3322, %v3316
      %v3665 = vpack.c.b16 %v3323, %v3317
      %v3666 = vpack.c.b16 %v3330, %v3324
      %v3667 = vpack.c.b16 %v3331, %v3325
      %v3668 = vpack.c.b16 %v3332, %v3326
      %v3669 = vpack.c.b16 %v3333, %v3327
      %v3670 = vpack.c.b16 %v3334, %v3328
      %v3671 = vpack.c.b16 %v3335, %v3329
      %v3672 = vpack.c.b16 %v3342, %v3336
      %v3673 = vpack.c.b16 %v3343, %v3337
      %v3674 = vpack.c.b16 %v3344, %v3338
      %v3675 = vpack.c.b16 %v3345, %v3339
      %v3676 = vpack.c.b16 %v3346, %v3340
      %v3677 = vpack.c.b16 %v3347, %v3341
      %v3678 = vpack.c.b16 %v3354, %v3348
      %v3679 = vpack.c.b16 %v3355, %v3349
      %v3680 = vpack.c.b16 %v3356, %v3350
      %v3681 = vpack.c.b16 %v3357, %v3351
      %v3682 = vpack.c.b16 %v3358, %v3352
      %v3683 = vpack.c.b16 %v3359, %v3353
      %v3684 = vpack.c.b16 %v3366, %v3360
      %v3685 = vpack.c.b16 %v3367, %v3361
      %v3686 = vpack.c.b16 %v3368, %v3362
      %v3687 = vpack.c.b16 %v3369, %v3363
      %v3688 = vpack.c.b16 %v3370, %v3364
      %v3689 = vpack.c.b16 %v3371, %v3365
      %v3690 = vpack.c.b16 %v3378, %v3372
      %v3691 = vpack.c.b16 %v3379, %v3373
      %v3692 = vpack.c.b16 %v3380, %v3374
      %v3693 = vpack.c.b16 %v3381, %v3375
      %v3694 = vpack.c.b16 %v3382, %v3376
      %v3695 = vpack.c.b16 %v3383, %v3377
      %v3696 = vpack.c.b16 %v3390, %v3384
      %v3697 = vpack.c.b16 %v3391, %v3385
      %v3698 = vpack.c.b16 %v3392, %v3386
      %v3699 = vpack.c.b16 %v3393, %v3387
      %v3700 = vpack.c.b16 %v3394, %v3388
      %v3701 = vpack.c.b16 %v3395, %v3389
      %v3702 = vpack.c.b16 %v3402, %v3396
      %v3703 = vpack.c.b16 %v3403, %v3397
      %v3704 = vpack.c.b16 %v3404, %v3398
      %v3705 = vpack.c.b16 %v3405, %v3399
      %v3706 = vpack.c.b16 %v3406, %v3400
      %v3707 = vpack.c.b16 %v3407, %v3401
      %v3708 = vpack.c.b16 %v3414, %v3408
      %v3709 = vpack.c.b16 %v3415, %v3409
      %v3710 = vpack.c.b16 %v3416, %v3410
      %v3711 = vpack.c.b16 %v3417, %v3411
      %v3712 = vpack.c.b16 %v3418, %v3412
      %v3713 = vpack.c.b16 %v3419, %v3413
      %v3714 = vpack.c.b16 %v3426, %v3420
      %v3715 = vpack.c.b16 %v3427, %v3421
      %v3716 = vpack.c.b16 %v3428, %v3422
      %v3717 = vpack.c.b16 %v3429, %v3423
      %v3718 = vpack.c.b16 %v3430, %v3424
      %v3719 = vpack.c.b16 %v3431, %v3425
      %v3720 = vpack.c.b16 %v3438, %v3432
      %v3721 = vpack.c.b16 %v3439, %v3433
      %v3722 = vpack.c.b16 %v3440, %v3434
      %v3723 = vpack.c.b16 %v3441, %v3435
      %v3724 = vpack.c.b16 %v3442, %v3436
      %v3725 = vpack.c.b16 %v3443, %v3437
      %v3726 = vpack.c.b16 %v3450, %v3444
      %v3727 = vpack.c.b16 %v3451, %v3445
      %v3728 = vpack.c.b16 %v3452, %v3446
      %v3729 = vpack.c.b16 %v3453, %v3447
      %v3730 = vpack.c.b16 %v3454, %v3448
      %v3731 = vpack.c.b16 %v3455, %v3449
      %v3732 = vpack.c.b16 %v3462, %v3456
      %v3733 = vpack.c.b16 %v3463, %v3457
      %v3734 = vpack.c.b16 %v3464, %v3458
      %v3735 = vpack.c.b16 %v3465, %v3459
      %v3736 = vpack.c.b16 %v3466, %v3460
      %v3737 = vpack.c.b16 %v3467, %v3461
      %v3738 = vpack.c.b16 %v3474, %v3468
      %v3739 = vpack.c.b16 %v3475, %v3469
      %v3740 = vpack.c.b16 %v3476, %v3470
      %v3741 = vpack.c.b16 %v3477, %v3471
      %v3742 = vpack.c.b16 %v3478, %v3472
      %v3743 = vpack.c.b16 %v3479, %v3473
      %v3744 = vpack.c.b16 %v3486, %v3480
      %v3745 = vpack.c.b16 %v3487, %v3481
      %v3746 = vpack.c.b16 %v3488, %v3482
      %v3747 = vpack.c.b16 %v3489, %v3483
      %v3748 = vpack.c.b16 %v3490, %v3484
      %v3749 = vpack.c.b16 %v3491, %v3485
      %v3750 = vpack.c.b16 %v3498, %v3492
      %v3751 = vpack.c.b16 %v3499, %v3493
      %v3752 = vpack.c.b16 %v3500, %v3494
      %v3753 = vpack.c.b16 %v3501, %v3495
      %v3754 = vpack.c.b16 %v3502, %v3496
      %v3755 = vpack.c.b16 %v3503, %v3497
      %v3756 = vpack.c.b16 %v3510, %v3504
      %v3757 = vpack.c.b16 %v3511, %v3505
      %v3758 = vpack.c.b16 %v3512, %v3506
      %v3759 = vpack.c.b16 %v3513, %v3507
      %v3760 = vpack.c.b16 %v3514, %v3508
      %v3761 = vpack.c.b16 %v3515, %v3509
      %v3762 = vpack.c.b16 %v3522, %v3516
      %v3763 = vpack.c.b16 %v3523, %v3517
      %v3764 = vpack.c.b16 %v3524, %v3518
      %v3765 = vpack.c.b16 %v3525, %v3519
      %v3766 = vpack.c.b16 %v3526, %v3520
      %v3767 = vpack.c.b16 %v3527, %v3521
      %v3768 = vpack.c.b16 %v3534, %v3528
      %v3769 = vpack.c.b16 %v3535, %v3529
      %v3770 = vpack.c.b16 %v3536, %v3530
      %v3771 = vpack.c.b16 %v3537, %v3531
      %v3772 = vpack.c.b16 %v3538, %v3532
      %v3773 = vpack.c.b16 %v3539, %v3533
      %v3774 = vpack.c.b16 %v3546, %v3540
      %v3775 = vpack.c.b16 %v3547, %v3541
      %v3776 = vpack.c.b16 %v3548, %v3542
      %v3777 = vpack.c.b16 %v3549, %v3543
      %v3778 = vpack.c.b16 %v3550, %v3544
      %v3779 = vpack.c.b16 %v3551, %v3545
      %v3780 = vpack.c.b16 %v3558, %v3552
      %v3781 = vpack.c.b16 %v3559, %v3553
      %v3782 = vpack.c.b16 %v3560, %v3554
      %v3783 = vpack.c.b16 %v3561, %v3555
      %v3784 = vpack.c.b16 %v3562, %v3556
      %v3785 = vpack.c.b16 %v3563, %v3557
      %v3786 = vpack.c.b16 %v3570, %v3564
      %v3787 = vpack.c.b16 %v3571, %v3565
      %v3788 = vpack.c.b16 %v3572, %v3566
      %v3789 = vpack.c.b16 %v3573, %v3567
      %v3790 = vpack.c.b16 %v3574, %v3568
      %v3791 = vpack.c.b16 %v3575, %v3569
      %v3792 = vpack.c.b16 %v3582, %v3576
      %v3793 = vpack.c.b16 %v3583, %v3577
      %v3794 = vpack.c.b16 %v3584, %v3578
      %v3795 = vpack.c.b16 %v3585, %v3579
      %v3796 = vpack.c.b16 %v3586, %v3580
      %v3797 = vpack.c.b16 %v3587, %v3581
      %v3798 = vpack.c.b16 %v3594, %v3588
      %v3799 = vpack.c.b16 %v3595, %v3589
      %v3800 = vpack.c.b16 %v3596, %v3590
      %v3801 = vpack.c.b16 %v3597, %v3591
      %v3802 = vpack.c.b16 %v3598, %v3592
      %v3803 = vpack.c.b16 %v3599, %v3593
      %v3804 = vpack.c.b16 %v3606, %v3600
      %v3805 = vpack.c.b16 %v3607, %v3601
      %v3806 = vpack.c.b16 %v3608, %v3602
      %v3807 = vpack.c.b16 %v3609, %v3603
      %v3808 = vpack.c.b16 %v3610, %v3604
      %v3809 = vpack.c.b16 %v3611, %v3605
      %v3810 = vpack.c.b16 %v3618, %v3612
      %v3811 = vpack.c.b16 %v3619, %v3613
      %v3812 = vpack.c.b16 %v3620, %v3614
      %v3813 = vpack.c.b16 %v3621, %v3615
      %v3814 = vpack.c.b16 %v3622, %v3616
      %v3815 = vpack.c.b16 %v3623, %v3617
      %4008 = vmatprep.subr.bf16.mxu0 %v3625
      %4009 = vmatpush1.bf16.msra.mxu0 %v3624
      %4010 = vmatprep.subr.bf16.mxu0 %v3631
      %4011 = vmatpush1.bf16.msra.mxu0 %v3630
      %4012 = vmatprep.subr.bf16.mxu0 %v3637
      %4013 = vmatpush1.bf16.msra.mxu0 %v3636
      %4014 = vmatprep.subr.bf16.mxu0 %v3643
      %4015 = vmatpush1.bf16.msra.mxu0 %v3642
      %4016 = vmatprep.subr.bf16.mxu0 %v3649
      %4017 = vmatpush1.bf16.msra.mxu0 %v3648
      %4018 = vmatprep.subr.bf16.mxu0 %v3655
      %4019 = vmatpush1.bf16.msra.mxu0 %v3654
      %4020 = vmatprep.subr.bf16.mxu0 %v3661
      %4021 = vmatpush1.bf16.msra.mxu0 %v3660
      %4022 = vmatprep.subr.bf16.mxu0 %v3667
      %4023 = vmatpush1.bf16.msra.mxu0 %v3666
      %4024 = vmatprep.subr.bf16.mxu0 %v3673
      %4025 = vmatpush1.bf16.msra.mxu0 %v3672
      %4026 = vmatprep.subr.bf16.mxu0 %v3679
      %4027 = vmatpush1.bf16.msra.mxu0 %v3678
      %4028 = vmatprep.subr.bf16.mxu0 %v3685
      %4029 = vmatpush1.bf16.msra.mxu0 %v3684
      %4030 = vmatprep.subr.bf16.mxu0 %v3691
      %4031 = vmatpush1.bf16.msra.mxu0 %v3690
      %4032 = vmatprep.subr.bf16.mxu0 %v3697
      %4033 = vmatpush1.bf16.msra.mxu0 %v3696
      %4034 = vmatprep.subr.bf16.mxu0 %v3703
      %4035 = vmatpush1.bf16.msra.mxu0 %v3702
      %4036 = vmatprep.subr.bf16.mxu0 %v3709
      %4037 = vmatpush1.bf16.msra.mxu0 %v3708
      %4038 = vmatprep.subr.bf16.mxu0 %v3715
      %4039 = vmatpush1.bf16.msra.mxu0 %v3714
      %4040 = vmatprep.mubr.bf16.mxu0 %v2793
      %4041 = vmatmul.mubr.bf16.gmra.mrb[0].mxu0 %v2792
      %v4042 = vpop.f32.mrb[0].mxu0
      %v4043 = vadd.f32 %v3021, %v4042
      %v4044 = vpop.f32.mrb[0].mxu0
      %v4045 = vadd.f32 %v3025, %v4044
      %v4046 = vpop.f32.mrb[0].mxu0
      %v4047 = vadd.f32 %v3021, %v4046
      %v4048 = vpop.f32.mrb[0].mxu0
      %v4049 = vadd.f32 %v3025, %v4048
      %4050 = vmatprep.mubr.bf16.mxu0 %v2797
      %4051 = vmatmul.mubr.bf16.gmra.mrb[0].mxu0 %v2796
      %v4052 = vpop.f32.mrb[0].mxu0
      %v4053 = vadd.f32 %v3021, %v4052
      %v4054 = vpop.f32.mrb[0].mxu0
      %v4055 = vadd.f32 %v3025, %v4054
      %v4056 = vpop.f32.mrb[0].mxu0
      %v4057 = vadd.f32 %v3021, %v4056
      %v4058 = vpop.f32.mrb[0].mxu0
      %v4059 = vadd.f32 %v3025, %v4058
      %4060 = vmatprep.mubr.bf16.mxu0 %v2801
      %4061 = vmatmul.mubr.bf16.gmra.mrb[0].mxu0 %v2800
      %v4062 = vpop.f32.mrb[0].mxu0
      %v4063 = vadd.f32 %v3021, %v4062
      %v4064 = vpop.f32.mrb[0].mxu0
      %v4065 = vadd.f32 %v3025, %v4064
      %v4066 = vpop.f32.mrb[0].mxu0
      %v4067 = vadd.f32 %v3021, %v4066
      %v4068 = vpop.f32.mrb[0].mxu0
      %v4069 = vadd.f32 %v3025, %v4068
      %4070 = vmatprep.mubr.bf16.mxu0 %v2805
      %4071 = vmatmul.mubr.bf16.gmra.mrb[0].mxu0 %v2804
      %v4072 = vpop.f32.mrb[0].mxu0
      %v4073 = vadd.f32 %v3021, %v4072
      %v4074 = vpop.f32.mrb[0].mxu0
      %v4075 = vadd.f32 %v3025, %v4074
      %v4076 = vpop.f32.mrb[0].mxu0
      %v4077 = vadd.f32 %v3021, %v4076
      %v4078 = vpop.f32.mrb[0].mxu0
      %v4079 = vadd.f32 %v3025, %v4078
      %4080 = vmatprep.mubr.bf16.mxu0 %v2809
      %4081 = vmatmul.mubr.bf16.gmra.mrb[0].mxu0 %v2808
      %v4082 = vpop.f32.mrb[0].mxu0
      %v4083 = vadd.f32 %v3021, %v4082
      %v4084 = vpop.f32.mrb[0].mxu0
      %v4085 = vadd.f32 %v3025, %v4084
      %v4086 = vpop.f32.mrb[0].mxu0
      %v4087 = vadd.f32 %v3021, %v4086
      %v4088 = vpop.f32.mrb[0].mxu0
      %v4089 = vadd.f32 %v3025, %v4088
      %4090 = vmatprep.mubr.bf16.mxu0 %v2813
      %4091 = vmatmul.mubr.bf16.gmra.mrb[0].mxu0 %v2812
      %v4092 = vpop.f32.mrb[0].mxu0
      %v4093 = vadd.f32 %v3021, %v4092
      %v4094 = vpop.f32.mrb[0].mxu0
      %v4095 = vadd.f32 %v3025, %v4094
      %v4096 = vpop.f32.mrb[0].mxu0
      %v4097 = vadd.f32 %v3021, %v4096
      %v4098 = vpop.f32.mrb[0].mxu0
      %v4099 = vadd.f32 %v3025, %v4098
      %4100 = vmatprep.mubr.bf16.mxu0 %v2817
      %4101 = vmatmul.mubr.bf16.gmra.mrb[0].mxu0 %v2816
      %v4102 = vpop.f32.mrb[0].mxu0
      %v4103 = vadd.f32 %v3021, %v4102
      %v4104 = vpop.f32.mrb[0].mxu0
      %v4105 = vadd.f32 %v3025, %v4104
      %v4106 = vpop.f32.mrb[0].mxu0
      %v4107 = vadd.f32 %v3021, %v4106
      %v4108 = vpop.f32.mrb[0].mxu0
      %v4109 = vadd.f32 %v3025, %v4108
      %4110 = vmatprep.mubr.bf16.mxu0 %v2821
      %4111 = vmatmul.mubr.bf16.gmra.mrb[0].mxu0 %v2820
      %v4112 = vpop.f32.mrb[0].mxu0
      %v4113 = vadd.f32 %v3021, %v4112
      %v4114 = vpop.f32.mrb[0].mxu0
      %v4115 = vadd.f32 %v3025, %v4114
      %v4116 = vpop.f32.mrb[0].mxu0
      %v4117 = vadd.f32 %v3021, %v4116
      %v4118 = vpop.f32.mrb[0].mxu0
      %v4119 = vadd.f32 %v3025, %v4118
      %4120 = vdwg.mxu0
      %4121 = vmatprep.subr.bf16.mxu0 %v3721
      %4122 = vmatpush1.bf16.msra.mxu0 %v3720
      %4123 = vmatprep.subr.bf16.mxu0 %v3727
      %4124 = vmatpush1.bf16.msra.mxu0 %v3726
      %4125 = vmatprep.subr.bf16.mxu0 %v3733
      %4126 = vmatpush1.bf16.msra.mxu0 %v3732
      %4127 = vmatprep.subr.bf16.mxu0 %v3739
      %4128 = vmatpush1.bf16.msra.mxu0 %v3738
      %4129 = vmatprep.subr.bf16.mxu0 %v3745
      %4130 = vmatpush1.bf16.msra.mxu0 %v3744
      %4131 = vmatprep.subr.bf16.mxu0 %v3751
      %4132 = vmatpush1.bf16.msra.mxu0 %v3750
      %4133 = vmatprep.subr.bf16.mxu0 %v3757
      %4134 = vmatpush1.bf16.msra.mxu0 %v3756
      %4135 = vmatprep.subr.bf16.mxu0 %v3763
      %4136 = vmatpush1.bf16.msra.mxu0 %v3762
      %4137 = vmatprep.subr.bf16.mxu0 %v3769
      %4138 = vmatpush1.bf16.msra.mxu0 %v3768
      %4139 = vmatprep.subr.bf16.mxu0 %v3775
      %4140 = vmatpush1.bf16.msra.mxu0 %v3774
      %4141 = vmatprep.subr.bf16.mxu0 %v3781
      %4142 = vmatpush1.bf16.msra.mxu0 %v3780
      %4143 = vmatprep.subr.bf16.mxu0 %v3787
      %4144 = vmatpush1.bf16.msra.mxu0 %v3786
      %4145 = vmatprep.subr.bf16.mxu0 %v3793
      %4146 = vmatpush1.bf16.msra.mxu0 %v3792
      %4147 = vmatprep.subr.bf16.mxu0 %v3799
      %4148 = vmatpush1.bf16.msra.mxu0 %v3798
      %4149 = vmatprep.subr.bf16.mxu0 %v3805
      %4150 = vmatpush1.bf16.msra.mxu0 %v3804
      %4151 = vmatprep.subr.bf16.mxu0 %v3811
      %4152 = vmatpush1.bf16.msra.mxu0 %v3810
      %4153 = vmatprep.mubr.bf16.mxu0 %v2795
      %4154 = vmatmul.mubr.bf16.gmra.mrb[0].mxu0 %v2794
      %v4155 = vpop.f32.mrb[0].mxu0
      %v4156 = vadd.f32 %v4043, %v4155
      %v4157 = vpop.f32.mrb[0].mxu0
      %v4158 = vadd.f32 %v4045, %v4157
      %v4159 = vpop.f32.mrb[0].mxu0
      %v4160 = vadd.f32 %v4047, %v4159
      %v4161 = vpop.f32.mrb[0].mxu0
      %v4162 = vadd.f32 %v4049, %v4161
      %4163 = vmatprep.mubr.bf16.mxu0 %v2799
      %4164 = vmatmul.mubr.bf16.gmra.mrb[0].mxu0 %v2798
      %v4165 = vpop.f32.mrb[0].mxu0
      %v4166 = vadd.f32 %v4053, %v4165
      %v4167 = vpop.f32.mrb[0].mxu0
      %v4168 = vadd.f32 %v4055, %v4167
      %v4169 = vpop.f32.mrb[0].mxu0
      %v4170 = vadd.f32 %v4057, %v4169
      %v4171 = vpop.f32.mrb[0].mxu0
      %v4172 = vadd.f32 %v4059, %v4171
      %4173 = vmatprep.mubr.bf16.mxu0 %v2803
      %4174 = vmatmul.mubr.bf16.gmra.mrb[0].mxu0 %v2802
      %v4175 = vpop.f32.mrb[0].mxu0
      %v4176 = vadd.f32 %v4063, %v4175
      %v4177 = vpop.f32.mrb[0].mxu0
      %v4178 = vadd.f32 %v4065, %v4177
      %v4179 = vpop.f32.mrb[0].mxu0
      %v4180 = vadd.f32 %v4067, %v4179
      %v4181 = vpop.f32.mrb[0].mxu0
      %v4182 = vadd.f32 %v4069, %v4181
      %4183 = vmatprep.mubr.bf16.mxu0 %v2807
      %4184 = vmatmul.mubr.bf16.gmra.mrb[0].mxu0 %v2806
      %v4185 = vpop.f32.mrb[0].mxu0
      %v4186 = vadd.f32 %v4073, %v4185
      %v4187 = vpop.f32.mrb[0].mxu0
      %v4188 = vadd.f32 %v4075, %v4187
      %v4189 = vpop.f32.mrb[0].mxu0
      %v4190 = vadd.f32 %v4077, %v4189
      %v4191 = vpop.f32.mrb[0].mxu0
      %v4192 = vadd.f32 %v4079, %v4191
      %4193 = vmatprep.mubr.bf16.mxu0 %v2811
      %4194 = vmatmul.mubr.bf16.gmra.mrb[0].mxu0 %v2810
      %v4195 = vpop.f32.mrb[0].mxu0
      %v4196 = vadd.f32 %v4083, %v4195
      %v4197 = vpop.f32.mrb[0].mxu0
      %v4198 = vadd.f32 %v4085, %v4197
      %v4199 = vpop.f32.mrb[0].mxu0
      %v4200 = vadd.f32 %v4087, %v4199
      %v4201 = vpop.f32.mrb[0].mxu0
      %v4202 = vadd.f32 %v4089, %v4201
      %4203 = vmatprep.mubr.bf16.mxu0 %v2815
      %4204 = vmatmul.mubr.bf16.gmra.mrb[0].mxu0 %v2814
      %v4205 = vpop.f32.mrb[0].mxu0
      %v4206 = vadd.f32 %v4093, %v4205
      %v4207 = vpop.f32.mrb[0].mxu0
      %v4208 = vadd.f32 %v4095, %v4207
      %v4209 = vpop.f32.mrb[0].mxu0
      %v4210 = vadd.f32 %v4097, %v4209
      %v4211 = vpop.f32.mrb[0].mxu0
      %v4212 = vadd.f32 %v4099, %v4211
      %4213 = vmatprep.mubr.bf16.mxu0 %v2819
      %4214 = vmatmul.mubr.bf16.gmra.mrb[0].mxu0 %v2818
      %v4215 = vpop.f32.mrb[0].mxu0
      %v4216 = vadd.f32 %v4103, %v4215
      %v4217 = vpop.f32.mrb[0].mxu0
      %v4218 = vadd.f32 %v4105, %v4217
      %v4219 = vpop.f32.mrb[0].mxu0
      %v4220 = vadd.f32 %v4107, %v4219
      %v4221 = vpop.f32.mrb[0].mxu0
      %v4222 = vadd.f32 %v4109, %v4221
      %4223 = vmatprep.mubr.bf16.mxu0 %v2823
      %4224 = vmatmul.mubr.bf16.gmra.mrb[0].mxu0 %v2822
      %v4225 = vpop.f32.mrb[0].mxu0
      %v4226 = vadd.f32 %v4113, %v4225
      %v4227 = vpop.f32.mrb[0].mxu0
      %v4228 = vadd.f32 %v4115, %v4227
      %v4229 = vpop.f32.mrb[0].mxu0
      %v4230 = vadd.f32 %v4117, %v4229
      %v4231 = vpop.f32.mrb[0].mxu0
      %v4232 = vadd.f32 %v4119, %v4231
      %4233 = vdwg.mxu0
      %4234 = vmatprep.subr.bf16.mxu0 %v3627
      %4235 = vmatpush1.bf16.msra.mxu0 %v3626
      %4236 = vmatprep.subr.bf16.mxu0 %v3633
      %4237 = vmatpush1.bf16.msra.mxu0 %v3632
      %4238 = vmatprep.subr.bf16.mxu0 %v3639
      %4239 = vmatpush1.bf16.msra.mxu0 %v3638
      %4240 = vmatprep.subr.bf16.mxu0 %v3645
      %4241 = vmatpush1.bf16.msra.mxu0 %v3644
      %4242 = vmatprep.subr.bf16.mxu0 %v3651
      %4243 = vmatpush1.bf16.msra.mxu0 %v3650
      %4244 = vmatprep.subr.bf16.mxu0 %v3657
      %4245 = vmatpush1.bf16.msra.mxu0 %v3656
      %4246 = vmatprep.subr.bf16.mxu0 %v3663
      %4247 = vmatpush1.bf16.msra.mxu0 %v3662
      %4248 = vmatprep.subr.bf16.mxu0 %v3669
      %4249 = vmatpush1.bf16.msra.mxu0 %v3668
      %4250 = vmatprep.subr.bf16.mxu0 %v3675
      %4251 = vmatpush1.bf16.msra.mxu0 %v3674
      %4252 = vmatprep.subr.bf16.mxu0 %v3681
      %4253 = vmatpush1.bf16.msra.mxu0 %v3680
      %4254 = vmatprep.subr.bf16.mxu0 %v3687
      %4255 = vmatpush1.bf16.msra.mxu0 %v3686
      %4256 = vmatprep.subr.bf16.mxu0 %v3693
      %4257 = vmatpush1.bf16.msra.mxu0 %v3692
      %4258 = vmatprep.subr.bf16.mxu0 %v3699
      %4259 = vmatpush1.bf16.msra.mxu0 %v3698
      %4260 = vmatprep.subr.bf16.mxu0 %v3705
      %4261 = vmatpush1.bf16.msra.mxu0 %v3704
      %4262 = vmatprep.subr.bf16.mxu0 %v3711
      %4263 = vmatpush1.bf16.msra.mxu0 %v3710
      %4264 = vmatprep.subr.bf16.mxu0 %v3717
      %4265 = vmatpush1.bf16.msra.mxu0 %v3716
      %4266 = vmatprep.mubr.bf16.mxu0 %v2793
      %4267 = vmatmul.mubr.bf16.gmra.mrb[0].mxu0 %v2792
      %v4268 = vpop.f32.mrb[0].mxu0
      %v4269 = vadd.f32 %v3029, %v4268
      %v4270 = vpop.f32.mrb[0].mxu0
      %v4271 = vadd.f32 %v3033, %v4270
      %v4272 = vpop.f32.mrb[0].mxu0
      %v4273 = vadd.f32 %v3029, %v4272
      %v4274 = vpop.f32.mrb[0].mxu0
      %v4275 = vadd.f32 %v3033, %v4274
      %4276 = vmatprep.mubr.bf16.mxu0 %v2797
      %4277 = vmatmul.mubr.bf16.gmra.mrb[0].mxu0 %v2796
      %v4278 = vpop.f32.mrb[0].mxu0
      %v4279 = vadd.f32 %v3029, %v4278
      %v4280 = vpop.f32.mrb[0].mxu0
      %v4281 = vadd.f32 %v3033, %v4280
      %v4282 = vpop.f32.mrb[0].mxu0
      %v4283 = vadd.f32 %v3029, %v4282
      %v4284 = vpop.f32.mrb[0].mxu0
      %v4285 = vadd.f32 %v3033, %v4284
      %4286 = vmatprep.mubr.bf16.mxu0 %v2801
      %4287 = vmatmul.mubr.bf16.gmra.mrb[0].mxu0 %v2800
      %v4288 = vpop.f32.mrb[0].mxu0
      %v4289 = vadd.f32 %v3029, %v4288
      %v4290 = vpop.f32.mrb[0].mxu0
      %v4291 = vadd.f32 %v3033, %v4290
      %v4292 = vpop.f32.mrb[0].mxu0
      %v4293 = vadd.f32 %v3029, %v4292
      %v4294 = vpop.f32.mrb[0].mxu0
      %v4295 = vadd.f32 %v3033, %v4294
      %4296 = vmatprep.mubr.bf16.mxu0 %v2805
      %4297 = vmatmul.mubr.bf16.gmra.mrb[0].mxu0 %v2804
      %v4298 = vpop.f32.mrb[0].mxu0
      %v4299 = vadd.f32 %v3029, %v4298
      %v4300 = vpop.f32.mrb[0].mxu0
      %v4301 = vadd.f32 %v3033, %v4300
      %v4302 = vpop.f32.mrb[0].mxu0
      %v4303 = vadd.f32 %v3029, %v4302
      %v4304 = vpop.f32.mrb[0].mxu0
      %v4305 = vadd.f32 %v3033, %v4304
      %4306 = vmatprep.mubr.bf16.mxu0 %v2809
      %4307 = vmatmul.mubr.bf16.gmra.mrb[0].mxu0 %v2808
      %v4308 = vpop.f32.mrb[0].mxu0
      %v4309 = vadd.f32 %v3029, %v4308
      %v4310 = vpop.f32.mrb[0].mxu0
      %v4311 = vadd.f32 %v3033, %v4310
      %v4312 = vpop.f32.mrb[0].mxu0
      %v4313 = vadd.f32 %v3029, %v4312
      %v4314 = vpop.f32.mrb[0].mxu0
      %v4315 = vadd.f32 %v3033, %v4314
      %4316 = vmatprep.mubr.bf16.mxu0 %v2813
      %4317 = vmatmul.mubr.bf16.gmra.mrb[0].mxu0 %v2812
      %v4318 = vpop.f32.mrb[0].mxu0
      %v4319 = vadd.f32 %v3029, %v4318
      %v4320 = vpop.f32.mrb[0].mxu0
      %v4321 = vadd.f32 %v3033, %v4320
      %v4322 = vpop.f32.mrb[0].mxu0
      %v4323 = vadd.f32 %v3029, %v4322
      %v4324 = vpop.f32.mrb[0].mxu0
      %v4325 = vadd.f32 %v3033, %v4324
      %4326 = vmatprep.mubr.bf16.mxu0 %v2817
      %4327 = vmatmul.mubr.bf16.gmra.mrb[0].mxu0 %v2816
      %v4328 = vpop.f32.mrb[0].mxu0
      %v4329 = vadd.f32 %v3029, %v4328
      %v4330 = vpop.f32.mrb[0].mxu0
      %v4331 = vadd.f32 %v3033, %v4330
      %v4332 = vpop.f32.mrb[0].mxu0
      %v4333 = vadd.f32 %v3029, %v4332
      %v4334 = vpop.f32.mrb[0].mxu0
      %v4335 = vadd.f32 %v3033, %v4334
      %4336 = vmatprep.mubr.bf16.mxu0 %v2821
      %4337 = vmatmul.mubr.bf16.gmra.mrb[0].mxu0 %v2820
      %v4338 = vpop.f32.mrb[0].mxu0
      %v4339 = vadd.f32 %v3029, %v4338
      %v4340 = vpop.f32.mrb[0].mxu0
      %v4341 = vadd.f32 %v3033, %v4340
      %v4342 = vpop.f32.mrb[0].mxu0
      %v4343 = vadd.f32 %v3029, %v4342
      %v4344 = vpop.f32.mrb[0].mxu0
      %v4345 = vadd.f32 %v3033, %v4344
      %4346 = vdwg.mxu0
      %4347 = vmatprep.subr.bf16.mxu0 %v3723
      %4348 = vmatpush1.bf16.msra.mxu0 %v3722
      %4349 = vmatprep.subr.bf16.mxu0 %v3729
      %4350 = vmatpush1.bf16.msra.mxu0 %v3728
      %4351 = vmatprep.subr.bf16.mxu0 %v3735
      %4352 = vmatpush1.bf16.msra.mxu0 %v3734
      %4353 = vmatprep.subr.bf16.mxu0 %v3741
      %4354 = vmatpush1.bf16.msra.mxu0 %v3740
      %4355 = vmatprep.subr.bf16.mxu0 %v3747
      %4356 = vmatpush1.bf16.msra.mxu0 %v3746
      %4357 = vmatprep.subr.bf16.mxu0 %v3753
      %4358 = vmatpush1.bf16.msra.mxu0 %v3752
      %4359 = vmatprep.subr.bf16.mxu0 %v3759
      %4360 = vmatpush1.bf16.msra.mxu0 %v3758
      %4361 = vmatprep.subr.bf16.mxu0 %v3765
      %4362 = vmatpush1.bf16.msra.mxu0 %v3764
      %4363 = vmatprep.subr.bf16.mxu0 %v3771
      %4364 = vmatpush1.bf16.msra.mxu0 %v3770
      %4365 = vmatprep.subr.bf16.mxu0 %v3777
      %4366 = vmatpush1.bf16.msra.mxu0 %v3776
      %4367 = vmatprep.subr.bf16.mxu0 %v3783
      %4368 = vmatpush1.bf16.msra.mxu0 %v3782
      %4369 = vmatprep.subr.bf16.mxu0 %v3789
      %4370 = vmatpush1.bf16.msra.mxu0 %v3788
      %4371 = vmatprep.subr.bf16.mxu0 %v3795
      %4372 = vmatpush1.bf16.msra.mxu0 %v3794
      %4373 = vmatprep.subr.bf16.mxu0 %v3801
      %4374 = vmatpush1.bf16.msra.mxu0 %v3800
      %4375 = vmatprep.subr.bf16.mxu0 %v3807
      %4376 = vmatpush1.bf16.msra.mxu0 %v3806
      %4377 = vmatprep.subr.bf16.mxu0 %v3813
      %4378 = vmatpush1.bf16.msra.mxu0 %v3812
      %4379 = vmatprep.mubr.bf16.mxu0 %v2795
      %4380 = vmatmul.mubr.bf16.gmra.mrb[0].mxu0 %v2794
      %v4381 = vpop.f32.mrb[0].mxu0
      %v4382 = vadd.f32 %v4269, %v4381
      %v4383 = vpop.f32.mrb[0].mxu0
      %v4384 = vadd.f32 %v4271, %v4383
      %v4385 = vpop.f32.mrb[0].mxu0
      %v4386 = vadd.f32 %v4273, %v4385
      %v4387 = vpop.f32.mrb[0].mxu0
      %v4388 = vadd.f32 %v4275, %v4387
      %4389 = vmatprep.mubr.bf16.mxu0 %v2799
      %4390 = vmatmul.mubr.bf16.gmra.mrb[0].mxu0 %v2798
      %v4391 = vpop.f32.mrb[0].mxu0
      %v4392 = vadd.f32 %v4279, %v4391
      %v4393 = vpop.f32.mrb[0].mxu0
      %v4394 = vadd.f32 %v4281, %v4393
      %v4395 = vpop.f32.mrb[0].mxu0
      %v4396 = vadd.f32 %v4283, %v4395
      %v4397 = vpop.f32.mrb[0].mxu0
      %v4398 = vadd.f32 %v4285, %v4397
      %4399 = vmatprep.mubr.bf16.mxu0 %v2803
      %4400 = vmatmul.mubr.bf16.gmra.mrb[0].mxu0 %v2802
      %v4401 = vpop.f32.mrb[0].mxu0
      %v4402 = vadd.f32 %v4289, %v4401
      %v4403 = vpop.f32.mrb[0].mxu0
      %v4404 = vadd.f32 %v4291, %v4403
      %v4405 = vpop.f32.mrb[0].mxu0
      %v4406 = vadd.f32 %v4293, %v4405
      %v4407 = vpop.f32.mrb[0].mxu0
      %v4408 = vadd.f32 %v4295, %v4407
      %4409 = vmatprep.mubr.bf16.mxu0 %v2807
      %4410 = vmatmul.mubr.bf16.gmra.mrb[0].mxu0 %v2806
      %v4411 = vpop.f32.mrb[0].mxu0
      %v4412 = vadd.f32 %v4299, %v4411
      %v4413 = vpop.f32.mrb[0].mxu0
      %v4414 = vadd.f32 %v4301, %v4413
      %v4415 = vpop.f32.mrb[0].mxu0
      %v4416 = vadd.f32 %v4303, %v4415
      %v4417 = vpop.f32.mrb[0].mxu0
      %v4418 = vadd.f32 %v4305, %v4417
      %4419 = vmatprep.mubr.bf16.mxu0 %v2811
      %4420 = vmatmul.mubr.bf16.gmra.mrb[0].mxu0 %v2810
      %v4421 = vpop.f32.mrb[0].mxu0
      %v4422 = vadd.f32 %v4309, %v4421
      %v4423 = vpop.f32.mrb[0].mxu0
      %v4424 = vadd.f32 %v4311, %v4423
      %v4425 = vpop.f32.mrb[0].mxu0
      %v4426 = vadd.f32 %v4313, %v4425
      %v4427 = vpop.f32.mrb[0].mxu0
      %v4428 = vadd.f32 %v4315, %v4427
      %4429 = vmatprep.mubr.bf16.mxu0 %v2815
      %4430 = vmatmul.mubr.bf16.gmra.mrb[0].mxu0 %v2814
      %v4431 = vpop.f32.mrb[0].mxu0
      %v4432 = vadd.f32 %v4319, %v4431
      %v4433 = vpop.f32.mrb[0].mxu0
      %v4434 = vadd.f32 %v4321, %v4433
      %v4435 = vpop.f32.mrb[0].mxu0
      %v4436 = vadd.f32 %v4323, %v4435
      %v4437 = vpop.f32.mrb[0].mxu0
      %v4438 = vadd.f32 %v4325, %v4437
      %4439 = vmatprep.mubr.bf16.mxu0 %v2819
      %4440 = vmatmul.mubr.bf16.gmra.mrb[0].mxu0 %v2818
      %v4441 = vpop.f32.mrb[0].mxu0
      %v4442 = vadd.f32 %v4329, %v4441
      %v4443 = vpop.f32.mrb[0].mxu0
      %v4444 = vadd.f32 %v4331, %v4443
      %v4445 = vpop.f32.mrb[0].mxu0
      %v4446 = vadd.f32 %v4333, %v4445
      %v4447 = vpop.f32.mrb[0].mxu0
      %v4448 = vadd.f32 %v4335, %v4447
      %4449 = vmatprep.mubr.bf16.mxu0 %v2823
      %4450 = vmatmul.mubr.bf16.gmra.mrb[0].mxu0 %v2822
      %v4451 = vpop.f32.mrb[0].mxu0
      %v4452 = vadd.f32 %v4339, %v4451
      %v4453 = vpop.f32.mrb[0].mxu0
      %v4454 = vadd.f32 %v4341, %v4453
      %v4455 = vpop.f32.mrb[0].mxu0
      %v4456 = vadd.f32 %v4343, %v4455
      %v4457 = vpop.f32.mrb[0].mxu0
      %v4458 = vadd.f32 %v4345, %v4457
      %4459 = vdwg.mxu0
      %4460 = vmatprep.subr.bf16.mxu0 %v3629
      %4461 = vmatpush1.bf16.msra.mxu0 %v3628
      %4462 = vmatprep.subr.bf16.mxu0 %v3635
      %4463 = vmatpush1.bf16.msra.mxu0 %v3634
      %4464 = vmatprep.subr.bf16.mxu0 %v3641
      %4465 = vmatpush1.bf16.msra.mxu0 %v3640
      %4466 = vmatprep.subr.bf16.mxu0 %v3647
      %4467 = vmatpush1.bf16.msra.mxu0 %v3646
      %4468 = vmatprep.subr.bf16.mxu0 %v3653
      %4469 = vmatpush1.bf16.msra.mxu0 %v3652
      %4470 = vmatprep.subr.bf16.mxu0 %v3659
      %4471 = vmatpush1.bf16.msra.mxu0 %v3658
      %4472 = vmatprep.subr.bf16.mxu0 %v3665
      %4473 = vmatpush1.bf16.msra.mxu0 %v3664
      %4474 = vmatprep.subr.bf16.mxu0 %v3671
      %4475 = vmatpush1.bf16.msra.mxu0 %v3670
      %4476 = vmatprep.subr.bf16.mxu0 %v3677
      %4477 = vmatpush1.bf16.msra.mxu0 %v3676
      %4478 = vmatprep.subr.bf16.mxu0 %v3683
      %4479 = vmatpush1.bf16.msra.mxu0 %v3682
      %4480 = vmatprep.subr.bf16.mxu0 %v3689
      %4481 = vmatpush1.bf16.msra.mxu0 %v3688
      %4482 = vmatprep.subr.bf16.mxu0 %v3695
      %4483 = vmatpush1.bf16.msra.mxu0 %v3694
      %4484 = vmatprep.subr.bf16.mxu0 %v3701
      %4485 = vmatpush1.bf16.msra.mxu0 %v3700
      %4486 = vmatprep.subr.bf16.mxu0 %v3707
      %4487 = vmatpush1.bf16.msra.mxu0 %v3706
      %4488 = vmatprep.subr.bf16.mxu0 %v3713
      %4489 = vmatpush1.bf16.msra.mxu0 %v3712
      %4490 = vmatprep.subr.bf16.mxu0 %v3719
      %4491 = vmatpush1.bf16.msra.mxu0 %v3718
      %4492 = vmatprep.mubr.bf16.mxu0 %v2793
      %4493 = vmatmul.mubr.bf16.gmra.mrb[0].mxu0 %v2792
      %v4494 = vpop.f32.mrb[0].mxu0
      %v4495 = vadd.f32 %v3037, %v4494
      %v4496 = vpop.f32.mrb[0].mxu0
      %v4497 = vadd.f32 %v3041, %v4496
      %v4498 = vpop.f32.mrb[0].mxu0
      %v4499 = vadd.f32 %v3037, %v4498
      %v4500 = vpop.f32.mrb[0].mxu0
      %v4501 = vadd.f32 %v3041, %v4500
      %4502 = vmatprep.mubr.bf16.mxu0 %v2797
      %4503 = vmatmul.mubr.bf16.gmra.mrb[0].mxu0 %v2796
      %v4504 = vpop.f32.mrb[0].mxu0
      %v4505 = vadd.f32 %v3037, %v4504
      %v4506 = vpop.f32.mrb[0].mxu0
      %v4507 = vadd.f32 %v3041, %v4506
      %v4508 = vpop.f32.mrb[0].mxu0
      %v4509 = vadd.f32 %v3037, %v4508
      %v4510 = vpop.f32.mrb[0].mxu0
      %v4511 = vadd.f32 %v3041, %v4510
      %4512 = vmatprep.mubr.bf16.mxu0 %v2801
      %4513 = vmatmul.mubr.bf16.gmra.mrb[0].mxu0 %v2800
      %v4514 = vpop.f32.mrb[0].mxu0
      %v4515 = vadd.f32 %v3037, %v4514
      %v4516 = vpop.f32.mrb[0].mxu0
      %v4517 = vadd.f32 %v3041, %v4516
      %v4518 = vpop.f32.mrb[0].mxu0
      %v4519 = vadd.f32 %v3037, %v4518
      %v4520 = vpop.f32.mrb[0].mxu0
      %v4521 = vadd.f32 %v3041, %v4520
      %4522 = vmatprep.mubr.bf16.mxu0 %v2805
      %4523 = vmatmul.mubr.bf16.gmra.mrb[0].mxu0 %v2804
      %v4524 = vpop.f32.mrb[0].mxu0
      %v4525 = vadd.f32 %v3037, %v4524
      %v4526 = vpop.f32.mrb[0].mxu0
      %v4527 = vadd.f32 %v3041, %v4526
      %v4528 = vpop.f32.mrb[0].mxu0
      %v4529 = vadd.f32 %v3037, %v4528
      %v4530 = vpop.f32.mrb[0].mxu0
      %v4531 = vadd.f32 %v3041, %v4530
      %4532 = vmatprep.mubr.bf16.mxu0 %v2809
      %4533 = vmatmul.mubr.bf16.gmra.mrb[0].mxu0 %v2808
      %v4534 = vpop.f32.mrb[0].mxu0
      %v4535 = vadd.f32 %v3037, %v4534
      %v4536 = vpop.f32.mrb[0].mxu0
      %v4537 = vadd.f32 %v3041, %v4536
      %v4538 = vpop.f32.mrb[0].mxu0
      %v4539 = vadd.f32 %v3037, %v4538
      %v4540 = vpop.f32.mrb[0].mxu0
      %v4541 = vadd.f32 %v3041, %v4540
      %4542 = vmatprep.mubr.bf16.mxu0 %v2813
      %4543 = vmatmul.mubr.bf16.gmra.mrb[0].mxu0 %v2812
      %v4544 = vpop.f32.mrb[0].mxu0
      %v4545 = vadd.f32 %v3037, %v4544
      %v4546 = vpop.f32.mrb[0].mxu0
      %v4547 = vadd.f32 %v3041, %v4546
      %v4548 = vpop.f32.mrb[0].mxu0
      %v4549 = vadd.f32 %v3037, %v4548
      %v4550 = vpop.f32.mrb[0].mxu0
      %v4551 = vadd.f32 %v3041, %v4550
      %4552 = vmatprep.mubr.bf16.mxu0 %v2817
      %4553 = vmatmul.mubr.bf16.gmra.mrb[0].mxu0 %v2816
      %v4554 = vpop.f32.mrb[0].mxu0
      %v4555 = vadd.f32 %v3037, %v4554
      %v4556 = vpop.f32.mrb[0].mxu0
      %v4557 = vadd.f32 %v3041, %v4556
      %v4558 = vpop.f32.mrb[0].mxu0
      %v4559 = vadd.f32 %v3037, %v4558
      %v4560 = vpop.f32.mrb[0].mxu0
      %v4561 = vadd.f32 %v3041, %v4560
      %4562 = vmatprep.mubr.bf16.mxu0 %v2821
      %4563 = vmatmul.mubr.bf16.gmra.mrb[0].mxu0 %v2820
      %v4564 = vpop.f32.mrb[0].mxu0
      %v4565 = vadd.f32 %v3037, %v4564
      %v4566 = vpop.f32.mrb[0].mxu0
      %v4567 = vadd.f32 %v3041, %v4566
      %v4568 = vpop.f32.mrb[0].mxu0
      %v4569 = vadd.f32 %v3037, %v4568
      %v4570 = vpop.f32.mrb[0].mxu0
      %v4571 = vadd.f32 %v3041, %v4570
      %4572 = vdwg.mxu0
      %4573 = vmatprep.subr.bf16.mxu0 %v3725
      %4574 = vmatpush1.bf16.msra.mxu0 %v3724
      %4575 = vmatprep.subr.bf16.mxu0 %v3731
      %4576 = vmatpush1.bf16.msra.mxu0 %v3730
      %4577 = vmatprep.subr.bf16.mxu0 %v3737
      %4578 = vmatpush1.bf16.msra.mxu0 %v3736
      %4579 = vmatprep.subr.bf16.mxu0 %v3743
      %4580 = vmatpush1.bf16.msra.mxu0 %v3742
      %4581 = vmatprep.subr.bf16.mxu0 %v3749
      %4582 = vmatpush1.bf16.msra.mxu0 %v3748
      %4583 = vmatprep.subr.bf16.mxu0 %v3755
      %4584 = vmatpush1.bf16.msra.mxu0 %v3754
      %4585 = vmatprep.subr.bf16.mxu0 %v3761
      %4586 = vmatpush1.bf16.msra.mxu0 %v3760
      %4587 = vmatprep.subr.bf16.mxu0 %v3767
      %4588 = vmatpush1.bf16.msra.mxu0 %v3766
      %4589 = vmatprep.subr.bf16.mxu0 %v3773
      %4590 = vmatpush1.bf16.msra.mxu0 %v3772
      %4591 = vmatprep.subr.bf16.mxu0 %v3779
      %4592 = vmatpush1.bf16.msra.mxu0 %v3778
      %4593 = vmatprep.subr.bf16.mxu0 %v3785
      %4594 = vmatpush1.bf16.msra.mxu0 %v3784
      %4595 = vmatprep.subr.bf16.mxu0 %v3791
      %4596 = vmatpush1.bf16.msra.mxu0 %v3790
      %4597 = vmatprep.subr.bf16.mxu0 %v3797
      %4598 = vmatpush1.bf16.msra.mxu0 %v3796
      %4599 = vmatprep.subr.bf16.mxu0 %v3803
      %4600 = vmatpush1.bf16.msra.mxu0 %v3802
      %4601 = vmatprep.subr.bf16.mxu0 %v3809
      %4602 = vmatpush1.bf16.msra.mxu0 %v3808
      %4603 = vmatprep.subr.bf16.mxu0 %v3815
      %4604 = vmatpush1.bf16.msra.mxu0 %v3814
      %4605 = vmatprep.mubr.bf16.mxu0 %v2795
      %4606 = vmatmul.mubr.bf16.gmra.mrb[0].mxu0 %v2794
      %v4607 = vpop.f32.mrb[0].mxu0
      %v4608 = vadd.f32 %v4495, %v4607
      %v4609 = vpop.f32.mrb[0].mxu0
      %v4610 = vadd.f32 %v4497, %v4609
      %v4611 = vpop.f32.mrb[0].mxu0
      %v4612 = vadd.f32 %v4499, %v4611
      %v4613 = vpop.f32.mrb[0].mxu0
      %v4614 = vadd.f32 %v4501, %v4613
      %4615 = vmatprep.mubr.bf16.mxu0 %v2799
      %4616 = vmatmul.mubr.bf16.gmra.mrb[0].mxu0 %v2798
      %v4617 = vpop.f32.mrb[0].mxu0
      %v4618 = vadd.f32 %v4505, %v4617
      %v4619 = vpop.f32.mrb[0].mxu0
      %v4620 = vadd.f32 %v4507, %v4619
      %v4621 = vpop.f32.mrb[0].mxu0
      %v4622 = vadd.f32 %v4509, %v4621
      %v4623 = vpop.f32.mrb[0].mxu0
      %v4624 = vadd.f32 %v4511, %v4623
      %4625 = vmatprep.mubr.bf16.mxu0 %v2803
      %4626 = vmatmul.mubr.bf16.gmra.mrb[0].mxu0 %v2802
      %v4627 = vpop.f32.mrb[0].mxu0
      %v4628 = vadd.f32 %v4515, %v4627
      %v4629 = vpop.f32.mrb[0].mxu0
      %v4630 = vadd.f32 %v4517, %v4629
      %v4631 = vpop.f32.mrb[0].mxu0
      %v4632 = vadd.f32 %v4519, %v4631
      %v4633 = vpop.f32.mrb[0].mxu0
      %v4634 = vadd.f32 %v4521, %v4633
      %4635 = vmatprep.mubr.bf16.mxu0 %v2807
      %4636 = vmatmul.mubr.bf16.gmra.mrb[0].mxu0 %v2806
      %v4637 = vpop.f32.mrb[0].mxu0
      %v4638 = vadd.f32 %v4525, %v4637
      %v4639 = vpop.f32.mrb[0].mxu0
      %v4640 = vadd.f32 %v4527, %v4639
      %v4641 = vpop.f32.mrb[0].mxu0
      %v4642 = vadd.f32 %v4529, %v4641
      %v4643 = vpop.f32.mrb[0].mxu0
      %v4644 = vadd.f32 %v4531, %v4643
      %4645 = vmatprep.mubr.bf16.mxu0 %v2811
      %4646 = vmatmul.mubr.bf16.gmra.mrb[0].mxu0 %v2810
      %v4647 = vpop.f32.mrb[0].mxu0
      %v4648 = vadd.f32 %v4535, %v4647
      %v4649 = vpop.f32.mrb[0].mxu0
      %v4650 = vadd.f32 %v4537, %v4649
      %v4651 = vpop.f32.mrb[0].mxu0
      %v4652 = vadd.f32 %v4539, %v4651
      %v4653 = vpop.f32.mrb[0].mxu0
      %v4654 = vadd.f32 %v4541, %v4653
      %4655 = vmatprep.mubr.bf16.mxu0 %v2815
      %4656 = vmatmul.mubr.bf16.gmra.mrb[0].mxu0 %v2814
      %v4657 = vpop.f32.mrb[0].mxu0
      %v4658 = vadd.f32 %v4545, %v4657
      %v4659 = vpop.f32.mrb[0].mxu0
      %v4660 = vadd.f32 %v4547, %v4659
      %v4661 = vpop.f32.mrb[0].mxu0
      %v4662 = vadd.f32 %v4549, %v4661
      %v4663 = vpop.f32.mrb[0].mxu0
      %v4664 = vadd.f32 %v4551, %v4663
      %4665 = vmatprep.mubr.bf16.mxu0 %v2819
      %4666 = vmatmul.mubr.bf16.gmra.mrb[0].mxu0 %v2818
      %v4667 = vpop.f32.mrb[0].mxu0
      %v4668 = vadd.f32 %v4555, %v4667
      %v4669 = vpop.f32.mrb[0].mxu0
      %v4670 = vadd.f32 %v4557, %v4669
      %v4671 = vpop.f32.mrb[0].mxu0
      %v4672 = vadd.f32 %v4559, %v4671
      %v4673 = vpop.f32.mrb[0].mxu0
      %v4674 = vadd.f32 %v4561, %v4673
      %4675 = vmatprep.mubr.bf16.mxu0 %v2823
      %4676 = vmatmul.mubr.bf16.gmra.mrb[0].mxu0 %v2822
      %v4677 = vpop.f32.mrb[0].mxu0
      %v4678 = vadd.f32 %v4565, %v4677
      %v4679 = vpop.f32.mrb[0].mxu0
      %v4680 = vadd.f32 %v4567, %v4679
      %v4681 = vpop.f32.mrb[0].mxu0
      %v4682 = vadd.f32 %v4569, %v4681
      %v4683 = vpop.f32.mrb[0].mxu0
      %v4684 = vadd.f32 %v4571, %v4683
      %4685 = vdwg.mxu0
      %vm4686 = vcmp.gt.f32.partialorder %v4156, 0.0
      %vm4687 = vcmp.gt.f32.partialorder %v4158, 0.0
      %vm4688 = vcmp.gt.f32.partialorder %v4382, 0.0
      %vm4689 = vcmp.gt.f32.partialorder %v4384, 0.0
      %vm4690 = vcmp.gt.f32.partialorder %v4608, 0.0
      %vm4691 = vcmp.gt.f32.partialorder %v4610, 0.0
      %vm4692 = vcmp.gt.f32.partialorder %v4160, 0.0
      %vm4693 = vcmp.gt.f32.partialorder %v4162, 0.0
      %vm4694 = vcmp.gt.f32.partialorder %v4386, 0.0
      %vm4695 = vcmp.gt.f32.partialorder %v4388, 0.0
      %vm4696 = vcmp.gt.f32.partialorder %v4612, 0.0
      %vm4697 = vcmp.gt.f32.partialorder %v4614, 0.0
      %vm4698 = vcmp.gt.f32.partialorder %v4166, 0.0
      %vm4699 = vcmp.gt.f32.partialorder %v4168, 0.0
      %vm4700 = vcmp.gt.f32.partialorder %v4392, 0.0
      %vm4701 = vcmp.gt.f32.partialorder %v4394, 0.0
      %vm4702 = vcmp.gt.f32.partialorder %v4618, 0.0
      %vm4703 = vcmp.gt.f32.partialorder %v4620, 0.0
      %vm4704 = vcmp.gt.f32.partialorder %v4170, 0.0
      %vm4705 = vcmp.gt.f32.partialorder %v4172, 0.0
      %vm4706 = vcmp.gt.f32.partialorder %v4396, 0.0
      %vm4707 = vcmp.gt.f32.partialorder %v4398, 0.0
      %vm4708 = vcmp.gt.f32.partialorder %v4622, 0.0
      %vm4709 = vcmp.gt.f32.partialorder %v4624, 0.0
      %vm4710 = vcmp.gt.f32.partialorder %v4176, 0.0
      %vm4711 = vcmp.gt.f32.partialorder %v4178, 0.0
      %vm4712 = vcmp.gt.f32.partialorder %v4402, 0.0
      %vm4713 = vcmp.gt.f32.partialorder %v4404, 0.0
      %vm4714 = vcmp.gt.f32.partialorder %v4628, 0.0
      %vm4715 = vcmp.gt.f32.partialorder %v4630, 0.0
      %vm4716 = vcmp.gt.f32.partialorder %v4180, 0.0
      %vm4717 = vcmp.gt.f32.partialorder %v4182, 0.0
      %vm4718 = vcmp.gt.f32.partialorder %v4406, 0.0
      %vm4719 = vcmp.gt.f32.partialorder %v4408, 0.0
      %vm4720 = vcmp.gt.f32.partialorder %v4632, 0.0
      %vm4721 = vcmp.gt.f32.partialorder %v4634, 0.0
      %vm4722 = vcmp.gt.f32.partialorder %v4186, 0.0
      %vm4723 = vcmp.gt.f32.partialorder %v4188, 0.0
      %vm4724 = vcmp.gt.f32.partialorder %v4412, 0.0
      %vm4725 = vcmp.gt.f32.partialorder %v4414, 0.0
      %vm4726 = vcmp.gt.f32.partialorder %v4638, 0.0
      %vm4727 = vcmp.gt.f32.partialorder %v4640, 0.0
      %vm4728 = vcmp.gt.f32.partialorder %v4190, 0.0
      %vm4729 = vcmp.gt.f32.partialorder %v4192, 0.0
      %vm4730 = vcmp.gt.f32.partialorder %v4416, 0.0
      %vm4731 = vcmp.gt.f32.partialorder %v4418, 0.0
      %vm4732 = vcmp.gt.f32.partialorder %v4642, 0.0
      %vm4733 = vcmp.gt.f32.partialorder %v4644, 0.0
      %vm4734 = vcmp.gt.f32.partialorder %v4196, 0.0
      %vm4735 = vcmp.gt.f32.partialorder %v4198, 0.0
      %vm4736 = vcmp.gt.f32.partialorder %v4422, 0.0
      %vm4737 = vcmp.gt.f32.partialorder %v4424, 0.0
      %vm4738 = vcmp.gt.f32.partialorder %v4648, 0.0
      %vm4739 = vcmp.gt.f32.partialorder %v4650, 0.0
      %vm4740 = vcmp.gt.f32.partialorder %v4200, 0.0
      %vm4741 = vcmp.gt.f32.partialorder %v4202, 0.0
      %vm4742 = vcmp.gt.f32.partialorder %v4426, 0.0
      %vm4743 = vcmp.gt.f32.partialorder %v4428, 0.0
      %vm4744 = vcmp.gt.f32.partialorder %v4652, 0.0
      %vm4745 = vcmp.gt.f32.partialorder %v4654, 0.0
      %vm4746 = vcmp.gt.f32.partialorder %v4206, 0.0
      %vm4747 = vcmp.gt.f32.partialorder %v4208, 0.0
      %vm4748 = vcmp.gt.f32.partialorder %v4432, 0.0
      %vm4749 = vcmp.gt.f32.partialorder %v4434, 0.0
      %vm4750 = vcmp.gt.f32.partialorder %v4658, 0.0
      %vm4751 = vcmp.gt.f32.partialorder %v4660, 0.0
      %vm4752 = vcmp.gt.f32.partialorder %v4210, 0.0
      %vm4753 = vcmp.gt.f32.partialorder %v4212, 0.0
      %vm4754 = vcmp.gt.f32.partialorder %v4436, 0.0
      %vm4755 = vcmp.gt.f32.partialorder %v4438, 0.0
      %vm4756 = vcmp.gt.f32.partialorder %v4662, 0.0
      %vm4757 = vcmp.gt.f32.partialorder %v4664, 0.0
      %vm4758 = vcmp.gt.f32.partialorder %v4216, 0.0
      %vm4759 = vcmp.gt.f32.partialorder %v4218, 0.0
      %vm4760 = vcmp.gt.f32.partialorder %v4442, 0.0
      %vm4761 = vcmp.gt.f32.partialorder %v4444, 0.0
      %vm4762 = vcmp.gt.f32.partialorder %v4668, 0.0
      %vm4763 = vcmp.gt.f32.partialorder %v4670, 0.0
      %vm4764 = vcmp.gt.f32.partialorder %v4220, 0.0
      %vm4765 = vcmp.gt.f32.partialorder %v4222, 0.0
      %vm4766 = vcmp.gt.f32.partialorder %v4446, 0.0
      %vm4767 = vcmp.gt.f32.partialorder %v4448, 0.0
      %vm4768 = vcmp.gt.f32.partialorder %v4672, 0.0
      %vm4769 = vcmp.gt.f32.partialorder %v4674, 0.0
      %vm4770 = vcmp.gt.f32.partialorder %v4226, 0.0
      %vm4771 = vcmp.gt.f32.partialorder %v4228, 0.0
      %vm4772 = vcmp.gt.f32.partialorder %v4452, 0.0
      %vm4773 = vcmp.gt.f32.partialorder %v4454, 0.0
      %vm4774 = vcmp.gt.f32.partialorder %v4678, 0.0
      %vm4775 = vcmp.gt.f32.partialorder %v4680, 0.0
      %vm4776 = vcmp.gt.f32.partialorder %v4230, 0.0
      %vm4777 = vcmp.gt.f32.partialorder %v4232, 0.0
      %vm4778 = vcmp.gt.f32.partialorder %v4456, 0.0
      %vm4779 = vcmp.gt.f32.partialorder %v4458, 0.0
      %vm4780 = vcmp.gt.f32.partialorder %v4682, 0.0
      %vm4781 = vcmp.gt.f32.partialorder %v4684, 0.0
      %v4782 = vmul.f32 %v4156, 1.442695
      %v4783 = vpow.pop %v4782
      %v4784 = vmul.f32 %v4158, 1.442695
      %v4785 = vpow.pop %v4784
      %v4786 = vmul.f32 %v4382, 1.442695
      %v4787 = vpow.pop %v4786
      %v4788 = vmul.f32 %v4384, 1.442695
      %v4789 = vpow.pop %v4788
      %v4790 = vmul.f32 %v4608, 1.442695
      %v4791 = vpow.pop %v4790
      %v4792 = vmul.f32 %v4610, 1.442695
      %v4793 = vpow.pop %v4792
      %v4794 = vmul.f32 %v4160, 1.442695
      %v4795 = vpow.pop %v4794
      %v4796 = vmul.f32 %v4162, 1.442695
      %v4797 = vpow.pop %v4796
      %v4798 = vmul.f32 %v4386, 1.442695
      %v4799 = vpow.pop %v4798
      %v4800 = vmul.f32 %v4388, 1.442695
      %v4801 = vpow.pop %v4800
      %v4802 = vmul.f32 %v4612, 1.442695
      %v4803 = vpow.pop %v4802
      %v4804 = vmul.f32 %v4614, 1.442695
      %v4805 = vpow.pop %v4804
      %v4806 = vmul.f32 %v4166, 1.442695
      %v4807 = vpow.pop %v4806
      %v4808 = vmul.f32 %v4168, 1.442695
      %v4809 = vpow.pop %v4808
      %v4810 = vmul.f32 %v4392, 1.442695
      %v4811 = vpow.pop %v4810
      %v4812 = vmul.f32 %v4394, 1.442695
      %v4813 = vpow.pop %v4812
      %v4814 = vmul.f32 %v4618, 1.442695
      %v4815 = vpow.pop %v4814
      %v4816 = vmul.f32 %v4620, 1.442695
      %v4817 = vpow.pop %v4816
      %v4818 = vmul.f32 %v4170, 1.442695
      %v4819 = vpow.pop %v4818
      %v4820 = vmul.f32 %v4172, 1.442695
      %v4821 = vpow.pop %v4820
      %v4822 = vmul.f32 %v4396, 1.442695
      %v4823 = vpow.pop %v4822
      %v4824 = vmul.f32 %v4398, 1.442695
      %v4825 = vpow.pop %v4824
      %v4826 = vmul.f32 %v4622, 1.442695
      %v4827 = vpow.pop %v4826
      %v4828 = vmul.f32 %v4624, 1.442695
      %v4829 = vpow.pop %v4828
      %v4830 = vmul.f32 %v4176, 1.442695
      %v4831 = vpow.pop %v4830
      %v4832 = vmul.f32 %v4178, 1.442695
      %v4833 = vpow.pop %v4832
      %v4834 = vmul.f32 %v4402, 1.442695
      %v4835 = vpow.pop %v4834
      %v4836 = vmul.f32 %v4404, 1.442695
      %v4837 = vpow.pop %v4836
      %v4838 = vmul.f32 %v4628, 1.442695
      %v4839 = vpow.pop %v4838
      %v4840 = vmul.f32 %v4630, 1.442695
      %v4841 = vpow.pop %v4840
      %v4842 = vmul.f32 %v4180, 1.442695
      %v4843 = vpow.pop %v4842
      %v4844 = vmul.f32 %v4182, 1.442695
      %v4845 = vpow.pop %v4844
      %v4846 = vmul.f32 %v4406, 1.442695
      %v4847 = vpow.pop %v4846
      %v4848 = vmul.f32 %v4408, 1.442695
      %v4849 = vpow.pop %v4848
      %v4850 = vmul.f32 %v4632, 1.442695
      %v4851 = vpow.pop %v4850
      %v4852 = vmul.f32 %v4634, 1.442695
      %v4853 = vpow.pop %v4852
      %v4854 = vmul.f32 %v4186, 1.442695
      %v4855 = vpow.pop %v4854
      %v4856 = vmul.f32 %v4188, 1.442695
      %v4857 = vpow.pop %v4856
      %v4858 = vmul.f32 %v4412, 1.442695
      %v4859 = vpow.pop %v4858
      %v4860 = vmul.f32 %v4414, 1.442695
      %v4861 = vpow.pop %v4860
      %v4862 = vmul.f32 %v4638, 1.442695
      %v4863 = vpow.pop %v4862
      %v4864 = vmul.f32 %v4640, 1.442695
      %v4865 = vpow.pop %v4864
      %v4866 = vmul.f32 %v4190, 1.442695
      %v4867 = vpow.pop %v4866
      %v4868 = vmul.f32 %v4192, 1.442695
      %v4869 = vpow.pop %v4868
      %v4870 = vmul.f32 %v4416, 1.442695
      %v4871 = vpow.pop %v4870
      %v4872 = vmul.f32 %v4418, 1.442695
      %v4873 = vpow.pop %v4872
      %v4874 = vmul.f32 %v4642, 1.442695
      %v4875 = vpow.pop %v4874
      %v4876 = vmul.f32 %v4644, 1.442695
      %v4877 = vpow.pop %v4876
      %v4878 = vmul.f32 %v4196, 1.442695
      %v4879 = vpow.pop %v4878
      %v4880 = vmul.f32 %v4198, 1.442695
      %v4881 = vpow.pop %v4880
      %v4882 = vmul.f32 %v4422, 1.442695
      %v4883 = vpow.pop %v4882
      %v4884 = vmul.f32 %v4424, 1.442695
      %v4885 = vpow.pop %v4884
      %v4886 = vmul.f32 %v4648, 1.442695
      %v4887 = vpow.pop %v4886
      %v4888 = vmul.f32 %v4650, 1.442695
      %v4889 = vpow.pop %v4888
      %v4890 = vmul.f32 %v4200, 1.442695
      %v4891 = vpow.pop %v4890
      %v4892 = vmul.f32 %v4202, 1.442695
      %v4893 = vpow.pop %v4892
      %v4894 = vmul.f32 %v4426, 1.442695
      %v4895 = vpow.pop %v4894
      %v4896 = vmul.f32 %v4428, 1.442695
      %v4897 = vpow.pop %v4896
      %v4898 = vmul.f32 %v4652, 1.442695
      %v4899 = vpow.pop %v4898
      %v4900 = vmul.f32 %v4654, 1.442695
      %v4901 = vpow.pop %v4900
      %v4902 = vmul.f32 %v4206, 1.442695
      %v4903 = vpow.pop %v4902
      %v4904 = vmul.f32 %v4208, 1.442695
      %v4905 = vpow.pop %v4904
      %v4906 = vmul.f32 %v4432, 1.442695
      %v4907 = vpow.pop %v4906
      %v4908 = vmul.f32 %v4434, 1.442695
      %v4909 = vpow.pop %v4908
      %v4910 = vmul.f32 %v4658, 1.442695
      %v4911 = vpow.pop %v4910
      %v4912 = vmul.f32 %v4660, 1.442695
      %v4913 = vpow.pop %v4912
      %v4914 = vmul.f32 %v4210, 1.442695
      %v4915 = vpow.pop %v4914
      %v4916 = vmul.f32 %v4212, 1.442695
      %v4917 = vpow.pop %v4916
      %v4918 = vmul.f32 %v4436, 1.442695
      %v4919 = vpow.pop %v4918
      %v4920 = vmul.f32 %v4438, 1.442695
      %v4921 = vpow.pop %v4920
      %v4922 = vmul.f32 %v4662, 1.442695
      %v4923 = vpow.pop %v4922
      %v4924 = vmul.f32 %v4664, 1.442695
      %v4925 = vpow.pop %v4924
      %v4926 = vmul.f32 %v4216, 1.442695
      %v4927 = vpow.pop %v4926
      %v4928 = vmul.f32 %v4218, 1.442695
      %v4929 = vpow.pop %v4928
      %v4930 = vmul.f32 %v4442, 1.442695
      %v4931 = vpow.pop %v4930
      %v4932 = vmul.f32 %v4444, 1.442695
      %v4933 = vpow.pop %v4932
      %v4934 = vmul.f32 %v4668, 1.442695
      %v4935 = vpow.pop %v4934
      %v4936 = vmul.f32 %v4670, 1.442695
      %v4937 = vpow.pop %v4936
      %v4938 = vmul.f32 %v4220, 1.442695
      %v4939 = vpow.pop %v4938
      %v4940 = vmul.f32 %v4222, 1.442695
      %v4941 = vpow.pop %v4940
      %v4942 = vmul.f32 %v4446, 1.442695
      %v4943 = vpow.pop %v4942
      %v4944 = vmul.f32 %v4448, 1.442695
      %v4945 = vpow.pop %v4944
      %v4946 = vmul.f32 %v4672, 1.442695
      %v4947 = vpow.pop %v4946
      %v4948 = vmul.f32 %v4674, 1.442695
      %v4949 = vpow.pop %v4948
      %v4950 = vmul.f32 %v4226, 1.442695
      %v4951 = vpow.pop %v4950
      %v4952 = vmul.f32 %v4228, 1.442695
      %v4953 = vpow.pop %v4952
      %v4954 = vmul.f32 %v4452, 1.442695
      %v4955 = vpow.pop %v4954
      %v4956 = vmul.f32 %v4454, 1.442695
      %v4957 = vpow.pop %v4956
      %v4958 = vmul.f32 %v4678, 1.442695
      %v4959 = vpow.pop %v4958
      %v4960 = vmul.f32 %v4680, 1.442695
      %v4961 = vpow.pop %v4960
      %v4962 = vmul.f32 %v4230, 1.442695
      %v4963 = vpow.pop %v4962
      %v4964 = vmul.f32 %v4232, 1.442695
      %v4965 = vpow.pop %v4964
      %v4966 = vmul.f32 %v4456, 1.442695
      %v4967 = vpow.pop %v4966
      %v4968 = vmul.f32 %v4458, 1.442695
      %v4969 = vpow.pop %v4968
      %v4970 = vmul.f32 %v4682, 1.442695
      %v4971 = vpow.pop %v4970
      %v4972 = vmul.f32 %v4684, 1.442695
      %v4973 = vpow.pop %v4972
      %v4974 = vsub.f32 %v4783, 1.0
      %v4975 = vsub.f32 %v4785, 1.0
      %v4976 = vsub.f32 %v4787, 1.0
      %v4977 = vsub.f32 %v4789, 1.0
      %v4978 = vsub.f32 %v4791, 1.0
      %v4979 = vsub.f32 %v4793, 1.0
      %v4980 = vsub.f32 %v4795, 1.0
      %v4981 = vsub.f32 %v4797, 1.0
      %v4982 = vsub.f32 %v4799, 1.0
      %v4983 = vsub.f32 %v4801, 1.0
      %v4984 = vsub.f32 %v4803, 1.0
      %v4985 = vsub.f32 %v4805, 1.0
      %v4986 = vsub.f32 %v4807, 1.0
      %v4987 = vsub.f32 %v4809, 1.0
      %v4988 = vsub.f32 %v4811, 1.0
      %v4989 = vsub.f32 %v4813, 1.0
      %v4990 = vsub.f32 %v4815, 1.0
      %v4991 = vsub.f32 %v4817, 1.0
      %v4992 = vsub.f32 %v4819, 1.0
      %v4993 = vsub.f32 %v4821, 1.0
      %v4994 = vsub.f32 %v4823, 1.0
      %v4995 = vsub.f32 %v4825, 1.0
      %v4996 = vsub.f32 %v4827, 1.0
      %v4997 = vsub.f32 %v4829, 1.0
      %v4998 = vsub.f32 %v4831, 1.0
      %v4999 = vsub.f32 %v4833, 1.0
      %v5000 = vsub.f32 %v4835, 1.0
      %v5001 = vsub.f32 %v4837, 1.0
      %v5002 = vsub.f32 %v4839, 1.0
      %v5003 = vsub.f32 %v4841, 1.0
      %v5004 = vsub.f32 %v4843, 1.0
      %v5005 = vsub.f32 %v4845, 1.0
      %v5006 = vsub.f32 %v4847, 1.0
      %v5007 = vsub.f32 %v4849, 1.0
      %v5008 = vsub.f32 %v4851, 1.0
      %v5009 = vsub.f32 %v4853, 1.0
      %v5010 = vsub.f32 %v4855, 1.0
      %v5011 = vsub.f32 %v4857, 1.0
      %v5012 = vsub.f32 %v4859, 1.0
      %v5013 = vsub.f32 %v4861, 1.0
      %v5014 = vsub.f32 %v4863, 1.0
      %v5015 = vsub.f32 %v4865, 1.0
      %v5016 = vsub.f32 %v4867, 1.0
      %v5017 = vsub.f32 %v4869, 1.0
      %v5018 = vsub.f32 %v4871, 1.0
      %v5019 = vsub.f32 %v4873, 1.0
      %v5020 = vsub.f32 %v4875, 1.0
      %v5021 = vsub.f32 %v4877, 1.0
      %v5022 = vsub.f32 %v4879, 1.0
      %v5023 = vsub.f32 %v4881, 1.0
      %v5024 = vsub.f32 %v4883, 1.0
      %v5025 = vsub.f32 %v4885, 1.0
      %v5026 = vsub.f32 %v4887, 1.0
      %v5027 = vsub.f32 %v4889, 1.0
      %v5028 = vsub.f32 %v4891, 1.0
      %v5029 = vsub.f32 %v4893, 1.0
      %v5030 = vsub.f32 %v4895, 1.0
      %v5031 = vsub.f32 %v4897, 1.0
      %v5032 = vsub.f32 %v4899, 1.0
      %v5033 = vsub.f32 %v4901, 1.0
      %v5034 = vsub.f32 %v4903, 1.0
      %v5035 = vsub.f32 %v4905, 1.0
      %v5036 = vsub.f32 %v4907, 1.0
      %v5037 = vsub.f32 %v4909, 1.0
      %v5038 = vsub.f32 %v4911, 1.0
      %v5039 = vsub.f32 %v4913, 1.0
      %v5040 = vsub.f32 %v4915, 1.0
      %v5041 = vsub.f32 %v4917, 1.0
      %v5042 = vsub.f32 %v4919, 1.0
      %v5043 = vsub.f32 %v4921, 1.0
      %v5044 = vsub.f32 %v4923, 1.0
      %v5045 = vsub.f32 %v4925, 1.0
      %v5046 = vsub.f32 %v4927, 1.0
      %v5047 = vsub.f32 %v4929, 1.0
      %v5048 = vsub.f32 %v4931, 1.0
      %v5049 = vsub.f32 %v4933, 1.0
      %v5050 = vsub.f32 %v4935, 1.0
      %v5051 = vsub.f32 %v4937, 1.0
      %v5052 = vsub.f32 %v4939, 1.0
      %v5053 = vsub.f32 %v4941, 1.0
      %v5054 = vsub.f32 %v4943, 1.0
      %v5055 = vsub.f32 %v4945, 1.0
      %v5056 = vsub.f32 %v4947, 1.0
      %v5057 = vsub.f32 %v4949, 1.0
      %v5058 = vsub.f32 %v4951, 1.0
      %v5059 = vsub.f32 %v4953, 1.0
      %v5060 = vsub.f32 %v4955, 1.0
      %v5061 = vsub.f32 %v4957, 1.0
      %v5062 = vsub.f32 %v4959, 1.0
      %v5063 = vsub.f32 %v4961, 1.0
      %v5064 = vsub.f32 %v4963, 1.0
      %v5065 = vsub.f32 %v4965, 1.0
      %v5066 = vsub.f32 %v4967, 1.0
      %v5067 = vsub.f32 %v4969, 1.0
      %v5068 = vsub.f32 %v4971, 1.0
      %v5069 = vsub.f32 %v4973, 1.0
      %v5070 = vsel %vm4686, %v4156, %v4974
      %v5071 = vsel %vm4687, %v4158, %v4975
      %v5072 = vsel %vm4688, %v4382, %v4976
      %v5073 = vsel %vm4689, %v4384, %v4977
      %v5074 = vsel %vm4690, %v4608, %v4978
      %v5075 = vsel %vm4691, %v4610, %v4979
      %v5076 = vsel %vm4692, %v4160, %v4980
      %v5077 = vsel %vm4693, %v4162, %v4981
      %v5078 = vsel %vm4694, %v4386, %v4982
      %v5079 = vsel %vm4695, %v4388, %v4983
      %v5080 = vsel %vm4696, %v4612, %v4984
      %v5081 = vsel %vm4697, %v4614, %v4985
      %v5082 = vsel %vm4698, %v4166, %v4986
      %v5083 = vsel %vm4699, %v4168, %v4987
      %v5084 = vsel %vm4700, %v4392, %v4988
      %v5085 = vsel %vm4701, %v4394, %v4989
      %v5086 = vsel %vm4702, %v4618, %v4990
      %v5087 = vsel %vm4703, %v4620, %v4991
      %v5088 = vsel %vm4704, %v4170, %v4992
      %v5089 = vsel %vm4705, %v4172, %v4993
      %v5090 = vsel %vm4706, %v4396, %v4994
      %v5091 = vsel %vm4707, %v4398, %v4995
      %v5092 = vsel %vm4708, %v4622, %v4996
      %v5093 = vsel %vm4709, %v4624, %v4997
      %v5094 = vsel %vm4710, %v4176, %v4998
      %v5095 = vsel %vm4711, %v4178, %v4999
      %v5096 = vsel %vm4712, %v4402, %v5000
      %v5097 = vsel %vm4713, %v4404, %v5001
      %v5098 = vsel %vm4714, %v4628, %v5002
      %v5099 = vsel %vm4715, %v4630, %v5003
      %v5100 = vsel %vm4716, %v4180, %v5004
      %v5101 = vsel %vm4717, %v4182, %v5005
      %v5102 = vsel %vm4718, %v4406, %v5006
      %v5103 = vsel %vm4719, %v4408, %v5007
      %v5104 = vsel %vm4720, %v4632, %v5008
      %v5105 = vsel %vm4721, %v4634, %v5009
      %v5106 = vsel %vm4722, %v4186, %v5010
      %v5107 = vsel %vm4723, %v4188, %v5011
      %v5108 = vsel %vm4724, %v4412, %v5012
      %v5109 = vsel %vm4725, %v4414, %v5013
      %v5110 = vsel %vm4726, %v4638, %v5014
      %v5111 = vsel %vm4727, %v4640, %v5015
      %v5112 = vsel %vm4728, %v4190, %v5016
      %v5113 = vsel %vm4729, %v4192, %v5017
      %v5114 = vsel %vm4730, %v4416, %v5018
      %v5115 = vsel %vm4731, %v4418, %v5019
      %v5116 = vsel %vm4732, %v4642, %v5020
      %v5117 = vsel %vm4733, %v4644, %v5021
      %v5118 = vsel %vm4734, %v4196, %v5022
      %v5119 = vsel %vm4735, %v4198, %v5023
      %v5120 = vsel %vm4736, %v4422, %v5024
      %v5121 = vsel %vm4737, %v4424, %v5025
      %v5122 = vsel %vm4738, %v4648, %v5026
      %v5123 = vsel %vm4739, %v4650, %v5027
      %v5124 = vsel %vm4740, %v4200, %v5028
      %v5125 = vsel %vm4741, %v4202, %v5029
      %v5126 = vsel %vm4742, %v4426, %v5030
      %v5127 = vsel %vm4743, %v4428, %v5031
      %v5128 = vsel %vm4744, %v4652, %v5032
      %v5129 = vsel %vm4745, %v4654, %v5033
      %v5130 = vsel %vm4746, %v4206, %v5034
      %v5131 = vsel %vm4747, %v4208, %v5035
      %v5132 = vsel %vm4748, %v4432, %v5036
      %v5133 = vsel %vm4749, %v4434, %v5037
      %v5134 = vsel %vm4750, %v4658, %v5038
      %v5135 = vsel %vm4751, %v4660, %v5039
      %v5136 = vsel %vm4752, %v4210, %v5040
      %v5137 = vsel %vm4753, %v4212, %v5041
      %v5138 = vsel %vm4754, %v4436, %v5042
      %v5139 = vsel %vm4755, %v4438, %v5043
      %v5140 = vsel %vm4756, %v4662, %v5044
      %v5141 = vsel %vm4757, %v4664, %v5045
      %v5142 = vsel %vm4758, %v4216, %v5046
      %v5143 = vsel %vm4759, %v4218, %v5047
      %v5144 = vsel %vm4760, %v4442, %v5048
      %v5145 = vsel %vm4761, %v4444, %v5049
      %v5146 = vsel %vm4762, %v4668, %v5050
      %v5147 = vsel %vm4763, %v4670, %v5051
      %v5148 = vsel %vm4764, %v4220, %v5052
      %v5149 = vsel %vm4765, %v4222, %v5053
      %v5150 = vsel %vm4766, %v4446, %v5054
      %v5151 = vsel %vm4767, %v4448, %v5055
      %v5152 = vsel %vm4768, %v4672, %v5056
      %v5153 = vsel %vm4769, %v4674, %v5057
      %v5154 = vsel %vm4770, %v4226, %v5058
      %v5155 = vsel %vm4771, %v4228, %v5059
      %v5156 = vsel %vm4772, %v4452, %v5060
      %v5157 = vsel %vm4773, %v4454, %v5061
      %v5158 = vsel %vm4774, %v4678, %v5062
      %v5159 = vsel %vm4775, %v4680, %v5063
      %v5160 = vsel %vm4776, %v4230, %v5064
      %v5161 = vsel %vm4777, %v4232, %v5065
      %v5162 = vsel %vm4778, %v4456, %v5066
      %v5163 = vsel %vm4779, %v4458, %v5067
      %v5164 = vsel %vm4780, %v4682, %v5068
      %v5165 = vsel %vm4781, %v4684, %v5069
      %v5166 = vmul.f32 %v2712, %v5075
      %v5167 = vmul.f32 %v2713, %v5081
      %v5168 = vmul.f32 %v2714, %v5087
      %v5169 = vmul.f32 %v2715, %v5093
      %v5170 = vmul.f32 %v2716, %v5099
      %v5171 = vmul.f32 %v2717, %v5105
      %v5172 = vmul.f32 %v2718, %v5111
      %v5173 = vmul.f32 %v2719, %v5117
      %v5174 = vmul.f32 %v2720, %v5123
      %v5175 = vmul.f32 %v2721, %v5129
      %v5176 = vmul.f32 %v2722, %v5135
      %v5177 = vmul.f32 %v2723, %v5141
      %v5178 = vmul.f32 %v2724, %v5147
      %v5179 = vmul.f32 %v2725, %v5153
      %v5180 = vmul.f32 %v2726, %v5159
      %v5181 = vmul.f32 %v2727, %v5165
      %5198 = vrot.lane.b32.xlu0 %v2712, 96
      %v5199 = vpop.permute.xlu0 %5198
      %5200 = vrot.lane.b32.xlu0 %v2713, 96
      %v5201 = vpop.permute.xlu0 %5200
      %5202 = vrot.lane.b32.xlu0 %v2714, 96
      %v5203 = vpop.permute.xlu0 %5202
      %5204 = vrot.lane.b32.xlu0 %v2715, 96
      %v5205 = vpop.permute.xlu0 %5204
      %5206 = vrot.lane.b32.xlu0 %v2716, 96
      %v5207 = vpop.permute.xlu0 %5206
      %5208 = vrot.lane.b32.xlu0 %v2717, 96
      %v5209 = vpop.permute.xlu0 %5208
      %5210 = vrot.lane.b32.xlu0 %v2718, 96
      %v5211 = vpop.permute.xlu0 %5210
      %5212 = vrot.lane.b32.xlu0 %v2719, 96
      %v5213 = vpop.permute.xlu0 %5212
      %5214 = vrot.lane.b32.xlu0 %v2720, 96
      %v5215 = vpop.permute.xlu0 %5214
      %5216 = vrot.lane.b32.xlu0 %v2721, 96
      %v5217 = vpop.permute.xlu0 %5216
      %5218 = vrot.lane.b32.xlu0 %v2722, 96
      %v5219 = vpop.permute.xlu0 %5218
      %5220 = vrot.lane.b32.xlu0 %v2723, 96
      %v5221 = vpop.permute.xlu0 %5220
      %5222 = vrot.lane.b32.xlu0 %v2724, 96
      %v5223 = vpop.permute.xlu0 %5222
      %5224 = vrot.lane.b32.xlu0 %v2725, 96
      %v5225 = vpop.permute.xlu0 %5224
      %5226 = vrot.lane.b32.xlu0 %v2726, 96
      %v5227 = vpop.permute.xlu0 %5226
      %5228 = vrot.lane.b32.xlu0 %v2727, 96
      %v5229 = vpop.permute.xlu0 %5228
      %v5246 = vsel %vm971, %v5199, 0.0
      %5247 = vadd.xlane.f32.xlu0 %v5246
      %v5248 = vpop.xlane.xlu0 %5247
      %v5249 = vsel %vm971, %v5201, 0.0
      %5250 = vadd.xlane.f32.xlu0 %v5249
      %v5251 = vpop.xlane.xlu0 %5250
      %v5252 = vsel %vm971, %v5203, 0.0
      %5253 = vadd.xlane.f32.xlu0 %v5252
      %v5254 = vpop.xlane.xlu0 %5253
      %v5255 = vsel %vm971, %v5205, 0.0
      %5256 = vadd.xlane.f32.xlu0 %v5255
      %v5257 = vpop.xlane.xlu0 %5256
      %v5258 = vsel %vm971, %v5207, 0.0
      %5259 = vadd.xlane.f32.xlu0 %v5258
      %v5260 = vpop.xlane.xlu0 %5259
      %v5261 = vsel %vm971, %v5209, 0.0
      %5262 = vadd.xlane.f32.xlu0 %v5261
      %v5263 = vpop.xlane.xlu0 %5262
      %v5264 = vsel %vm971, %v5211, 0.0
      %5265 = vadd.xlane.f32.xlu0 %v5264
      %v5266 = vpop.xlane.xlu0 %5265
      %v5267 = vsel %vm971, %v5213, 0.0
      %5268 = vadd.xlane.f32.xlu0 %v5267
      %v5269 = vpop.xlane.xlu0 %5268
      %v5270 = vsel %vm971, %v5215, 0.0
      %5271 = vadd.xlane.f32.xlu0 %v5270
      %v5272 = vpop.xlane.xlu0 %5271
      %v5273 = vsel %vm971, %v5217, 0.0
      %5274 = vadd.xlane.f32.xlu0 %v5273
      %v5275 = vpop.xlane.xlu0 %5274
      %v5276 = vsel %vm971, %v5219, 0.0
      %5277 = vadd.xlane.f32.xlu0 %v5276
      %v5278 = vpop.xlane.xlu0 %5277
      %v5279 = vsel %vm971, %v5221, 0.0
      %5280 = vadd.xlane.f32.xlu0 %v5279
      %v5281 = vpop.xlane.xlu0 %5280
      %v5282 = vsel %vm971, %v5223, 0.0
      %5283 = vadd.xlane.f32.xlu0 %v5282
      %v5284 = vpop.xlane.xlu0 %5283
      %v5285 = vsel %vm971, %v5225, 0.0
      %5286 = vadd.xlane.f32.xlu0 %v5285
      %v5287 = vpop.xlane.xlu0 %5286
      %v5288 = vsel %vm971, %v5227, 0.0
      %5289 = vadd.xlane.f32.xlu0 %v5288
      %v5290 = vpop.xlane.xlu0 %5289
      %v5291 = vsel %vm971, %v5229, 0.0
      %5292 = vadd.xlane.f32.xlu0 %v5291
      %v5293 = vpop.xlane.xlu0 %5292
      %v5294 = vrcp.pop 32.0
      %v5295 = vmul.f32 %v5248, %v5294
      %v5296 = vmul.f32 %v5251, %v5294
      %v5297 = vmul.f32 %v5254, %v5294
      %v5298 = vmul.f32 %v5257, %v5294
      %v5299 = vmul.f32 %v5260, %v5294
      %v5300 = vmul.f32 %v5263, %v5294
      %v5301 = vmul.f32 %v5266, %v5294
      %v5302 = vmul.f32 %v5269, %v5294
      %v5303 = vmul.f32 %v5272, %v5294
      %v5304 = vmul.f32 %v5275, %v5294
      %v5305 = vmul.f32 %v5278, %v5294
      %v5306 = vmul.f32 %v5281, %v5294
      %v5307 = vmul.f32 %v5284, %v5294
      %v5308 = vmul.f32 %v5287, %v5294
      %v5309 = vmul.f32 %v5290, %v5294
      %v5310 = vmul.f32 %v5293, %v5294
      %v5311 = vmul.f32 %v5295, %v5075
      %v5312 = vmul.f32 %v5296, %v5081
      %v5313 = vmul.f32 %v5297, %v5087
      %v5314 = vmul.f32 %v5298, %v5093
      %v5315 = vmul.f32 %v5299, %v5099
      %v5316 = vmul.f32 %v5300, %v5105
      %v5317 = vmul.f32 %v5301, %v5111
      %v5318 = vmul.f32 %v5302, %v5117
      %v5319 = vmul.f32 %v5303, %v5123
      %v5320 = vmul.f32 %v5304, %v5129
      %v5321 = vmul.f32 %v5305, %v5135
      %v5322 = vmul.f32 %v5306, %v5141
      %v5323 = vmul.f32 %v5307, %v5147
      %v5324 = vmul.f32 %v5308, %v5153
      %v5325 = vmul.f32 %v5309, %v5159
      %v5326 = vmul.f32 %v5310, %v5165
      %5343 = vrot.lane.b32.xlu0 %v5166, 96
      %v5344 = vpop.permute.xlu0 %5343
      %5345 = vrot.lane.b32.xlu0 %v5167, 96
      %v5346 = vpop.permute.xlu0 %5345
      %5347 = vrot.lane.b32.xlu0 %v5168, 96
      %v5348 = vpop.permute.xlu0 %5347
      %5349 = vrot.lane.b32.xlu0 %v5169, 96
      %v5350 = vpop.permute.xlu0 %5349
      %5351 = vrot.lane.b32.xlu0 %v5170, 96
      %v5352 = vpop.permute.xlu0 %5351
      %5353 = vrot.lane.b32.xlu0 %v5171, 96
      %v5354 = vpop.permute.xlu0 %5353
      %5355 = vrot.lane.b32.xlu0 %v5172, 96
      %v5356 = vpop.permute.xlu0 %5355
      %5357 = vrot.lane.b32.xlu0 %v5173, 96
      %v5358 = vpop.permute.xlu0 %5357
      %5359 = vrot.lane.b32.xlu0 %v5174, 96
      %v5360 = vpop.permute.xlu0 %5359
      %5361 = vrot.lane.b32.xlu0 %v5175, 96
      %v5362 = vpop.permute.xlu0 %5361
      %5363 = vrot.lane.b32.xlu0 %v5176, 96
      %v5364 = vpop.permute.xlu0 %5363
      %5365 = vrot.lane.b32.xlu0 %v5177, 96
      %v5366 = vpop.permute.xlu0 %5365
      %5367 = vrot.lane.b32.xlu0 %v5178, 96
      %v5368 = vpop.permute.xlu0 %5367
      %5369 = vrot.lane.b32.xlu0 %v5179, 96
      %v5370 = vpop.permute.xlu0 %5369
      %5371 = vrot.lane.b32.xlu0 %v5180, 96
      %v5372 = vpop.permute.xlu0 %5371
      %5373 = vrot.lane.b32.xlu0 %v5181, 96
      %v5374 = vpop.permute.xlu0 %5373
      %v5391 = vsel %vm971, %v5344, %v5311
      %v5392 = vsel %vm971, %v5346, %v5312
      %v5393 = vsel %vm971, %v5348, %v5313
      %v5394 = vsel %vm971, %v5350, %v5314
      %v5395 = vsel %vm971, %v5352, %v5315
      %v5396 = vsel %vm971, %v5354, %v5316
      %v5397 = vsel %vm971, %v5356, %v5317
      %v5398 = vsel %vm971, %v5358, %v5318
      %v5399 = vsel %vm971, %v5360, %v5319
      %v5400 = vsel %vm971, %v5362, %v5320
      %v5401 = vsel %vm971, %v5364, %v5321
      %v5402 = vsel %vm971, %v5366, %v5322
      %v5403 = vsel %vm971, %v5368, %v5323
      %v5404 = vsel %vm971, %v5370, %v5324
      %v5405 = vsel %vm971, %v5372, %v5325
      %v5406 = vsel %vm971, %v5374, %v5326
      %v5407 = vpack.c.bf16 %v2478, %v2472
      %v5408 = vpack.c.bf16 %v2479, %v2473
      %v5409 = vpack.c.bf16 %v2480, %v2474
      %v5410 = vpack.c.bf16 %v2481, %v2475
      %v5411 = vpack.c.bf16 %v2482, %v2476
      %v5412 = vpack.c.bf16 %v2483, %v2477
      %v5413 = vpack.c.bf16 %v2490, %v2484
      %v5414 = vpack.c.bf16 %v2491, %v2485
      %v5415 = vpack.c.bf16 %v2492, %v2486
      %v5416 = vpack.c.bf16 %v2493, %v2487
      %v5417 = vpack.c.bf16 %v2494, %v2488
      %v5418 = vpack.c.bf16 %v2495, %v2489
      %v5419 = vpack.c.bf16 %v2502, %v2496
      %v5420 = vpack.c.bf16 %v2503, %v2497
      %v5421 = vpack.c.bf16 %v2504, %v2498
      %v5422 = vpack.c.bf16 %v2505, %v2499
      %v5423 = vpack.c.bf16 %v2506, %v2500
      %v5424 = vpack.c.bf16 %v2507, %v2501
      %v5425 = vpack.c.bf16 %v2514, %v2508
      %v5426 = vpack.c.bf16 %v2515, %v2509
      %v5427 = vpack.c.bf16 %v2516, %v2510
      %v5428 = vpack.c.bf16 %v2517, %v2511
      %v5429 = vpack.c.bf16 %v2518, %v2512
      %v5430 = vpack.c.bf16 %v2519, %v2513
      %v5431 = vpack.c.bf16 %v2526, %v2520
      %v5432 = vpack.c.bf16 %v2527, %v2521
      %v5433 = vpack.c.bf16 %v2528, %v2522
      %v5434 = vpack.c.bf16 %v2529, %v2523
      %v5435 = vpack.c.bf16 %v2530, %v2524
      %v5436 = vpack.c.bf16 %v2531, %v2525
      %v5437 = vpack.c.bf16 %v2538, %v2532
      %v5438 = vpack.c.bf16 %v2539, %v2533
      %v5439 = vpack.c.bf16 %v2540, %v2534
      %v5440 = vpack.c.bf16 %v2541, %v2535
      %v5441 = vpack.c.bf16 %v2542, %v2536
      %v5442 = vpack.c.bf16 %v2543, %v2537
      %v5443 = vpack.c.bf16 %v2550, %v2544
      %v5444 = vpack.c.bf16 %v2551, %v2545
      %v5445 = vpack.c.bf16 %v2552, %v2546
      %v5446 = vpack.c.bf16 %v2553, %v2547
      %v5447 = vpack.c.bf16 %v2554, %v2548
      %v5448 = vpack.c.bf16 %v2555, %v2549
      %v5449 = vpack.c.bf16 %v2562, %v2556
      %v5450 = vpack.c.bf16 %v2563, %v2557
      %v5451 = vpack.c.bf16 %v2564, %v2558
      %v5452 = vpack.c.bf16 %v2565, %v2559
      %v5453 = vpack.c.bf16 %v2566, %v2560
      %v5454 = vpack.c.bf16 %v2567, %v2561
      %v5455 = vld [vmem:[%s11] sm:$0xff]
      %v5456 = vld [vmem:[%s11 + $0x8] sm:$0xff]
      %v5457 = vld [vmem:[%s11 + $0x10] sm:$0xff]
      %v5458 = vld [vmem:[%s11 + $0x18] sm:$0xff]
      %v5459 = vld [vmem:[%s11 + $0x20] sm:$0xff]
      %v5460 = vld [vmem:[%s11 + $0x28] sm:$0xff]
      %v5461 = vld [vmem:[%s11 + $0x30] sm:$0xff]
      %v5462 = vld [vmem:[%s11 + $0x38] sm:$0xff]
      %v5463 = vld [vmem:[%s11 + $0x40] sm:$0xff]
      %v5464 = vld [vmem:[%s11 + $0x48] sm:$0xff]
      %v5465 = vld [vmem:[%s11 + $0x50] sm:$0xff]
      %v5466 = vld [vmem:[%s11 + $0x58] sm:$0xff]
      %v5467 = vld [vmem:[%s11 + $0x60] sm:$0xff]
      %v5468 = vld [vmem:[%s11 + $0x68] sm:$0xff]
      %v5469 = vld [vmem:[%s11 + $0x70] sm:$0xff]
      %v5470 = vld [vmem:[%s11 + $0x78] sm:$0xff]
      %v5471 = vld [vmem:[%s11 + $0x80] sm:$0xff]
      %v5472 = vld [vmem:[%s11 + $0x88] sm:$0xff]
      %v5473 = vld [vmem:[%s11 + $0x90] sm:$0xff]
      %v5474 = vld [vmem:[%s11 + $0x98] sm:$0xff]
      %v5475 = vld [vmem:[%s11 + $0xa0] sm:$0xff]
      %v5476 = vld [vmem:[%s11 + $0xa8] sm:$0xff]
      %v5477 = vld [vmem:[%s11 + $0xb0] sm:$0xff]
      %v5478 = vld [vmem:[%s11 + $0xb8] sm:$0xff]
      %v5479 = vld [vmem:[%s11 + $0xc0] sm:$0xff]
      %v5480 = vld [vmem:[%s11 + $0xc8] sm:$0xff]
      %v5481 = vld [vmem:[%s11 + $0xd0] sm:$0xff]
      %v5482 = vld [vmem:[%s11 + $0xd8] sm:$0xff]
      %v5483 = vld [vmem:[%s11 + $0xe0] sm:$0xff]
      %v5484 = vld [vmem:[%s11 + $0xe8] sm:$0xff]
      %v5485 = vld [vmem:[%s11 + $0xf0] sm:$0xff]
      %v5486 = vld [vmem:[%s11 + $0xf8] sm:$0xff]
      %v5487 = vld [vmem:[%s11 + $0x100] sm:$0xff]
      %v5488 = vld [vmem:[%s11 + $0x108] sm:$0xff]
      %v5489 = vld [vmem:[%s11 + $0x110] sm:$0xff]
      %v5490 = vld [vmem:[%s11 + $0x118] sm:$0xff]
      %v5491 = vld [vmem:[%s11 + $0x120] sm:$0xff]
      %v5492 = vld [vmem:[%s11 + $0x128] sm:$0xff]
      %v5493 = vld [vmem:[%s11 + $0x130] sm:$0xff]
      %v5494 = vld [vmem:[%s11 + $0x138] sm:$0xff]
      %v5495 = vld [vmem:[%s11 + $0x140] sm:$0xff]
      %v5496 = vld [vmem:[%s11 + $0x148] sm:$0xff]
      %v5497 = vld [vmem:[%s11 + $0x150] sm:$0xff]
      %v5498 = vld [vmem:[%s11 + $0x158] sm:$0xff]
      %v5499 = vld [vmem:[%s11 + $0x160] sm:$0xff]
      %v5500 = vld [vmem:[%s11 + $0x168] sm:$0xff]
      %v5501 = vld [vmem:[%s11 + $0x170] sm:$0xff]
      %v5502 = vld [vmem:[%s11 + $0x178] sm:$0xff]
      %v5503 = vld [vmem:[%s11 + $0x180] sm:$0xff]
      %v5504 = vld [vmem:[%s11 + $0x188] sm:$0xff]
      %v5505 = vld [vmem:[%s11 + $0x190] sm:$0xff]
      %v5506 = vld [vmem:[%s11 + $0x198] sm:$0xff]
      %v5507 = vld [vmem:[%s11 + $0x1a0] sm:$0xff]
      %v5508 = vld [vmem:[%s11 + $0x1a8] sm:$0xff]
      %v5509 = vld [vmem:[%s11 + $0x1b0] sm:$0xff]
      %v5510 = vld [vmem:[%s11 + $0x1b8] sm:$0xff]
      %v5511 = vld [vmem:[%s11 + $0x1c0] sm:$0xff]
      %v5512 = vld [vmem:[%s11 + $0x1c8] sm:$0xff]
      %v5513 = vld [vmem:[%s11 + $0x1d0] sm:$0xff]
      %v5514 = vld [vmem:[%s11 + $0x1d8] sm:$0xff]
      %v5515 = vld [vmem:[%s11 + $0x1e0] sm:$0xff]
      %v5516 = vld [vmem:[%s11 + $0x1e8] sm:$0xff]
      %v5517 = vld [vmem:[%s11 + $0x1f0] sm:$0xff]
      %v5518 = vld [vmem:[%s11 + $0x1f8] sm:$0xff]
      %v5519 = vld [vmem:[%s11 + $0x200] sm:$0xff]
      %v5520 = vld [vmem:[%s11 + $0x208] sm:$0xff]
      %v5521 = vld [vmem:[%s11 + $0x210] sm:$0xff]
      %v5522 = vld [vmem:[%s11 + $0x218] sm:$0xff]
      %v5523 = vld [vmem:[%s11 + $0x220] sm:$0xff]
      %v5524 = vld [vmem:[%s11 + $0x228] sm:$0xff]
      %v5525 = vld [vmem:[%s11 + $0x230] sm:$0xff]
      %v5526 = vld [vmem:[%s11 + $0x238] sm:$0xff]
      %v5527 = vld [vmem:[%s11 + $0x240] sm:$0xff]
      %v5528 = vld [vmem:[%s11 + $0x248] sm:$0xff]
      %v5529 = vld [vmem:[%s11 + $0x250] sm:$0xff]
      %v5530 = vld [vmem:[%s11 + $0x258] sm:$0xff]
      %v5531 = vld [vmem:[%s11 + $0x260] sm:$0xff]
      %v5532 = vld [vmem:[%s11 + $0x268] sm:$0xff]
      %v5533 = vld [vmem:[%s11 + $0x270] sm:$0xff]
      %v5534 = vld [vmem:[%s11 + $0x278] sm:$0xff]
      %v5535 = vld [vmem:[%s11 + $0x280] sm:$0xff]
      %v5536 = vld [vmem:[%s11 + $0x288] sm:$0xff]
      %v5537 = vld [vmem:[%s11 + $0x290] sm:$0xff]
      %v5538 = vld [vmem:[%s11 + $0x298] sm:$0xff]
      %v5539 = vpack.c.bf16 %v5076, %v5070
      %v5540 = vpack.c.bf16 %v5077, %v5071
      %v5541 = vpack.c.bf16 %v5078, %v5072
      %v5542 = vpack.c.bf16 %v5079, %v5073
      %v5543 = vpack.c.bf16 %v5080, %v5074
      %v5544 = vpack.c.bf16 %v5081, %v5075
      %v5545 = vpack.c.bf16 %v5088, %v5082
      %v5546 = vpack.c.bf16 %v5089, %v5083
      %v5547 = vpack.c.bf16 %v5090, %v5084
      %v5548 = vpack.c.bf16 %v5091, %v5085
      %v5549 = vpack.c.bf16 %v5092, %v5086
      %v5550 = vpack.c.bf16 %v5093, %v5087
      %v5551 = vpack.c.bf16 %v5100, %v5094
      %v5552 = vpack.c.bf16 %v5101, %v5095
      %v5553 = vpack.c.bf16 %v5102, %v5096
      %v5554 = vpack.c.bf16 %v5103, %v5097
      %v5555 = vpack.c.bf16 %v5104, %v5098
      %v5556 = vpack.c.bf16 %v5105, %v5099
      %v5557 = vpack.c.bf16 %v5112, %v5106
      %v5558 = vpack.c.bf16 %v5113, %v5107
      %v5559 = vpack.c.bf16 %v5114, %v5108
      %v5560 = vpack.c.bf16 %v5115, %v5109
      %v5561 = vpack.c.bf16 %v5116, %v5110
      %v5562 = vpack.c.bf16 %v5117, %v5111
      %v5563 = vpack.c.bf16 %v5124, %v5118
      %v5564 = vpack.c.bf16 %v5125, %v5119
      %v5565 = vpack.c.bf16 %v5126, %v5120
      %v5566 = vpack.c.bf16 %v5127, %v5121
      %v5567 = vpack.c.bf16 %v5128, %v5122
      %v5568 = vpack.c.bf16 %v5129, %v5123
      %v5569 = vpack.c.bf16 %v5136, %v5130
      %v5570 = vpack.c.bf16 %v5137, %v5131
      %v5571 = vpack.c.bf16 %v5138, %v5132
      %v5572 = vpack.c.bf16 %v5139, %v5133
      %v5573 = vpack.c.bf16 %v5140, %v5134
      %v5574 = vpack.c.bf16 %v5141, %v5135
      %v5575 = vpack.c.bf16 %v5148, %v5142
      %v5576 = vpack.c.bf16 %v5149, %v5143
      %v5577 = vpack.c.bf16 %v5150, %v5144
      %v5578 = vpack.c.bf16 %v5151, %v5145
      %v5579 = vpack.c.bf16 %v5152, %v5146
      %v5580 = vpack.c.bf16 %v5153, %v5147
      %v5581 = vpack.c.bf16 %v5160, %v5154
      %v5582 = vpack.c.bf16 %v5161, %v5155
      %v5583 = vpack.c.bf16 %v5162, %v5156
      %v5584 = vpack.c.bf16 %v5163, %v5157
      %v5585 = vpack.c.bf16 %v5164, %v5158
      %v5586 = vpack.c.bf16 %v5165, %v5159
      %v5587 = vld [vmem:[%s12] sm:$0xff]
      %v5588 = vld [vmem:[%s12 + $0x8] sm:$0xff]
      %v5589 = vld [vmem:[%s12 + $0x10] sm:$0xff]
      %v5590 = vld [vmem:[%s12 + $0x18] sm:$0xff]
      %v5591 = vld [vmem:[%s12 + $0x20] sm:$0xff]
      %v5592 = vld [vmem:[%s12 + $0x28] sm:$0xff]
      %v5593 = vld [vmem:[%s12 + $0x30] sm:$0xff]
      %v5594 = vld [vmem:[%s12 + $0x38] sm:$0xff]
      %v5595 = vld [vmem:[%s12 + $0x40] sm:$0xff]
      %v5596 = vld [vmem:[%s12 + $0x48] sm:$0xff]
      %v5597 = vld [vmem:[%s12 + $0x50] sm:$0xff]
      %v5598 = vld [vmem:[%s12 + $0x58] sm:$0xff]
      %v5599 = vld [vmem:[%s12 + $0x60] sm:$0xff]
      %v5600 = vld [vmem:[%s12 + $0x68] sm:$0xff]
      %v5601 = vld [vmem:[%s12 + $0x70] sm:$0xff]
      %v5602 = vld [vmem:[%s12 + $0x78] sm:$0xff]
      %v5603 = vld [vmem:[%s12 + $0x80] sm:$0xff]
      %v5604 = vld [vmem:[%s12 + $0x88] sm:$0xff]
      %v5605 = vld [vmem:[%s12 + $0x90] sm:$0xff]
      %v5606 = vld [vmem:[%s12 + $0x98] sm:$0xff]
      %v5607 = vld [vmem:[%s12 + $0xa0] sm:$0xff]
      %v5608 = vld [vmem:[%s12 + $0xa8] sm:$0xff]
      %v5609 = vld [vmem:[%s12 + $0xb0] sm:$0xff]
      %v5610 = vld [vmem:[%s12 + $0xb8] sm:$0xff]
      %v5611 = vld [vmem:[%s12 + $0xc0] sm:$0xff]
      %v5612 = vld [vmem:[%s12 + $0xc8] sm:$0xff]
      %v5613 = vld [vmem:[%s12 + $0xd0] sm:$0xff]
      %v5614 = vld [vmem:[%s12 + $0xd8] sm:$0xff]
      %v5615 = vld [vmem:[%s12 + $0xe0] sm:$0xff]
      %v5616 = vld [vmem:[%s12 + $0xe8] sm:$0xff]
      %v5617 = vld [vmem:[%s12 + $0xf0] sm:$0xff]
      %v5618 = vld [vmem:[%s12 + $0xf8] sm:$0xff]
      %v5619 = vld [vmem:[%s12 + $0x100] sm:$0xff]
      %v5620 = vld [vmem:[%s12 + $0x108] sm:$0xff]
      %v5621 = vld [vmem:[%s12 + $0x110] sm:$0xff]
      %v5622 = vld [vmem:[%s12 + $0x118] sm:$0xff]
      %v5623 = vld [vmem:[%s12 + $0x120] sm:$0xff]
      %v5624 = vld [vmem:[%s12 + $0x128] sm:$0xff]
      %v5625 = vld [vmem:[%s12 + $0x130] sm:$0xff]
      %v5626 = vld [vmem:[%s12 + $0x138] sm:$0xff]
      %v5627 = vld [vmem:[%s12 + $0x140] sm:$0xff]
      %v5628 = vld [vmem:[%s12 + $0x148] sm:$0xff]
      %v5629 = vld [vmem:[%s12 + $0x150] sm:$0xff]
      %v5630 = vld [vmem:[%s12 + $0x158] sm:$0xff]
      %v5631 = vld [vmem:[%s12 + $0x160] sm:$0xff]
      %v5632 = vld [vmem:[%s12 + $0x168] sm:$0xff]
      %v5633 = vld [vmem:[%s12 + $0x170] sm:$0xff]
      %v5634 = vld [vmem:[%s12 + $0x178] sm:$0xff]
      %v5635 = vld [vmem:[%s12 + $0x180] sm:$0xff]
      %v5636 = vld [vmem:[%s12 + $0x188] sm:$0xff]
      %v5637 = vld [vmem:[%s12 + $0x190] sm:$0xff]
      %v5638 = vld [vmem:[%s12 + $0x198] sm:$0xff]
      %v5639 = vld [vmem:[%s12 + $0x1a0] sm:$0xff]
      %v5640 = vld [vmem:[%s12 + $0x1a8] sm:$0xff]
      %v5641 = vld [vmem:[%s12 + $0x1b0] sm:$0xff]
      %v5642 = vld [vmem:[%s12 + $0x1b8] sm:$0xff]
      %v5643 = vld [vmem:[%s12 + $0x1c0] sm:$0xff]
      %v5644 = vld [vmem:[%s12 + $0x1c8] sm:$0xff]
      %v5645 = vld [vmem:[%s12 + $0x1d0] sm:$0xff]
      %v5646 = vld [vmem:[%s12 + $0x1d8] sm:$0xff]
      %v5647 = vld [vmem:[%s12 + $0x1e0] sm:$0xff]
      %v5648 = vld [vmem:[%s12 + $0x1e8] sm:$0xff]
      %v5649 = vld [vmem:[%s12 + $0x1f0] sm:$0xff]
      %v5650 = vld [vmem:[%s12 + $0x1f8] sm:$0xff]
      %v5651 = vld [vmem:[%s12 + $0x200] sm:$0xff]
      %v5652 = vld [vmem:[%s12 + $0x208] sm:$0xff]
      %v5653 = vld [vmem:[%s12 + $0x210] sm:$0xff]
      %v5654 = vld [vmem:[%s12 + $0x218] sm:$0xff]
      %v5655 = vld [vmem:[%s12 + $0x220] sm:$0xff]
      %v5656 = vld [vmem:[%s12 + $0x228] sm:$0xff]
      %v5657 = vld [vmem:[%s12 + $0x230] sm:$0xff]
      %v5658 = vld [vmem:[%s12 + $0x238] sm:$0xff]
      %v5659 = vld [vmem:[%s12 + $0x240] sm:$0xff]
      %v5660 = vld [vmem:[%s12 + $0x248] sm:$0xff]
      %v5661 = vld [vmem:[%s12 + $0x250] sm:$0xff]
      %v5662 = vld [vmem:[%s12 + $0x258] sm:$0xff]
      %v5663 = vld [vmem:[%s12 + $0x260] sm:$0xff]
      %v5664 = vld [vmem:[%s12 + $0x268] sm:$0xff]
      %v5665 = vld [vmem:[%s12 + $0x270] sm:$0xff]
      %v5666 = vld [vmem:[%s12 + $0x278] sm:$0xff]
      %v5667 = vld [vmem:[%s12 + $0x280] sm:$0xff]
      %v5668 = vld [vmem:[%s12 + $0x288] sm:$0xff]
      %v5669 = vld [vmem:[%s12 + $0x290] sm:$0xff]
      %v5670 = vld [vmem:[%s12 + $0x298] sm:$0xff]
      %v5755 = vunpack.c.l.b16 %v5587
      %v5756 = vunpack.c.h.b16 %v5587
      %v5757 = vunpack.c.l.b16 %v5588
      %v5758 = vunpack.c.h.b16 %v5588
      %v5759 = vunpack.c.l.b16 %v5589
      %v5760 = vunpack.c.h.b16 %v5589
      %v5761 = vunpack.c.l.b16 %v5590
      %v5762 = vunpack.c.h.b16 %v5590
      %v5763 = vunpack.c.l.b16 %v5591
      %v5764 = vunpack.c.h.b16 %v5591
      %v5765 = vunpack.c.l.b16 %v5592
      %v5766 = vunpack.c.h.b16 %v5592
      %v5767 = vunpack.c.l.b16 %v5593
      %v5768 = vunpack.c.h.b16 %v5593
      %v5769 = vunpack.c.l.b16 %v5594
      %v5770 = vunpack.c.h.b16 %v5594
      %v5771 = vunpack.c.l.b16 %v5595
      %v5772 = vunpack.c.h.b16 %v5595
      %v5773 = vunpack.c.l.b16 %v5596
      %v5774 = vunpack.c.h.b16 %v5596
      %v5775 = vunpack.c.l.b16 %v5597
      %v5776 = vunpack.c.h.b16 %v5597
      %v5777 = vunpack.c.l.b16 %v5598
      %v5778 = vunpack.c.h.b16 %v5598
      %v5779 = vunpack.c.l.b16 %v5599
      %v5780 = vunpack.c.h.b16 %v5599
      %v5781 = vunpack.c.l.b16 %v5600
      %v5782 = vunpack.c.h.b16 %v5600
      %v5783 = vunpack.c.l.b16 %v5601
      %v5784 = vunpack.c.h.b16 %v5601
      %v5785 = vunpack.c.l.b16 %v5602
      %v5786 = vunpack.c.h.b16 %v5602
      %v5787 = vunpack.c.l.b16 %v5603
      %v5788 = vunpack.c.h.b16 %v5603
      %v5789 = vunpack.c.l.b16 %v5604
      %v5790 = vunpack.c.h.b16 %v5604
      %v5791 = vunpack.c.l.b16 %v5605
      %v5792 = vunpack.c.h.b16 %v5605
      %v5793 = vunpack.c.l.b16 %v5606
      %v5794 = vunpack.c.h.b16 %v5606
      %v5795 = vunpack.c.l.b16 %v5607
      %v5796 = vunpack.c.h.b16 %v5607
      %v5797 = vunpack.c.l.b16 %v5608
      %v5798 = vunpack.c.h.b16 %v5608
      %v5799 = vunpack.c.l.b16 %v5609
      %v5800 = vunpack.c.h.b16 %v5609
      %v5801 = vunpack.c.l.b16 %v5610
      %v5802 = vunpack.c.h.b16 %v5610
      %v5803 = vunpack.c.l.b16 %v5611
      %v5804 = vunpack.c.h.b16 %v5611
      %v5805 = vunpack.c.l.b16 %v5612
      %v5806 = vunpack.c.h.b16 %v5612
      %v5807 = vunpack.c.l.b16 %v5613
      %v5808 = vunpack.c.h.b16 %v5613
      %v5809 = vunpack.c.l.b16 %v5614
      %v5810 = vunpack.c.h.b16 %v5614
      %v5811 = vunpack.c.l.b16 %v5615
      %v5812 = vunpack.c.h.b16 %v5615
      %v5813 = vunpack.c.l.b16 %v5616
      %v5814 = vunpack.c.h.b16 %v5616
      %v5815 = vunpack.c.l.b16 %v5617
      %v5816 = vunpack.c.h.b16 %v5617
      %v5817 = vunpack.c.l.b16 %v5618
      %v5818 = vunpack.c.h.b16 %v5618
      %v5819 = vunpack.c.l.b16 %v5619
      %v5820 = vunpack.c.h.b16 %v5619
      %v5821 = vunpack.c.l.b16 %v5620
      %v5822 = vunpack.c.h.b16 %v5620
      %v5823 = vunpack.c.l.b16 %v5621
      %v5824 = vunpack.c.h.b16 %v5621
      %v5825 = vunpack.c.l.b16 %v5622
      %v5826 = vunpack.c.h.b16 %v5622
      %v5827 = vunpack.c.l.b16 %v5623
      %v5828 = vunpack.c.h.b16 %v5623
      %v5829 = vunpack.c.l.b16 %v5624
      %v5830 = vunpack.c.h.b16 %v5624
      %v5831 = vunpack.c.l.b16 %v5625
      %v5832 = vunpack.c.h.b16 %v5625
      %v5833 = vunpack.c.l.b16 %v5626
      %v5834 = vunpack.c.h.b16 %v5626
      %v5835 = vunpack.c.l.b16 %v5627
      %v5836 = vunpack.c.h.b16 %v5627
      %v5837 = vunpack.c.l.b16 %v5628
      %v5838 = vunpack.c.h.b16 %v5628
      %v5839 = vunpack.c.l.b16 %v5629
      %v5840 = vunpack.c.h.b16 %v5629
      %v5841 = vunpack.c.l.b16 %v5630
      %v5842 = vunpack.c.h.b16 %v5630
      %v5843 = vunpack.c.l.b16 %v5631
      %v5844 = vunpack.c.h.b16 %v5631
      %v5845 = vunpack.c.l.b16 %v5632
      %v5846 = vunpack.c.h.b16 %v5632
      %v5847 = vunpack.c.l.b16 %v5633
      %v5848 = vunpack.c.h.b16 %v5633
      %v5849 = vunpack.c.l.b16 %v5634
      %v5850 = vunpack.c.h.b16 %v5634
      %v5851 = vunpack.c.l.b16 %v5635
      %v5852 = vunpack.c.h.b16 %v5635
      %v5853 = vunpack.c.l.b16 %v5636
      %v5854 = vunpack.c.h.b16 %v5636
      %v5855 = vunpack.c.l.b16 %v5637
      %v5856 = vunpack.c.h.b16 %v5637
      %v5857 = vunpack.c.l.b16 %v5638
      %v5858 = vunpack.c.h.b16 %v5638
      %v5859 = vunpack.c.l.b16 %v5639
      %v5860 = vunpack.c.h.b16 %v5639
      %v5861 = vunpack.c.l.b16 %v5640
      %v5862 = vunpack.c.h.b16 %v5640
      %v5863 = vunpack.c.l.b16 %v5641
      %v5864 = vunpack.c.h.b16 %v5641
      %v5865 = vunpack.c.l.b16 %v5642
      %v5866 = vunpack.c.h.b16 %v5642
      %v5867 = vunpack.c.l.b16 %v5643
      %v5868 = vunpack.c.h.b16 %v5643
      %v5869 = vunpack.c.l.b16 %v5644
      %v5870 = vunpack.c.h.b16 %v5644
      %v5871 = vunpack.c.l.b16 %v5645
      %v5872 = vunpack.c.h.b16 %v5645
      %v5873 = vunpack.c.l.b16 %v5646
      %v5874 = vunpack.c.h.b16 %v5646
      %v5875 = vunpack.c.l.b16 %v5647
      %v5876 = vunpack.c.h.b16 %v5647
      %v5877 = vunpack.c.l.b16 %v5648
      %v5878 = vunpack.c.h.b16 %v5648
      %v5879 = vunpack.c.l.b16 %v5649
      %v5880 = vunpack.c.h.b16 %v5649
      %v5881 = vunpack.c.l.b16 %v5650
      %v5882 = vunpack.c.h.b16 %v5650
      %v5883 = vunpack.c.l.b16 %v5651
      %v5884 = vunpack.c.h.b16 %v5651
      %v5885 = vunpack.c.l.b16 %v5652
      %v5886 = vunpack.c.h.b16 %v5652
      %v5887 = vunpack.c.l.b16 %v5653
      %v5888 = vunpack.c.h.b16 %v5653
      %v5889 = vunpack.c.l.b16 %v5654
      %v5890 = vunpack.c.h.b16 %v5654
      %v5891 = vunpack.c.l.b16 %v5655
      %v5892 = vunpack.c.h.b16 %v5655
      %v5893 = vunpack.c.l.b16 %v5656
      %v5894 = vunpack.c.h.b16 %v5656
      %v5895 = vunpack.c.l.b16 %v5657
      %v5896 = vunpack.c.h.b16 %v5657
      %v5897 = vunpack.c.l.b16 %v5658
      %v5898 = vunpack.c.h.b16 %v5658
      %v5899 = vunpack.c.l.b16 %v5659
      %v5900 = vunpack.c.h.b16 %v5659
      %v5901 = vunpack.c.l.b16 %v5660
      %v5902 = vunpack.c.h.b16 %v5660
      %v5903 = vunpack.c.l.b16 %v5661
      %v5904 = vunpack.c.h.b16 %v5661
      %v5905 = vunpack.c.l.b16 %v5662
      %v5906 = vunpack.c.h.b16 %v5662
      %v5907 = vunpack.c.l.b16 %v5663
      %v5908 = vunpack.c.h.b16 %v5663
      %v5909 = vunpack.c.l.b16 %v5664
      %v5910 = vunpack.c.h.b16 %v5664
      %v5911 = vunpack.c.l.b16 %v5665
      %v5912 = vunpack.c.h.b16 %v5665
      %v5913 = vunpack.c.l.b16 %v5666
      %v5914 = vunpack.c.h.b16 %v5666
      %v5915 = vunpack.c.l.b16 %v5667
      %v5916 = vunpack.c.h.b16 %v5667
      %v5917 = vunpack.c.l.b16 %v5668
      %v5918 = vunpack.c.h.b16 %v5668
      %v5919 = vunpack.c.l.b16 %v5669
      %v5920 = vunpack.c.h.b16 %v5669
      %v5921 = vunpack.c.l.b16 %v5670
      %v5922 = vunpack.c.h.b16 %v5670
      %v5923 = vpack.c.b16 %v5757, %v5755
      %v5924 = vpack.c.b16 %v5758, %v5756
      %v5925 = vpack.c.b16 %v5761, %v5759
      %v5926 = vpack.c.b16 %v5762, %v5760
      %v5927 = vpack.c.b16 %v5765, %v5763
      %v5928 = vpack.c.b16 %v5766, %v5764
      %v5929 = vpack.c.b16 %v5769, %v5767
      %v5930 = vpack.c.b16 %v5770, %v5768
      %v5931 = vpack.c.b16 %v5773, %v5771
      %v5932 = vpack.c.b16 %v5774, %v5772
      %v5933 = vpack.c.b16 %v5777, %v5775
      %v5934 = vpack.c.b16 %v5778, %v5776
      %v5935 = vpack.c.b16 %v5781, %v5779
      %v5936 = vpack.c.b16 %v5782, %v5780
      %v5937 = vpack.c.b16 %v5785, %v5783
      %v5938 = vpack.c.b16 %v5786, %v5784
      %v5939 = vpack.c.b16 %v5789, %v5787
      %v5940 = vpack.c.b16 %v5790, %v5788
      %v5941 = vpack.c.b16 %v5793, %v5791
      %v5942 = vpack.c.b16 %v5794, %v5792
      %v5943 = vpack.c.b16 %v5797, %v5795
      %v5944 = vpack.c.b16 %v5798, %v5796
      %v5945 = vpack.c.b16 %v5801, %v5799
      %v5946 = vpack.c.b16 %v5802, %v5800
      %v5947 = vpack.c.b16 %v5805, %v5803
      %v5948 = vpack.c.b16 %v5806, %v5804
      %v5949 = vpack.c.b16 %v5809, %v5807
      %v5950 = vpack.c.b16 %v5810, %v5808
      %v5951 = vpack.c.b16 %v5813, %v5811
      %v5952 = vpack.c.b16 %v5814, %v5812
      %v5953 = vpack.c.b16 %v5817, %v5815
      %v5954 = vpack.c.b16 %v5818, %v5816
      %v5955 = vpack.c.b16 %v5821, %v5819
      %v5956 = vpack.c.b16 %v5822, %v5820
      %v5957 = vpack.c.b16 %v5825, %v5823
      %v5958 = vpack.c.b16 %v5826, %v5824
      %v5959 = vpack.c.b16 %v5829, %v5827
      %v5960 = vpack.c.b16 %v5830, %v5828
      %v5961 = vpack.c.b16 %v5833, %v5831
      %v5962 = vpack.c.b16 %v5834, %v5832
      %v5963 = vpack.c.b16 %v5837, %v5835
      %v5964 = vpack.c.b16 %v5838, %v5836
      %v5965 = vpack.c.b16 %v5841, %v5839
      %v5966 = vpack.c.b16 %v5842, %v5840
      %v5967 = vpack.c.b16 %v5845, %v5843
      %v5968 = vpack.c.b16 %v5846, %v5844
      %v5969 = vpack.c.b16 %v5849, %v5847
      %v5970 = vpack.c.b16 %v5850, %v5848
      %v5971 = vpack.c.b16 %v5853, %v5851
      %v5972 = vpack.c.b16 %v5854, %v5852
      %v5973 = vpack.c.b16 %v5857, %v5855
      %v5974 = vpack.c.b16 %v5858, %v5856
      %v5975 = vpack.c.b16 %v5861, %v5859
      %v5976 = vpack.c.b16 %v5862, %v5860
      %v5977 = vpack.c.b16 %v5865, %v5863
      %v5978 = vpack.c.b16 %v5866, %v5864
      %v5979 = vpack.c.b16 %v5869, %v5867
      %v5980 = vpack.c.b16 %v5870, %v5868
      %v5981 = vpack.c.b16 %v5873, %v5871
      %v5982 = vpack.c.b16 %v5874, %v5872
      %v5983 = vpack.c.b16 %v5877, %v5875
      %v5984 = vpack.c.b16 %v5878, %v5876
      %v5985 = vpack.c.b16 %v5881, %v5879
      %v5986 = vpack.c.b16 %v5882, %v5880
      %v5987 = vpack.c.b16 %v5885, %v5883
      %v5988 = vpack.c.b16 %v5886, %v5884
      %v5989 = vpack.c.b16 %v5889, %v5887
      %v5990 = vpack.c.b16 %v5890, %v5888
      %v5991 = vpack.c.b16 %v5893, %v5891
      %v5992 = vpack.c.b16 %v5894, %v5892
      %v5993 = vpack.c.b16 %v5897, %v5895
      %v5994 = vpack.c.b16 %v5898, %v5896
      %v5995 = vpack.c.b16 %v5901, %v5899
      %v5996 = vpack.c.b16 %v5902, %v5900
      %v5997 = vpack.c.b16 %v5905, %v5903
      %v5998 = vpack.c.b16 %v5906, %v5904
      %v5999 = vpack.c.b16 %v5909, %v5907
      %v6000 = vpack.c.b16 %v5910, %v5908
      %v6001 = vpack.c.b16 %v5913, %v5911
      %v6002 = vpack.c.b16 %v5914, %v5912
      %v6003 = vpack.c.b16 %v5917, %v5915
      %v6004 = vpack.c.b16 %v5918, %v5916
      %v6005 = vpack.c.b16 %v5921, %v5919
      %v6006 = vpack.c.b16 %v5922, %v5920
      %v6092 = vsel %vm971, %v5544, 0
      %v6095 = vsel %vm971, %v5550, 0
      %v6098 = vsel %vm971, %v5556, 0
      %v6101 = vsel %vm971, %v5562, 0
      %v6104 = vsel %vm971, %v5568, 0
      %v6107 = vsel %vm971, %v5574, 0
      %v6110 = vsel %vm971, %v5580, 0
      %v6113 = vsel %vm971, %v5586, 0
      %6115 = vmatprep.subr.bf16.mxu0 %v5924
      %6116 = vmatpush1.bf16.msra.mxu0 %v5923
      %6117 = vmatprep.subr.bf16.mxu0 %v5926
      %6118 = vmatpush1.bf16.msra.mxu0 %v5925
      %6119 = vmatprep.subr.bf16.mxu0 %v5928
      %6120 = vmatpush1.bf16.msra.mxu0 %v5927
      %6121 = vmatprep.subr.bf16.mxu0 %v5930
      %6122 = vmatpush1.bf16.msra.mxu0 %v5929
      %6123 = vmatprep.subr.bf16.mxu0 %v5932
      %6124 = vmatpush1.bf16.msra.mxu0 %v5931
      %6125 = vmatprep.subr.bf16.mxu0 %v5934
      %6126 = vmatpush1.bf16.msra.mxu0 %v5933
      %6127 = vmatprep.subr.bf16.mxu0 %v5936
      %6128 = vmatpush1.bf16.msra.mxu0 %v5935
      %6129 = vmatprep.subr.bf16.mxu0 %v5938
      %6130 = vmatpush1.bf16.msra.mxu0 %v5937
      %6131 = vmatprep.subr.bf16.mxu0 %v5940
      %6132 = vmatpush1.bf16.msra.mxu0 %v5939
      %6133 = vmatprep.subr.bf16.mxu0 %v5942
      %6134 = vmatpush1.bf16.msra.mxu0 %v5941
      %6135 = vmatprep.subr.bf16.mxu0 %v5944
      %6136 = vmatpush1.bf16.msra.mxu0 %v5943
      %6137 = vmatprep.subr.bf16.mxu0 %v5946
      %6138 = vmatpush1.bf16.msra.mxu0 %v5945
      %6139 = vmatprep.subr.bf16.mxu0 %v5948
      %6140 = vmatpush1.bf16.msra.mxu0 %v5947
      %6141 = vmatprep.subr.bf16.mxu0 %v5950
      %6142 = vmatpush1.bf16.msra.mxu0 %v5949
      %6143 = vmatprep.subr.bf16.mxu0 %v5952
      %6144 = vmatpush1.bf16.msra.mxu0 %v5951
      %6145 = vmatprep.subr.bf16.mxu0 %v5954
      %6146 = vmatpush1.bf16.msra.mxu0 %v5953
      %6147 = vmatprep.mubr.bf16.mxu0 %v5540
      %6148 = vmatmul.mubr.bf16.gmra.mrb[0].mxu0 %v5539
      %v6149 = vpop.f32.mrb[0].mxu0
      %v6150 = vadd.f32 0.0, %v6149
      %v6151 = vpop.f32.mrb[0].mxu0
      %v6152 = vadd.f32 0.0, %v6151
      %v6153 = vpop.f32.mrb[0].mxu0
      %v6154 = vadd.f32 0.0, %v6153
      %v6155 = vpop.f32.mrb[0].mxu0
      %v6156 = vadd.f32 0.0, %v6155
      %6157 = vmatprep.mubr.bf16.mxu0 %v5546
      %6158 = vmatmul.mubr.bf16.gmra.mrb[0].mxu0 %v5545
      %v6159 = vpop.f32.mrb[0].mxu0
      %v6160 = vadd.f32 0.0, %v6159
      %v6161 = vpop.f32.mrb[0].mxu0
      %v6162 = vadd.f32 0.0, %v6161
      %v6163 = vpop.f32.mrb[0].mxu0
      %v6164 = vadd.f32 0.0, %v6163
      %v6165 = vpop.f32.mrb[0].mxu0
      %v6166 = vadd.f32 0.0, %v6165
      %6167 = vmatprep.mubr.bf16.mxu0 %v5552
      %6168 = vmatmul.mubr.bf16.gmra.mrb[0].mxu0 %v5551
      %v6169 = vpop.f32.mrb[0].mxu0
      %v6170 = vadd.f32 0.0, %v6169
      %v6171 = vpop.f32.mrb[0].mxu0
      %v6172 = vadd.f32 0.0, %v6171
      %v6173 = vpop.f32.mrb[0].mxu0
      %v6174 = vadd.f32 0.0, %v6173
      %v6175 = vpop.f32.mrb[0].mxu0
      %v6176 = vadd.f32 0.0, %v6175
      %6177 = vmatprep.mubr.bf16.mxu0 %v5558
      %6178 = vmatmul.mubr.bf16.gmra.mrb[0].mxu0 %v5557
      %v6179 = vpop.f32.mrb[0].mxu0
      %v6180 = vadd.f32 0.0, %v6179
      %v6181 = vpop.f32.mrb[0].mxu0
      %v6182 = vadd.f32 0.0, %v6181
      %v6183 = vpop.f32.mrb[0].mxu0
      %v6184 = vadd.f32 0.0, %v6183
      %v6185 = vpop.f32.mrb[0].mxu0
      %v6186 = vadd.f32 0.0, %v6185
      %6187 = vmatprep.mubr.bf16.mxu0 %v5564
      %6188 = vmatmul.mubr.bf16.gmra.mrb[0].mxu0 %v5563
      %v6189 = vpop.f32.mrb[0].mxu0
      %v6190 = vadd.f32 0.0, %v6189
      %v6191 = vpop.f32.mrb[0].mxu0
      %v6192 = vadd.f32 0.0, %v6191
      %v6193 = vpop.f32.mrb[0].mxu0
      %v6194 = vadd.f32 0.0, %v6193
      %v6195 = vpop.f32.mrb[0].mxu0
      %v6196 = vadd.f32 0.0, %v6195
      %6197 = vmatprep.mubr.bf16.mxu0 %v5570
      %6198 = vmatmul.mubr.bf16.gmra.mrb[0].mxu0 %v5569
      %v6199 = vpop.f32.mrb[0].mxu0
      %v6200 = vadd.f32 0.0, %v6199
      %v6201 = vpop.f32.mrb[0].mxu0
      %v6202 = vadd.f32 0.0, %v6201
      %v6203 = vpop.f32.mrb[0].mxu0
      %v6204 = vadd.f32 0.0, %v6203
      %v6205 = vpop.f32.mrb[0].mxu0
      %v6206 = vadd.f32 0.0, %v6205
      %6207 = vmatprep.mubr.bf16.mxu0 %v5576
      %6208 = vmatmul.mubr.bf16.gmra.mrb[0].mxu0 %v5575
      %v6209 = vpop.f32.mrb[0].mxu0
      %v6210 = vadd.f32 0.0, %v6209
      %v6211 = vpop.f32.mrb[0].mxu0
      %v6212 = vadd.f32 0.0, %v6211
      %v6213 = vpop.f32.mrb[0].mxu0
      %v6214 = vadd.f32 0.0, %v6213
      %v6215 = vpop.f32.mrb[0].mxu0
      %v6216 = vadd.f32 0.0, %v6215
      %6217 = vmatprep.mubr.bf16.mxu0 %v5582
      %6218 = vmatmul.mubr.bf16.gmra.mrb[0].mxu0 %v5581
      %v6219 = vpop.f32.mrb[0].mxu0
      %v6220 = vadd.f32 0.0, %v6219
      %v6221 = vpop.f32.mrb[0].mxu0
      %v6222 = vadd.f32 0.0, %v6221
      %v6223 = vpop.f32.mrb[0].mxu0
      %v6224 = vadd.f32 0.0, %v6223
      %v6225 = vpop.f32.mrb[0].mxu0
      %v6226 = vadd.f32 0.0, %v6225
      %6227 = vdwg.mxu0
      %6228 = vmatprep.subr.bf16.mxu0 %v5956
      %6229 = vmatpush1.bf16.msra.mxu0 %v5955
      %6230 = vmatprep.subr.bf16.mxu0 %v5958
      %6231 = vmatpush1.bf16.msra.mxu0 %v5957
      %6232 = vmatprep.subr.bf16.mxu0 %v5960
      %6233 = vmatpush1.bf16.msra.mxu0 %v5959
      %6234 = vmatprep.subr.bf16.mxu0 %v5962
      %6235 = vmatpush1.bf16.msra.mxu0 %v5961
      %6236 = vmatprep.subr.bf16.mxu0 %v5964
      %6237 = vmatpush1.bf16.msra.mxu0 %v5963
      %6238 = vmatprep.subr.bf16.mxu0 %v5966
      %6239 = vmatpush1.bf16.msra.mxu0 %v5965
      %6240 = vmatprep.subr.bf16.mxu0 %v5968
      %6241 = vmatpush1.bf16.msra.mxu0 %v5967
      %6242 = vmatprep.subr.bf16.mxu0 %v5970
      %6243 = vmatpush1.bf16.msra.mxu0 %v5969
      %6244 = vmatprep.subr.bf16.mxu0 %v5972
      %6245 = vmatpush1.bf16.msra.mxu0 %v5971
      %6246 = vmatprep.subr.bf16.mxu0 %v5974
      %6247 = vmatpush1.bf16.msra.mxu0 %v5973
      %6248 = vmatprep.subr.bf16.mxu0 %v5976
      %6249 = vmatpush1.bf16.msra.mxu0 %v5975
      %6250 = vmatprep.subr.bf16.mxu0 %v5978
      %6251 = vmatpush1.bf16.msra.mxu0 %v5977
      %6252 = vmatprep.subr.bf16.mxu0 %v5980
      %6253 = vmatpush1.bf16.msra.mxu0 %v5979
      %6254 = vmatprep.subr.bf16.mxu0 %v5982
      %6255 = vmatpush1.bf16.msra.mxu0 %v5981
      %6256 = vmatprep.subr.bf16.mxu0 %v5984
      %6257 = vmatpush1.bf16.msra.mxu0 %v5983
      %6258 = vmatprep.subr.bf16.mxu0 %v5986
      %6259 = vmatpush1.bf16.msra.mxu0 %v5985
      %6260 = vmatprep.mubr.bf16.mxu0 %v5542
      %6261 = vmatmul.mubr.bf16.gmra.mrb[0].mxu0 %v5541
      %v6262 = vpop.f32.mrb[0].mxu0
      %v6263 = vadd.f32 %v6150, %v6262
      %v6264 = vpop.f32.mrb[0].mxu0
      %v6265 = vadd.f32 %v6152, %v6264
      %v6266 = vpop.f32.mrb[0].mxu0
      %v6267 = vadd.f32 %v6154, %v6266
      %v6268 = vpop.f32.mrb[0].mxu0
      %v6269 = vadd.f32 %v6156, %v6268
      %6270 = vmatprep.mubr.bf16.mxu0 %v5548
      %6271 = vmatmul.mubr.bf16.gmra.mrb[0].mxu0 %v5547
      %v6272 = vpop.f32.mrb[0].mxu0
      %v6273 = vadd.f32 %v6160, %v6272
      %v6274 = vpop.f32.mrb[0].mxu0
      %v6275 = vadd.f32 %v6162, %v6274
      %v6276 = vpop.f32.mrb[0].mxu0
      %v6277 = vadd.f32 %v6164, %v6276
      %v6278 = vpop.f32.mrb[0].mxu0
      %v6279 = vadd.f32 %v6166, %v6278
      %6280 = vmatprep.mubr.bf16.mxu0 %v5554
      %6281 = vmatmul.mubr.bf16.gmra.mrb[0].mxu0 %v5553
      %v6282 = vpop.f32.mrb[0].mxu0
      %v6283 = vadd.f32 %v6170, %v6282
      %v6284 = vpop.f32.mrb[0].mxu0
      %v6285 = vadd.f32 %v6172, %v6284
      %v6286 = vpop.f32.mrb[0].mxu0
      %v6287 = vadd.f32 %v6174, %v6286
      %v6288 = vpop.f32.mrb[0].mxu0
      %v6289 = vadd.f32 %v6176, %v6288
      %6290 = vmatprep.mubr.bf16.mxu0 %v5560
      %6291 = vmatmul.mubr.bf16.gmra.mrb[0].mxu0 %v5559
      %v6292 = vpop.f32.mrb[0].mxu0
      %v6293 = vadd.f32 %v6180, %v6292
      %v6294 = vpop.f32.mrb[0].mxu0
      %v6295 = vadd.f32 %v6182, %v6294
      %v6296 = vpop.f32.mrb[0].mxu0
      %v6297 = vadd.f32 %v6184, %v6296
      %v6298 = vpop.f32.mrb[0].mxu0
      %v6299 = vadd.f32 %v6186, %v6298
      %6300 = vmatprep.mubr.bf16.mxu0 %v5566
      %6301 = vmatmul.mubr.bf16.gmra.mrb[0].mxu0 %v5565
      %v6302 = vpop.f32.mrb[0].mxu0
      %v6303 = vadd.f32 %v6190, %v6302
      %v6304 = vpop.f32.mrb[0].mxu0
      %v6305 = vadd.f32 %v6192, %v6304
      %v6306 = vpop.f32.mrb[0].mxu0
      %v6307 = vadd.f32 %v6194, %v6306
      %v6308 = vpop.f32.mrb[0].mxu0
      %v6309 = vadd.f32 %v6196, %v6308
      %6310 = vmatprep.mubr.bf16.mxu0 %v5572
      %6311 = vmatmul.mubr.bf16.gmra.mrb[0].mxu0 %v5571
      %v6312 = vpop.f32.mrb[0].mxu0
      %v6313 = vadd.f32 %v6200, %v6312
      %v6314 = vpop.f32.mrb[0].mxu0
      %v6315 = vadd.f32 %v6202, %v6314
      %v6316 = vpop.f32.mrb[0].mxu0
      %v6317 = vadd.f32 %v6204, %v6316
      %v6318 = vpop.f32.mrb[0].mxu0
      %v6319 = vadd.f32 %v6206, %v6318
      %6320 = vmatprep.mubr.bf16.mxu0 %v5578
      %6321 = vmatmul.mubr.bf16.gmra.mrb[0].mxu0 %v5577
      %v6322 = vpop.f32.mrb[0].mxu0
      %v6323 = vadd.f32 %v6210, %v6322
      %v6324 = vpop.f32.mrb[0].mxu0
      %v6325 = vadd.f32 %v6212, %v6324
      %v6326 = vpop.f32.mrb[0].mxu0
      %v6327 = vadd.f32 %v6214, %v6326
      %v6328 = vpop.f32.mrb[0].mxu0
      %v6329 = vadd.f32 %v6216, %v6328
      %6330 = vmatprep.mubr.bf16.mxu0 %v5584
      %6331 = vmatmul.mubr.bf16.gmra.mrb[0].mxu0 %v5583
      %v6332 = vpop.f32.mrb[0].mxu0
      %v6333 = vadd.f32 %v6220, %v6332
      %v6334 = vpop.f32.mrb[0].mxu0
      %v6335 = vadd.f32 %v6222, %v6334
      %v6336 = vpop.f32.mrb[0].mxu0
      %v6337 = vadd.f32 %v6224, %v6336
      %v6338 = vpop.f32.mrb[0].mxu0
      %v6339 = vadd.f32 %v6226, %v6338
      %6340 = vdwg.mxu0
      %6341 = vmatprep.subr.bf16.mxu0 %v5988
      %6342 = vmatpush1.bf16.msra.mxu0 %v5987
      %6343 = vmatprep.subr.bf16.mxu0 %v5990
      %6344 = vmatpush1.bf16.msra.mxu0 %v5989
      %6345 = vmatprep.subr.bf16.mxu0 %v5992
      %6346 = vmatpush1.bf16.msra.mxu0 %v5991
      %6347 = vmatprep.subr.bf16.mxu0 %v5994
      %6348 = vmatpush1.bf16.msra.mxu0 %v5993
      %6349 = vmatprep.subr.bf16.mxu0 %v5996
      %6350 = vmatpush1.bf16.msra.mxu0 %v5995
      %6351 = vmatprep.subr.bf16.mxu0 %v5998
      %6352 = vmatpush1.bf16.msra.mxu0 %v5997
      %6353 = vmatprep.subr.bf16.mxu0 %v6000
      %6354 = vmatpush1.bf16.msra.mxu0 %v5999
      %6355 = vmatprep.subr.bf16.mxu0 %v6002
      %6356 = vmatpush1.bf16.msra.mxu0 %v6001
      %6357 = vmatprep.subr.bf16.mxu0 %v6004
      %6358 = vmatpush1.bf16.msra.mxu0 %v6003
      %6359 = vmatprep.subr.bf16.mxu0 %v6006
      %6360 = vmatpush1.bf16.msra.mxu0 %v6005
      %6361 = vmatprep.subr.bf16.mxu0 0
      %6362 = vmatpush1.bf16.msra.mxu0 0
      %6363 = vmatprep.subr.bf16.mxu0 0
      %6364 = vmatpush1.bf16.msra.mxu0 0
      %6365 = vmatprep.subr.bf16.mxu0 0
      %6366 = vmatpush1.bf16.msra.mxu0 0
      %6367 = vmatprep.subr.bf16.mxu0 0
      %6368 = vmatpush1.bf16.msra.mxu0 0
      %6369 = vmatprep.subr.bf16.mxu0 0
      %6370 = vmatpush1.bf16.msra.mxu0 0
      %6371 = vmatprep.subr.bf16.mxu0 0
      %6372 = vmatpush1.bf16.msra.mxu0 0
      %6373 = vmatprep.mubr.bf16.mxu0 %v6092
      %6374 = vmatmul.mubr.bf16.gmra.mrb[0].mxu0 %v5543
      %v6375 = vpop.f32.mrb[0].mxu0
      %v6376 = vadd.f32 %v6263, %v6375
      %v6377 = vpop.f32.mrb[0].mxu0
      %v6378 = vadd.f32 %v6265, %v6377
      %v6379 = vpop.f32.mrb[0].mxu0
      %v6380 = vadd.f32 %v6267, %v6379
      %v6381 = vpop.f32.mrb[0].mxu0
      %v6382 = vadd.f32 %v6269, %v6381
      %6383 = vmatprep.mubr.bf16.mxu0 %v6095
      %6384 = vmatmul.mubr.bf16.gmra.mrb[0].mxu0 %v5549
      %v6385 = vpop.f32.mrb[0].mxu0
      %v6386 = vadd.f32 %v6273, %v6385
      %v6387 = vpop.f32.mrb[0].mxu0
      %v6388 = vadd.f32 %v6275, %v6387
      %v6389 = vpop.f32.mrb[0].mxu0
      %v6390 = vadd.f32 %v6277, %v6389
      %v6391 = vpop.f32.mrb[0].mxu0
      %v6392 = vadd.f32 %v6279, %v6391
      %6393 = vmatprep.mubr.bf16.mxu0 %v6098
      %6394 = vmatmul.mubr.bf16.gmra.mrb[0].mxu0 %v5555
      %v6395 = vpop.f32.mrb[0].mxu0
      %v6396 = vadd.f32 %v6283, %v6395
      %v6397 = vpop.f32.mrb[0].mxu0
      %v6398 = vadd.f32 %v6285, %v6397
      %v6399 = vpop.f32.mrb[0].mxu0
      %v6400 = vadd.f32 %v6287, %v6399
      %v6401 = vpop.f32.mrb[0].mxu0
      %v6402 = vadd.f32 %v6289, %v6401
      %6403 = vmatprep.mubr.bf16.mxu0 %v6101
      %6404 = vmatmul.mubr.bf16.gmra.mrb[0].mxu0 %v5561
      %v6405 = vpop.f32.mrb[0].mxu0
      %v6406 = vadd.f32 %v6293, %v6405
      %v6407 = vpop.f32.mrb[0].mxu0
      %v6408 = vadd.f32 %v6295, %v6407
      %v6409 = vpop.f32.mrb[0].mxu0
      %v6410 = vadd.f32 %v6297, %v6409
      %v6411 = vpop.f32.mrb[0].mxu0
      %v6412 = vadd.f32 %v6299, %v6411
      %6413 = vmatprep.mubr.bf16.mxu0 %v6104
      %6414 = vmatmul.mubr.bf16.gmra.mrb[0].mxu0 %v5567
      %v6415 = vpop.f32.mrb[0].mxu0
      %v6416 = vadd.f32 %v6303, %v6415
      %v6417 = vpop.f32.mrb[0].mxu0
      %v6418 = vadd.f32 %v6305, %v6417
      %v6419 = vpop.f32.mrb[0].mxu0
      %v6420 = vadd.f32 %v6307, %v6419
      %v6421 = vpop.f32.mrb[0].mxu0
      %v6422 = vadd.f32 %v6309, %v6421
      %6423 = vmatprep.mubr.bf16.mxu0 %v6107
      %6424 = vmatmul.mubr.bf16.gmra.mrb[0].mxu0 %v5573
      %v6425 = vpop.f32.mrb[0].mxu0
      %v6426 = vadd.f32 %v6313, %v6425
      %v6427 = vpop.f32.mrb[0].mxu0
      %v6428 = vadd.f32 %v6315, %v6427
      %v6429 = vpop.f32.mrb[0].mxu0
      %v6430 = vadd.f32 %v6317, %v6429
      %v6431 = vpop.f32.mrb[0].mxu0
      %v6432 = vadd.f32 %v6319, %v6431
      %6433 = vmatprep.mubr.bf16.mxu0 %v6110
      %6434 = vmatmul.mubr.bf16.gmra.mrb[0].mxu0 %v5579
      %v6435 = vpop.f32.mrb[0].mxu0
      %v6436 = vadd.f32 %v6323, %v6435
      %v6437 = vpop.f32.mrb[0].mxu0
      %v6438 = vadd.f32 %v6325, %v6437
      %v6439 = vpop.f32.mrb[0].mxu0
      %v6440 = vadd.f32 %v6327, %v6439
      %v6441 = vpop.f32.mrb[0].mxu0
      %v6442 = vadd.f32 %v6329, %v6441
      %6443 = vmatprep.mubr.bf16.mxu0 %v6113
      %6444 = vmatmul.mubr.bf16.gmra.mrb[0].mxu0 %v5585
      %v6445 = vpop.f32.mrb[0].mxu0
      %v6446 = vadd.f32 %v6333, %v6445
      %v6447 = vpop.f32.mrb[0].mxu0
      %v6448 = vadd.f32 %v6335, %v6447
      %v6449 = vpop.f32.mrb[0].mxu0
      %v6450 = vadd.f32 %v6337, %v6449
      %v6451 = vpop.f32.mrb[0].mxu0
      %v6452 = vadd.f32 %v6339, %v6451
      %6453 = vdwg.mxu0
      %v6538 = vunpack.c.l.b16 %v5455
      %v6539 = vunpack.c.h.b16 %v5455
      %v6540 = vunpack.c.l.b16 %v5456
      %v6541 = vunpack.c.h.b16 %v5456
      %v6542 = vunpack.c.l.b16 %v5457
      %v6543 = vunpack.c.h.b16 %v5457
      %v6544 = vunpack.c.l.b16 %v5458
      %v6545 = vunpack.c.h.b16 %v5458
      %v6546 = vunpack.c.l.b16 %v5459
      %v6547 = vunpack.c.h.b16 %v5459
      %v6548 = vunpack.c.l.b16 %v5460
      %v6549 = vunpack.c.h.b16 %v5460
      %v6550 = vunpack.c.l.b16 %v5461
      %v6551 = vunpack.c.h.b16 %v5461
      %v6552 = vunpack.c.l.b16 %v5462
      %v6553 = vunpack.c.h.b16 %v5462
      %v6554 = vunpack.c.l.b16 %v5463
      %v6555 = vunpack.c.h.b16 %v5463
      %v6556 = vunpack.c.l.b16 %v5464
      %v6557 = vunpack.c.h.b16 %v5464
      %v6558 = vunpack.c.l.b16 %v5465
      %v6559 = vunpack.c.h.b16 %v5465
      %v6560 = vunpack.c.l.b16 %v5466
      %v6561 = vunpack.c.h.b16 %v5466
      %v6562 = vunpack.c.l.b16 %v5467
      %v6563 = vunpack.c.h.b16 %v5467
      %v6564 = vunpack.c.l.b16 %v5468
      %v6565 = vunpack.c.h.b16 %v5468
      %v6566 = vunpack.c.l.b16 %v5469
      %v6567 = vunpack.c.h.b16 %v5469
      %v6568 = vunpack.c.l.b16 %v5470
      %v6569 = vunpack.c.h.b16 %v5470
      %v6570 = vunpack.c.l.b16 %v5471
      %v6571 = vunpack.c.h.b16 %v5471
      %v6572 = vunpack.c.l.b16 %v5472
      %v6573 = vunpack.c.h.b16 %v5472
      %v6574 = vunpack.c.l.b16 %v5473
      %v6575 = vunpack.c.h.b16 %v5473
      %v6576 = vunpack.c.l.b16 %v5474
      %v6577 = vunpack.c.h.b16 %v5474
      %v6578 = vunpack.c.l.b16 %v5475
      %v6579 = vunpack.c.h.b16 %v5475
      %v6580 = vunpack.c.l.b16 %v5476
      %v6581 = vunpack.c.h.b16 %v5476
      %v6582 = vunpack.c.l.b16 %v5477
      %v6583 = vunpack.c.h.b16 %v5477
      %v6584 = vunpack.c.l.b16 %v5478
      %v6585 = vunpack.c.h.b16 %v5478
      %v6586 = vunpack.c.l.b16 %v5479
      %v6587 = vunpack.c.h.b16 %v5479
      %v6588 = vunpack.c.l.b16 %v5480
      %v6589 = vunpack.c.h.b16 %v5480
      %v6590 = vunpack.c.l.b16 %v5481
      %v6591 = vunpack.c.h.b16 %v5481
      %v6592 = vunpack.c.l.b16 %v5482
      %v6593 = vunpack.c.h.b16 %v5482
      %v6594 = vunpack.c.l.b16 %v5483
      %v6595 = vunpack.c.h.b16 %v5483
      %v6596 = vunpack.c.l.b16 %v5484
      %v6597 = vunpack.c.h.b16 %v5484
      %v6598 = vunpack.c.l.b16 %v5485
      %v6599 = vunpack.c.h.b16 %v5485
      %v6600 = vunpack.c.l.b16 %v5486
      %v6601 = vunpack.c.h.b16 %v5486
      %v6602 = vunpack.c.l.b16 %v5487
      %v6603 = vunpack.c.h.b16 %v5487
      %v6604 = vunpack.c.l.b16 %v5488
      %v6605 = vunpack.c.h.b16 %v5488
      %v6606 = vunpack.c.l.b16 %v5489
      %v6607 = vunpack.c.h.b16 %v5489
      %v6608 = vunpack.c.l.b16 %v5490
      %v6609 = vunpack.c.h.b16 %v5490
      %v6610 = vunpack.c.l.b16 %v5491
      %v6611 = vunpack.c.h.b16 %v5491
      %v6612 = vunpack.c.l.b16 %v5492
      %v6613 = vunpack.c.h.b16 %v5492
      %v6614 = vunpack.c.l.b16 %v5493
      %v6615 = vunpack.c.h.b16 %v5493
      %v6616 = vunpack.c.l.b16 %v5494
      %v6617 = vunpack.c.h.b16 %v5494
      %v6618 = vunpack.c.l.b16 %v5495
      %v6619 = vunpack.c.h.b16 %v5495
      %v6620 = vunpack.c.l.b16 %v5496
      %v6621 = vunpack.c.h.b16 %v5496
      %v6622 = vunpack.c.l.b16 %v5497
      %v6623 = vunpack.c.h.b16 %v5497
      %v6624 = vunpack.c.l.b16 %v5498
      %v6625 = vunpack.c.h.b16 %v5498
      %v6626 = vunpack.c.l.b16 %v5499
      %v6627 = vunpack.c.h.b16 %v5499
      %v6628 = vunpack.c.l.b16 %v5500
      %v6629 = vunpack.c.h.b16 %v5500
      %v6630 = vunpack.c.l.b16 %v5501
      %v6631 = vunpack.c.h.b16 %v5501
      %v6632 = vunpack.c.l.b16 %v5502
      %v6633 = vunpack.c.h.b16 %v5502
      %v6634 = vunpack.c.l.b16 %v5503
      %v6635 = vunpack.c.h.b16 %v5503
      %v6636 = vunpack.c.l.b16 %v5504
      %v6637 = vunpack.c.h.b16 %v5504
      %v6638 = vunpack.c.l.b16 %v5505
      %v6639 = vunpack.c.h.b16 %v5505
      %v6640 = vunpack.c.l.b16 %v5506
      %v6641 = vunpack.c.h.b16 %v5506
      %v6642 = vunpack.c.l.b16 %v5507
      %v6643 = vunpack.c.h.b16 %v5507
      %v6644 = vunpack.c.l.b16 %v5508
      %v6645 = vunpack.c.h.b16 %v5508
      %v6646 = vunpack.c.l.b16 %v5509
      %v6647 = vunpack.c.h.b16 %v5509
      %v6648 = vunpack.c.l.b16 %v5510
      %v6649 = vunpack.c.h.b16 %v5510
      %v6650 = vunpack.c.l.b16 %v5511
      %v6651 = vunpack.c.h.b16 %v5511
      %v6652 = vunpack.c.l.b16 %v5512
      %v6653 = vunpack.c.h.b16 %v5512
      %v6654 = vunpack.c.l.b16 %v5513
      %v6655 = vunpack.c.h.b16 %v5513
      %v6656 = vunpack.c.l.b16 %v5514
      %v6657 = vunpack.c.h.b16 %v5514
      %v6658 = vunpack.c.l.b16 %v5515
      %v6659 = vunpack.c.h.b16 %v5515
      %v6660 = vunpack.c.l.b16 %v5516
      %v6661 = vunpack.c.h.b16 %v5516
      %v6662 = vunpack.c.l.b16 %v5517
      %v6663 = vunpack.c.h.b16 %v5517
      %v6664 = vunpack.c.l.b16 %v5518
      %v6665 = vunpack.c.h.b16 %v5518
      %v6666 = vunpack.c.l.b16 %v5519
      %v6667 = vunpack.c.h.b16 %v5519
      %v6668 = vunpack.c.l.b16 %v5520
      %v6669 = vunpack.c.h.b16 %v5520
      %v6670 = vunpack.c.l.b16 %v5521
      %v6671 = vunpack.c.h.b16 %v5521
      %v6672 = vunpack.c.l.b16 %v5522
      %v6673 = vunpack.c.h.b16 %v5522
      %v6674 = vunpack.c.l.b16 %v5523
      %v6675 = vunpack.c.h.b16 %v5523
      %v6676 = vunpack.c.l.b16 %v5524
      %v6677 = vunpack.c.h.b16 %v5524
      %v6678 = vunpack.c.l.b16 %v5525
      %v6679 = vunpack.c.h.b16 %v5525
      %v6680 = vunpack.c.l.b16 %v5526
      %v6681 = vunpack.c.h.b16 %v5526
      %v6682 = vunpack.c.l.b16 %v5527
      %v6683 = vunpack.c.h.b16 %v5527
      %v6684 = vunpack.c.l.b16 %v5528
      %v6685 = vunpack.c.h.b16 %v5528
      %v6686 = vunpack.c.l.b16 %v5529
      %v6687 = vunpack.c.h.b16 %v5529
      %v6688 = vunpack.c.l.b16 %v5530
      %v6689 = vunpack.c.h.b16 %v5530
      %v6690 = vunpack.c.l.b16 %v5531
      %v6691 = vunpack.c.h.b16 %v5531
      %v6692 = vunpack.c.l.b16 %v5532
      %v6693 = vunpack.c.h.b16 %v5532
      %v6694 = vunpack.c.l.b16 %v5533
      %v6695 = vunpack.c.h.b16 %v5533
      %v6696 = vunpack.c.l.b16 %v5534
      %v6697 = vunpack.c.h.b16 %v5534
      %v6698 = vunpack.c.l.b16 %v5535
      %v6699 = vunpack.c.h.b16 %v5535
      %v6700 = vunpack.c.l.b16 %v5536
      %v6701 = vunpack.c.h.b16 %v5536
      %v6702 = vunpack.c.l.b16 %v5537
      %v6703 = vunpack.c.h.b16 %v5537
      %v6704 = vunpack.c.l.b16 %v5538
      %v6705 = vunpack.c.h.b16 %v5538
      %v6706 = vpack.c.b16 %v6540, %v6538
      %v6707 = vpack.c.b16 %v6541, %v6539
      %v6708 = vpack.c.b16 %v6544, %v6542
      %v6709 = vpack.c.b16 %v6545, %v6543
      %v6710 = vpack.c.b16 %v6548, %v6546
      %v6711 = vpack.c.b16 %v6549, %v6547
      %v6712 = vpack.c.b16 %v6552, %v6550
      %v6713 = vpack.c.b16 %v6553, %v6551
      %v6714 = vpack.c.b16 %v6556, %v6554
      %v6715 = vpack.c.b16 %v6557, %v6555
      %v6716 = vpack.c.b16 %v6560, %v6558
      %v6717 = vpack.c.b16 %v6561, %v6559
      %v6718 = vpack.c.b16 %v6564, %v6562
      %v6719 = vpack.c.b16 %v6565, %v6563
      %v6720 = vpack.c.b16 %v6568, %v6566
      %v6721 = vpack.c.b16 %v6569, %v6567
      %v6722 = vpack.c.b16 %v6572, %v6570
      %v6723 = vpack.c.b16 %v6573, %v6571
      %v6724 = vpack.c.b16 %v6576, %v6574
      %v6725 = vpack.c.b16 %v6577, %v6575
      %v6726 = vpack.c.b16 %v6580, %v6578
      %v6727 = vpack.c.b16 %v6581, %v6579
      %v6728 = vpack.c.b16 %v6584, %v6582
      %v6729 = vpack.c.b16 %v6585, %v6583
      %v6730 = vpack.c.b16 %v6588, %v6586
      %v6731 = vpack.c.b16 %v6589, %v6587
      %v6732 = vpack.c.b16 %v6592, %v6590
      %v6733 = vpack.c.b16 %v6593, %v6591
      %v6734 = vpack.c.b16 %v6596, %v6594
      %v6735 = vpack.c.b16 %v6597, %v6595
      %v6736 = vpack.c.b16 %v6600, %v6598
      %v6737 = vpack.c.b16 %v6601, %v6599
      %v6738 = vpack.c.b16 %v6604, %v6602
      %v6739 = vpack.c.b16 %v6605, %v6603
      %v6740 = vpack.c.b16 %v6608, %v6606
      %v6741 = vpack.c.b16 %v6609, %v6607
      %v6742 = vpack.c.b16 %v6612, %v6610
      %v6743 = vpack.c.b16 %v6613, %v6611
      %v6744 = vpack.c.b16 %v6616, %v6614
      %v6745 = vpack.c.b16 %v6617, %v6615
      %v6746 = vpack.c.b16 %v6620, %v6618
      %v6747 = vpack.c.b16 %v6621, %v6619
      %v6748 = vpack.c.b16 %v6624, %v6622
      %v6749 = vpack.c.b16 %v6625, %v6623
      %v6750 = vpack.c.b16 %v6628, %v6626
      %v6751 = vpack.c.b16 %v6629, %v6627
      %v6752 = vpack.c.b16 %v6632, %v6630
      %v6753 = vpack.c.b16 %v6633, %v6631
      %v6754 = vpack.c.b16 %v6636, %v6634
      %v6755 = vpack.c.b16 %v6637, %v6635
      %v6756 = vpack.c.b16 %v6640, %v6638
      %v6757 = vpack.c.b16 %v6641, %v6639
      %v6758 = vpack.c.b16 %v6644, %v6642
      %v6759 = vpack.c.b16 %v6645, %v6643
      %v6760 = vpack.c.b16 %v6648, %v6646
      %v6761 = vpack.c.b16 %v6649, %v6647
      %v6762 = vpack.c.b16 %v6652, %v6650
      %v6763 = vpack.c.b16 %v6653, %v6651
      %v6764 = vpack.c.b16 %v6656, %v6654
      %v6765 = vpack.c.b16 %v6657, %v6655
      %v6766 = vpack.c.b16 %v6660, %v6658
      %v6767 = vpack.c.b16 %v6661, %v6659
      %v6768 = vpack.c.b16 %v6664, %v6662
      %v6769 = vpack.c.b16 %v6665, %v6663
      %v6770 = vpack.c.b16 %v6668, %v6666
      %v6771 = vpack.c.b16 %v6669, %v6667
      %v6772 = vpack.c.b16 %v6672, %v6670
      %v6773 = vpack.c.b16 %v6673, %v6671
      %v6774 = vpack.c.b16 %v6676, %v6674
      %v6775 = vpack.c.b16 %v6677, %v6675
      %v6776 = vpack.c.b16 %v6680, %v6678
      %v6777 = vpack.c.b16 %v6681, %v6679
      %v6778 = vpack.c.b16 %v6684, %v6682
      %v6779 = vpack.c.b16 %v6685, %v6683
      %v6780 = vpack.c.b16 %v6688, %v6686
      %v6781 = vpack.c.b16 %v6689, %v6687
      %v6782 = vpack.c.b16 %v6692, %v6690
      %v6783 = vpack.c.b16 %v6693, %v6691
      %v6784 = vpack.c.b16 %v6696, %v6694
      %v6785 = vpack.c.b16 %v6697, %v6695
      %v6786 = vpack.c.b16 %v6700, %v6698
      %v6787 = vpack.c.b16 %v6701, %v6699
      %v6788 = vpack.c.b16 %v6704, %v6702
      %v6789 = vpack.c.b16 %v6705, %v6703
      %v6875 = vsel %vm971, %v5412, 0
      %v6878 = vsel %vm971, %v5418, 0
      %v6881 = vsel %vm971, %v5424, 0
      %v6884 = vsel %vm971, %v5430, 0
      %v6887 = vsel %vm971, %v5436, 0
      %v6890 = vsel %vm971, %v5442, 0
      %v6893 = vsel %vm971, %v5448, 0
      %v6896 = vsel %vm971, %v5454, 0
      %6898 = vmatprep.subr.bf16.mxu0 %v6707
      %6899 = vmatpush1.bf16.msra.mxu0 %v6706
      %6900 = vmatprep.subr.bf16.mxu0 %v6709
      %6901 = vmatpush1.bf16.msra.mxu0 %v6708
      %6902 = vmatprep.subr.bf16.mxu0 %v6711
      %6903 = vmatpush1.bf16.msra.mxu0 %v6710
      %6904 = vmatprep.subr.bf16.mxu0 %v6713
      %6905 = vmatpush1.bf16.msra.mxu0 %v6712
      %6906 = vmatprep.subr.bf16.mxu0 %v6715
      %6907 = vmatpush1.bf16.msra.mxu0 %v6714
      %6908 = vmatprep.subr.bf16.mxu0 %v6717
      %6909 = vmatpush1.bf16.msra.mxu0 %v6716
      %6910 = vmatprep.subr.bf16.mxu0 %v6719
      %6911 = vmatpush1.bf16.msra.mxu0 %v6718
      %6912 = vmatprep.subr.bf16.mxu0 %v6721
      %6913 = vmatpush1.bf16.msra.mxu0 %v6720
      %6914 = vmatprep.subr.bf16.mxu0 %v6723
      %6915 = vmatpush1.bf16.msra.mxu0 %v6722
      %6916 = vmatprep.subr.bf16.mxu0 %v6725
      %6917 = vmatpush1.bf16.msra.mxu0 %v6724
      %6918 = vmatprep.subr.bf16.mxu0 %v6727
      %6919 = vmatpush1.bf16.msra.mxu0 %v6726
      %6920 = vmatprep.subr.bf16.mxu0 %v6729
      %6921 = vmatpush1.bf16.msra.mxu0 %v6728
      %6922 = vmatprep.subr.bf16.mxu0 %v6731
      %6923 = vmatpush1.bf16.msra.mxu0 %v6730
      %6924 = vmatprep.subr.bf16.mxu0 %v6733
      %6925 = vmatpush1.bf16.msra.mxu0 %v6732
      %6926 = vmatprep.subr.bf16.mxu0 %v6735
      %6927 = vmatpush1.bf16.msra.mxu0 %v6734
      %6928 = vmatprep.subr.bf16.mxu0 %v6737
      %6929 = vmatpush1.bf16.msra.mxu0 %v6736
      %6930 = vmatprep.mubr.bf16.mxu0 %v5408
      %6931 = vmatmul.mubr.bf16.gmra.mrb[0].mxu0 %v5407
      %v6932 = vpop.f32.mrb[0].mxu0
      %v6933 = vadd.f32 %v6376, %v6932
      %v6934 = vpop.f32.mrb[0].mxu0
      %v6935 = vadd.f32 %v6378, %v6934
      %v6936 = vpop.f32.mrb[0].mxu0
      %v6937 = vadd.f32 %v6380, %v6936
      %v6938 = vpop.f32.mrb[0].mxu0
      %v6939 = vadd.f32 %v6382, %v6938
      %6940 = vmatprep.mubr.bf16.mxu0 %v5414
      %6941 = vmatmul.mubr.bf16.gmra.mrb[0].mxu0 %v5413
      %v6942 = vpop.f32.mrb[0].mxu0
      %v6943 = vadd.f32 %v6386, %v6942
      %v6944 = vpop.f32.mrb[0].mxu0
      %v6945 = vadd.f32 %v6388, %v6944
      %v6946 = vpop.f32.mrb[0].mxu0
      %v6947 = vadd.f32 %v6390, %v6946
      %v6948 = vpop.f32.mrb[0].mxu0
      %v6949 = vadd.f32 %v6392, %v6948
      %6950 = vmatprep.mubr.bf16.mxu0 %v5420
      %6951 = vmatmul.mubr.bf16.gmra.mrb[0].mxu0 %v5419
      %v6952 = vpop.f32.mrb[0].mxu0
      %v6953 = vadd.f32 %v6396, %v6952
      %v6954 = vpop.f32.mrb[0].mxu0
      %v6955 = vadd.f32 %v6398, %v6954
      %v6956 = vpop.f32.mrb[0].mxu0
      %v6957 = vadd.f32 %v6400, %v6956
      %v6958 = vpop.f32.mrb[0].mxu0
      %v6959 = vadd.f32 %v6402, %v6958
      %6960 = vmatprep.mubr.bf16.mxu0 %v5426
      %6961 = vmatmul.mubr.bf16.gmra.mrb[0].mxu0 %v5425
      %v6962 = vpop.f32.mrb[0].mxu0
      %v6963 = vadd.f32 %v6406, %v6962
      %v6964 = vpop.f32.mrb[0].mxu0
      %v6965 = vadd.f32 %v6408, %v6964
      %v6966 = vpop.f32.mrb[0].mxu0
      %v6967 = vadd.f32 %v6410, %v6966
      %v6968 = vpop.f32.mrb[0].mxu0
      %v6969 = vadd.f32 %v6412, %v6968
      %6970 = vmatprep.mubr.bf16.mxu0 %v5432
      %6971 = vmatmul.mubr.bf16.gmra.mrb[0].mxu0 %v5431
      %v6972 = vpop.f32.mrb[0].mxu0
      %v6973 = vadd.f32 %v6416, %v6972
      %v6974 = vpop.f32.mrb[0].mxu0
      %v6975 = vadd.f32 %v6418, %v6974
      %v6976 = vpop.f32.mrb[0].mxu0
      %v6977 = vadd.f32 %v6420, %v6976
      %v6978 = vpop.f32.mrb[0].mxu0
      %v6979 = vadd.f32 %v6422, %v6978
      %6980 = vmatprep.mubr.bf16.mxu0 %v5438
      %6981 = vmatmul.mubr.bf16.gmra.mrb[0].mxu0 %v5437
      %v6982 = vpop.f32.mrb[0].mxu0
      %v6983 = vadd.f32 %v6426, %v6982
      %v6984 = vpop.f32.mrb[0].mxu0
      %v6985 = vadd.f32 %v6428, %v6984
      %v6986 = vpop.f32.mrb[0].mxu0
      %v6987 = vadd.f32 %v6430, %v6986
      %v6988 = vpop.f32.mrb[0].mxu0
      %v6989 = vadd.f32 %v6432, %v6988
      %6990 = vmatprep.mubr.bf16.mxu0 %v5444
      %6991 = vmatmul.mubr.bf16.gmra.mrb[0].mxu0 %v5443
      %v6992 = vpop.f32.mrb[0].mxu0
      %v6993 = vadd.f32 %v6436, %v6992
      %v6994 = vpop.f32.mrb[0].mxu0
      %v6995 = vadd.f32 %v6438, %v6994
      %v6996 = vpop.f32.mrb[0].mxu0
      %v6997 = vadd.f32 %v6440, %v6996
      %v6998 = vpop.f32.mrb[0].mxu0
      %v6999 = vadd.f32 %v6442, %v6998
      %7000 = vmatprep.mubr.bf16.mxu0 %v5450
      %7001 = vmatmul.mubr.bf16.gmra.mrb[0].mxu0 %v5449
      %v7002 = vpop.f32.mrb[0].mxu0
      %v7003 = vadd.f32 %v6446, %v7002
      %v7004 = vpop.f32.mrb[0].mxu0
      %v7005 = vadd.f32 %v6448, %v7004
      %v7006 = vpop.f32.mrb[0].mxu0
      %v7007 = vadd.f32 %v6450, %v7006
      %v7008 = vpop.f32.mrb[0].mxu0
      %v7009 = vadd.f32 %v6452, %v7008
      %7010 = vdwg.mxu0
      %7011 = vmatprep.subr.bf16.mxu0 %v6739
      %7012 = vmatpush1.bf16.msra.mxu0 %v6738
      %7013 = vmatprep.subr.bf16.mxu0 %v6741
      %7014 = vmatpush1.bf16.msra.mxu0 %v6740
      %7015 = vmatprep.subr.bf16.mxu0 %v6743
      %7016 = vmatpush1.bf16.msra.mxu0 %v6742
      %7017 = vmatprep.subr.bf16.mxu0 %v6745
      %7018 = vmatpush1.bf16.msra.mxu0 %v6744
      %7019 = vmatprep.subr.bf16.mxu0 %v6747
      %7020 = vmatpush1.bf16.msra.mxu0 %v6746
      %7021 = vmatprep.subr.bf16.mxu0 %v6749
      %7022 = vmatpush1.bf16.msra.mxu0 %v6748
      %7023 = vmatprep.subr.bf16.mxu0 %v6751
      %7024 = vmatpush1.bf16.msra.mxu0 %v6750
      %7025 = vmatprep.subr.bf16.mxu0 %v6753
      %7026 = vmatpush1.bf16.msra.mxu0 %v6752
      %7027 = vmatprep.subr.bf16.mxu0 %v6755
      %7028 = vmatpush1.bf16.msra.mxu0 %v6754
      %7029 = vmatprep.subr.bf16.mxu0 %v6757
      %7030 = vmatpush1.bf16.msra.mxu0 %v6756
      %7031 = vmatprep.subr.bf16.mxu0 %v6759
      %7032 = vmatpush1.bf16.msra.mxu0 %v6758
      %7033 = vmatprep.subr.bf16.mxu0 %v6761
      %7034 = vmatpush1.bf16.msra.mxu0 %v6760
      %7035 = vmatprep.subr.bf16.mxu0 %v6763
      %7036 = vmatpush1.bf16.msra.mxu0 %v6762
      %7037 = vmatprep.subr.bf16.mxu0 %v6765
      %7038 = vmatpush1.bf16.msra.mxu0 %v6764
      %7039 = vmatprep.subr.bf16.mxu0 %v6767
      %7040 = vmatpush1.bf16.msra.mxu0 %v6766
      %7041 = vmatprep.subr.bf16.mxu0 %v6769
      %7042 = vmatpush1.bf16.msra.mxu0 %v6768
      %7043 = vmatprep.mubr.bf16.mxu0 %v5410
      %7044 = vmatmul.mubr.bf16.gmra.mrb[0].mxu0 %v5409
      %v7045 = vpop.f32.mrb[0].mxu0
      %v7046 = vadd.f32 %v6933, %v7045
      %v7047 = vpop.f32.mrb[0].mxu0
      %v7048 = vadd.f32 %v6935, %v7047
      %v7049 = vpop.f32.mrb[0].mxu0
      %v7050 = vadd.f32 %v6937, %v7049
      %v7051 = vpop.f32.mrb[0].mxu0
      %v7052 = vadd.f32 %v6939, %v7051
      %7053 = vmatprep.mubr.bf16.mxu0 %v5416
      %7054 = vmatmul.mubr.bf16.gmra.mrb[0].mxu0 %v5415
      %v7055 = vpop.f32.mrb[0].mxu0
      %v7056 = vadd.f32 %v6943, %v7055
      %v7057 = vpop.f32.mrb[0].mxu0
      %v7058 = vadd.f32 %v6945, %v7057
      %v7059 = vpop.f32.mrb[0].mxu0
      %v7060 = vadd.f32 %v6947, %v7059
      %v7061 = vpop.f32.mrb[0].mxu0
      %v7062 = vadd.f32 %v6949, %v7061
      %7063 = vmatprep.mubr.bf16.mxu0 %v5422
      %7064 = vmatmul.mubr.bf16.gmra.mrb[0].mxu0 %v5421
      %v7065 = vpop.f32.mrb[0].mxu0
      %v7066 = vadd.f32 %v6953, %v7065
      %v7067 = vpop.f32.mrb[0].mxu0
      %v7068 = vadd.f32 %v6955, %v7067
      %v7069 = vpop.f32.mrb[0].mxu0
      %v7070 = vadd.f32 %v6957, %v7069
      %v7071 = vpop.f32.mrb[0].mxu0
      %v7072 = vadd.f32 %v6959, %v7071
      %7073 = vmatprep.mubr.bf16.mxu0 %v5428
      %7074 = vmatmul.mubr.bf16.gmra.mrb[0].mxu0 %v5427
      %v7075 = vpop.f32.mrb[0].mxu0
      %v7076 = vadd.f32 %v6963, %v7075
      %v7077 = vpop.f32.mrb[0].mxu0
      %v7078 = vadd.f32 %v6965, %v7077
      %v7079 = vpop.f32.mrb[0].mxu0
      %v7080 = vadd.f32 %v6967, %v7079
      %v7081 = vpop.f32.mrb[0].mxu0
      %v7082 = vadd.f32 %v6969, %v7081
      %7083 = vmatprep.mubr.bf16.mxu0 %v5434
      %7084 = vmatmul.mubr.bf16.gmra.mrb[0].mxu0 %v5433
      %v7085 = vpop.f32.mrb[0].mxu0
      %v7086 = vadd.f32 %v6973, %v7085
      %v7087 = vpop.f32.mrb[0].mxu0
      %v7088 = vadd.f32 %v6975, %v7087
      %v7089 = vpop.f32.mrb[0].mxu0
      %v7090 = vadd.f32 %v6977, %v7089
      %v7091 = vpop.f32.mrb[0].mxu0
      %v7092 = vadd.f32 %v6979, %v7091
      %7093 = vmatprep.mubr.bf16.mxu0 %v5440
      %7094 = vmatmul.mubr.bf16.gmra.mrb[0].mxu0 %v5439
      %v7095 = vpop.f32.mrb[0].mxu0
      %v7096 = vadd.f32 %v6983, %v7095
      %v7097 = vpop.f32.mrb[0].mxu0
      %v7098 = vadd.f32 %v6985, %v7097
      %v7099 = vpop.f32.mrb[0].mxu0
      %v7100 = vadd.f32 %v6987, %v7099
      %v7101 = vpop.f32.mrb[0].mxu0
      %v7102 = vadd.f32 %v6989, %v7101
      %7103 = vmatprep.mubr.bf16.mxu0 %v5446
      %7104 = vmatmul.mubr.bf16.gmra.mrb[0].mxu0 %v5445
      %v7105 = vpop.f32.mrb[0].mxu0
      %v7106 = vadd.f32 %v6993, %v7105
      %v7107 = vpop.f32.mrb[0].mxu0
      %v7108 = vadd.f32 %v6995, %v7107
      %v7109 = vpop.f32.mrb[0].mxu0
      %v7110 = vadd.f32 %v6997, %v7109
      %v7111 = vpop.f32.mrb[0].mxu0
      %v7112 = vadd.f32 %v6999, %v7111
      %7113 = vmatprep.mubr.bf16.mxu0 %v5452
      %7114 = vmatmul.mubr.bf16.gmra.mrb[0].mxu0 %v5451
      %v7115 = vpop.f32.mrb[0].mxu0
      %v7116 = vadd.f32 %v7003, %v7115
      %v7117 = vpop.f32.mrb[0].mxu0
      %v7118 = vadd.f32 %v7005, %v7117
      %v7119 = vpop.f32.mrb[0].mxu0
      %v7120 = vadd.f32 %v7007, %v7119
      %v7121 = vpop.f32.mrb[0].mxu0
      %v7122 = vadd.f32 %v7009, %v7121
      %7123 = vdwg.mxu0
      %7124 = vmatprep.subr.bf16.mxu0 %v6771
      %7125 = vmatpush1.bf16.msra.mxu0 %v6770
      %7126 = vmatprep.subr.bf16.mxu0 %v6773
      %7127 = vmatpush1.bf16.msra.mxu0 %v6772
      %7128 = vmatprep.subr.bf16.mxu0 %v6775
      %7129 = vmatpush1.bf16.msra.mxu0 %v6774
      %7130 = vmatprep.subr.bf16.mxu0 %v6777
      %7131 = vmatpush1.bf16.msra.mxu0 %v6776
      %7132 = vmatprep.subr.bf16.mxu0 %v6779
      %7133 = vmatpush1.bf16.msra.mxu0 %v6778
      %7134 = vmatprep.subr.bf16.mxu0 %v6781
      %7135 = vmatpush1.bf16.msra.mxu0 %v6780
      %7136 = vmatprep.subr.bf16.mxu0 %v6783
      %7137 = vmatpush1.bf16.msra.mxu0 %v6782
      %7138 = vmatprep.subr.bf16.mxu0 %v6785
      %7139 = vmatpush1.bf16.msra.mxu0 %v6784
      %7140 = vmatprep.subr.bf16.mxu0 %v6787
      %7141 = vmatpush1.bf16.msra.mxu0 %v6786
      %7142 = vmatprep.subr.bf16.mxu0 %v6789
      %7143 = vmatpush1.bf16.msra.mxu0 %v6788
      %7144 = vmatprep.subr.bf16.mxu0 0
      %7145 = vmatpush1.bf16.msra.mxu0 0
      %7146 = vmatprep.subr.bf16.mxu0 0
      %7147 = vmatpush1.bf16.msra.mxu0 0
      %7148 = vmatprep.subr.bf16.mxu0 0
      %7149 = vmatpush1.bf16.msra.mxu0 0
      %7150 = vmatprep.subr.bf16.mxu0 0
      %7151 = vmatpush1.bf16.msra.mxu0 0
      %7152 = vmatprep.subr.bf16.mxu0 0
      %7153 = vmatpush1.bf16.msra.mxu0 0
      %7154 = vmatprep.subr.bf16.mxu0 0
      %7155 = vmatpush1.bf16.msra.mxu0 0
      %7156 = vmatprep.mubr.bf16.mxu0 %v6875
      %7157 = vmatmul.mubr.bf16.gmra.mrb[0].mxu0 %v5411
      %v7158 = vpop.f32.mrb[0].mxu0
      %v7159 = vadd.f32 %v7046, %v7158
      %v7160 = vpop.f32.mrb[0].mxu0
      %v7161 = vadd.f32 %v7048, %v7160
      %v7162 = vpop.f32.mrb[0].mxu0
      %v7163 = vadd.f32 %v7050, %v7162
      %v7164 = vpop.f32.mrb[0].mxu0
      %v7165 = vadd.f32 %v7052, %v7164
      %7166 = vmatprep.mubr.bf16.mxu0 %v6878
      %7167 = vmatmul.mubr.bf16.gmra.mrb[0].mxu0 %v5417
      %v7168 = vpop.f32.mrb[0].mxu0
      %v7169 = vadd.f32 %v7056, %v7168
      %v7170 = vpop.f32.mrb[0].mxu0
      %v7171 = vadd.f32 %v7058, %v7170
      %v7172 = vpop.f32.mrb[0].mxu0
      %v7173 = vadd.f32 %v7060, %v7172
      %v7174 = vpop.f32.mrb[0].mxu0
      %v7175 = vadd.f32 %v7062, %v7174
      %7176 = vmatprep.mubr.bf16.mxu0 %v6881
      %7177 = vmatmul.mubr.bf16.gmra.mrb[0].mxu0 %v5423
      %v7178 = vpop.f32.mrb[0].mxu0
      %v7179 = vadd.f32 %v7066, %v7178
      %v7180 = vpop.f32.mrb[0].mxu0
      %v7181 = vadd.f32 %v7068, %v7180
      %v7182 = vpop.f32.mrb[0].mxu0
      %v7183 = vadd.f32 %v7070, %v7182
      %v7184 = vpop.f32.mrb[0].mxu0
      %v7185 = vadd.f32 %v7072, %v7184
      %7186 = vmatprep.mubr.bf16.mxu0 %v6884
      %7187 = vmatmul.mubr.bf16.gmra.mrb[0].mxu0 %v5429
      %v7188 = vpop.f32.mrb[0].mxu0
      %v7189 = vadd.f32 %v7076, %v7188
      %v7190 = vpop.f32.mrb[0].mxu0
      %v7191 = vadd.f32 %v7078, %v7190
      %v7192 = vpop.f32.mrb[0].mxu0
      %v7193 = vadd.f32 %v7080, %v7192
      %v7194 = vpop.f32.mrb[0].mxu0
      %v7195 = vadd.f32 %v7082, %v7194
      %7196 = vmatprep.mubr.bf16.mxu0 %v6887
      %7197 = vmatmul.mubr.bf16.gmra.mrb[0].mxu0 %v5435
      %v7198 = vpop.f32.mrb[0].mxu0
      %v7199 = vadd.f32 %v7086, %v7198
      %v7200 = vpop.f32.mrb[0].mxu0
      %v7201 = vadd.f32 %v7088, %v7200
      %v7202 = vpop.f32.mrb[0].mxu0
      %v7203 = vadd.f32 %v7090, %v7202
      %v7204 = vpop.f32.mrb[0].mxu0
      %v7205 = vadd.f32 %v7092, %v7204
      %7206 = vmatprep.mubr.bf16.mxu0 %v6890
      %7207 = vmatmul.mubr.bf16.gmra.mrb[0].mxu0 %v5441
      %v7208 = vpop.f32.mrb[0].mxu0
      %v7209 = vadd.f32 %v7096, %v7208
      %v7210 = vpop.f32.mrb[0].mxu0
      %v7211 = vadd.f32 %v7098, %v7210
      %v7212 = vpop.f32.mrb[0].mxu0
      %v7213 = vadd.f32 %v7100, %v7212
      %v7214 = vpop.f32.mrb[0].mxu0
      %v7215 = vadd.f32 %v7102, %v7214
      %7216 = vmatprep.mubr.bf16.mxu0 %v6893
      %7217 = vmatmul.mubr.bf16.gmra.mrb[0].mxu0 %v5447
      %v7218 = vpop.f32.mrb[0].mxu0
      %v7219 = vadd.f32 %v7106, %v7218
      %v7220 = vpop.f32.mrb[0].mxu0
      %v7221 = vadd.f32 %v7108, %v7220
      %v7222 = vpop.f32.mrb[0].mxu0
      %v7223 = vadd.f32 %v7110, %v7222
      %v7224 = vpop.f32.mrb[0].mxu0
      %v7225 = vadd.f32 %v7112, %v7224
      %7226 = vmatprep.mubr.bf16.mxu0 %v6896
      %7227 = vmatmul.mubr.bf16.gmra.mrb[0].mxu0 %v5453
      %v7228 = vpop.f32.mrb[0].mxu0
      %v7229 = vadd.f32 %v7116, %v7228
      %v7230 = vpop.f32.mrb[0].mxu0
      %v7231 = vadd.f32 %v7118, %v7230
      %v7232 = vpop.f32.mrb[0].mxu0
      %v7233 = vadd.f32 %v7120, %v7232
      %v7234 = vpop.f32.mrb[0].mxu0
      %v7235 = vadd.f32 %v7122, %v7234
      %7236 = vdwg.mxu0
      %v7237 = vpack.c.bf16 %v5392, %v5391
      %v7238 = vpack.c.bf16 %v5394, %v5393
      %v7239 = vpack.c.bf16 %v5396, %v5395
      %v7240 = vpack.c.bf16 %v5398, %v5397
      %v7241 = vpack.c.bf16 %v5400, %v5399
      %v7242 = vpack.c.bf16 %v5402, %v5401
      %v7243 = vpack.c.bf16 %v5404, %v5403
      %v7244 = vpack.c.bf16 %v5406, %v5405
      %v7245 = vld [vmem:[%s13] sm:$0xff]
      %v7246 = vld [vmem:[%s13 + $0x8] sm:$0xff]
      %v7247 = vld [vmem:[%s13 + $0x10] sm:$0xff]
      %v7248 = vld [vmem:[%s13 + $0x18] sm:$0xff]
      %v7249 = vld [vmem:[%s13 + $0x20] sm:$0xff]
      %v7250 = vld [vmem:[%s13 + $0x28] sm:$0xff]
      %v7251 = vld [vmem:[%s13 + $0x30] sm:$0xff]
      %v7252 = vld [vmem:[%s13 + $0x38] sm:$0xff]
      %v7261 = vunpack.c.l.b16 %v7245
      %v7262 = vunpack.c.h.b16 %v7245
      %v7263 = vunpack.c.l.b16 %v7246
      %v7264 = vunpack.c.h.b16 %v7246
      %v7265 = vunpack.c.l.b16 %v7247
      %v7266 = vunpack.c.h.b16 %v7247
      %v7267 = vunpack.c.l.b16 %v7248
      %v7268 = vunpack.c.h.b16 %v7248
      %v7269 = vunpack.c.l.b16 %v7249
      %v7270 = vunpack.c.h.b16 %v7249
      %v7271 = vunpack.c.l.b16 %v7250
      %v7272 = vunpack.c.h.b16 %v7250
      %v7273 = vunpack.c.l.b16 %v7251
      %v7274 = vunpack.c.h.b16 %v7251
      %v7275 = vunpack.c.l.b16 %v7252
      %v7276 = vunpack.c.h.b16 %v7252
      %v7277 = vpack.c.b16 %v7263, %v7261
      %v7278 = vpack.c.b16 %v7264, %v7262
      %v7279 = vpack.c.b16 %v7267, %v7265
      %v7280 = vpack.c.b16 %v7268, %v7266
      %v7281 = vpack.c.b16 %v7271, %v7269
      %v7282 = vpack.c.b16 %v7272, %v7270
      %v7283 = vpack.c.b16 %v7275, %v7273
      %v7284 = vpack.c.b16 %v7276, %v7274
      %vm7293 = vcmask 523264
      %v7295 = vsel %vm7293, %v7237, 0
      %v7298 = vsel %vm7293, %v7238, 0
      %v7301 = vsel %vm7293, %v7239, 0
      %v7304 = vsel %vm7293, %v7240, 0
      %v7307 = vsel %vm7293, %v7241, 0
      %v7310 = vsel %vm7293, %v7242, 0
      %v7313 = vsel %vm7293, %v7243, 0
      %v7316 = vsel %vm7293, %v7244, 0
      %7318 = vmatprep.subr.bf16.mxu0 %v7278
      %7319 = vmatpush1.bf16.msra.mxu0 %v7277
      %7320 = vmatprep.subr.bf16.mxu0 %v7280
      %7321 = vmatpush1.bf16.msra.mxu0 %v7279
      %7322 = vmatprep.subr.bf16.mxu0 %v7282
      %7323 = vmatpush1.bf16.msra.mxu0 %v7281
      %7324 = vmatprep.subr.bf16.mxu0 %v7284
      %7325 = vmatpush1.bf16.msra.mxu0 %v7283
      %7326 = vmatprep.subr.bf16.mxu0 0
      %7327 = vmatpush1.bf16.msra.mxu0 0
      %7328 = vmatprep.subr.bf16.mxu0 0
      %7329 = vmatpush1.bf16.msra.mxu0 0
      %7330 = vmatprep.subr.bf16.mxu0 0
      %7331 = vmatpush1.bf16.msra.mxu0 0
      %7332 = vmatprep.subr.bf16.mxu0 0
      %7333 = vmatpush1.bf16.msra.mxu0 0
      %7334 = vmatprep.subr.bf16.mxu0 0
      %7335 = vmatpush1.bf16.msra.mxu0 0
      %7336 = vmatprep.subr.bf16.mxu0 0
      %7337 = vmatpush1.bf16.msra.mxu0 0
      %7338 = vmatprep.subr.bf16.mxu0 0
      %7339 = vmatpush1.bf16.msra.mxu0 0
      %7340 = vmatprep.subr.bf16.mxu0 0
      %7341 = vmatpush1.bf16.msra.mxu0 0
      %7342 = vmatprep.subr.bf16.mxu0 0
      %7343 = vmatpush1.bf16.msra.mxu0 0
      %7344 = vmatprep.subr.bf16.mxu0 0
      %7345 = vmatpush1.bf16.msra.mxu0 0
      %7346 = vmatprep.subr.bf16.mxu0 0
      %7347 = vmatpush1.bf16.msra.mxu0 0
      %7348 = vmatprep.subr.bf16.mxu0 0
      %7349 = vmatpush1.bf16.msra.mxu0 0
      %7350 = vmatprep.mubr.bf16.mxu0 0
      %7351 = vmatmul.mubr.bf16.gmra.mrb[0].mxu0 %v7295
      %v7352 = vpop.f32.mrb[0].mxu0
      %v7353 = vadd.f32 0.0, %v7352
      %v7354 = vpop.f32.mrb[0].mxu0
      %v7355 = vadd.f32 0.0, %v7354
      %v7356 = vpop.f32.mrb[0].mxu0
      %v7357 = vadd.f32 0.0, %v7356
      %v7358 = vpop.f32.mrb[0].mxu0
      %v7359 = vadd.f32 0.0, %v7358
      %7360 = vmatprep.mubr.bf16.mxu0 0
      %7361 = vmatmul.mubr.bf16.gmra.mrb[0].mxu0 %v7298
      %v7362 = vpop.f32.mrb[0].mxu0
      %v7363 = vadd.f32 0.0, %v7362
      %v7364 = vpop.f32.mrb[0].mxu0
      %v7365 = vadd.f32 0.0, %v7364
      %v7366 = vpop.f32.mrb[0].mxu0
      %v7367 = vadd.f32 0.0, %v7366
      %v7368 = vpop.f32.mrb[0].mxu0
      %v7369 = vadd.f32 0.0, %v7368
      %7370 = vmatprep.mubr.bf16.mxu0 0
      %7371 = vmatmul.mubr.bf16.gmra.mrb[0].mxu0 %v7301
      %v7372 = vpop.f32.mrb[0].mxu0
      %v7373 = vadd.f32 0.0, %v7372
      %v7374 = vpop.f32.mrb[0].mxu0
      %v7375 = vadd.f32 0.0, %v7374
      %v7376 = vpop.f32.mrb[0].mxu0
      %v7377 = vadd.f32 0.0, %v7376
      %v7378 = vpop.f32.mrb[0].mxu0
      %v7379 = vadd.f32 0.0, %v7378
      %7380 = vmatprep.mubr.bf16.mxu0 0
      %7381 = vmatmul.mubr.bf16.gmra.mrb[0].mxu0 %v7304
      %v7382 = vpop.f32.mrb[0].mxu0
      %v7383 = vadd.f32 0.0, %v7382
      %v7384 = vpop.f32.mrb[0].mxu0
      %v7385 = vadd.f32 0.0, %v7384
      %v7386 = vpop.f32.mrb[0].mxu0
      %v7387 = vadd.f32 0.0, %v7386
      %v7388 = vpop.f32.mrb[0].mxu0
      %v7389 = vadd.f32 0.0, %v7388
      %7390 = vmatprep.mubr.bf16.mxu0 0
      %7391 = vmatmul.mubr.bf16.gmra.mrb[0].mxu0 %v7307
      %v7392 = vpop.f32.mrb[0].mxu0
      %v7393 = vadd.f32 0.0, %v7392
      %v7394 = vpop.f32.mrb[0].mxu0
      %v7395 = vadd.f32 0.0, %v7394
      %v7396 = vpop.f32.mrb[0].mxu0
      %v7397 = vadd.f32 0.0, %v7396
      %v7398 = vpop.f32.mrb[0].mxu0
      %v7399 = vadd.f32 0.0, %v7398
      %7400 = vmatprep.mubr.bf16.mxu0 0
      %7401 = vmatmul.mubr.bf16.gmra.mrb[0].mxu0 %v7310
      %v7402 = vpop.f32.mrb[0].mxu0
      %v7403 = vadd.f32 0.0, %v7402
      %v7404 = vpop.f32.mrb[0].mxu0
      %v7405 = vadd.f32 0.0, %v7404
      %v7406 = vpop.f32.mrb[0].mxu0
      %v7407 = vadd.f32 0.0, %v7406
      %v7408 = vpop.f32.mrb[0].mxu0
      %v7409 = vadd.f32 0.0, %v7408
      %7410 = vmatprep.mubr.bf16.mxu0 0
      %7411 = vmatmul.mubr.bf16.gmra.mrb[0].mxu0 %v7313
      %v7412 = vpop.f32.mrb[0].mxu0
      %v7413 = vadd.f32 0.0, %v7412
      %v7414 = vpop.f32.mrb[0].mxu0
      %v7415 = vadd.f32 0.0, %v7414
      %v7416 = vpop.f32.mrb[0].mxu0
      %v7417 = vadd.f32 0.0, %v7416
      %v7418 = vpop.f32.mrb[0].mxu0
      %v7419 = vadd.f32 0.0, %v7418
      %7420 = vmatprep.mubr.bf16.mxu0 0
      %7421 = vmatmul.mubr.bf16.gmra.mrb[0].mxu0 %v7316
      %v7422 = vpop.f32.mrb[0].mxu0
      %v7423 = vadd.f32 0.0, %v7422
      %v7424 = vpop.f32.mrb[0].mxu0
      %v7425 = vadd.f32 0.0, %v7424
      %v7426 = vpop.f32.mrb[0].mxu0
      %v7427 = vadd.f32 0.0, %v7426
      %v7428 = vpop.f32.mrb[0].mxu0
      %v7429 = vadd.f32 0.0, %v7428
      %7430 = vdwg.mxu0
      %v7431 = vadd.f32 %v7159, %v7353
      %v7432 = vadd.f32 %v7161, %v7355
      %v7433 = vadd.f32 %v7163, %v7357
      %v7434 = vadd.f32 %v7165, %v7359
      %v7435 = vadd.f32 %v7169, %v7363
      %v7436 = vadd.f32 %v7171, %v7365
      %v7437 = vadd.f32 %v7173, %v7367
      %v7438 = vadd.f32 %v7175, %v7369
      %v7439 = vadd.f32 %v7179, %v7373
      %v7440 = vadd.f32 %v7181, %v7375
      %v7441 = vadd.f32 %v7183, %v7377
      %v7442 = vadd.f32 %v7185, %v7379
      %v7443 = vadd.f32 %v7189, %v7383
      %v7444 = vadd.f32 %v7191, %v7385
      %v7445 = vadd.f32 %v7193, %v7387
      %v7446 = vadd.f32 %v7195, %v7389
      %v7447 = vadd.f32 %v7199, %v7393
      %v7448 = vadd.f32 %v7201, %v7395
      %v7449 = vadd.f32 %v7203, %v7397
      %v7450 = vadd.f32 %v7205, %v7399
      %v7451 = vadd.f32 %v7209, %v7403
      %v7452 = vadd.f32 %v7211, %v7405
      %v7453 = vadd.f32 %v7213, %v7407
      %v7454 = vadd.f32 %v7215, %v7409
      %v7455 = vadd.f32 %v7219, %v7413
      %v7456 = vadd.f32 %v7221, %v7415
      %v7457 = vadd.f32 %v7223, %v7417
      %v7458 = vadd.f32 %v7225, %v7419
      %v7459 = vadd.f32 %v7229, %v7423
      %v7460 = vadd.f32 %v7231, %v7425
      %v7461 = vadd.f32 %v7233, %v7427
      %v7462 = vadd.f32 %v7235, %v7429
      %v7463 = vld [vmem:[%s14] sm:$0x3]
      %v7465 = vlaneseq
      %v7466 = vshrl.u32 %v7465, 7
      %v7467 = vsub.s32 0, %v7466
      %v7468 = vrot.slane %v7463, %v7467
      %v7469 = vlaneseq
      %v7470 = vshrl.u32 %v7469, 7
      %v7471 = vsub.s32 1, %v7470
      %v7472 = vrot.slane %v7463, %v7471
      %v7475 = vadd.f32 %v7431, %v7468
      %v7476 = vadd.f32 %v7432, %v7472
      %v7477 = vadd.f32 %v7433, %v7468
      %v7478 = vadd.f32 %v7434, %v7472
      %v7479 = vadd.f32 %v7435, %v7468
      %v7480 = vadd.f32 %v7436, %v7472
      %v7481 = vadd.f32 %v7437, %v7468
      %v7482 = vadd.f32 %v7438, %v7472
      %v7483 = vadd.f32 %v7439, %v7468
      %v7484 = vadd.f32 %v7440, %v7472
      %v7485 = vadd.f32 %v7441, %v7468
      %v7486 = vadd.f32 %v7442, %v7472
      %v7487 = vadd.f32 %v7443, %v7468
      %v7488 = vadd.f32 %v7444, %v7472
      %v7489 = vadd.f32 %v7445, %v7468
      %v7490 = vadd.f32 %v7446, %v7472
      %v7491 = vadd.f32 %v7447, %v7468
      %v7492 = vadd.f32 %v7448, %v7472
      %v7493 = vadd.f32 %v7449, %v7468
      %v7494 = vadd.f32 %v7450, %v7472
      %v7495 = vadd.f32 %v7451, %v7468
      %v7496 = vadd.f32 %v7452, %v7472
      %v7497 = vadd.f32 %v7453, %v7468
      %v7498 = vadd.f32 %v7454, %v7472
      %v7499 = vadd.f32 %v7455, %v7468
      %v7500 = vadd.f32 %v7456, %v7472
      %v7501 = vadd.f32 %v7457, %v7468
      %v7502 = vadd.f32 %v7458, %v7472
      %v7503 = vadd.f32 %v7459, %v7468
      %v7504 = vadd.f32 %v7460, %v7472
      %v7505 = vadd.f32 %v7461, %v7468
      %v7506 = vadd.f32 %v7462, %v7472
      %v7507 = vmax.f32 %v7475, 0.0
      %v7508 = vmax.f32 %v7476, 0.0
      %v7509 = vmax.f32 %v7477, 0.0
      %v7510 = vmax.f32 %v7478, 0.0
      %v7511 = vmax.f32 %v7479, 0.0
      %v7512 = vmax.f32 %v7480, 0.0
      %v7513 = vmax.f32 %v7481, 0.0
      %v7514 = vmax.f32 %v7482, 0.0
      %v7515 = vmax.f32 %v7483, 0.0
      %v7516 = vmax.f32 %v7484, 0.0
      %v7517 = vmax.f32 %v7485, 0.0
      %v7518 = vmax.f32 %v7486, 0.0
      %v7519 = vmax.f32 %v7487, 0.0
      %v7520 = vmax.f32 %v7488, 0.0
      %v7521 = vmax.f32 %v7489, 0.0
      %v7522 = vmax.f32 %v7490, 0.0
      %v7523 = vmax.f32 %v7491, 0.0
      %v7524 = vmax.f32 %v7492, 0.0
      %v7525 = vmax.f32 %v7493, 0.0
      %v7526 = vmax.f32 %v7494, 0.0
      %v7527 = vmax.f32 %v7495, 0.0
      %v7528 = vmax.f32 %v7496, 0.0
      %v7529 = vmax.f32 %v7497, 0.0
      %v7530 = vmax.f32 %v7498, 0.0
      %v7531 = vmax.f32 %v7499, 0.0
      %v7532 = vmax.f32 %v7500, 0.0
      %v7533 = vmax.f32 %v7501, 0.0
      %v7534 = vmax.f32 %v7502, 0.0
      %v7535 = vmax.f32 %v7503, 0.0
      %v7536 = vmax.f32 %v7504, 0.0
      %v7537 = vmax.f32 %v7505, 0.0
      %v7538 = vmax.f32 %v7506, 0.0
      %v7539 = vpack.c.bf16 %v7509, %v7507
      %v7540 = vpack.c.bf16 %v7510, %v7508
      %v7541 = vpack.c.bf16 %v7513, %v7511
      %v7542 = vpack.c.bf16 %v7514, %v7512
      %v7543 = vpack.c.bf16 %v7517, %v7515
      %v7544 = vpack.c.bf16 %v7518, %v7516
      %v7545 = vpack.c.bf16 %v7521, %v7519
      %v7546 = vpack.c.bf16 %v7522, %v7520
      %v7547 = vpack.c.bf16 %v7525, %v7523
      %v7548 = vpack.c.bf16 %v7526, %v7524
      %v7549 = vpack.c.bf16 %v7529, %v7527
      %v7550 = vpack.c.bf16 %v7530, %v7528
      %v7551 = vpack.c.bf16 %v7533, %v7531
      %v7552 = vpack.c.bf16 %v7534, %v7532
      %v7553 = vpack.c.bf16 %v7537, %v7535
      %v7554 = vpack.c.bf16 %v7538, %v7536
      %v7555 = vld [vmem:[%s15] sm:$0xff]
      %v7556 = vld [vmem:[%s15 + $0x8] sm:$0xff]
      %v7557 = vld [vmem:[%s15 + $0x10] sm:$0xff]
      %v7558 = vld [vmem:[%s15 + $0x18] sm:$0xff]
      %v7559 = vld [vmem:[%s15 + $0x20] sm:$0xff]
      %v7560 = vld [vmem:[%s15 + $0x28] sm:$0xff]
      %v7561 = vld [vmem:[%s15 + $0x30] sm:$0xff]
      %v7562 = vld [vmem:[%s15 + $0x38] sm:$0xff]
      %v7563 = vld [vmem:[%s15 + $0x40] sm:$0xff]
      %v7564 = vld [vmem:[%s15 + $0x48] sm:$0xff]
      %v7565 = vld [vmem:[%s15 + $0x50] sm:$0xff]
      %v7566 = vld [vmem:[%s15 + $0x58] sm:$0xff]
      %v7567 = vld [vmem:[%s15 + $0x60] sm:$0xff]
      %v7568 = vld [vmem:[%s15 + $0x68] sm:$0xff]
      %v7569 = vld [vmem:[%s15 + $0x70] sm:$0xff]
      %v7570 = vld [vmem:[%s15 + $0x78] sm:$0xff]
      %v7571 = vld [vmem:[%s15 + $0x80] sm:$0xff]
      %v7572 = vld [vmem:[%s15 + $0x88] sm:$0xff]
      %v7573 = vld [vmem:[%s15 + $0x90] sm:$0xff]
      %v7574 = vld [vmem:[%s15 + $0x98] sm:$0xff]
      %v7575 = vld [vmem:[%s15 + $0xa0] sm:$0xff]
      %v7576 = vld [vmem:[%s15 + $0xa8] sm:$0xff]
      %v7577 = vld [vmem:[%s15 + $0xb0] sm:$0xff]
      %v7578 = vld [vmem:[%s15 + $0xb8] sm:$0xff]
      %v7579 = vld [vmem:[%s15 + $0xc0] sm:$0xff]
      %v7580 = vld [vmem:[%s15 + $0xc8] sm:$0xff]
      %v7581 = vld [vmem:[%s15 + $0xd0] sm:$0xff]
      %v7582 = vld [vmem:[%s15 + $0xd8] sm:$0xff]
      %v7583 = vld [vmem:[%s15 + $0xe0] sm:$0xff]
      %v7584 = vld [vmem:[%s15 + $0xe8] sm:$0xff]
      %v7585 = vld [vmem:[%s15 + $0xf0] sm:$0xff]
      %v7586 = vld [vmem:[%s15 + $0xf8] sm:$0xff]
      %v7587 = vld [vmem:[%s15 + $0x100] sm:$0xff]
      %v7588 = vld [vmem:[%s15 + $0x108] sm:$0xff]
      %v7589 = vld [vmem:[%s15 + $0x110] sm:$0xff]
      %v7590 = vld [vmem:[%s15 + $0x118] sm:$0xff]
      %v7591 = vld [vmem:[%s15 + $0x120] sm:$0xff]
      %v7592 = vld [vmem:[%s15 + $0x128] sm:$0xff]
      %v7593 = vld [vmem:[%s15 + $0x130] sm:$0xff]
      %v7594 = vld [vmem:[%s15 + $0x138] sm:$0xff]
      %v7595 = vld [vmem:[%s15 + $0x140] sm:$0xff]
      %v7596 = vld [vmem:[%s15 + $0x148] sm:$0xff]
      %v7597 = vld [vmem:[%s15 + $0x150] sm:$0xff]
      %v7598 = vld [vmem:[%s15 + $0x158] sm:$0xff]
      %v7599 = vld [vmem:[%s15 + $0x160] sm:$0xff]
      %v7600 = vld [vmem:[%s15 + $0x168] sm:$0xff]
      %v7601 = vld [vmem:[%s15 + $0x170] sm:$0xff]
      %v7602 = vld [vmem:[%s15 + $0x178] sm:$0xff]
      %v7603 = vld [vmem:[%s15 + $0x180] sm:$0xff]
      %v7604 = vld [vmem:[%s15 + $0x188] sm:$0xff]
      %v7605 = vld [vmem:[%s15 + $0x190] sm:$0xff]
      %v7606 = vld [vmem:[%s15 + $0x198] sm:$0xff]
      %v7607 = vld [vmem:[%s15 + $0x1a0] sm:$0xff]
      %v7608 = vld [vmem:[%s15 + $0x1a8] sm:$0xff]
      %v7609 = vld [vmem:[%s15 + $0x1b0] sm:$0xff]
      %v7610 = vld [vmem:[%s15 + $0x1b8] sm:$0xff]
      %v7611 = vld [vmem:[%s15 + $0x1c0] sm:$0xff]
      %v7612 = vld [vmem:[%s15 + $0x1c8] sm:$0xff]
      %v7613 = vld [vmem:[%s15 + $0x1d0] sm:$0xff]
      %v7614 = vld [vmem:[%s15 + $0x1d8] sm:$0xff]
      %v7615 = vld [vmem:[%s15 + $0x1e0] sm:$0xff]
      %v7616 = vld [vmem:[%s15 + $0x1e8] sm:$0xff]
      %v7617 = vld [vmem:[%s15 + $0x1f0] sm:$0xff]
      %v7618 = vld [vmem:[%s15 + $0x1f8] sm:$0xff]
      %v7619 = vld [vmem:[%s16] sm:$0xf]
      %v7621 = vlaneseq
      %v7622 = vshrl.u32 %v7621, 7
      %v7623 = vsub.s32 0, %v7622
      %v7624 = vrot.slane %v7619, %v7623
      %v7625 = vlaneseq
      %v7626 = vshrl.u32 %v7625, 7
      %v7627 = vsub.s32 1, %v7626
      %v7628 = vrot.slane %v7619, %v7627
      %v7629 = vlaneseq
      %v7630 = vshrl.u32 %v7629, 7
      %v7631 = vsub.s32 2, %v7630
      %v7632 = vrot.slane %v7619, %v7631
      %v7633 = vlaneseq
      %v7634 = vshrl.u32 %v7633, 7
      %v7635 = vsub.s32 3, %v7634
      %v7636 = vrot.slane %v7619, %v7635
      %v7705 = vunpack.c.l.b16 %v7555
      %v7706 = vunpack.c.h.b16 %v7555
      %v7707 = vunpack.c.l.b16 %v7556
      %v7708 = vunpack.c.h.b16 %v7556
      %v7709 = vunpack.c.l.b16 %v7557
      %v7710 = vunpack.c.h.b16 %v7557
      %v7711 = vunpack.c.l.b16 %v7558
      %v7712 = vunpack.c.h.b16 %v7558
      %v7713 = vunpack.c.l.b16 %v7559
      %v7714 = vunpack.c.h.b16 %v7559
      %v7715 = vunpack.c.l.b16 %v7560
      %v7716 = vunpack.c.h.b16 %v7560
      %v7717 = vunpack.c.l.b16 %v7561
      %v7718 = vunpack.c.h.b16 %v7561
      %v7719 = vunpack.c.l.b16 %v7562
      %v7720 = vunpack.c.h.b16 %v7562
      %v7721 = vunpack.c.l.b16 %v7563
      %v7722 = vunpack.c.h.b16 %v7563
      %v7723 = vunpack.c.l.b16 %v7564
      %v7724 = vunpack.c.h.b16 %v7564
      %v7725 = vunpack.c.l.b16 %v7565
      %v7726 = vunpack.c.h.b16 %v7565
      %v7727 = vunpack.c.l.b16 %v7566
      %v7728 = vunpack.c.h.b16 %v7566
      %v7729 = vunpack.c.l.b16 %v7567
      %v7730 = vunpack.c.h.b16 %v7567
      %v7731 = vunpack.c.l.b16 %v7568
      %v7732 = vunpack.c.h.b16 %v7568
      %v7733 = vunpack.c.l.b16 %v7569
      %v7734 = vunpack.c.h.b16 %v7569
      %v7735 = vunpack.c.l.b16 %v7570
      %v7736 = vunpack.c.h.b16 %v7570
      %v7737 = vunpack.c.l.b16 %v7571
      %v7738 = vunpack.c.h.b16 %v7571
      %v7739 = vunpack.c.l.b16 %v7572
      %v7740 = vunpack.c.h.b16 %v7572
      %v7741 = vunpack.c.l.b16 %v7573
      %v7742 = vunpack.c.h.b16 %v7573
      %v7743 = vunpack.c.l.b16 %v7574
      %v7744 = vunpack.c.h.b16 %v7574
      %v7745 = vunpack.c.l.b16 %v7575
      %v7746 = vunpack.c.h.b16 %v7575
      %v7747 = vunpack.c.l.b16 %v7576
      %v7748 = vunpack.c.h.b16 %v7576
      %v7749 = vunpack.c.l.b16 %v7577
      %v7750 = vunpack.c.h.b16 %v7577
      %v7751 = vunpack.c.l.b16 %v7578
      %v7752 = vunpack.c.h.b16 %v7578
      %v7753 = vunpack.c.l.b16 %v7579
      %v7754 = vunpack.c.h.b16 %v7579
      %v7755 = vunpack.c.l.b16 %v7580
      %v7756 = vunpack.c.h.b16 %v7580
      %v7757 = vunpack.c.l.b16 %v7581
      %v7758 = vunpack.c.h.b16 %v7581
      %v7759 = vunpack.c.l.b16 %v7582
      %v7760 = vunpack.c.h.b16 %v7582
      %v7761 = vunpack.c.l.b16 %v7583
      %v7762 = vunpack.c.h.b16 %v7583
      %v7763 = vunpack.c.l.b16 %v7584
      %v7764 = vunpack.c.h.b16 %v7584
      %v7765 = vunpack.c.l.b16 %v7585
      %v7766 = vunpack.c.h.b16 %v7585
      %v7767 = vunpack.c.l.b16 %v7586
      %v7768 = vunpack.c.h.b16 %v7586
      %v7769 = vunpack.c.l.b16 %v7587
      %v7770 = vunpack.c.h.b16 %v7587
      %v7771 = vunpack.c.l.b16 %v7588
      %v7772 = vunpack.c.h.b16 %v7588
      %v7773 = vunpack.c.l.b16 %v7589
      %v7774 = vunpack.c.h.b16 %v7589
      %v7775 = vunpack.c.l.b16 %v7590
      %v7776 = vunpack.c.h.b16 %v7590
      %v7777 = vunpack.c.l.b16 %v7591
      %v7778 = vunpack.c.h.b16 %v7591
      %v7779 = vunpack.c.l.b16 %v7592
      %v7780 = vunpack.c.h.b16 %v7592
      %v7781 = vunpack.c.l.b16 %v7593
      %v7782 = vunpack.c.h.b16 %v7593
      %v7783 = vunpack.c.l.b16 %v7594
      %v7784 = vunpack.c.h.b16 %v7594
      %v7785 = vunpack.c.l.b16 %v7595
      %v7786 = vunpack.c.h.b16 %v7595
      %v7787 = vunpack.c.l.b16 %v7596
      %v7788 = vunpack.c.h.b16 %v7596
      %v7789 = vunpack.c.l.b16 %v7597
      %v7790 = vunpack.c.h.b16 %v7597
      %v7791 = vunpack.c.l.b16 %v7598
      %v7792 = vunpack.c.h.b16 %v7598
      %v7793 = vunpack.c.l.b16 %v7599
      %v7794 = vunpack.c.h.b16 %v7599
      %v7795 = vunpack.c.l.b16 %v7600
      %v7796 = vunpack.c.h.b16 %v7600
      %v7797 = vunpack.c.l.b16 %v7601
      %v7798 = vunpack.c.h.b16 %v7601
      %v7799 = vunpack.c.l.b16 %v7602
      %v7800 = vunpack.c.h.b16 %v7602
      %v7801 = vunpack.c.l.b16 %v7603
      %v7802 = vunpack.c.h.b16 %v7603
      %v7803 = vunpack.c.l.b16 %v7604
      %v7804 = vunpack.c.h.b16 %v7604
      %v7805 = vunpack.c.l.b16 %v7605
      %v7806 = vunpack.c.h.b16 %v7605
      %v7807 = vunpack.c.l.b16 %v7606
      %v7808 = vunpack.c.h.b16 %v7606
      %v7809 = vunpack.c.l.b16 %v7607
      %v7810 = vunpack.c.h.b16 %v7607
      %v7811 = vunpack.c.l.b16 %v7608
      %v7812 = vunpack.c.h.b16 %v7608
      %v7813 = vunpack.c.l.b16 %v7609
      %v7814 = vunpack.c.h.b16 %v7609
      %v7815 = vunpack.c.l.b16 %v7610
      %v7816 = vunpack.c.h.b16 %v7610
      %v7817 = vunpack.c.l.b16 %v7611
      %v7818 = vunpack.c.h.b16 %v7611
      %v7819 = vunpack.c.l.b16 %v7612
      %v7820 = vunpack.c.h.b16 %v7612
      %v7821 = vunpack.c.l.b16 %v7613
      %v7822 = vunpack.c.h.b16 %v7613
      %v7823 = vunpack.c.l.b16 %v7614
      %v7824 = vunpack.c.h.b16 %v7614
      %v7825 = vunpack.c.l.b16 %v7615
      %v7826 = vunpack.c.h.b16 %v7615
      %v7827 = vunpack.c.l.b16 %v7616
      %v7828 = vunpack.c.h.b16 %v7616
      %v7829 = vunpack.c.l.b16 %v7617
      %v7830 = vunpack.c.h.b16 %v7617
      %v7831 = vunpack.c.l.b16 %v7618
      %v7832 = vunpack.c.h.b16 %v7618
      %v7833 = vpack.c.b16 %v7709, %v7705
      %v7834 = vpack.c.b16 %v7710, %v7706
      %v7835 = vpack.c.b16 %v7711, %v7707
      %v7836 = vpack.c.b16 %v7712, %v7708
      %v7837 = vpack.c.b16 %v7717, %v7713
      %v7838 = vpack.c.b16 %v7718, %v7714
      %v7839 = vpack.c.b16 %v7719, %v7715
      %v7840 = vpack.c.b16 %v7720, %v7716
      %v7841 = vpack.c.b16 %v7725, %v7721
      %v7842 = vpack.c.b16 %v7726, %v7722
      %v7843 = vpack.c.b16 %v7727, %v7723
      %v7844 = vpack.c.b16 %v7728, %v7724
      %v7845 = vpack.c.b16 %v7733, %v7729
      %v7846 = vpack.c.b16 %v7734, %v7730
      %v7847 = vpack.c.b16 %v7735, %v7731
      %v7848 = vpack.c.b16 %v7736, %v7732
      %v7849 = vpack.c.b16 %v7741, %v7737
      %v7850 = vpack.c.b16 %v7742, %v7738
      %v7851 = vpack.c.b16 %v7743, %v7739
      %v7852 = vpack.c.b16 %v7744, %v7740
      %v7853 = vpack.c.b16 %v7749, %v7745
      %v7854 = vpack.c.b16 %v7750, %v7746
      %v7855 = vpack.c.b16 %v7751, %v7747
      %v7856 = vpack.c.b16 %v7752, %v7748
      %v7857 = vpack.c.b16 %v7757, %v7753
      %v7858 = vpack.c.b16 %v7758, %v7754
      %v7859 = vpack.c.b16 %v7759, %v7755
      %v7860 = vpack.c.b16 %v7760, %v7756
      %v7861 = vpack.c.b16 %v7765, %v7761
      %v7862 = vpack.c.b16 %v7766, %v7762
      %v7863 = vpack.c.b16 %v7767, %v7763
      %v7864 = vpack.c.b16 %v7768, %v7764
      %v7865 = vpack.c.b16 %v7773, %v7769
      %v7866 = vpack.c.b16 %v7774, %v7770
      %v7867 = vpack.c.b16 %v7775, %v7771
      %v7868 = vpack.c.b16 %v7776, %v7772
      %v7869 = vpack.c.b16 %v7781, %v7777
      %v7870 = vpack.c.b16 %v7782, %v7778
      %v7871 = vpack.c.b16 %v7783, %v7779
      %v7872 = vpack.c.b16 %v7784, %v7780
      %v7873 = vpack.c.b16 %v7789, %v7785
      %v7874 = vpack.c.b16 %v7790, %v7786
      %v7875 = vpack.c.b16 %v7791, %v7787
      %v7876 = vpack.c.b16 %v7792, %v7788
      %v7877 = vpack.c.b16 %v7797, %v7793
      %v7878 = vpack.c.b16 %v7798, %v7794
      %v7879 = vpack.c.b16 %v7799, %v7795
      %v7880 = vpack.c.b16 %v7800, %v7796
      %v7881 = vpack.c.b16 %v7805, %v7801
      %v7882 = vpack.c.b16 %v7806, %v7802
      %v7883 = vpack.c.b16 %v7807, %v7803
      %v7884 = vpack.c.b16 %v7808, %v7804
      %v7885 = vpack.c.b16 %v7813, %v7809
      %v7886 = vpack.c.b16 %v7814, %v7810
      %v7887 = vpack.c.b16 %v7815, %v7811
      %v7888 = vpack.c.b16 %v7816, %v7812
      %v7889 = vpack.c.b16 %v7821, %v7817
      %v7890 = vpack.c.b16 %v7822, %v7818
      %v7891 = vpack.c.b16 %v7823, %v7819
      %v7892 = vpack.c.b16 %v7824, %v7820
      %v7893 = vpack.c.b16 %v7829, %v7825
      %v7894 = vpack.c.b16 %v7830, %v7826
      %v7895 = vpack.c.b16 %v7831, %v7827
      %v7896 = vpack.c.b16 %v7832, %v7828
      %7961 = vmatprep.subr.bf16.mxu0 %v7834
      %7962 = vmatpush1.bf16.msra.mxu0 %v7833
      %7963 = vmatprep.subr.bf16.mxu0 %v7838
      %7964 = vmatpush1.bf16.msra.mxu0 %v7837
      %7965 = vmatprep.subr.bf16.mxu0 %v7842
      %7966 = vmatpush1.bf16.msra.mxu0 %v7841
      %7967 = vmatprep.subr.bf16.mxu0 %v7846
      %7968 = vmatpush1.bf16.msra.mxu0 %v7845
      %7969 = vmatprep.subr.bf16.mxu0 %v7850
      %7970 = vmatpush1.bf16.msra.mxu0 %v7849
      %7971 = vmatprep.subr.bf16.mxu0 %v7854
      %7972 = vmatpush1.bf16.msra.mxu0 %v7853
      %7973 = vmatprep.subr.bf16.mxu0 %v7858
      %7974 = vmatpush1.bf16.msra.mxu0 %v7857
      %7975 = vmatprep.subr.bf16.mxu0 %v7862
      %7976 = vmatpush1.bf16.msra.mxu0 %v7861
      %7977 = vmatprep.subr.bf16.mxu0 %v7866
      %7978 = vmatpush1.bf16.msra.mxu0 %v7865
      %7979 = vmatprep.subr.bf16.mxu0 %v7870
      %7980 = vmatpush1.bf16.msra.mxu0 %v7869
      %7981 = vmatprep.subr.bf16.mxu0 %v7874
      %7982 = vmatpush1.bf16.msra.mxu0 %v7873
      %7983 = vmatprep.subr.bf16.mxu0 %v7878
      %7984 = vmatpush1.bf16.msra.mxu0 %v7877
      %7985 = vmatprep.subr.bf16.mxu0 %v7882
      %7986 = vmatpush1.bf16.msra.mxu0 %v7881
      %7987 = vmatprep.subr.bf16.mxu0 %v7886
      %7988 = vmatpush1.bf16.msra.mxu0 %v7885
      %7989 = vmatprep.subr.bf16.mxu0 %v7890
      %7990 = vmatpush1.bf16.msra.mxu0 %v7889
      %7991 = vmatprep.subr.bf16.mxu0 %v7894
      %7992 = vmatpush1.bf16.msra.mxu0 %v7893
      %7993 = vmatprep.mubr.bf16.mxu0 %v7540
      %7994 = vmatmul.mubr.bf16.gmra.mrb[0].mxu0 %v7539
      %v7995 = vpop.f32.mrb[0].mxu0
      %v7996 = vadd.f32 %v7624, %v7995
      %v7997 = vpop.f32.mrb[0].mxu0
      %v7998 = vadd.f32 %v7628, %v7997
      %v7999 = vpop.f32.mrb[0].mxu0
      %v8000 = vadd.f32 %v7624, %v7999
      %v8001 = vpop.f32.mrb[0].mxu0
      %v8002 = vadd.f32 %v7628, %v8001
      %8003 = vmatprep.mubr.bf16.mxu0 %v7542
      %8004 = vmatmul.mubr.bf16.gmra.mrb[0].mxu0 %v7541
      %v8005 = vpop.f32.mrb[0].mxu0
      %v8006 = vadd.f32 %v7624, %v8005
      %v8007 = vpop.f32.mrb[0].mxu0
      %v8008 = vadd.f32 %v7628, %v8007
      %v8009 = vpop.f32.mrb[0].mxu0
      %v8010 = vadd.f32 %v7624, %v8009
      %v8011 = vpop.f32.mrb[0].mxu0
      %v8012 = vadd.f32 %v7628, %v8011
      %8013 = vmatprep.mubr.bf16.mxu0 %v7544
      %8014 = vmatmul.mubr.bf16.gmra.mrb[0].mxu0 %v7543
      %v8015 = vpop.f32.mrb[0].mxu0
      %v8016 = vadd.f32 %v7624, %v8015
      %v8017 = vpop.f32.mrb[0].mxu0
      %v8018 = vadd.f32 %v7628, %v8017
      %v8019 = vpop.f32.mrb[0].mxu0
      %v8020 = vadd.f32 %v7624, %v8019
      %v8021 = vpop.f32.mrb[0].mxu0
      %v8022 = vadd.f32 %v7628, %v8021
      %8023 = vmatprep.mubr.bf16.mxu0 %v7546
      %8024 = vmatmul.mubr.bf16.gmra.mrb[0].mxu0 %v7545
      %v8025 = vpop.f32.mrb[0].mxu0
      %v8026 = vadd.f32 %v7624, %v8025
      %v8027 = vpop.f32.mrb[0].mxu0
      %v8028 = vadd.f32 %v7628, %v8027
      %v8029 = vpop.f32.mrb[0].mxu0
      %v8030 = vadd.f32 %v7624, %v8029
      %v8031 = vpop.f32.mrb[0].mxu0
      %v8032 = vadd.f32 %v7628, %v8031
      %8033 = vmatprep.mubr.bf16.mxu0 %v7548
      %8034 = vmatmul.mubr.bf16.gmra.mrb[0].mxu0 %v7547
      %v8035 = vpop.f32.mrb[0].mxu0
      %v8036 = vadd.f32 %v7624, %v8035
      %v8037 = vpop.f32.mrb[0].mxu0
      %v8038 = vadd.f32 %v7628, %v8037
      %v8039 = vpop.f32.mrb[0].mxu0
      %v8040 = vadd.f32 %v7624, %v8039
      %v8041 = vpop.f32.mrb[0].mxu0
      %v8042 = vadd.f32 %v7628, %v8041
      %8043 = vmatprep.mubr.bf16.mxu0 %v7550
      %8044 = vmatmul.mubr.bf16.gmra.mrb[0].mxu0 %v7549
      %v8045 = vpop.f32.mrb[0].mxu0
      %v8046 = vadd.f32 %v7624, %v8045
      %v8047 = vpop.f32.mrb[0].mxu0
      %v8048 = vadd.f32 %v7628, %v8047
      %v8049 = vpop.f32.mrb[0].mxu0
      %v8050 = vadd.f32 %v7624, %v8049
      %v8051 = vpop.f32.mrb[0].mxu0
      %v8052 = vadd.f32 %v7628, %v8051
      %8053 = vmatprep.mubr.bf16.mxu0 %v7552
      %8054 = vmatmul.mubr.bf16.gmra.mrb[0].mxu0 %v7551
      %v8055 = vpop.f32.mrb[0].mxu0
      %v8056 = vadd.f32 %v7624, %v8055
      %v8057 = vpop.f32.mrb[0].mxu0
      %v8058 = vadd.f32 %v7628, %v8057
      %v8059 = vpop.f32.mrb[0].mxu0
      %v8060 = vadd.f32 %v7624, %v8059
      %v8061 = vpop.f32.mrb[0].mxu0
      %v8062 = vadd.f32 %v7628, %v8061
      %8063 = vmatprep.mubr.bf16.mxu0 %v7554
      %8064 = vmatmul.mubr.bf16.gmra.mrb[0].mxu0 %v7553
      %v8065 = vpop.f32.mrb[0].mxu0
      %v8066 = vadd.f32 %v7624, %v8065
      %v8067 = vpop.f32.mrb[0].mxu0
      %v8068 = vadd.f32 %v7628, %v8067
      %v8069 = vpop.f32.mrb[0].mxu0
      %v8070 = vadd.f32 %v7624, %v8069
      %v8071 = vpop.f32.mrb[0].mxu0
      %v8072 = vadd.f32 %v7628, %v8071
      %8073 = vdwg.mxu0
      %8074 = vmatprep.subr.bf16.mxu0 %v7836
      %8075 = vmatpush1.bf16.msra.mxu0 %v7835
      %8076 = vmatprep.subr.bf16.mxu0 %v7840
      %8077 = vmatpush1.bf16.msra.mxu0 %v7839
      %8078 = vmatprep.subr.bf16.mxu0 %v7844
      %8079 = vmatpush1.bf16.msra.mxu0 %v7843
      %8080 = vmatprep.subr.bf16.mxu0 %v7848
      %8081 = vmatpush1.bf16.msra.mxu0 %v7847
      %8082 = vmatprep.subr.bf16.mxu0 %v7852
      %8083 = vmatpush1.bf16.msra.mxu0 %v7851
      %8084 = vmatprep.subr.bf16.mxu0 %v7856
      %8085 = vmatpush1.bf16.msra.mxu0 %v7855
      %8086 = vmatprep.subr.bf16.mxu0 %v7860
      %8087 = vmatpush1.bf16.msra.mxu0 %v7859
      %8088 = vmatprep.subr.bf16.mxu0 %v7864
      %8089 = vmatpush1.bf16.msra.mxu0 %v7863
      %8090 = vmatprep.subr.bf16.mxu0 %v7868
      %8091 = vmatpush1.bf16.msra.mxu0 %v7867
      %8092 = vmatprep.subr.bf16.mxu0 %v7872
      %8093 = vmatpush1.bf16.msra.mxu0 %v7871
      %8094 = vmatprep.subr.bf16.mxu0 %v7876
      %8095 = vmatpush1.bf16.msra.mxu0 %v7875
      %8096 = vmatprep.subr.bf16.mxu0 %v7880
      %8097 = vmatpush1.bf16.msra.mxu0 %v7879
      %8098 = vmatprep.subr.bf16.mxu0 %v7884
      %8099 = vmatpush1.bf16.msra.mxu0 %v7883
      %8100 = vmatprep.subr.bf16.mxu0 %v7888
      %8101 = vmatpush1.bf16.msra.mxu0 %v7887
      %8102 = vmatprep.subr.bf16.mxu0 %v7892
      %8103 = vmatpush1.bf16.msra.mxu0 %v7891
      %8104 = vmatprep.subr.bf16.mxu0 %v7896
      %8105 = vmatpush1.bf16.msra.mxu0 %v7895
      %8106 = vmatprep.mubr.bf16.mxu0 %v7540
      %8107 = vmatmul.mubr.bf16.gmra.mrb[0].mxu0 %v7539
      %v8108 = vpop.f32.mrb[0].mxu0
      %v8109 = vadd.f32 %v7632, %v8108
      %v8110 = vpop.f32.mrb[0].mxu0
      %v8111 = vadd.f32 %v7636, %v8110
      %v8112 = vpop.f32.mrb[0].mxu0
      %v8113 = vadd.f32 %v7632, %v8112
      %v8114 = vpop.f32.mrb[0].mxu0
      %v8115 = vadd.f32 %v7636, %v8114
      %8116 = vmatprep.mubr.bf16.mxu0 %v7542
      %8117 = vmatmul.mubr.bf16.gmra.mrb[0].mxu0 %v7541
      %v8118 = vpop.f32.mrb[0].mxu0
      %v8119 = vadd.f32 %v7632, %v8118
      %v8120 = vpop.f32.mrb[0].mxu0
      %v8121 = vadd.f32 %v7636, %v8120
      %v8122 = vpop.f32.mrb[0].mxu0
      %v8123 = vadd.f32 %v7632, %v8122
      %v8124 = vpop.f32.mrb[0].mxu0
      %v8125 = vadd.f32 %v7636, %v8124
      %8126 = vmatprep.mubr.bf16.mxu0 %v7544
      %8127 = vmatmul.mubr.bf16.gmra.mrb[0].mxu0 %v7543
      %v8128 = vpop.f32.mrb[0].mxu0
      %v8129 = vadd.f32 %v7632, %v8128
      %v8130 = vpop.f32.mrb[0].mxu0
      %v8131 = vadd.f32 %v7636, %v8130
      %v8132 = vpop.f32.mrb[0].mxu0
      %v8133 = vadd.f32 %v7632, %v8132
      %v8134 = vpop.f32.mrb[0].mxu0
      %v8135 = vadd.f32 %v7636, %v8134
      %8136 = vmatprep.mubr.bf16.mxu0 %v7546
      %8137 = vmatmul.mubr.bf16.gmra.mrb[0].mxu0 %v7545
      %v8138 = vpop.f32.mrb[0].mxu0
      %v8139 = vadd.f32 %v7632, %v8138
      %v8140 = vpop.f32.mrb[0].mxu0
      %v8141 = vadd.f32 %v7636, %v8140
      %v8142 = vpop.f32.mrb[0].mxu0
      %v8143 = vadd.f32 %v7632, %v8142
      %v8144 = vpop.f32.mrb[0].mxu0
      %v8145 = vadd.f32 %v7636, %v8144
      %8146 = vmatprep.mubr.bf16.mxu0 %v7548
      %8147 = vmatmul.mubr.bf16.gmra.mrb[0].mxu0 %v7547
      %v8148 = vpop.f32.mrb[0].mxu0
      %v8149 = vadd.f32 %v7632, %v8148
      %v8150 = vpop.f32.mrb[0].mxu0
      %v8151 = vadd.f32 %v7636, %v8150
      %v8152 = vpop.f32.mrb[0].mxu0
      %v8153 = vadd.f32 %v7632, %v8152
      %v8154 = vpop.f32.mrb[0].mxu0
      %v8155 = vadd.f32 %v7636, %v8154
      %8156 = vmatprep.mubr.bf16.mxu0 %v7550
      %8157 = vmatmul.mubr.bf16.gmra.mrb[0].mxu0 %v7549
      %v8158 = vpop.f32.mrb[0].mxu0
      %v8159 = vadd.f32 %v7632, %v8158
      %v8160 = vpop.f32.mrb[0].mxu0
      %v8161 = vadd.f32 %v7636, %v8160
      %v8162 = vpop.f32.mrb[0].mxu0
      %v8163 = vadd.f32 %v7632, %v8162
      %v8164 = vpop.f32.mrb[0].mxu0
      %v8165 = vadd.f32 %v7636, %v8164
      %8166 = vmatprep.mubr.bf16.mxu0 %v7552
      %8167 = vmatmul.mubr.bf16.gmra.mrb[0].mxu0 %v7551
      %v8168 = vpop.f32.mrb[0].mxu0
      %v8169 = vadd.f32 %v7632, %v8168
      %v8170 = vpop.f32.mrb[0].mxu0
      %v8171 = vadd.f32 %v7636, %v8170
      %v8172 = vpop.f32.mrb[0].mxu0
      %v8173 = vadd.f32 %v7632, %v8172
      %v8174 = vpop.f32.mrb[0].mxu0
      %v8175 = vadd.f32 %v7636, %v8174
      %8176 = vmatprep.mubr.bf16.mxu0 %v7554
      %8177 = vmatmul.mubr.bf16.gmra.mrb[0].mxu0 %v7553
      %v8178 = vpop.f32.mrb[0].mxu0
      %v8179 = vadd.f32 %v7632, %v8178
      %v8180 = vpop.f32.mrb[0].mxu0
      %v8181 = vadd.f32 %v7636, %v8180
      %v8182 = vpop.f32.mrb[0].mxu0
      %v8183 = vadd.f32 %v7632, %v8182
      %v8184 = vpop.f32.mrb[0].mxu0
      %v8185 = vadd.f32 %v7636, %v8184
      %8186 = vdwg.mxu0
      %vm8187 = vcmp.gt.f32.partialorder %v7996, 0.0
      %vm8188 = vcmp.gt.f32.partialorder %v7998, 0.0
      %vm8189 = vcmp.gt.f32.partialorder %v8109, 0.0
      %vm8190 = vcmp.gt.f32.partialorder %v8111, 0.0
      %vm8191 = vcmp.gt.f32.partialorder %v8000, 0.0
      %vm8192 = vcmp.gt.f32.partialorder %v8002, 0.0
      %vm8193 = vcmp.gt.f32.partialorder %v8113, 0.0
      %vm8194 = vcmp.gt.f32.partialorder %v8115, 0.0
      %vm8195 = vcmp.gt.f32.partialorder %v8006, 0.0
      %vm8196 = vcmp.gt.f32.partialorder %v8008, 0.0
      %vm8197 = vcmp.gt.f32.partialorder %v8119, 0.0
      %vm8198 = vcmp.gt.f32.partialorder %v8121, 0.0
      %vm8199 = vcmp.gt.f32.partialorder %v8010, 0.0
      %vm8200 = vcmp.gt.f32.partialorder %v8012, 0.0
      %vm8201 = vcmp.gt.f32.partialorder %v8123, 0.0
      %vm8202 = vcmp.gt.f32.partialorder %v8125, 0.0
      %vm8203 = vcmp.gt.f32.partialorder %v8016, 0.0
      %vm8204 = vcmp.gt.f32.partialorder %v8018, 0.0
      %vm8205 = vcmp.gt.f32.partialorder %v8129, 0.0
      %vm8206 = vcmp.gt.f32.partialorder %v8131, 0.0
      %vm8207 = vcmp.gt.f32.partialorder %v8020, 0.0
      %vm8208 = vcmp.gt.f32.partialorder %v8022, 0.0
      %vm8209 = vcmp.gt.f32.partialorder %v8133, 0.0
      %vm8210 = vcmp.gt.f32.partialorder %v8135, 0.0
      %vm8211 = vcmp.gt.f32.partialorder %v8026, 0.0
      %vm8212 = vcmp.gt.f32.partialorder %v8028, 0.0
      %vm8213 = vcmp.gt.f32.partialorder %v8139, 0.0
      %vm8214 = vcmp.gt.f32.partialorder %v8141, 0.0
      %vm8215 = vcmp.gt.f32.partialorder %v8030, 0.0
      %vm8216 = vcmp.gt.f32.partialorder %v8032, 0.0
      %vm8217 = vcmp.gt.f32.partialorder %v8143, 0.0
      %vm8218 = vcmp.gt.f32.partialorder %v8145, 0.0
      %vm8219 = vcmp.gt.f32.partialorder %v8036, 0.0
      %vm8220 = vcmp.gt.f32.partialorder %v8038, 0.0
      %vm8221 = vcmp.gt.f32.partialorder %v8149, 0.0
      %vm8222 = vcmp.gt.f32.partialorder %v8151, 0.0
      %vm8223 = vcmp.gt.f32.partialorder %v8040, 0.0
      %vm8224 = vcmp.gt.f32.partialorder %v8042, 0.0
      %vm8225 = vcmp.gt.f32.partialorder %v8153, 0.0
      %vm8226 = vcmp.gt.f32.partialorder %v8155, 0.0
      %vm8227 = vcmp.gt.f32.partialorder %v8046, 0.0
      %vm8228 = vcmp.gt.f32.partialorder %v8048, 0.0
      %vm8229 = vcmp.gt.f32.partialorder %v8159, 0.0
      %vm8230 = vcmp.gt.f32.partialorder %v8161, 0.0
      %vm8231 = vcmp.gt.f32.partialorder %v8050, 0.0
      %vm8232 = vcmp.gt.f32.partialorder %v8052, 0.0
      %vm8233 = vcmp.gt.f32.partialorder %v8163, 0.0
      %vm8234 = vcmp.gt.f32.partialorder %v8165, 0.0
      %vm8235 = vcmp.gt.f32.partialorder %v8056, 0.0
      %vm8236 = vcmp.gt.f32.partialorder %v8058, 0.0
      %vm8237 = vcmp.gt.f32.partialorder %v8169, 0.0
      %vm8238 = vcmp.gt.f32.partialorder %v8171, 0.0
      %vm8239 = vcmp.gt.f32.partialorder %v8060, 0.0
      %vm8240 = vcmp.gt.f32.partialorder %v8062, 0.0
      %vm8241 = vcmp.gt.f32.partialorder %v8173, 0.0
      %vm8242 = vcmp.gt.f32.partialorder %v8175, 0.0
      %vm8243 = vcmp.gt.f32.partialorder %v8066, 0.0
      %vm8244 = vcmp.gt.f32.partialorder %v8068, 0.0
      %vm8245 = vcmp.gt.f32.partialorder %v8179, 0.0
      %vm8246 = vcmp.gt.f32.partialorder %v8181, 0.0
      %vm8247 = vcmp.gt.f32.partialorder %v8070, 0.0
      %vm8248 = vcmp.gt.f32.partialorder %v8072, 0.0
      %vm8249 = vcmp.gt.f32.partialorder %v8183, 0.0
      %vm8250 = vcmp.gt.f32.partialorder %v8185, 0.0
      %v8251 = vmul.f32 %v7996, 1.442695
      %v8252 = vpow.pop %v8251
      %v8253 = vmul.f32 %v7998, 1.442695
      %v8254 = vpow.pop %v8253
      %v8255 = vmul.f32 %v8109, 1.442695
      %v8256 = vpow.pop %v8255
      %v8257 = vmul.f32 %v8111, 1.442695
      %v8258 = vpow.pop %v8257
      %v8259 = vmul.f32 %v8000, 1.442695
      %v8260 = vpow.pop %v8259
      %v8261 = vmul.f32 %v8002, 1.442695
      %v8262 = vpow.pop %v8261
      %v8263 = vmul.f32 %v8113, 1.442695
      %v8264 = vpow.pop %v8263
      %v8265 = vmul.f32 %v8115, 1.442695
      %v8266 = vpow.pop %v8265
      %v8267 = vmul.f32 %v8006, 1.442695
      %v8268 = vpow.pop %v8267
      %v8269 = vmul.f32 %v8008, 1.442695
      %v8270 = vpow.pop %v8269
      %v8271 = vmul.f32 %v8119, 1.442695
      %v8272 = vpow.pop %v8271
      %v8273 = vmul.f32 %v8121, 1.442695
      %v8274 = vpow.pop %v8273
      %v8275 = vmul.f32 %v8010, 1.442695
      %v8276 = vpow.pop %v8275
      %v8277 = vmul.f32 %v8012, 1.442695
      %v8278 = vpow.pop %v8277
      %v8279 = vmul.f32 %v8123, 1.442695
      %v8280 = vpow.pop %v8279
      %v8281 = vmul.f32 %v8125, 1.442695
      %v8282 = vpow.pop %v8281
      %v8283 = vmul.f32 %v8016, 1.442695
      %v8284 = vpow.pop %v8283
      %v8285 = vmul.f32 %v8018, 1.442695
      %v8286 = vpow.pop %v8285
      %v8287 = vmul.f32 %v8129, 1.442695
      %v8288 = vpow.pop %v8287
      %v8289 = vmul.f32 %v8131, 1.442695
      %v8290 = vpow.pop %v8289
      %v8291 = vmul.f32 %v8020, 1.442695
      %v8292 = vpow.pop %v8291
      %v8293 = vmul.f32 %v8022, 1.442695
      %v8294 = vpow.pop %v8293
      %v8295 = vmul.f32 %v8133, 1.442695
      %v8296 = vpow.pop %v8295
      %v8297 = vmul.f32 %v8135, 1.442695
      %v8298 = vpow.pop %v8297
      %v8299 = vmul.f32 %v8026, 1.442695
      %v8300 = vpow.pop %v8299
      %v8301 = vmul.f32 %v8028, 1.442695
      %v8302 = vpow.pop %v8301
      %v8303 = vmul.f32 %v8139, 1.442695
      %v8304 = vpow.pop %v8303
      %v8305 = vmul.f32 %v8141, 1.442695
      %v8306 = vpow.pop %v8305
      %v8307 = vmul.f32 %v8030, 1.442695
      %v8308 = vpow.pop %v8307
      %v8309 = vmul.f32 %v8032, 1.442695
      %v8310 = vpow.pop %v8309
      %v8311 = vmul.f32 %v8143, 1.442695
      %v8312 = vpow.pop %v8311
      %v8313 = vmul.f32 %v8145, 1.442695
      %v8314 = vpow.pop %v8313
      %v8315 = vmul.f32 %v8036, 1.442695
      %v8316 = vpow.pop %v8315
      %v8317 = vmul.f32 %v8038, 1.442695
      %v8318 = vpow.pop %v8317
      %v8319 = vmul.f32 %v8149, 1.442695
      %v8320 = vpow.pop %v8319
      %v8321 = vmul.f32 %v8151, 1.442695
      %v8322 = vpow.pop %v8321
      %v8323 = vmul.f32 %v8040, 1.442695
      %v8324 = vpow.pop %v8323
      %v8325 = vmul.f32 %v8042, 1.442695
      %v8326 = vpow.pop %v8325
      %v8327 = vmul.f32 %v8153, 1.442695
      %v8328 = vpow.pop %v8327
      %v8329 = vmul.f32 %v8155, 1.442695
      %v8330 = vpow.pop %v8329
      %v8331 = vmul.f32 %v8046, 1.442695
      %v8332 = vpow.pop %v8331
      %v8333 = vmul.f32 %v8048, 1.442695
      %v8334 = vpow.pop %v8333
      %v8335 = vmul.f32 %v8159, 1.442695
      %v8336 = vpow.pop %v8335
      %v8337 = vmul.f32 %v8161, 1.442695
      %v8338 = vpow.pop %v8337
      %v8339 = vmul.f32 %v8050, 1.442695
      %v8340 = vpow.pop %v8339
      %v8341 = vmul.f32 %v8052, 1.442695
      %v8342 = vpow.pop %v8341
      %v8343 = vmul.f32 %v8163, 1.442695
      %v8344 = vpow.pop %v8343
      %v8345 = vmul.f32 %v8165, 1.442695
      %v8346 = vpow.pop %v8345
      %v8347 = vmul.f32 %v8056, 1.442695
      %v8348 = vpow.pop %v8347
      %v8349 = vmul.f32 %v8058, 1.442695
      %v8350 = vpow.pop %v8349
      %v8351 = vmul.f32 %v8169, 1.442695
      %v8352 = vpow.pop %v8351
      %v8353 = vmul.f32 %v8171, 1.442695
      %v8354 = vpow.pop %v8353
      %v8355 = vmul.f32 %v8060, 1.442695
      %v8356 = vpow.pop %v8355
      %v8357 = vmul.f32 %v8062, 1.442695
      %v8358 = vpow.pop %v8357
      %v8359 = vmul.f32 %v8173, 1.442695
      %v8360 = vpow.pop %v8359
      %v8361 = vmul.f32 %v8175, 1.442695
      %v8362 = vpow.pop %v8361
      %v8363 = vmul.f32 %v8066, 1.442695
      %v8364 = vpow.pop %v8363
      %v8365 = vmul.f32 %v8068, 1.442695
      %v8366 = vpow.pop %v8365
      %v8367 = vmul.f32 %v8179, 1.442695
      %v8368 = vpow.pop %v8367
      %v8369 = vmul.f32 %v8181, 1.442695
      %v8370 = vpow.pop %v8369
      %v8371 = vmul.f32 %v8070, 1.442695
      %v8372 = vpow.pop %v8371
      %v8373 = vmul.f32 %v8072, 1.442695
      %v8374 = vpow.pop %v8373
      %v8375 = vmul.f32 %v8183, 1.442695
      %v8376 = vpow.pop %v8375
      %v8377 = vmul.f32 %v8185, 1.442695
      %v8378 = vpow.pop %v8377
      %v8379 = vsub.f32 %v8252, 1.0
      %v8380 = vsub.f32 %v8254, 1.0
      %v8381 = vsub.f32 %v8256, 1.0
      %v8382 = vsub.f32 %v8258, 1.0
      %v8383 = vsub.f32 %v8260, 1.0
      %v8384 = vsub.f32 %v8262, 1.0
      %v8385 = vsub.f32 %v8264, 1.0
      %v8386 = vsub.f32 %v8266, 1.0
      %v8387 = vsub.f32 %v8268, 1.0
      %v8388 = vsub.f32 %v8270, 1.0
      %v8389 = vsub.f32 %v8272, 1.0
      %v8390 = vsub.f32 %v8274, 1.0
      %v8391 = vsub.f32 %v8276, 1.0
      %v8392 = vsub.f32 %v8278, 1.0
      %v8393 = vsub.f32 %v8280, 1.0
      %v8394 = vsub.f32 %v8282, 1.0
      %v8395 = vsub.f32 %v8284, 1.0
      %v8396 = vsub.f32 %v8286, 1.0
      %v8397 = vsub.f32 %v8288, 1.0
      %v8398 = vsub.f32 %v8290, 1.0
      %v8399 = vsub.f32 %v8292, 1.0
      %v8400 = vsub.f32 %v8294, 1.0
      %v8401 = vsub.f32 %v8296, 1.0
      %v8402 = vsub.f32 %v8298, 1.0
      %v8403 = vsub.f32 %v8300, 1.0
      %v8404 = vsub.f32 %v8302, 1.0
      %v8405 = vsub.f32 %v8304, 1.0
      %v8406 = vsub.f32 %v8306, 1.0
      %v8407 = vsub.f32 %v8308, 1.0
      %v8408 = vsub.f32 %v8310, 1.0
      %v8409 = vsub.f32 %v8312, 1.0
      %v8410 = vsub.f32 %v8314, 1.0
      %v8411 = vsub.f32 %v8316, 1.0
      %v8412 = vsub.f32 %v8318, 1.0
      %v8413 = vsub.f32 %v8320, 1.0
      %v8414 = vsub.f32 %v8322, 1.0
      %v8415 = vsub.f32 %v8324, 1.0
      %v8416 = vsub.f32 %v8326, 1.0
      %v8417 = vsub.f32 %v8328, 1.0
      %v8418 = vsub.f32 %v8330, 1.0
      %v8419 = vsub.f32 %v8332, 1.0
      %v8420 = vsub.f32 %v8334, 1.0
      %v8421 = vsub.f32 %v8336, 1.0
      %v8422 = vsub.f32 %v8338, 1.0
      %v8423 = vsub.f32 %v8340, 1.0
      %v8424 = vsub.f32 %v8342, 1.0
      %v8425 = vsub.f32 %v8344, 1.0
      %v8426 = vsub.f32 %v8346, 1.0
      %v8427 = vsub.f32 %v8348, 1.0
      %v8428 = vsub.f32 %v8350, 1.0
      %v8429 = vsub.f32 %v8352, 1.0
      %v8430 = vsub.f32 %v8354, 1.0
      %v8431 = vsub.f32 %v8356, 1.0
      %v8432 = vsub.f32 %v8358, 1.0
      %v8433 = vsub.f32 %v8360, 1.0
      %v8434 = vsub.f32 %v8362, 1.0
      %v8435 = vsub.f32 %v8364, 1.0
      %v8436 = vsub.f32 %v8366, 1.0
      %v8437 = vsub.f32 %v8368, 1.0
      %v8438 = vsub.f32 %v8370, 1.0
      %v8439 = vsub.f32 %v8372, 1.0
      %v8440 = vsub.f32 %v8374, 1.0
      %v8441 = vsub.f32 %v8376, 1.0
      %v8442 = vsub.f32 %v8378, 1.0
      %v8443 = vsel %vm8187, %v7996, %v8379
      %v8444 = vsel %vm8188, %v7998, %v8380
      %v8445 = vsel %vm8189, %v8109, %v8381
      %v8446 = vsel %vm8190, %v8111, %v8382
      %v8447 = vsel %vm8191, %v8000, %v8383
      %v8448 = vsel %vm8192, %v8002, %v8384
      %v8449 = vsel %vm8193, %v8113, %v8385
      %v8450 = vsel %vm8194, %v8115, %v8386
      %v8451 = vsel %vm8195, %v8006, %v8387
      %v8452 = vsel %vm8196, %v8008, %v8388
      %v8453 = vsel %vm8197, %v8119, %v8389
      %v8454 = vsel %vm8198, %v8121, %v8390
      %v8455 = vsel %vm8199, %v8010, %v8391
      %v8456 = vsel %vm8200, %v8012, %v8392
      %v8457 = vsel %vm8201, %v8123, %v8393
      %v8458 = vsel %vm8202, %v8125, %v8394
      %v8459 = vsel %vm8203, %v8016, %v8395
      %v8460 = vsel %vm8204, %v8018, %v8396
      %v8461 = vsel %vm8205, %v8129, %v8397
      %v8462 = vsel %vm8206, %v8131, %v8398
      %v8463 = vsel %vm8207, %v8020, %v8399
      %v8464 = vsel %vm8208, %v8022, %v8400
      %v8465 = vsel %vm8209, %v8133, %v8401
      %v8466 = vsel %vm8210, %v8135, %v8402
      %v8467 = vsel %vm8211, %v8026, %v8403
      %v8468 = vsel %vm8212, %v8028, %v8404
      %v8469 = vsel %vm8213, %v8139, %v8405
      %v8470 = vsel %vm8214, %v8141, %v8406
      %v8471 = vsel %vm8215, %v8030, %v8407
      %v8472 = vsel %vm8216, %v8032, %v8408
      %v8473 = vsel %vm8217, %v8143, %v8409
      %v8474 = vsel %vm8218, %v8145, %v8410
      %v8475 = vsel %vm8219, %v8036, %v8411
      %v8476 = vsel %vm8220, %v8038, %v8412
      %v8477 = vsel %vm8221, %v8149, %v8413
      %v8478 = vsel %vm8222, %v8151, %v8414
      %v8479 = vsel %vm8223, %v8040, %v8415
      %v8480 = vsel %vm8224, %v8042, %v8416
      %v8481 = vsel %vm8225, %v8153, %v8417
      %v8482 = vsel %vm8226, %v8155, %v8418
      %v8483 = vsel %vm8227, %v8046, %v8419
      %v8484 = vsel %vm8228, %v8048, %v8420
      %v8485 = vsel %vm8229, %v8159, %v8421
      %v8486 = vsel %vm8230, %v8161, %v8422
      %v8487 = vsel %vm8231, %v8050, %v8423
      %v8488 = vsel %vm8232, %v8052, %v8424
      %v8489 = vsel %vm8233, %v8163, %v8425
      %v8490 = vsel %vm8234, %v8165, %v8426
      %v8491 = vsel %vm8235, %v8056, %v8427
      %v8492 = vsel %vm8236, %v8058, %v8428
      %v8493 = vsel %vm8237, %v8169, %v8429
      %v8494 = vsel %vm8238, %v8171, %v8430
      %v8495 = vsel %vm8239, %v8060, %v8431
      %v8496 = vsel %vm8240, %v8062, %v8432
      %v8497 = vsel %vm8241, %v8173, %v8433
      %v8498 = vsel %vm8242, %v8175, %v8434
      %v8499 = vsel %vm8243, %v8066, %v8435
      %v8500 = vsel %vm8244, %v8068, %v8436
      %v8501 = vsel %vm8245, %v8179, %v8437
      %v8502 = vsel %vm8246, %v8181, %v8438
      %v8503 = vsel %vm8247, %v8070, %v8439
      %v8504 = vsel %vm8248, %v8072, %v8440
      %v8505 = vsel %vm8249, %v8183, %v8441
      %v8506 = vsel %vm8250, %v8185, %v8442
      %v8507 = vld [vmem:[%s17] sm:$0xf]
      %v8509 = vlaneseq
      %v8510 = vshrl.u32 %v8509, 7
      %v8511 = vsub.s32 0, %v8510
      %v8512 = vrot.slane %v8507, %v8511
      %v8513 = vlaneseq
      %v8514 = vshrl.u32 %v8513, 7
      %v8515 = vsub.s32 1, %v8514
      %v8516 = vrot.slane %v8507, %v8515
      %v8517 = vlaneseq
      %v8518 = vshrl.u32 %v8517, 7
      %v8519 = vsub.s32 2, %v8518
      %v8520 = vrot.slane %v8507, %v8519
      %v8521 = vlaneseq
      %v8522 = vshrl.u32 %v8521, 7
      %v8523 = vsub.s32 3, %v8522
      %v8524 = vrot.slane %v8507, %v8523
      %v8529 = vmul.f32 %v8443, %v8512
      %v8530 = vmul.f32 %v8444, %v8516
      %v8531 = vmul.f32 %v8445, %v8520
      %v8532 = vmul.f32 %v8446, %v8524
      %v8533 = vmul.f32 %v8447, %v8512
      %v8534 = vmul.f32 %v8448, %v8516
      %v8535 = vmul.f32 %v8449, %v8520
      %v8536 = vmul.f32 %v8450, %v8524
      %v8537 = vmul.f32 %v8451, %v8512
      %v8538 = vmul.f32 %v8452, %v8516
      %v8539 = vmul.f32 %v8453, %v8520
      %v8540 = vmul.f32 %v8454, %v8524
      %v8541 = vmul.f32 %v8455, %v8512
      %v8542 = vmul.f32 %v8456, %v8516
      %v8543 = vmul.f32 %v8457, %v8520
      %v8544 = vmul.f32 %v8458, %v8524
      %v8545 = vmul.f32 %v8459, %v8512
      %v8546 = vmul.f32 %v8460, %v8516
      %v8547 = vmul.f32 %v8461, %v8520
      %v8548 = vmul.f32 %v8462, %v8524
      %v8549 = vmul.f32 %v8463, %v8512
      %v8550 = vmul.f32 %v8464, %v8516
      %v8551 = vmul.f32 %v8465, %v8520
      %v8552 = vmul.f32 %v8466, %v8524
      %v8553 = vmul.f32 %v8467, %v8512
      %v8554 = vmul.f32 %v8468, %v8516
      %v8555 = vmul.f32 %v8469, %v8520
      %v8556 = vmul.f32 %v8470, %v8524
      %v8557 = vmul.f32 %v8471, %v8512
      %v8558 = vmul.f32 %v8472, %v8516
      %v8559 = vmul.f32 %v8473, %v8520
      %v8560 = vmul.f32 %v8474, %v8524
      %v8561 = vmul.f32 %v8475, %v8512
      %v8562 = vmul.f32 %v8476, %v8516
      %v8563 = vmul.f32 %v8477, %v8520
      %v8564 = vmul.f32 %v8478, %v8524
      %v8565 = vmul.f32 %v8479, %v8512
      %v8566 = vmul.f32 %v8480, %v8516
      %v8567 = vmul.f32 %v8481, %v8520
      %v8568 = vmul.f32 %v8482, %v8524
      %v8569 = vmul.f32 %v8483, %v8512
      %v8570 = vmul.f32 %v8484, %v8516
      %v8571 = vmul.f32 %v8485, %v8520
      %v8572 = vmul.f32 %v8486, %v8524
      %v8573 = vmul.f32 %v8487, %v8512
      %v8574 = vmul.f32 %v8488, %v8516
      %v8575 = vmul.f32 %v8489, %v8520
      %v8576 = vmul.f32 %v8490, %v8524
      %v8577 = vmul.f32 %v8491, %v8512
      %v8578 = vmul.f32 %v8492, %v8516
      %v8579 = vmul.f32 %v8493, %v8520
      %v8580 = vmul.f32 %v8494, %v8524
      %v8581 = vmul.f32 %v8495, %v8512
      %v8582 = vmul.f32 %v8496, %v8516
      %v8583 = vmul.f32 %v8497, %v8520
      %v8584 = vmul.f32 %v8498, %v8524
      %v8585 = vmul.f32 %v8499, %v8512
      %v8586 = vmul.f32 %v8500, %v8516
      %v8587 = vmul.f32 %v8501, %v8520
      %v8588 = vmul.f32 %v8502, %v8524
      %v8589 = vmul.f32 %v8503, %v8512
      %v8590 = vmul.f32 %v8504, %v8516
      %v8591 = vmul.f32 %v8505, %v8520
      %v8592 = vmul.f32 %v8506, %v8524
      %v8593 = vadd.f32 %v8529, %v8530
      %v8594 = vadd.f32 %v8593, %v8531
      %v8595 = vadd.f32 %v8594, %v8532
      %8596 = vadd.xlane.f32.xlu0 %v8595
      %v8597 = vpop.xlane.xlu0 %8596
      %v8598 = vadd.f32 %v8533, %v8534
      %v8599 = vadd.f32 %v8598, %v8535
      %v8600 = vadd.f32 %v8599, %v8536
      %8601 = vadd.xlane.f32.xlu0 %v8600
      %v8602 = vpop.xlane.xlu0 %8601
      %v8603 = vadd.f32 %v8537, %v8538
      %v8604 = vadd.f32 %v8603, %v8539
      %v8605 = vadd.f32 %v8604, %v8540
      %8606 = vadd.xlane.f32.xlu0 %v8605
      %v8607 = vpop.xlane.xlu0 %8606
      %v8608 = vadd.f32 %v8541, %v8542
      %v8609 = vadd.f32 %v8608, %v8543
      %v8610 = vadd.f32 %v8609, %v8544
      %8611 = vadd.xlane.f32.xlu0 %v8610
      %v8612 = vpop.xlane.xlu0 %8611
      %v8613 = vadd.f32 %v8545, %v8546
      %v8614 = vadd.f32 %v8613, %v8547
      %v8615 = vadd.f32 %v8614, %v8548
      %8616 = vadd.xlane.f32.xlu0 %v8615
      %v8617 = vpop.xlane.xlu0 %8616
      %v8618 = vadd.f32 %v8549, %v8550
      %v8619 = vadd.f32 %v8618, %v8551
      %v8620 = vadd.f32 %v8619, %v8552
      %8621 = vadd.xlane.f32.xlu0 %v8620
      %v8622 = vpop.xlane.xlu0 %8621
      %v8623 = vadd.f32 %v8553, %v8554
      %v8624 = vadd.f32 %v8623, %v8555
      %v8625 = vadd.f32 %v8624, %v8556
      %8626 = vadd.xlane.f32.xlu0 %v8625
      %v8627 = vpop.xlane.xlu0 %8626
      %v8628 = vadd.f32 %v8557, %v8558
      %v8629 = vadd.f32 %v8628, %v8559
      %v8630 = vadd.f32 %v8629, %v8560
      %8631 = vadd.xlane.f32.xlu0 %v8630
      %v8632 = vpop.xlane.xlu0 %8631
      %v8633 = vadd.f32 %v8561, %v8562
      %v8634 = vadd.f32 %v8633, %v8563
      %v8635 = vadd.f32 %v8634, %v8564
      %8636 = vadd.xlane.f32.xlu0 %v8635
      %v8637 = vpop.xlane.xlu0 %8636
      %v8638 = vadd.f32 %v8565, %v8566
      %v8639 = vadd.f32 %v8638, %v8567
      %v8640 = vadd.f32 %v8639, %v8568
      %8641 = vadd.xlane.f32.xlu0 %v8640
      %v8642 = vpop.xlane.xlu0 %8641
      %v8643 = vadd.f32 %v8569, %v8570
      %v8644 = vadd.f32 %v8643, %v8571
      %v8645 = vadd.f32 %v8644, %v8572
      %8646 = vadd.xlane.f32.xlu0 %v8645
      %v8647 = vpop.xlane.xlu0 %8646
      %v8648 = vadd.f32 %v8573, %v8574
      %v8649 = vadd.f32 %v8648, %v8575
      %v8650 = vadd.f32 %v8649, %v8576
      %8651 = vadd.xlane.f32.xlu0 %v8650
      %v8652 = vpop.xlane.xlu0 %8651
      %v8653 = vadd.f32 %v8577, %v8578
      %v8654 = vadd.f32 %v8653, %v8579
      %v8655 = vadd.f32 %v8654, %v8580
      %8656 = vadd.xlane.f32.xlu0 %v8655
      %v8657 = vpop.xlane.xlu0 %8656
      %v8658 = vadd.f32 %v8581, %v8582
      %v8659 = vadd.f32 %v8658, %v8583
      %v8660 = vadd.f32 %v8659, %v8584
      %8661 = vadd.xlane.f32.xlu0 %v8660
      %v8662 = vpop.xlane.xlu0 %8661
      %v8663 = vadd.f32 %v8585, %v8586
      %v8664 = vadd.f32 %v8663, %v8587
      %v8665 = vadd.f32 %v8664, %v8588
      %8666 = vadd.xlane.f32.xlu0 %v8665
      %v8667 = vpop.xlane.xlu0 %8666
      %v8668 = vadd.f32 %v8589, %v8590
      %v8669 = vadd.f32 %v8668, %v8591
      %v8670 = vadd.f32 %v8669, %v8592
      %8671 = vadd.xlane.f32.xlu0 %v8670
      %v8672 = vpop.xlane.xlu0 %8671
      %v8673 = vld [vmem:[#allocation2] sm:$0x1]
      %v8675 = vlaneseq
      %v8676 = vshrl.u32 %v8675, 7
      %v8677 = vsub.s32 0, %v8676
      %v8678 = vrot.slane %v8673, %v8677
      %v8680 = vadd.f32 %v8597, %v8678
      %v8681 = vadd.f32 %v8602, %v8678
      %v8682 = vadd.f32 %v8607, %v8678
      %v8683 = vadd.f32 %v8612, %v8678
      %v8684 = vadd.f32 %v8617, %v8678
      %v8685 = vadd.f32 %v8622, %v8678
      %v8686 = vadd.f32 %v8627, %v8678
      %v8687 = vadd.f32 %v8632, %v8678
      %v8688 = vadd.f32 %v8637, %v8678
      %v8689 = vadd.f32 %v8642, %v8678
      %v8690 = vadd.f32 %v8647, %v8678
      %v8691 = vadd.f32 %v8652, %v8678
      %v8692 = vadd.f32 %v8657, %v8678
      %v8693 = vadd.f32 %v8662, %v8678
      %v8694 = vadd.f32 %v8667, %v8678
      %v8695 = vadd.f32 %v8672, %v8678
      %vm8696 = vcmask 7168
      %8697 = vst.msk [vmem:[%s656] sm:$0xff] %vm8696, %v8680
      %8698 = vst.msk [vmem:[%s656 + $0x8] sm:$0xff] %vm8696, %v8681
      %8699 = vst.msk [vmem:[%s656 + $0x10] sm:$0xff] %vm8696, %v8682
      %8700 = vst.msk [vmem:[%s656 + $0x18] sm:$0xff] %vm8696, %v8683
      %8701 = vst.msk [vmem:[%s656 + $0x20] sm:$0xff] %vm8696, %v8684
      %8702 = vst.msk [vmem:[%s656 + $0x28] sm:$0xff] %vm8696, %v8685
      %8703 = vst.msk [vmem:[%s656 + $0x30] sm:$0xff] %vm8696, %v8686
      %8704 = vst.msk [vmem:[%s656 + $0x38] sm:$0xff] %vm8696, %v8687
      %8705 = vst.msk [vmem:[%s656 + $0x40] sm:$0xff] %vm8696, %v8688
      %8706 = vst.msk [vmem:[%s656 + $0x48] sm:$0xff] %vm8696, %v8689
      %8707 = vst.msk [vmem:[%s656 + $0x50] sm:$0xff] %vm8696, %v8690
      %8708 = vst.msk [vmem:[%s656 + $0x58] sm:$0xff] %vm8696, %v8691
      %8709 = vst.msk [vmem:[%s656 + $0x60] sm:$0xff] %vm8696, %v8692
      %8710 = vst.msk [vmem:[%s656 + $0x68] sm:$0xff] %vm8696, %v8693
      %8711 = vst.msk [vmem:[%s656 + $0x70] sm:$0xff] %vm8696, %v8694
      %8712 = vst.msk [vmem:[%s656 + $0x78] sm:$0xff] %vm8696, %v8695
      %s8713 = smul.u32 16, %s32
      %p8714 = scmp.lt.s32.totalorder %s8713, 31
      %s8715 = scalar_select %p8714, %s8713, 31
      %s8716 = smul.addr %s8715, 8
      %s8717 = scalar_lea.vmem %s19, %s8716
      // Predicated region
      $region97: #{_isgdrp_forward_impl.1} parent=95 // pred_check
        %p8718 = pneg %p464
      $region98: #{_isgdrp_forward_impl.1} parent=95 // pred_check_branch
        %8720 = sbr.rel (%p8718) target = $region100
      $region99: #{_isgdrp_forward_impl.1} parent=95 // pred_region
        %s8721 = smul.u32 16, %s32
      $region100: #{_isgdrp_forward_impl.1} parent=95 // pred_fallthru
        _
    $region96: #{_isgdrp_forward_impl.1} parent=5 // pred_fallthru
      _
    %p8722 = scmp.le.s32.totalorder 2, %s27
    // Predicated region
    $region101: #{_isgdrp_forward_impl.1} parent=5 // pred_check
      %p8723 = pneg %p8722
    $region102: #{_isgdrp_forward_impl.1} parent=5 // pred_check_branch
      %8725 = sbr.rel (%p8723) target = $region104
    $region103: #{_isgdrp_forward_impl.1} parent=5 // pred_region
      %s8726 = ssub.s32 %s27, 2
      // Predicated region
      $region105: #{_isgdrp_forward_impl.1} parent=103 // pred_check
        %p8727 = pneg %p470
      $region106: #{_isgdrp_forward_impl.1} parent=103 // pred_check_branch
        %8729 = sbr.rel (%p8727) target = $region108
      $region107: #{_isgdrp_forward_impl.1} parent=103 // pred_region
        %s8730 = smul.u32 16, %s33
        %p8731 = scmp.lt.s32.totalorder %s8730, 31
        %s8732 = scalar_select %p8731, %s8730, 31
        %s8733 = smul.addr %s8732, 8
        %s8734 = scalar_lea.vmem %s19, %s8733
      $region108: #{_isgdrp_forward_impl.1} parent=103 // pred_fallthru
        _
    $region104: #{_isgdrp_forward_impl.1} parent=5 // pred_fallthru
      _
  $region6: #{_isgdrp_forward_impl.1} parent=0 // loop_footer
    %s31 = sadd.s32 1, %s27
  $region7: #{_isgdrp_forward_impl.1} parent=0 // loop_footer_branch
    %26 = sbr.rel target = $region3
  $region8: #{_isgdrp_forward_impl.1} parent=0 // loop_exit
    _

</llo_original>
